<compile_context>
chip_gen: v7x
topology: tpu7x:2x2x1
jax: 0.10.0
libtpu: 0.0.40
codegen_flags: <defaults>
</compile_context>

<pallas_src>
import functools

import jax
import jax.numpy as jnp
import numpy as np
from jax.experimental import pallas as pl
from jax.experimental.pallas import tpu as pltpu


# ----------------------------------------------------------------------------
# Pallas kernel: one grid step == Bt batch elements.
# ----------------------------------------------------------------------------
def _ms_context_kernel(x_ref, mpool_ref, hpack_ref, cpack_ref, rpack_ref,
                       o_ref, s_scr, ctxT_scr):
    """
    x_ref     : (Bt, C, HW)    bf16/f32 activations
    mpool_ref : (HW, Lp)       bf16 pooling matrix (zero-padded columns)
    hpack_ref : (C_hid, 3+C)   [ b1 | ln_gamma | ln_beta | w1 ]           f32
    cpack_ref : (C, 2+C_hid)   [ conv_mask w | b2 | w2 ]                  f32
    rpack_ref : (3, Lp)        [ scale_w ; bias*scale_w (pad=-1e30) ; bias ] f32
    o_ref     : (Bt, C, HW)
    s_scr     : (Bt, HW) f32 VMEM scratch   (dense conv_mask responses)
    ctxT_scr  : (C, Bt)  f32 VMEM scratch   (dense context vectors)
    """
    Bt, C, HW = x_ref.shape
    f32 = jnp.float32

    mp = mpool_ref[...].astype(f32)                 # (HW, Lp)
    hp = hpack_ref[...]                             # (C_hid, 3 + C)
    cp = cpack_ref[...]                             # (C, 2 + C_hid)
    rp = rpack_ref[...]                             # (3, Lp)
    c_hid = hp.shape[0]

    b1c = hp[:, 0:1]                                # (C_hid, 1)
    gamc = hp[:, 1:2]                               # (C_hid, 1)
    betc = hp[:, 2:3]                               # (C_hid, 1)
    w1 = hp[:, 3:3 + C]                             # (C_hid, C)
    wcol = cp[:, 0:1]                               # (C, 1)   conv_mask weight
    b2c = cp[:, 1:2]                                # (C, 1)
    w2 = cp[:, 2:2 + c_hid]                         # (C, C_hid)
    swp = rp[0:1, :]                                # (1, Lp)  per-scale weights
    bp = rp[1:2, :]                                 # (1, Lp)  bias*weight, pad=-1e30
    bm = rp[2:3, 0:1]                               # (1, 1)   conv_mask bias

    # ---- Phase 1: conv_mask channel reduction (VPU mul + sublane reduce),
    #      rows assembled into a dense (Bt, HW) buffer.
    for b in range(Bt):
        xb = x_ref[b].astype(f32)                                    # (C, HW)
        s_scr[b:b + 1, :] = jnp.sum(xb * wcol, axis=0, keepdims=True)

    s = s_scr[...]                                                   # (Bt, HW)

    # ---- Multi-scale logits + softmax, fully batched over the tile.
    l0 = s + bm                                                      # (Bt, HW)
    lp = jnp.dot(s, mp, preferred_element_type=f32) * swp + bp       # (Bt, Lp)

    # softmax over the virtual concat [l0 | lp] without concatenating;
    # padded lanes carry -1e30 bias -> exp underflows to exactly 0.
    m = jnp.maximum(jnp.max(l0, axis=-1, keepdims=True),
                    jnp.max(lp, axis=-1, keepdims=True))
    p0 = jnp.exp(l0 - m)
    pp = jnp.exp(lp - m)
    rz = 1.0 / (jnp.sum(p0, axis=-1, keepdims=True)
                + jnp.sum(pp, axis=-1, keepdims=True))
    a0 = p0 * rz                                                     # (Bt, HW)
    ap = pp * rz                                                     # (Bt, Lp)

    # back-project pooled attention onto the HW grid using the *same* pooling
    # matrix (contraction over its column axis) -- no transposed copy needed.
    v = a0 + jax.lax.dot_general(ap, mp, (((1,), (1,)), ((), ())),
                                 preferred_element_type=f32)         # (Bt, HW)

    # ---- Phase 2: context[b, c] = sum_hw x[b,c,hw] * v[b,hw], assembled as
    #      dense (C, Bt) columns for the batched channel MLP.
    for b in range(Bt):
        xb = x_ref[b].astype(f32)                                    # (C, HW)
        vb = v[b:b + 1, :]                                           # (1, HW)
        ctxT_scr[:, b:b + 1] = jnp.sum(xb * vb, axis=-1, keepdims=True)

    ctxT = ctxT_scr[...]                                             # (C, Bt)

    # ---- channel_add_conv: 1x1 conv -> LayerNorm([C_hid,1,1]) -> ReLU -> 1x1
    h = jnp.dot(w1, ctxT, preferred_element_type=f32) + b1c          # (C_hid, Bt)
    mu = jnp.mean(h, axis=0, keepdims=True)
    var = jnp.mean((h - mu) ** 2, axis=0, keepdims=True)
    h = (h - mu) * jax.lax.rsqrt(var + 1e-5)
    h = jnp.maximum(h * gamc + betc, 0.0)
    addT = jnp.dot(w2, h, preferred_element_type=f32) + b2c          # (C, Bt)

    # ---- Phase 3: out = x + channel_add_term (broadcast over the HW lanes)
    for b in range(Bt):
        o_ref[b] = (x_ref[b].astype(f32) + addT[:, b:b + 1]).astype(o_ref.dtype)


# ----------------------------------------------------------------------------
# Glue: pooling matrices, parameters, wrapper.
# ----------------------------------------------------------------------------
def build_pool_matrices(H, W, scale=3, weights=(1, 2, 4, 8)):
    """M_pool: (HW, Lp) s.t. z_flat @ M_pool == concat of the 2x/4x/8x
    avg-pooled maps flattened along spatial; swp: (1, Lp) per-scale
    softmax-logit weights."""
    HW = H * W
    rows = np.arange(HW)
    rh, rw = rows // W, rows % W
    mats, sws = [], []
    for ms in range(scale):
        k = 2 ** (ms + 1)
        Hk, Wk = H // k, W // k
        col = (rh // k) * Wk + (rw // k)
        Mk = (col[:, None] == np.arange(Hk * Wk)[None, :]).astype(np.float32)
        mats.append(Mk / float(k * k))
        sws.append(np.full((Hk * Wk,), float(weights[ms + 1]), np.float32))
    M_pool = np.concatenate(mats, axis=1)
    swp = np.concatenate(sws)[None, :]
    return jnp.asarray(M_pool), jnp.asarray(swp)


def init_params(key, C, C_hid):
    ks = jax.random.split(key, 8)
    return {
        "wmask": jax.random.normal(ks[0], (C, 1), jnp.float32) * 0.2,   # conv_mask w
        "bmask": jnp.full((1, 1), 0.05, jnp.float32),                   # conv_mask b
        "w1": jax.random.normal(ks[1], (C_hid, C), jnp.float32) * 0.2,
        "b1": jax.random.normal(ks[2], (C_hid, 1), jnp.float32) * 0.1,
        "gamma": 1.0 + 0.1 * jax.random.normal(ks[3], (C_hid, 1), jnp.float32),
        "beta": 0.1 * jax.random.normal(ks[4], (C_hid, 1), jnp.float32),
        "w2": jax.random.normal(ks[5], (C, C_hid), jnp.float32) * 0.2,
        "b2": jax.random.normal(ks[6], (C, 1), jnp.float32) * 0.1,
    }


@functools.partial(jax.jit, static_argnames=("H", "W", "Bt"))
def ms_context_block2d(x, params, M_pool, swp, *, H, W, Bt):
    B, C = x.shape[0], x.shape[1]
    HW = H * W
    C_hid = params["w1"].shape[0]
    assert B % Bt == 0, "batch must be divisible by the batch tile"

    x_flat = x.reshape(B, C, HW)          # pure reshape, no data movement

    # Pad the pooled axis to a lane multiple; padded logits get ~-inf bias so
    # they vanish in the softmax and contribute zero to the back-projection.
    Lp = M_pool.shape[1]
    Lp_pad = ((Lp + 127) // 128) * 128
    pad = Lp_pad - Lp

    # Single pooling constant, bf16 is lossless (entries 1/4, 1/16, 1/64).
    # For large H*W, tile this constant / keep it bf16 (v7x has 64 MiB VMEM).
    mpool = jnp.pad(M_pool, ((0, 0), (0, pad))).astype(jnp.bfloat16)

    # Sublane-major row pack: every field starts at lane 0 (no misaligned
    # lane slices inside the kernel).
    swp_pad = jnp.pad(swp, ((0, 0), (0, pad)))
    bp = jnp.pad(params["bmask"].reshape(1, 1) * swp, ((0, 0), (0, pad)),
                 constant_values=-1e30)
    bmrow = jnp.pad(params["bmask"].reshape(1, 1), ((0, 0), (0, Lp_pad - 1)))
    rpack = jnp.concatenate([swp_pad, bp, bmrow], axis=0)            # (3, Lp_pad)

    # Column-oriented parameter packs (natural orientation -> no in-kernel
    # transposes, column slices broadcast directly over the HW lanes).
    hpack = jnp.concatenate([params["b1"], params["gamma"], params["beta"],
                             params["w1"]], axis=1)                  # (C_hid, 3+C)
    cpack = jnp.concatenate([params["wmask"], params["b2"],
                             params["w2"]], axis=1)                  # (C, 2+C_hid)

    out_flat = pl.pallas_call(
        _ms_context_kernel,
        out_shape=jax.ShapeDtypeStruct((B, C, HW), x.dtype),
        grid_spec=pltpu.PrefetchScalarGridSpec(
            num_scalar_prefetch=0,
            grid=(B // Bt,),
            in_specs=[
                pl.BlockSpec((Bt, C, HW), lambda i: (i, 0, 0)),            # x
                pl.BlockSpec((HW, Lp_pad), lambda i: (0, 0),
                             pipeline_mode=pl.Buffered(1)),                # M_pool
                pl.BlockSpec((C_hid, 3 + C), lambda i: (0, 0),
                             pipeline_mode=pl.Buffered(1)),                # b1|g|b|w1
                pl.BlockSpec((C, 2 + C_hid), lambda i: (0, 0),
                             pipeline_mode=pl.Buffered(1)),                # wm|b2|w2
                pl.BlockSpec((3, Lp_pad), lambda i: (0, 0),
                             pipeline_mode=pl.Buffered(1)),                # rows
            ],
            out_specs=pl.BlockSpec((Bt, C, HW), lambda i: (i, 0, 0)),
            scratch_shapes=[pltpu.VMEM((Bt, HW), jnp.float32),             # dense s
                            pltpu.VMEM((C, Bt), jnp.float32)],             # ctx^T
        ),
        compiler_params=pltpu.CompilerParams(
            # v7x note: if "parallel" does not shard across the two TCs,
            # switch to pltpu.CORE_PARALLEL here.
            dimension_semantics=("parallel",),
            vmem_limit_bytes=32 * 1024 * 1024),
    )(x_flat, mpool, hpack, cpack, rpack)
    return out_flat.reshape(B, C, H, W)


# ----------------------------------------------------------------------------
# Pure-JAX reference, mirroring the PyTorch forward literally.
# ----------------------------------------------------------------------------
def reference(x, params):
    B, C, H, W = x.shape
    w = params["wmask"][:, 0]
    b = params["bmask"][0, 0]

    def avg_pool(z, k):
        return z.reshape(B, C, H // k, k, W // k, k).mean(axis=(3, 5))

    weight = [1, 2, 4, 8]
    input_x = x.reshape(B, C, H * W)
    cm = (jnp.einsum("bchw,c->bhw", x, w) + b).reshape(B, 1, H * W)
    for ms in range(3):
        k = 2 ** (ms + 1)
        xms = avg_pool(x, k)
        hm, wm = H // k, W // k
        input_x = jnp.concatenate([input_x, xms.reshape(B, C, hm * wm)], axis=2)
        cm_ms = (jnp.einsum("bchw,c->bhw", xms, w) + b).reshape(B, 1, hm * wm)
        cm = jnp.concatenate([cm, weight[ms + 1] * cm_ms], axis=2)
    attn = jax.nn.softmax(cm, axis=2)                        # (B, 1, L)
    context = jnp.einsum("bcl,bl->bc", input_x, attn[:, 0])  # (B, C)

    h = jnp.einsum("oc,bc->bo", params["w1"], context) + params["b1"][:, 0]
    mu = h.mean(axis=1, keepdims=True)
    var = ((h - mu) ** 2).mean(axis=1, keepdims=True)
    h = (h - mu) / jnp.sqrt(var + 1e-5)
    h = h * params["gamma"][:, 0] + params["beta"][:, 0]
    h = jnp.maximum(h, 0.0)
    add = jnp.einsum("oc,bc->bo", params["w2"], h) + params["b2"][:, 0]
    return x + add[:, :, None, None]


if __name__ == "__main__":
    # inplanes = planes = 32, ratio = 8  ->  hidden channels = 4
    B, C, H, W = 64, 32, 16, 16
    C_hid = 32 // 8
    Bt = 32          # 512 KiB bf16 blocks; grid length 2 (multiple of 2 for v7x)

    key = jax.random.PRNGKey(0)
    kx, kp = jax.random.split(key)
    x = jax.random.normal(kx, (B, C, H, W), jnp.float32)
    params = init_params(kp, C, C_hid)
    M_pool, swp = build_pool_matrices(H, W, scale=3)

    # bf16 HBM I/O (memory-bound kernel); all in-kernel compute stays f32.
    x_lp = x.astype(jnp.bfloat16)

    out = ms_context_block2d(x_lp, params, M_pool, swp, H=H, W=W, Bt=Bt)
    out = jax.block_until_ready(out)

    # Reference on the same bf16-quantized input, computed in f32.
    ref = reference(x_lp.astype(jnp.float32), params)
    np.testing.assert_allclose(np.asarray(out.astype(jnp.float32)),
                               np.asarray(ref), rtol=5e-3, atol=5e-3)
    print("KERNEL_OK")
</pallas_src>

<mosaic_0001>
module attributes {stable_mosaic.version = 11 : i64} {
  func.func @_ms_context_kernel(%arg0: i32, %arg1: memref<32x32x256xbf16, #tpu.memory_space<vmem>>, %arg2: memref<256x128xbf16, #tpu.memory_space<vmem>>, %arg3: memref<4x35xf32, #tpu.memory_space<vmem>>, %arg4: memref<32x6xf32, #tpu.memory_space<vmem>>, %arg5: memref<3x128xf32, #tpu.memory_space<vmem>>, %arg6: memref<32x32x256xbf16, #tpu.memory_space<vmem>>, %arg7: memref<32x256xf32, #tpu.memory_space<vmem>>, %arg8: memref<32x32xf32, #tpu.memory_space<vmem>>) attributes {dimension_semantics = [#tpu.dimension_semantics<parallel>], iteration_bounds = array<i64: 2>, scalar_prefetch = 0 : i64, scratch_operands = 2 : i64, tpu.core_type = #tpu.core_type<tc>, window_params = [{transform_indices = @transform_0, window_bounds = array<i64: 32, 32, 256>}, {pipeline_mode = #tpu.pipeline_mode<synchronous>, transform_indices = @transform_1, window_bounds = array<i64: 256, 128>}, {pipeline_mode = #tpu.pipeline_mode<synchronous>, transform_indices = @transform_2, window_bounds = array<i64: 4, 35>}, {pipeline_mode = #tpu.pipeline_mode<synchronous>, transform_indices = @transform_3, window_bounds = array<i64: 32, 6>}, {pipeline_mode = #tpu.pipeline_mode<synchronous>, transform_indices = @transform_4, window_bounds = array<i64: 3, 128>}, {transform_indices = @transform_5, window_bounds = array<i64: 32, 32, 256>}]} {
    %c0 = arith.constant 0 : index
    %c0_0 = arith.constant 0 : index
    %0 = vector.load %arg2[%c0, %c0_0] : memref<256x128xbf16, #tpu.memory_space<vmem>>, vector<256x128xbf16>
    %1 = arith.extf %0 : vector<256x128xbf16> to vector<256x128xf32>
    %c0_1 = arith.constant 0 : index
    %c0_2 = arith.constant 0 : index
    %2 = vector.load %arg3[%c0_1, %c0_2] : memref<4x35xf32, #tpu.memory_space<vmem>>, vector<4x35xf32>
    %c0_3 = arith.constant 0 : index
    %c0_4 = arith.constant 0 : index
    %3 = vector.load %arg4[%c0_3, %c0_4] : memref<32x6xf32, #tpu.memory_space<vmem>>, vector<32x6xf32>
    %c0_5 = arith.constant 0 : index
    %c0_6 = arith.constant 0 : index
    %4 = vector.load %arg5[%c0_5, %c0_6] : memref<3x128xf32, #tpu.memory_space<vmem>>, vector<3x128xf32>
    %5 = vector.extract_strided_slice %2 {offsets = [0, 0], sizes = [4, 1], strides = [1, 1]} : vector<4x35xf32> to vector<4x1xf32>
    %6 = vector.extract_strided_slice %2 {offsets = [0, 1], sizes = [4, 1], strides = [1, 1]} : vector<4x35xf32> to vector<4x1xf32>
    %7 = vector.extract_strided_slice %2 {offsets = [0, 2], sizes = [4, 1], strides = [1, 1]} : vector<4x35xf32> to vector<4x1xf32>
    %8 = vector.extract_strided_slice %2 {offsets = [0, 3], sizes = [4, 32], strides = [1, 1]} : vector<4x35xf32> to vector<4x32xf32>
    %9 = vector.extract_strided_slice %3 {offsets = [0, 0], sizes = [32, 1], strides = [1, 1]} : vector<32x6xf32> to vector<32x1xf32>
    %10 = vector.extract_strided_slice %3 {offsets = [0, 1], sizes = [32, 1], strides = [1, 1]} : vector<32x6xf32> to vector<32x1xf32>
    %11 = vector.extract_strided_slice %3 {offsets = [0, 2], sizes = [32, 4], strides = [1, 1]} : vector<32x6xf32> to vector<32x4xf32>
    %12 = vector.extract_strided_slice %4 {offsets = [0, 0], sizes = [1, 128], strides = [1, 1]} : vector<3x128xf32> to vector<1x128xf32>
    %13 = vector.extract_strided_slice %4 {offsets = [1, 0], sizes = [1, 128], strides = [1, 1]} : vector<3x128xf32> to vector<1x128xf32>
    %14 = vector.extract_strided_slice %4 {offsets = [2, 0], sizes = [1, 1], strides = [1, 1]} : vector<3x128xf32> to vector<1x1xf32>
    %c0_7 = arith.constant 0 : index
    %c0_8 = arith.constant 0 : index
    %c0_9 = arith.constant 0 : index
    %15 = vector.load %arg1[%c0_7, %c0_8, %c0_9] : memref<32x32x256xbf16, #tpu.memory_space<vmem>>, vector<1x32x256xbf16>
    %16 = vector.shape_cast %15 : vector<1x32x256xbf16> to vector<32x256xbf16>
    %17 = arith.extf %16 : vector<32x256xbf16> to vector<32x256xf32>
    %18 = vector.broadcast %9 : vector<32x1xf32> to vector<32x256xf32>
    %19 = arith.mulf %17, %18 : vector<32x256xf32>
    %cst = arith.constant dense<0.000000e+00> : vector<256xf32>
    %20 = vector.multi_reduction <add>, %19, %cst [0] : vector<32x256xf32> to vector<256xf32>
    %21 = vector.shape_cast %20 : vector<256xf32> to vector<1x256xf32>
    %c0_10 = arith.constant 0 : index
    %c0_11 = arith.constant 0 : index
    %22 = vector.load %arg7[%c0_10, %c0_11] : memref<32x256xf32, #tpu.memory_space<vmem>>, vector<1x256xf32>
    tpu.vector_store %arg7[%c0_10, %c0_11], %21 {strides = array<i32>} : memref<32x256xf32, #tpu.memory_space<vmem>>, vector<1x256xf32>,
    %c1 = arith.constant 1 : index
    %c0_12 = arith.constant 0 : index
    %c0_13 = arith.constant 0 : index
    %23 = vector.load %arg1[%c1, %c0_12, %c0_13] : memref<32x32x256xbf16, #tpu.memory_space<vmem>>, vector<1x32x256xbf16>
    %24 = vector.shape_cast %23 : vector<1x32x256xbf16> to vector<32x256xbf16>
    %25 = arith.extf %24 : vector<32x256xbf16> to vector<32x256xf32>
    %26 = vector.broadcast %9 : vector<32x1xf32> to vector<32x256xf32>
    %27 = arith.mulf %25, %26 : vector<32x256xf32>
    %cst_14 = arith.constant dense<0.000000e+00> : vector<256xf32>
    %28 = vector.multi_reduction <add>, %27, %cst_14 [0] : vector<32x256xf32> to vector<256xf32>
    %29 = vector.shape_cast %28 : vector<256xf32> to vector<1x256xf32>
    %c1_15 = arith.constant 1 : index
    %c0_16 = arith.constant 0 : index
    %30 = vector.load %arg7[%c1_15, %c0_16] : memref<32x256xf32, #tpu.memory_space<vmem>>, vector<1x256xf32>
    tpu.vector_store %arg7[%c1_15, %c0_16], %29 {strides = array<i32>} : memref<32x256xf32, #tpu.memory_space<vmem>>, vector<1x256xf32>,
    %c2 = arith.constant 2 : index
    %c0_17 = arith.constant 0 : index
    %c0_18 = arith.constant 0 : index
    %31 = vector.load %arg1[%c2, %c0_17, %c0_18] : memref<32x32x256xbf16, #tpu.memory_space<vmem>>, vector<1x32x256xbf16>
    %32 = vector.shape_cast %31 : vector<1x32x256xbf16> to vector<32x256xbf16>
    %33 = arith.extf %32 : vector<32x256xbf16> to vector<32x256xf32>
    %34 = vector.broadcast %9 : vector<32x1xf32> to vector<32x256xf32>
    %35 = arith.mulf %33, %34 : vector<32x256xf32>
    %cst_19 = arith.constant dense<0.000000e+00> : vector<256xf32>
    %36 = vector.multi_reduction <add>, %35, %cst_19 [0] : vector<32x256xf32> to vector<256xf32>
    %37 = vector.shape_cast %36 : vector<256xf32> to vector<1x256xf32>
    %c2_20 = arith.constant 2 : index
    %c0_21 = arith.constant 0 : index
    %38 = vector.load %arg7[%c2_20, %c0_21] : memref<32x256xf32, #tpu.memory_space<vmem>>, vector<1x256xf32>
    tpu.vector_store %arg7[%c2_20, %c0_21], %37 {strides = array<i32>} : memref<32x256xf32, #tpu.memory_space<vmem>>, vector<1x256xf32>,
    %c3 = arith.constant 3 : index
    %c0_22 = arith.constant 0 : index
    %c0_23 = arith.constant 0 : index
    %39 = vector.load %arg1[%c3, %c0_22, %c0_23] : memref<32x32x256xbf16, #tpu.memory_space<vmem>>, vector<1x32x256xbf16>
    %40 = vector.shape_cast %39 : vector<1x32x256xbf16> to vector<32x256xbf16>
    %41 = arith.extf %40 : vector<32x256xbf16> to vector<32x256xf32>
    %42 = vector.broadcast %9 : vector<32x1xf32> to vector<32x256xf32>
    %43 = arith.mulf %41, %42 : vector<32x256xf32>
    %cst_24 = arith.constant dense<0.000000e+00> : vector<256xf32>
    %44 = vector.multi_reduction <add>, %43, %cst_24 [0] : vector<32x256xf32> to vector<256xf32>
    %45 = vector.shape_cast %44 : vector<256xf32> to vector<1x256xf32>
    %c3_25 = arith.constant 3 : index
    %c0_26 = arith.constant 0 : index
    %46 = vector.load %arg7[%c3_25, %c0_26] : memref<32x256xf32, #tpu.memory_space<vmem>>, vector<1x256xf32>
    tpu.vector_store %arg7[%c3_25, %c0_26], %45 {strides = array<i32>} : memref<32x256xf32, #tpu.memory_space<vmem>>, vector<1x256xf32>,
    %c4 = arith.constant 4 : index
    %c0_27 = arith.constant 0 : index
    %c0_28 = arith.constant 0 : index
    %47 = vector.load %arg1[%c4, %c0_27, %c0_28] : memref<32x32x256xbf16, #tpu.memory_space<vmem>>, vector<1x32x256xbf16>
    %48 = vector.shape_cast %47 : vector<1x32x256xbf16> to vector<32x256xbf16>
    %49 = arith.extf %48 : vector<32x256xbf16> to vector<32x256xf32>
    %50 = vector.broadcast %9 : vector<32x1xf32> to vector<32x256xf32>
    %51 = arith.mulf %49, %50 : vector<32x256xf32>
    %cst_29 = arith.constant dense<0.000000e+00> : vector<256xf32>
    %52 = vector.multi_reduction <add>, %51, %cst_29 [0] : vector<32x256xf32> to vector<256xf32>
    %53 = vector.shape_cast %52 : vector<256xf32> to vector<1x256xf32>
    %c4_30 = arith.constant 4 : index
    %c0_31 = arith.constant 0 : index
    %54 = vector.load %arg7[%c4_30, %c0_31] : memref<32x256xf32, #tpu.memory_space<vmem>>, vector<1x256xf32>
    tpu.vector_store %arg7[%c4_30, %c0_31], %53 {strides = array<i32>} : memref<32x256xf32, #tpu.memory_space<vmem>>, vector<1x256xf32>,
    %c5 = arith.constant 5 : index
    %c0_32 = arith.constant 0 : index
    %c0_33 = arith.constant 0 : index
    %55 = vector.load %arg1[%c5, %c0_32, %c0_33] : memref<32x32x256xbf16, #tpu.memory_space<vmem>>, vector<1x32x256xbf16>
    %56 = vector.shape_cast %55 : vector<1x32x256xbf16> to vector<32x256xbf16>
    %57 = arith.extf %56 : vector<32x256xbf16> to vector<32x256xf32>
    %58 = vector.broadcast %9 : vector<32x1xf32> to vector<32x256xf32>
    %59 = arith.mulf %57, %58 : vector<32x256xf32>
    %cst_34 = arith.constant dense<0.000000e+00> : vector<256xf32>
    %60 = vector.multi_reduction <add>, %59, %cst_34 [0] : vector<32x256xf32> to vector<256xf32>
    %61 = vector.shape_cast %60 : vector<256xf32> to vector<1x256xf32>
    %c5_35 = arith.constant 5 : index
    %c0_36 = arith.constant 0 : index
    %62 = vector.load %arg7[%c5_35, %c0_36] : memref<32x256xf32, #tpu.memory_space<vmem>>, vector<1x256xf32>
    tpu.vector_store %arg7[%c5_35, %c0_36], %61 {strides = array<i32>} : memref<32x256xf32, #tpu.memory_space<vmem>>, vector<1x256xf32>,
    %c6 = arith.constant 6 : index
    %c0_37 = arith.constant 0 : index
    %c0_38 = arith.constant 0 : index
    %63 = vector.load %arg1[%c6, %c0_37, %c0_38] : memref<32x32x256xbf16, #tpu.memory_space<vmem>>, vector<1x32x256xbf16>
    %64 = vector.shape_cast %63 : vector<1x32x256xbf16> to vector<32x256xbf16>
    %65 = arith.extf %64 : vector<32x256xbf16> to vector<32x256xf32>
    %66 = vector.broadcast %9 : vector<32x1xf32> to vector<32x256xf32>
    %67 = arith.mulf %65, %66 : vector<32x256xf32>
    %cst_39 = arith.constant dense<0.000000e+00> : vector<256xf32>
    %68 = vector.multi_reduction <add>, %67, %cst_39 [0] : vector<32x256xf32> to vector<256xf32>
    %69 = vector.shape_cast %68 : vector<256xf32> to vector<1x256xf32>
    %c6_40 = arith.constant 6 : index
    %c0_41 = arith.constant 0 : index
    %70 = vector.load %arg7[%c6_40, %c0_41] : memref<32x256xf32, #tpu.memory_space<vmem>>, vector<1x256xf32>
    tpu.vector_store %arg7[%c6_40, %c0_41], %69 {strides = array<i32>} : memref<32x256xf32, #tpu.memory_space<vmem>>, vector<1x256xf32>,
    %c7 = arith.constant 7 : index
    %c0_42 = arith.constant 0 : index
    %c0_43 = arith.constant 0 : index
    %71 = vector.load %arg1[%c7, %c0_42, %c0_43] : memref<32x32x256xbf16, #tpu.memory_space<vmem>>, vector<1x32x256xbf16>
    %72 = vector.shape_cast %71 : vector<1x32x256xbf16> to vector<32x256xbf16>
    %73 = arith.extf %72 : vector<32x256xbf16> to vector<32x256xf32>
    %74 = vector.broadcast %9 : vector<32x1xf32> to vector<32x256xf32>
    %75 = arith.mulf %73, %74 : vector<32x256xf32>
    %cst_44 = arith.constant dense<0.000000e+00> : vector<256xf32>
    %76 = vector.multi_reduction <add>, %75, %cst_44 [0] : vector<32x256xf32> to vector<256xf32>
    %77 = vector.shape_cast %76 : vector<256xf32> to vector<1x256xf32>
    %c7_45 = arith.constant 7 : index
    %c0_46 = arith.constant 0 : index
    %78 = vector.load %arg7[%c7_45, %c0_46] : memref<32x256xf32, #tpu.memory_space<vmem>>, vector<1x256xf32>
    tpu.vector_store %arg7[%c7_45, %c0_46], %77 {strides = array<i32>} : memref<32x256xf32, #tpu.memory_space<vmem>>, vector<1x256xf32>,
    %c8 = arith.constant 8 : index
    %c0_47 = arith.constant 0 : index
    %c0_48 = arith.constant 0 : index
    %79 = vector.load %arg1[%c8, %c0_47, %c0_48] : memref<32x32x256xbf16, #tpu.memory_space<vmem>>, vector<1x32x256xbf16>
    %80 = vector.shape_cast %79 : vector<1x32x256xbf16> to vector<32x256xbf16>
    %81 = arith.extf %80 : vector<32x256xbf16> to vector<32x256xf32>
    %82 = vector.broadcast %9 : vector<32x1xf32> to vector<32x256xf32>
    %83 = arith.mulf %81, %82 : vector<32x256xf32>
    %cst_49 = arith.constant dense<0.000000e+00> : vector<256xf32>
    %84 = vector.multi_reduction <add>, %83, %cst_49 [0] : vector<32x256xf32> to vector<256xf32>
    %85 = vector.shape_cast %84 : vector<256xf32> to vector<1x256xf32>
    %c8_50 = arith.constant 8 : index
    %c0_51 = arith.constant 0 : index
    %86 = vector.load %arg7[%c8_50, %c0_51] : memref<32x256xf32, #tpu.memory_space<vmem>>, vector<1x256xf32>
    tpu.vector_store %arg7[%c8_50, %c0_51], %85 {strides = array<i32>} : memref<32x256xf32, #tpu.memory_space<vmem>>, vector<1x256xf32>,
    %c9 = arith.constant 9 : index
    %c0_52 = arith.constant 0 : index
    %c0_53 = arith.constant 0 : index
    %87 = vector.load %arg1[%c9, %c0_52, %c0_53] : memref<32x32x256xbf16, #tpu.memory_space<vmem>>, vector<1x32x256xbf16>
    %88 = vector.shape_cast %87 : vector<1x32x256xbf16> to vector<32x256xbf16>
    %89 = arith.extf %88 : vector<32x256xbf16> to vector<32x256xf32>
    %90 = vector.broadcast %9 : vector<32x1xf32> to vector<32x256xf32>
    %91 = arith.mulf %89, %90 : vector<32x256xf32>
    %cst_54 = arith.constant dense<0.000000e+00> : vector<256xf32>
    %92 = vector.multi_reduction <add>, %91, %cst_54 [0] : vector<32x256xf32> to vector<256xf32>
    %93 = vector.shape_cast %92 : vector<256xf32> to vector<1x256xf32>
    %c9_55 = arith.constant 9 : index
    %c0_56 = arith.constant 0 : index
    %94 = vector.load %arg7[%c9_55, %c0_56] : memref<32x256xf32, #tpu.memory_space<vmem>>, vector<1x256xf32>
    tpu.vector_store %arg7[%c9_55, %c0_56], %93 {strides = array<i32>} : memref<32x256xf32, #tpu.memory_space<vmem>>, vector<1x256xf32>,
    %c10 = arith.constant 10 : index
    %c0_57 = arith.constant 0 : index
    %c0_58 = arith.constant 0 : index
    %95 = vector.load %arg1[%c10, %c0_57, %c0_58] : memref<32x32x256xbf16, #tpu.memory_space<vmem>>, vector<1x32x256xbf16>
    %96 = vector.shape_cast %95 : vector<1x32x256xbf16> to vector<32x256xbf16>
    %97 = arith.extf %96 : vector<32x256xbf16> to vector<32x256xf32>
    %98 = vector.broadcast %9 : vector<32x1xf32> to vector<32x256xf32>
    %99 = arith.mulf %97, %98 : vector<32x256xf32>
    %cst_59 = arith.constant dense<0.000000e+00> : vector<256xf32>
    %100 = vector.multi_reduction <add>, %99, %cst_59 [0] : vector<32x256xf32> to vector<256xf32>
    %101 = vector.shape_cast %100 : vector<256xf32> to vector<1x256xf32>
    %c10_60 = arith.constant 10 : index
    %c0_61 = arith.constant 0 : index
    %102 = vector.load %arg7[%c10_60, %c0_61] : memref<32x256xf32, #tpu.memory_space<vmem>>, vector<1x256xf32>
    tpu.vector_store %arg7[%c10_60, %c0_61], %101 {strides = array<i32>} : memref<32x256xf32, #tpu.memory_space<vmem>>, vector<1x256xf32>,
    %c11 = arith.constant 11 : index
    %c0_62 = arith.constant 0 : index
    %c0_63 = arith.constant 0 : index
    %103 = vector.load %arg1[%c11, %c0_62, %c0_63] : memref<32x32x256xbf16, #tpu.memory_space<vmem>>, vector<1x32x256xbf16>
    %104 = vector.shape_cast %103 : vector<1x32x256xbf16> to vector<32x256xbf16>
    %105 = arith.extf %104 : vector<32x256xbf16> to vector<32x256xf32>
    %106 = vector.broadcast %9 : vector<32x1xf32> to vector<32x256xf32>
    %107 = arith.mulf %105, %106 : vector<32x256xf32>
    %cst_64 = arith.constant dense<0.000000e+00> : vector<256xf32>
    %108 = vector.multi_reduction <add>, %107, %cst_64 [0] : vector<32x256xf32> to vector<256xf32>
    %109 = vector.shape_cast %108 : vector<256xf32> to vector<1x256xf32>
    %c11_65 = arith.constant 11 : index
    %c0_66 = arith.constant 0 : index
    %110 = vector.load %arg7[%c11_65, %c0_66] : memref<32x256xf32, #tpu.memory_space<vmem>>, vector<1x256xf32>
    tpu.vector_store %arg7[%c11_65, %c0_66], %109 {strides = array<i32>} : memref<32x256xf32, #tpu.memory_space<vmem>>, vector<1x256xf32>,
    %c12 = arith.constant 12 : index
    %c0_67 = arith.constant 0 : index
    %c0_68 = arith.constant 0 : index
    %111 = vector.load %arg1[%c12, %c0_67, %c0_68] : memref<32x32x256xbf16, #tpu.memory_space<vmem>>, vector<1x32x256xbf16>
    %112 = vector.shape_cast %111 : vector<1x32x256xbf16> to vector<32x256xbf16>
    %113 = arith.extf %112 : vector<32x256xbf16> to vector<32x256xf32>
    %114 = vector.broadcast %9 : vector<32x1xf32> to vector<32x256xf32>
    %115 = arith.mulf %113, %114 : vector<32x256xf32>
    %cst_69 = arith.constant dense<0.000000e+00> : vector<256xf32>
    %116 = vector.multi_reduction <add>, %115, %cst_69 [0] : vector<32x256xf32> to vector<256xf32>
    %117 = vector.shape_cast %116 : vector<256xf32> to vector<1x256xf32>
    %c12_70 = arith.constant 12 : index
    %c0_71 = arith.constant 0 : index
    %118 = vector.load %arg7[%c12_70, %c0_71] : memref<32x256xf32, #tpu.memory_space<vmem>>, vector<1x256xf32>
    tpu.vector_store %arg7[%c12_70, %c0_71], %117 {strides = array<i32>} : memref<32x256xf32, #tpu.memory_space<vmem>>, vector<1x256xf32>,
    %c13 = arith.constant 13 : index
    %c0_72 = arith.constant 0 : index
    %c0_73 = arith.constant 0 : index
    %119 = vector.load %arg1[%c13, %c0_72, %c0_73] : memref<32x32x256xbf16, #tpu.memory_space<vmem>>, vector<1x32x256xbf16>
    %120 = vector.shape_cast %119 : vector<1x32x256xbf16> to vector<32x256xbf16>
    %121 = arith.extf %120 : vector<32x256xbf16> to vector<32x256xf32>
    %122 = vector.broadcast %9 : vector<32x1xf32> to vector<32x256xf32>
    %123 = arith.mulf %121, %122 : vector<32x256xf32>
    %cst_74 = arith.constant dense<0.000000e+00> : vector<256xf32>
    %124 = vector.multi_reduction <add>, %123, %cst_74 [0] : vector<32x256xf32> to vector<256xf32>
    %125 = vector.shape_cast %124 : vector<256xf32> to vector<1x256xf32>
    %c13_75 = arith.constant 13 : index
    %c0_76 = arith.constant 0 : index
    %126 = vector.load %arg7[%c13_75, %c0_76] : memref<32x256xf32, #tpu.memory_space<vmem>>, vector<1x256xf32>
    tpu.vector_store %arg7[%c13_75, %c0_76], %125 {strides = array<i32>} : memref<32x256xf32, #tpu.memory_space<vmem>>, vector<1x256xf32>,
    %c14 = arith.constant 14 : index
    %c0_77 = arith.constant 0 : index
    %c0_78 = arith.constant 0 : index
    %127 = vector.load %arg1[%c14, %c0_77, %c0_78] : memref<32x32x256xbf16, #tpu.memory_space<vmem>>, vector<1x32x256xbf16>
    %128 = vector.shape_cast %127 : vector<1x32x256xbf16> to vector<32x256xbf16>
    %129 = arith.extf %128 : vector<32x256xbf16> to vector<32x256xf32>
    %130 = vector.broadcast %9 : vector<32x1xf32> to vector<32x256xf32>
    %131 = arith.mulf %129, %130 : vector<32x256xf32>
    %cst_79 = arith.constant dense<0.000000e+00> : vector<256xf32>
    %132 = vector.multi_reduction <add>, %131, %cst_79 [0] : vector<32x256xf32> to vector<256xf32>
    %133 = vector.shape_cast %132 : vector<256xf32> to vector<1x256xf32>
    %c14_80 = arith.constant 14 : index
    %c0_81 = arith.constant 0 : index
    %134 = vector.load %arg7[%c14_80, %c0_81] : memref<32x256xf32, #tpu.memory_space<vmem>>, vector<1x256xf32>
    tpu.vector_store %arg7[%c14_80, %c0_81], %133 {strides = array<i32>} : memref<32x256xf32, #tpu.memory_space<vmem>>, vector<1x256xf32>,
    %c15 = arith.constant 15 : index
    %c0_82 = arith.constant 0 : index
    %c0_83 = arith.constant 0 : index
    %135 = vector.load %arg1[%c15, %c0_82, %c0_83] : memref<32x32x256xbf16, #tpu.memory_space<vmem>>, vector<1x32x256xbf16>
    %136 = vector.shape_cast %135 : vector<1x32x256xbf16> to vector<32x256xbf16>
    %137 = arith.extf %136 : vector<32x256xbf16> to vector<32x256xf32>
    %138 = vector.broadcast %9 : vector<32x1xf32> to vector<32x256xf32>
    %139 = arith.mulf %137, %138 : vector<32x256xf32>
    %cst_84 = arith.constant dense<0.000000e+00> : vector<256xf32>
    %140 = vector.multi_reduction <add>, %139, %cst_84 [0] : vector<32x256xf32> to vector<256xf32>
    %141 = vector.shape_cast %140 : vector<256xf32> to vector<1x256xf32>
    %c15_85 = arith.constant 15 : index
    %c0_86 = arith.constant 0 : index
    %142 = vector.load %arg7[%c15_85, %c0_86] : memref<32x256xf32, #tpu.memory_space<vmem>>, vector<1x256xf32>
    tpu.vector_store %arg7[%c15_85, %c0_86], %141 {strides = array<i32>} : memref<32x256xf32, #tpu.memory_space<vmem>>, vector<1x256xf32>,
    %c16 = arith.constant 16 : index
    %c0_87 = arith.constant 0 : index
    %c0_88 = arith.constant 0 : index
    %143 = vector.load %arg1[%c16, %c0_87, %c0_88] : memref<32x32x256xbf16, #tpu.memory_space<vmem>>, vector<1x32x256xbf16>
    %144 = vector.shape_cast %143 : vector<1x32x256xbf16> to vector<32x256xbf16>
    %145 = arith.extf %144 : vector<32x256xbf16> to vector<32x256xf32>
    %146 = vector.broadcast %9 : vector<32x1xf32> to vector<32x256xf32>
    %147 = arith.mulf %145, %146 : vector<32x256xf32>
    %cst_89 = arith.constant dense<0.000000e+00> : vector<256xf32>
    %148 = vector.multi_reduction <add>, %147, %cst_89 [0] : vector<32x256xf32> to vector<256xf32>
    %149 = vector.shape_cast %148 : vector<256xf32> to vector<1x256xf32>
    %c16_90 = arith.constant 16 : index
    %c0_91 = arith.constant 0 : index
    %150 = vector.load %arg7[%c16_90, %c0_91] : memref<32x256xf32, #tpu.memory_space<vmem>>, vector<1x256xf32>
    tpu.vector_store %arg7[%c16_90, %c0_91], %149 {strides = array<i32>} : memref<32x256xf32, #tpu.memory_space<vmem>>, vector<1x256xf32>,
    %c17 = arith.constant 17 : index
    %c0_92 = arith.constant 0 : index
    %c0_93 = arith.constant 0 : index
    %151 = vector.load %arg1[%c17, %c0_92, %c0_93] : memref<32x32x256xbf16, #tpu.memory_space<vmem>>, vector<1x32x256xbf16>
    %152 = vector.shape_cast %151 : vector<1x32x256xbf16> to vector<32x256xbf16>
    %153 = arith.extf %152 : vector<32x256xbf16> to vector<32x256xf32>
    %154 = vector.broadcast %9 : vector<32x1xf32> to vector<32x256xf32>
    %155 = arith.mulf %153, %154 : vector<32x256xf32>
    %cst_94 = arith.constant dense<0.000000e+00> : vector<256xf32>
    %156 = vector.multi_reduction <add>, %155, %cst_94 [0] : vector<32x256xf32> to vector<256xf32>
    %157 = vector.shape_cast %156 : vector<256xf32> to vector<1x256xf32>
    %c17_95 = arith.constant 17 : index
    %c0_96 = arith.constant 0 : index
    %158 = vector.load %arg7[%c17_95, %c0_96] : memref<32x256xf32, #tpu.memory_space<vmem>>, vector<1x256xf32>
    tpu.vector_store %arg7[%c17_95, %c0_96], %157 {strides = array<i32>} : memref<32x256xf32, #tpu.memory_space<vmem>>, vector<1x256xf32>,
    %c18 = arith.constant 18 : index
    %c0_97 = arith.constant 0 : index
    %c0_98 = arith.constant 0 : index
    %159 = vector.load %arg1[%c18, %c0_97, %c0_98] : memref<32x32x256xbf16, #tpu.memory_space<vmem>>, vector<1x32x256xbf16>
    %160 = vector.shape_cast %159 : vector<1x32x256xbf16> to vector<32x256xbf16>
    %161 = arith.extf %160 : vector<32x256xbf16> to vector<32x256xf32>
    %162 = vector.broadcast %9 : vector<32x1xf32> to vector<32x256xf32>
    %163 = arith.mulf %161, %162 : vector<32x256xf32>
    %cst_99 = arith.constant dense<0.000000e+00> : vector<256xf32>
    %164 = vector.multi_reduction <add>, %163, %cst_99 [0] : vector<32x256xf32> to vector<256xf32>
    %165 = vector.shape_cast %164 : vector<256xf32> to vector<1x256xf32>
    %c18_100 = arith.constant 18 : index
    %c0_101 = arith.constant 0 : index
    %166 = vector.load %arg7[%c18_100, %c0_101] : memref<32x256xf32, #tpu.memory_space<vmem>>, vector<1x256xf32>
    tpu.vector_store %arg7[%c18_100, %c0_101], %165 {strides = array<i32>} : memref<32x256xf32, #tpu.memory_space<vmem>>, vector<1x256xf32>,
    %c19 = arith.constant 19 : index
    %c0_102 = arith.constant 0 : index
    %c0_103 = arith.constant 0 : index
    %167 = vector.load %arg1[%c19, %c0_102, %c0_103] : memref<32x32x256xbf16, #tpu.memory_space<vmem>>, vector<1x32x256xbf16>
    %168 = vector.shape_cast %167 : vector<1x32x256xbf16> to vector<32x256xbf16>
    %169 = arith.extf %168 : vector<32x256xbf16> to vector<32x256xf32>
    %170 = vector.broadcast %9 : vector<32x1xf32> to vector<32x256xf32>
    %171 = arith.mulf %169, %170 : vector<32x256xf32>
    %cst_104 = arith.constant dense<0.000000e+00> : vector<256xf32>
    %172 = vector.multi_reduction <add>, %171, %cst_104 [0] : vector<32x256xf32> to vector<256xf32>
    %173 = vector.shape_cast %172 : vector<256xf32> to vector<1x256xf32>
    %c19_105 = arith.constant 19 : index
    %c0_106 = arith.constant 0 : index
    %174 = vector.load %arg7[%c19_105, %c0_106] : memref<32x256xf32, #tpu.memory_space<vmem>>, vector<1x256xf32>
    tpu.vector_store %arg7[%c19_105, %c0_106], %173 {strides = array<i32>} : memref<32x256xf32, #tpu.memory_space<vmem>>, vector<1x256xf32>,
    %c20 = arith.constant 20 : index
    %c0_107 = arith.constant 0 : index
    %c0_108 = arith.constant 0 : index
    %175 = vector.load %arg1[%c20, %c0_107, %c0_108] : memref<32x32x256xbf16, #tpu.memory_space<vmem>>, vector<1x32x256xbf16>
    %176 = vector.shape_cast %175 : vector<1x32x256xbf16> to vector<32x256xbf16>
    %177 = arith.extf %176 : vector<32x256xbf16> to vector<32x256xf32>
    %178 = vector.broadcast %9 : vector<32x1xf32> to vector<32x256xf32>
    %179 = arith.mulf %177, %178 : vector<32x256xf32>
    %cst_109 = arith.constant dense<0.000000e+00> : vector<256xf32>
    %180 = vector.multi_reduction <add>, %179, %cst_109 [0] : vector<32x256xf32> to vector<256xf32>
    %181 = vector.shape_cast %180 : vector<256xf32> to vector<1x256xf32>
    %c20_110 = arith.constant 20 : index
    %c0_111 = arith.constant 0 : index
    %182 = vector.load %arg7[%c20_110, %c0_111] : memref<32x256xf32, #tpu.memory_space<vmem>>, vector<1x256xf32>
    tpu.vector_store %arg7[%c20_110, %c0_111], %181 {strides = array<i32>} : memref<32x256xf32, #tpu.memory_space<vmem>>, vector<1x256xf32>,
    %c21 = arith.constant 21 : index
    %c0_112 = arith.constant 0 : index
    %c0_113 = arith.constant 0 : index
    %183 = vector.load %arg1[%c21, %c0_112, %c0_113] : memref<32x32x256xbf16, #tpu.memory_space<vmem>>, vector<1x32x256xbf16>
    %184 = vector.shape_cast %183 : vector<1x32x256xbf16> to vector<32x256xbf16>
    %185 = arith.extf %184 : vector<32x256xbf16> to vector<32x256xf32>
    %186 = vector.broadcast %9 : vector<32x1xf32> to vector<32x256xf32>
    %187 = arith.mulf %185, %186 : vector<32x256xf32>
    %cst_114 = arith.constant dense<0.000000e+00> : vector<256xf32>
    %188 = vector.multi_reduction <add>, %187, %cst_114 [0] : vector<32x256xf32> to vector<256xf32>
    %189 = vector.shape_cast %188 : vector<256xf32> to vector<1x256xf32>
    %c21_115 = arith.constant 21 : index
    %c0_116 = arith.constant 0 : index
    %190 = vector.load %arg7[%c21_115, %c0_116] : memref<32x256xf32, #tpu.memory_space<vmem>>, vector<1x256xf32>
    tpu.vector_store %arg7[%c21_115, %c0_116], %189 {strides = array<i32>} : memref<32x256xf32, #tpu.memory_space<vmem>>, vector<1x256xf32>,
    %c22 = arith.constant 22 : index
    %c0_117 = arith.constant 0 : index
    %c0_118 = arith.constant 0 : index
    %191 = vector.load %arg1[%c22, %c0_117, %c0_118] : memref<32x32x256xbf16, #tpu.memory_space<vmem>>, vector<1x32x256xbf16>
    %192 = vector.shape_cast %191 : vector<1x32x256xbf16> to vector<32x256xbf16>
    %193 = arith.extf %192 : vector<32x256xbf16> to vector<32x256xf32>
    %194 = vector.broadcast %9 : vector<32x1xf32> to vector<32x256xf32>
    %195 = arith.mulf %193, %194 : vector<32x256xf32>
    %cst_119 = arith.constant dense<0.000000e+00> : vector<256xf32>
    %196 = vector.multi_reduction <add>, %195, %cst_119 [0] : vector<32x256xf32> to vector<256xf32>
    %197 = vector.shape_cast %196 : vector<256xf32> to vector<1x256xf32>
    %c22_120 = arith.constant 22 : index
    %c0_121 = arith.constant 0 : index
    %198 = vector.load %arg7[%c22_120, %c0_121] : memref<32x256xf32, #tpu.memory_space<vmem>>, vector<1x256xf32>
    tpu.vector_store %arg7[%c22_120, %c0_121], %197 {strides = array<i32>} : memref<32x256xf32, #tpu.memory_space<vmem>>, vector<1x256xf32>,
    %c23 = arith.constant 23 : index
    %c0_122 = arith.constant 0 : index
    %c0_123 = arith.constant 0 : index
    %199 = vector.load %arg1[%c23, %c0_122, %c0_123] : memref<32x32x256xbf16, #tpu.memory_space<vmem>>, vector<1x32x256xbf16>
    %200 = vector.shape_cast %199 : vector<1x32x256xbf16> to vector<32x256xbf16>
    %201 = arith.extf %200 : vector<32x256xbf16> to vector<32x256xf32>
    %202 = vector.broadcast %9 : vector<32x1xf32> to vector<32x256xf32>
    %203 = arith.mulf %201, %202 : vector<32x256xf32>
    %cst_124 = arith.constant dense<0.000000e+00> : vector<256xf32>
    %204 = vector.multi_reduction <add>, %203, %cst_124 [0] : vector<32x256xf32> to vector<256xf32>
    %205 = vector.shape_cast %204 : vector<256xf32> to vector<1x256xf32>
    %c23_125 = arith.constant 23 : index
    %c0_126 = arith.constant 0 : index
    %206 = vector.load %arg7[%c23_125, %c0_126] : memref<32x256xf32, #tpu.memory_space<vmem>>, vector<1x256xf32>
    tpu.vector_store %arg7[%c23_125, %c0_126], %205 {strides = array<i32>} : memref<32x256xf32, #tpu.memory_space<vmem>>, vector<1x256xf32>,
    %c24 = arith.constant 24 : index
    %c0_127 = arith.constant 0 : index
    %c0_128 = arith.constant 0 : index
    %207 = vector.load %arg1[%c24, %c0_127, %c0_128] : memref<32x32x256xbf16, #tpu.memory_space<vmem>>, vector<1x32x256xbf16>
    %208 = vector.shape_cast %207 : vector<1x32x256xbf16> to vector<32x256xbf16>
    %209 = arith.extf %208 : vector<32x256xbf16> to vector<32x256xf32>
    %210 = vector.broadcast %9 : vector<32x1xf32> to vector<32x256xf32>
    %211 = arith.mulf %209, %210 : vector<32x256xf32>
    %cst_129 = arith.constant dense<0.000000e+00> : vector<256xf32>
    %212 = vector.multi_reduction <add>, %211, %cst_129 [0] : vector<32x256xf32> to vector<256xf32>
    %213 = vector.shape_cast %212 : vector<256xf32> to vector<1x256xf32>
    %c24_130 = arith.constant 24 : index
    %c0_131 = arith.constant 0 : index
    %214 = vector.load %arg7[%c24_130, %c0_131] : memref<32x256xf32, #tpu.memory_space<vmem>>, vector<1x256xf32>
    tpu.vector_store %arg7[%c24_130, %c0_131], %213 {strides = array<i32>} : memref<32x256xf32, #tpu.memory_space<vmem>>, vector<1x256xf32>,
    %c25 = arith.constant 25 : index
    %c0_132 = arith.constant 0 : index
    %c0_133 = arith.constant 0 : index
    %215 = vector.load %arg1[%c25, %c0_132, %c0_133] : memref<32x32x256xbf16, #tpu.memory_space<vmem>>, vector<1x32x256xbf16>
    %216 = vector.shape_cast %215 : vector<1x32x256xbf16> to vector<32x256xbf16>
    %217 = arith.extf %216 : vector<32x256xbf16> to vector<32x256xf32>
    %218 = vector.broadcast %9 : vector<32x1xf32> to vector<32x256xf32>
    %219 = arith.mulf %217, %218 : vector<32x256xf32>
    %cst_134 = arith.constant dense<0.000000e+00> : vector<256xf32>
    %220 = vector.multi_reduction <add>, %219, %cst_134 [0] : vector<32x256xf32> to vector<256xf32>
    %221 = vector.shape_cast %220 : vector<256xf32> to vector<1x256xf32>
    %c25_135 = arith.constant 25 : index
    %c0_136 = arith.constant 0 : index
    %222 = vector.load %arg7[%c25_135, %c0_136] : memref<32x256xf32, #tpu.memory_space<vmem>>, vector<1x256xf32>
    tpu.vector_store %arg7[%c25_135, %c0_136], %221 {strides = array<i32>} : memref<32x256xf32, #tpu.memory_space<vmem>>, vector<1x256xf32>,
    %c26 = arith.constant 26 : index
    %c0_137 = arith.constant 0 : index
    %c0_138 = arith.constant 0 : index
    %223 = vector.load %arg1[%c26, %c0_137, %c0_138] : memref<32x32x256xbf16, #tpu.memory_space<vmem>>, vector<1x32x256xbf16>
    %224 = vector.shape_cast %223 : vector<1x32x256xbf16> to vector<32x256xbf16>
    %225 = arith.extf %224 : vector<32x256xbf16> to vector<32x256xf32>
    %226 = vector.broadcast %9 : vector<32x1xf32> to vector<32x256xf32>
    %227 = arith.mulf %225, %226 : vector<32x256xf32>
    %cst_139 = arith.constant dense<0.000000e+00> : vector<256xf32>
    %228 = vector.multi_reduction <add>, %227, %cst_139 [0] : vector<32x256xf32> to vector<256xf32>
    %229 = vector.shape_cast %228 : vector<256xf32> to vector<1x256xf32>
    %c26_140 = arith.constant 26 : index
    %c0_141 = arith.constant 0 : index
    %230 = vector.load %arg7[%c26_140, %c0_141] : memref<32x256xf32, #tpu.memory_space<vmem>>, vector<1x256xf32>
    tpu.vector_store %arg7[%c26_140, %c0_141], %229 {strides = array<i32>} : memref<32x256xf32, #tpu.memory_space<vmem>>, vector<1x256xf32>,
    %c27 = arith.constant 27 : index
    %c0_142 = arith.constant 0 : index
    %c0_143 = arith.constant 0 : index
    %231 = vector.load %arg1[%c27, %c0_142, %c0_143] : memref<32x32x256xbf16, #tpu.memory_space<vmem>>, vector<1x32x256xbf16>
    %232 = vector.shape_cast %231 : vector<1x32x256xbf16> to vector<32x256xbf16>
    %233 = arith.extf %232 : vector<32x256xbf16> to vector<32x256xf32>
    %234 = vector.broadcast %9 : vector<32x1xf32> to vector<32x256xf32>
    %235 = arith.mulf %233, %234 : vector<32x256xf32>
    %cst_144 = arith.constant dense<0.000000e+00> : vector<256xf32>
    %236 = vector.multi_reduction <add>, %235, %cst_144 [0] : vector<32x256xf32> to vector<256xf32>
    %237 = vector.shape_cast %236 : vector<256xf32> to vector<1x256xf32>
    %c27_145 = arith.constant 27 : index
    %c0_146 = arith.constant 0 : index
    %238 = vector.load %arg7[%c27_145, %c0_146] : memref<32x256xf32, #tpu.memory_space<vmem>>, vector<1x256xf32>
    tpu.vector_store %arg7[%c27_145, %c0_146], %237 {strides = array<i32>} : memref<32x256xf32, #tpu.memory_space<vmem>>, vector<1x256xf32>,
    %c28 = arith.constant 28 : index
    %c0_147 = arith.constant 0 : index
    %c0_148 = arith.constant 0 : index
    %239 = vector.load %arg1[%c28, %c0_147, %c0_148] : memref<32x32x256xbf16, #tpu.memory_space<vmem>>, vector<1x32x256xbf16>
    %240 = vector.shape_cast %239 : vector<1x32x256xbf16> to vector<32x256xbf16>
    %241 = arith.extf %240 : vector<32x256xbf16> to vector<32x256xf32>
    %242 = vector.broadcast %9 : vector<32x1xf32> to vector<32x256xf32>
    %243 = arith.mulf %241, %242 : vector<32x256xf32>
    %cst_149 = arith.constant dense<0.000000e+00> : vector<256xf32>
    %244 = vector.multi_reduction <add>, %243, %cst_149 [0] : vector<32x256xf32> to vector<256xf32>
    %245 = vector.shape_cast %244 : vector<256xf32> to vector<1x256xf32>
    %c28_150 = arith.constant 28 : index
    %c0_151 = arith.constant 0 : index
    %246 = vector.load %arg7[%c28_150, %c0_151] : memref<32x256xf32, #tpu.memory_space<vmem>>, vector<1x256xf32>
    tpu.vector_store %arg7[%c28_150, %c0_151], %245 {strides = array<i32>} : memref<32x256xf32, #tpu.memory_space<vmem>>, vector<1x256xf32>,
    %c29 = arith.constant 29 : index
    %c0_152 = arith.constant 0 : index
    %c0_153 = arith.constant 0 : index
    %247 = vector.load %arg1[%c29, %c0_152, %c0_153] : memref<32x32x256xbf16, #tpu.memory_space<vmem>>, vector<1x32x256xbf16>
    %248 = vector.shape_cast %247 : vector<1x32x256xbf16> to vector<32x256xbf16>
    %249 = arith.extf %248 : vector<32x256xbf16> to vector<32x256xf32>
    %250 = vector.broadcast %9 : vector<32x1xf32> to vector<32x256xf32>
    %251 = arith.mulf %249, %250 : vector<32x256xf32>
    %cst_154 = arith.constant dense<0.000000e+00> : vector<256xf32>
    %252 = vector.multi_reduction <add>, %251, %cst_154 [0] : vector<32x256xf32> to vector<256xf32>
    %253 = vector.shape_cast %252 : vector<256xf32> to vector<1x256xf32>
    %c29_155 = arith.constant 29 : index
    %c0_156 = arith.constant 0 : index
    %254 = vector.load %arg7[%c29_155, %c0_156] : memref<32x256xf32, #tpu.memory_space<vmem>>, vector<1x256xf32>
    tpu.vector_store %arg7[%c29_155, %c0_156], %253 {strides = array<i32>} : memref<32x256xf32, #tpu.memory_space<vmem>>, vector<1x256xf32>,
    %c30 = arith.constant 30 : index
    %c0_157 = arith.constant 0 : index
    %c0_158 = arith.constant 0 : index
    %255 = vector.load %arg1[%c30, %c0_157, %c0_158] : memref<32x32x256xbf16, #tpu.memory_space<vmem>>, vector<1x32x256xbf16>
    %256 = vector.shape_cast %255 : vector<1x32x256xbf16> to vector<32x256xbf16>
    %257 = arith.extf %256 : vector<32x256xbf16> to vector<32x256xf32>
    %258 = vector.broadcast %9 : vector<32x1xf32> to vector<32x256xf32>
    %259 = arith.mulf %257, %258 : vector<32x256xf32>
    %cst_159 = arith.constant dense<0.000000e+00> : vector<256xf32>
    %260 = vector.multi_reduction <add>, %259, %cst_159 [0] : vector<32x256xf32> to vector<256xf32>
    %261 = vector.shape_cast %260 : vector<256xf32> to vector<1x256xf32>
    %c30_160 = arith.constant 30 : index
    %c0_161 = arith.constant 0 : index
    %262 = vector.load %arg7[%c30_160, %c0_161] : memref<32x256xf32, #tpu.memory_space<vmem>>, vector<1x256xf32>
    tpu.vector_store %arg7[%c30_160, %c0_161], %261 {strides = array<i32>} : memref<32x256xf32, #tpu.memory_space<vmem>>, vector<1x256xf32>,
    %c31 = arith.constant 31 : index
    %c0_162 = arith.constant 0 : index
    %c0_163 = arith.constant 0 : index
    %263 = vector.load %arg1[%c31, %c0_162, %c0_163] : memref<32x32x256xbf16, #tpu.memory_space<vmem>>, vector<1x32x256xbf16>
    %264 = vector.shape_cast %263 : vector<1x32x256xbf16> to vector<32x256xbf16>
    %265 = arith.extf %264 : vector<32x256xbf16> to vector<32x256xf32>
    %266 = vector.broadcast %9 : vector<32x1xf32> to vector<32x256xf32>
    %267 = arith.mulf %265, %266 : vector<32x256xf32>
    %cst_164 = arith.constant dense<0.000000e+00> : vector<256xf32>
    %268 = vector.multi_reduction <add>, %267, %cst_164 [0] : vector<32x256xf32> to vector<256xf32>
    %269 = vector.shape_cast %268 : vector<256xf32> to vector<1x256xf32>
    %c31_165 = arith.constant 31 : index
    %c0_166 = arith.constant 0 : index
    %270 = vector.load %arg7[%c31_165, %c0_166] : memref<32x256xf32, #tpu.memory_space<vmem>>, vector<1x256xf32>
    tpu.vector_store %arg7[%c31_165, %c0_166], %269 {strides = array<i32>} : memref<32x256xf32, #tpu.memory_space<vmem>>, vector<1x256xf32>,
    %c0_167 = arith.constant 0 : index
    %c0_168 = arith.constant 0 : index
    %271 = vector.load %arg7[%c0_167, %c0_168] : memref<32x256xf32, #tpu.memory_space<vmem>>, vector<32x256xf32>
    %272 = vector.broadcast %14 : vector<1x1xf32> to vector<32x256xf32>
    %273 = arith.addf %271, %272 : vector<32x256xf32>
    %cst_169 = arith.constant dense<0.000000e+00> : vector<32x128xf32>
    %274 = tpu.matmul %271, %1, %cst_169 {dimension_numbers = #tpu.dot_dimension_numbers<[1], [0], [0], [1], [0, 0, 1, 1], [], []>} : vector<32x256xf32>, vector<256x128xf32>, vector<32x128xf32> -> vector<32x128xf32>
    %275 = vector.broadcast %12 : vector<1x128xf32> to vector<32x128xf32>
    %276 = arith.mulf %274, %275 : vector<32x128xf32>
    %277 = vector.broadcast %13 : vector<1x128xf32> to vector<32x128xf32>
    %278 = arith.addf %276, %277 : vector<32x128xf32>
    %cst_170 = arith.constant dense<0xFF800000> : vector<32xf32>
    %279 = vector.multi_reduction <maximumf>, %273, %cst_170 [1] : vector<32x256xf32> to vector<32xf32>
    %280 = vector.shape_cast %279 : vector<32xf32> to vector<32x1xf32>
    %cst_171 = arith.constant dense<0xFF800000> : vector<32xf32>
    %281 = vector.multi_reduction <maximumf>, %278, %cst_171 [1] : vector<32x128xf32> to vector<32xf32>
    %282 = vector.shape_cast %281 : vector<32xf32> to vector<32x1xf32>
    %283 = arith.maximumf %280, %282 : vector<32x1xf32>
    %284 = vector.broadcast %283 : vector<32x1xf32> to vector<32x256xf32>
    %285 = arith.subf %273, %284 : vector<32x256xf32>
    %286 = math.exp %285 : vector<32x256xf32>
    %287 = vector.broadcast %283 : vector<32x1xf32> to vector<32x128xf32>
    %288 = arith.subf %278, %287 : vector<32x128xf32>
    %289 = math.exp %288 : vector<32x128xf32>
    %cst_172 = arith.constant dense<0.000000e+00> : vector<32xf32>
    %290 = vector.multi_reduction <add>, %286, %cst_172 [1] : vector<32x256xf32> to vector<32xf32>
    %291 = vector.shape_cast %290 : vector<32xf32> to vector<32x1xf32>
    %cst_173 = arith.constant dense<0.000000e+00> : vector<32xf32>
    %292 = vector.multi_reduction <add>, %289, %cst_173 [1] : vector<32x128xf32> to vector<32xf32>
    %293 = vector.shape_cast %292 : vector<32xf32> to vector<32x1xf32>
    %294 = arith.addf %291, %293 : vector<32x1xf32>
    %cst_174 = arith.constant 1.000000e+00 : f32
    %295 = vector.broadcast %cst_174 : f32 to vector<32x1xf32>
    %296 = arith.divf %295, %294 : vector<32x1xf32>
    %297 = vector.broadcast %296 : vector<32x1xf32> to vector<32x256xf32>
    %298 = arith.mulf %286, %297 : vector<32x256xf32>
    %299 = vector.broadcast %296 : vector<32x1xf32> to vector<32x128xf32>
    %300 = arith.mulf %289, %299 : vector<32x128xf32>
    %cst_175 = arith.constant dense<0.000000e+00> : vector<32x256xf32>
    %301 = tpu.matmul %300, %1, %cst_175 {dimension_numbers = #tpu.dot_dimension_numbers<[1], [1], [0], [0], [0, 0, 1, 0], [], []>} : vector<32x128xf32>, vector<256x128xf32>, vector<32x256xf32> -> vector<32x256xf32>
    %302 = arith.addf %298, %301 : vector<32x256xf32>
    %c0_176 = arith.constant 0 : index
    %c0_177 = arith.constant 0 : index
    %c0_178 = arith.constant 0 : index
    %303 = vector.load %arg1[%c0_176, %c0_177, %c0_178] : memref<32x32x256xbf16, #tpu.memory_space<vmem>>, vector<1x32x256xbf16>
    %304 = vector.shape_cast %303 : vector<1x32x256xbf16> to vector<32x256xbf16>
    %305 = arith.extf %304 : vector<32x256xbf16> to vector<32x256xf32>
    %306 = vector.extract_strided_slice %302 {offsets = [0, 0], sizes = [1, 256], strides = [1, 1]} : vector<32x256xf32> to vector<1x256xf32>
    %307 = vector.broadcast %306 : vector<1x256xf32> to vector<32x256xf32>
    %308 = arith.mulf %305, %307 : vector<32x256xf32>
    %cst_179 = arith.constant dense<0.000000e+00> : vector<32xf32>
    %309 = vector.multi_reduction <add>, %308, %cst_179 [1] : vector<32x256xf32> to vector<32xf32>
    %310 = vector.shape_cast %309 : vector<32xf32> to vector<32x1xf32>
    %c0_180 = arith.constant 0 : index
    %c0_181 = arith.constant 0 : index
    %311 = vector.load %arg8[%c0_180, %c0_181] : memref<32x32xf32, #tpu.memory_space<vmem>>, vector<32x1xf32>
    tpu.vector_store %arg8[%c0_180, %c0_181], %310 {strides = array<i32>} : memref<32x32xf32, #tpu.memory_space<vmem>>, vector<32x1xf32>,
    %c1_182 = arith.constant 1 : index
    %c0_183 = arith.constant 0 : index
    %c0_184 = arith.constant 0 : index
    %312 = vector.load %arg1[%c1_182, %c0_183, %c0_184] : memref<32x32x256xbf16, #tpu.memory_space<vmem>>, vector<1x32x256xbf16>
    %313 = vector.shape_cast %312 : vector<1x32x256xbf16> to vector<32x256xbf16>
    %314 = arith.extf %313 : vector<32x256xbf16> to vector<32x256xf32>
    %315 = vector.extract_strided_slice %302 {offsets = [1, 0], sizes = [1, 256], strides = [1, 1]} : vector<32x256xf32> to vector<1x256xf32>
    %316 = vector.broadcast %315 : vector<1x256xf32> to vector<32x256xf32>
    %317 = arith.mulf %314, %316 : vector<32x256xf32>
    %cst_185 = arith.constant dense<0.000000e+00> : vector<32xf32>
    %318 = vector.multi_reduction <add>, %317, %cst_185 [1] : vector<32x256xf32> to vector<32xf32>
    %319 = vector.shape_cast %318 : vector<32xf32> to vector<32x1xf32>
    %c0_186 = arith.constant 0 : index
    %c1_187 = arith.constant 1 : index
    %320 = vector.load %arg8[%c0_186, %c1_187] : memref<32x32xf32, #tpu.memory_space<vmem>>, vector<32x1xf32>
    tpu.vector_store %arg8[%c0_186, %c1_187], %319 {strides = array<i32>} : memref<32x32xf32, #tpu.memory_space<vmem>>, vector<32x1xf32>,
    %c2_188 = arith.constant 2 : index
    %c0_189 = arith.constant 0 : index
    %c0_190 = arith.constant 0 : index
    %321 = vector.load %arg1[%c2_188, %c0_189, %c0_190] : memref<32x32x256xbf16, #tpu.memory_space<vmem>>, vector<1x32x256xbf16>
    %322 = vector.shape_cast %321 : vector<1x32x256xbf16> to vector<32x256xbf16>
    %323 = arith.extf %322 : vector<32x256xbf16> to vector<32x256xf32>
    %324 = vector.extract_strided_slice %302 {offsets = [2, 0], sizes = [1, 256], strides = [1, 1]} : vector<32x256xf32> to vector<1x256xf32>
    %325 = vector.broadcast %324 : vector<1x256xf32> to vector<32x256xf32>
    %326 = arith.mulf %323, %325 : vector<32x256xf32>
    %cst_191 = arith.constant dense<0.000000e+00> : vector<32xf32>
    %327 = vector.multi_reduction <add>, %326, %cst_191 [1] : vector<32x256xf32> to vector<32xf32>
    %328 = vector.shape_cast %327 : vector<32xf32> to vector<32x1xf32>
    %c0_192 = arith.constant 0 : index
    %c2_193 = arith.constant 2 : index
    %329 = vector.load %arg8[%c0_192, %c2_193] : memref<32x32xf32, #tpu.memory_space<vmem>>, vector<32x1xf32>
    tpu.vector_store %arg8[%c0_192, %c2_193], %328 {strides = array<i32>} : memref<32x32xf32, #tpu.memory_space<vmem>>, vector<32x1xf32>,
    %c3_194 = arith.constant 3 : index
    %c0_195 = arith.constant 0 : index
    %c0_196 = arith.constant 0 : index
    %330 = vector.load %arg1[%c3_194, %c0_195, %c0_196] : memref<32x32x256xbf16, #tpu.memory_space<vmem>>, vector<1x32x256xbf16>
    %331 = vector.shape_cast %330 : vector<1x32x256xbf16> to vector<32x256xbf16>
    %332 = arith.extf %331 : vector<32x256xbf16> to vector<32x256xf32>
    %333 = vector.extract_strided_slice %302 {offsets = [3, 0], sizes = [1, 256], strides = [1, 1]} : vector<32x256xf32> to vector<1x256xf32>
    %334 = vector.broadcast %333 : vector<1x256xf32> to vector<32x256xf32>
    %335 = arith.mulf %332, %334 : vector<32x256xf32>
    %cst_197 = arith.constant dense<0.000000e+00> : vector<32xf32>
    %336 = vector.multi_reduction <add>, %335, %cst_197 [1] : vector<32x256xf32> to vector<32xf32>
    %337 = vector.shape_cast %336 : vector<32xf32> to vector<32x1xf32>
    %c0_198 = arith.constant 0 : index
    %c3_199 = arith.constant 3 : index
    %338 = vector.load %arg8[%c0_198, %c3_199] : memref<32x32xf32, #tpu.memory_space<vmem>>, vector<32x1xf32>
    tpu.vector_store %arg8[%c0_198, %c3_199], %337 {strides = array<i32>} : memref<32x32xf32, #tpu.memory_space<vmem>>, vector<32x1xf32>,
    %c4_200 = arith.constant 4 : index
    %c0_201 = arith.constant 0 : index
    %c0_202 = arith.constant 0 : index
    %339 = vector.load %arg1[%c4_200, %c0_201, %c0_202] : memref<32x32x256xbf16, #tpu.memory_space<vmem>>, vector<1x32x256xbf16>
    %340 = vector.shape_cast %339 : vector<1x32x256xbf16> to vector<32x256xbf16>
    %341 = arith.extf %340 : vector<32x256xbf16> to vector<32x256xf32>
    %342 = vector.extract_strided_slice %302 {offsets = [4, 0], sizes = [1, 256], strides = [1, 1]} : vector<32x256xf32> to vector<1x256xf32>
    %343 = vector.broadcast %342 : vector<1x256xf32> to vector<32x256xf32>
    %344 = arith.mulf %341, %343 : vector<32x256xf32>
    %cst_203 = arith.constant dense<0.000000e+00> : vector<32xf32>
    %345 = vector.multi_reduction <add>, %344, %cst_203 [1] : vector<32x256xf32> to vector<32xf32>
    %346 = vector.shape_cast %345 : vector<32xf32> to vector<32x1xf32>
    %c0_204 = arith.constant 0 : index
    %c4_205 = arith.constant 4 : index
    %347 = vector.load %arg8[%c0_204, %c4_205] : memref<32x32xf32, #tpu.memory_space<vmem>>, vector<32x1xf32>
    tpu.vector_store %arg8[%c0_204, %c4_205], %346 {strides = array<i32>} : memref<32x32xf32, #tpu.memory_space<vmem>>, vector<32x1xf32>,
    %c5_206 = arith.constant 5 : index
    %c0_207 = arith.constant 0 : index
    %c0_208 = arith.constant 0 : index
    %348 = vector.load %arg1[%c5_206, %c0_207, %c0_208] : memref<32x32x256xbf16, #tpu.memory_space<vmem>>, vector<1x32x256xbf16>
    %349 = vector.shape_cast %348 : vector<1x32x256xbf16> to vector<32x256xbf16>
    %350 = arith.extf %349 : vector<32x256xbf16> to vector<32x256xf32>
    %351 = vector.extract_strided_slice %302 {offsets = [5, 0], sizes = [1, 256], strides = [1, 1]} : vector<32x256xf32> to vector<1x256xf32>
    %352 = vector.broadcast %351 : vector<1x256xf32> to vector<32x256xf32>
    %353 = arith.mulf %350, %352 : vector<32x256xf32>
    %cst_209 = arith.constant dense<0.000000e+00> : vector<32xf32>
    %354 = vector.multi_reduction <add>, %353, %cst_209 [1] : vector<32x256xf32> to vector<32xf32>
    %355 = vector.shape_cast %354 : vector<32xf32> to vector<32x1xf32>
    %c0_210 = arith.constant 0 : index
    %c5_211 = arith.constant 5 : index
    %356 = vector.load %arg8[%c0_210, %c5_211] : memref<32x32xf32, #tpu.memory_space<vmem>>, vector<32x1xf32>
    tpu.vector_store %arg8[%c0_210, %c5_211], %355 {strides = array<i32>} : memref<32x32xf32, #tpu.memory_space<vmem>>, vector<32x1xf32>,
    %c6_212 = arith.constant 6 : index
    %c0_213 = arith.constant 0 : index
    %c0_214 = arith.constant 0 : index
    %357 = vector.load %arg1[%c6_212, %c0_213, %c0_214] : memref<32x32x256xbf16, #tpu.memory_space<vmem>>, vector<1x32x256xbf16>
    %358 = vector.shape_cast %357 : vector<1x32x256xbf16> to vector<32x256xbf16>
    %359 = arith.extf %358 : vector<32x256xbf16> to vector<32x256xf32>
    %360 = vector.extract_strided_slice %302 {offsets = [6, 0], sizes = [1, 256], strides = [1, 1]} : vector<32x256xf32> to vector<1x256xf32>
    %361 = vector.broadcast %360 : vector<1x256xf32> to vector<32x256xf32>
    %362 = arith.mulf %359, %361 : vector<32x256xf32>
    %cst_215 = arith.constant dense<0.000000e+00> : vector<32xf32>
    %363 = vector.multi_reduction <add>, %362, %cst_215 [1] : vector<32x256xf32> to vector<32xf32>
    %364 = vector.shape_cast %363 : vector<32xf32> to vector<32x1xf32>
    %c0_216 = arith.constant 0 : index
    %c6_217 = arith.constant 6 : index
    %365 = vector.load %arg8[%c0_216, %c6_217] : memref<32x32xf32, #tpu.memory_space<vmem>>, vector<32x1xf32>
    tpu.vector_store %arg8[%c0_216, %c6_217], %364 {strides = array<i32>} : memref<32x32xf32, #tpu.memory_space<vmem>>, vector<32x1xf32>,
    %c7_218 = arith.constant 7 : index
    %c0_219 = arith.constant 0 : index
    %c0_220 = arith.constant 0 : index
    %366 = vector.load %arg1[%c7_218, %c0_219, %c0_220] : memref<32x32x256xbf16, #tpu.memory_space<vmem>>, vector<1x32x256xbf16>
    %367 = vector.shape_cast %366 : vector<1x32x256xbf16> to vector<32x256xbf16>
    %368 = arith.extf %367 : vector<32x256xbf16> to vector<32x256xf32>
    %369 = vector.extract_strided_slice %302 {offsets = [7, 0], sizes = [1, 256], strides = [1, 1]} : vector<32x256xf32> to vector<1x256xf32>
    %370 = vector.broadcast %369 : vector<1x256xf32> to vector<32x256xf32>
    %371 = arith.mulf %368, %370 : vector<32x256xf32>
    %cst_221 = arith.constant dense<0.000000e+00> : vector<32xf32>
    %372 = vector.multi_reduction <add>, %371, %cst_221 [1] : vector<32x256xf32> to vector<32xf32>
    %373 = vector.shape_cast %372 : vector<32xf32> to vector<32x1xf32>
    %c0_222 = arith.constant 0 : index
    %c7_223 = arith.constant 7 : index
    %374 = vector.load %arg8[%c0_222, %c7_223] : memref<32x32xf32, #tpu.memory_space<vmem>>, vector<32x1xf32>
    tpu.vector_store %arg8[%c0_222, %c7_223], %373 {strides = array<i32>} : memref<32x32xf32, #tpu.memory_space<vmem>>, vector<32x1xf32>,
    %c8_224 = arith.constant 8 : index
    %c0_225 = arith.constant 0 : index
    %c0_226 = arith.constant 0 : index
    %375 = vector.load %arg1[%c8_224, %c0_225, %c0_226] : memref<32x32x256xbf16, #tpu.memory_space<vmem>>, vector<1x32x256xbf16>
    %376 = vector.shape_cast %375 : vector<1x32x256xbf16> to vector<32x256xbf16>
    %377 = arith.extf %376 : vector<32x256xbf16> to vector<32x256xf32>
    %378 = vector.extract_strided_slice %302 {offsets = [8, 0], sizes = [1, 256], strides = [1, 1]} : vector<32x256xf32> to vector<1x256xf32>
    %379 = vector.broadcast %378 : vector<1x256xf32> to vector<32x256xf32>
    %380 = arith.mulf %377, %379 : vector<32x256xf32>
    %cst_227 = arith.constant dense<0.000000e+00> : vector<32xf32>
    %381 = vector.multi_reduction <add>, %380, %cst_227 [1] : vector<32x256xf32> to vector<32xf32>
    %382 = vector.shape_cast %381 : vector<32xf32> to vector<32x1xf32>
    %c0_228 = arith.constant 0 : index
    %c8_229 = arith.constant 8 : index
    %383 = vector.load %arg8[%c0_228, %c8_229] : memref<32x32xf32, #tpu.memory_space<vmem>>, vector<32x1xf32>
    tpu.vector_store %arg8[%c0_228, %c8_229], %382 {strides = array<i32>} : memref<32x32xf32, #tpu.memory_space<vmem>>, vector<32x1xf32>,
    %c9_230 = arith.constant 9 : index
    %c0_231 = arith.constant 0 : index
    %c0_232 = arith.constant 0 : index
    %384 = vector.load %arg1[%c9_230, %c0_231, %c0_232] : memref<32x32x256xbf16, #tpu.memory_space<vmem>>, vector<1x32x256xbf16>
    %385 = vector.shape_cast %384 : vector<1x32x256xbf16> to vector<32x256xbf16>
    %386 = arith.extf %385 : vector<32x256xbf16> to vector<32x256xf32>
    %387 = vector.extract_strided_slice %302 {offsets = [9, 0], sizes = [1, 256], strides = [1, 1]} : vector<32x256xf32> to vector<1x256xf32>
    %388 = vector.broadcast %387 : vector<1x256xf32> to vector<32x256xf32>
    %389 = arith.mulf %386, %388 : vector<32x256xf32>
    %cst_233 = arith.constant dense<0.000000e+00> : vector<32xf32>
    %390 = vector.multi_reduction <add>, %389, %cst_233 [1] : vector<32x256xf32> to vector<32xf32>
    %391 = vector.shape_cast %390 : vector<32xf32> to vector<32x1xf32>
    %c0_234 = arith.constant 0 : index
    %c9_235 = arith.constant 9 : index
    %392 = vector.load %arg8[%c0_234, %c9_235] : memref<32x32xf32, #tpu.memory_space<vmem>>, vector<32x1xf32>
    tpu.vector_store %arg8[%c0_234, %c9_235], %391 {strides = array<i32>} : memref<32x32xf32, #tpu.memory_space<vmem>>, vector<32x1xf32>,
    %c10_236 = arith.constant 10 : index
    %c0_237 = arith.constant 0 : index
    %c0_238 = arith.constant 0 : index
    %393 = vector.load %arg1[%c10_236, %c0_237, %c0_238] : memref<32x32x256xbf16, #tpu.memory_space<vmem>>, vector<1x32x256xbf16>
    %394 = vector.shape_cast %393 : vector<1x32x256xbf16> to vector<32x256xbf16>
    %395 = arith.extf %394 : vector<32x256xbf16> to vector<32x256xf32>
    %396 = vector.extract_strided_slice %302 {offsets = [10, 0], sizes = [1, 256], strides = [1, 1]} : vector<32x256xf32> to vector<1x256xf32>
    %397 = vector.broadcast %396 : vector<1x256xf32> to vector<32x256xf32>
    %398 = arith.mulf %395, %397 : vector<32x256xf32>
    %cst_239 = arith.constant dense<0.000000e+00> : vector<32xf32>
    %399 = vector.multi_reduction <add>, %398, %cst_239 [1] : vector<32x256xf32> to vector<32xf32>
    %400 = vector.shape_cast %399 : vector<32xf32> to vector<32x1xf32>
    %c0_240 = arith.constant 0 : index
    %c10_241 = arith.constant 10 : index
    %401 = vector.load %arg8[%c0_240, %c10_241] : memref<32x32xf32, #tpu.memory_space<vmem>>, vector<32x1xf32>
    tpu.vector_store %arg8[%c0_240, %c10_241], %400 {strides = array<i32>} : memref<32x32xf32, #tpu.memory_space<vmem>>, vector<32x1xf32>,
    %c11_242 = arith.constant 11 : index
    %c0_243 = arith.constant 0 : index
    %c0_244 = arith.constant 0 : index
    %402 = vector.load %arg1[%c11_242, %c0_243, %c0_244] : memref<32x32x256xbf16, #tpu.memory_space<vmem>>, vector<1x32x256xbf16>
    %403 = vector.shape_cast %402 : vector<1x32x256xbf16> to vector<32x256xbf16>
    %404 = arith.extf %403 : vector<32x256xbf16> to vector<32x256xf32>
    %405 = vector.extract_strided_slice %302 {offsets = [11, 0], sizes = [1, 256], strides = [1, 1]} : vector<32x256xf32> to vector<1x256xf32>
    %406 = vector.broadcast %405 : vector<1x256xf32> to vector<32x256xf32>
    %407 = arith.mulf %404, %406 : vector<32x256xf32>
    %cst_245 = arith.constant dense<0.000000e+00> : vector<32xf32>
    %408 = vector.multi_reduction <add>, %407, %cst_245 [1] : vector<32x256xf32> to vector<32xf32>
    %409 = vector.shape_cast %408 : vector<32xf32> to vector<32x1xf32>
    %c0_246 = arith.constant 0 : index
    %c11_247 = arith.constant 11 : index
    %410 = vector.load %arg8[%c0_246, %c11_247] : memref<32x32xf32, #tpu.memory_space<vmem>>, vector<32x1xf32>
    tpu.vector_store %arg8[%c0_246, %c11_247], %409 {strides = array<i32>} : memref<32x32xf32, #tpu.memory_space<vmem>>, vector<32x1xf32>,
    %c12_248 = arith.constant 12 : index
    %c0_249 = arith.constant 0 : index
    %c0_250 = arith.constant 0 : index
    %411 = vector.load %arg1[%c12_248, %c0_249, %c0_250] : memref<32x32x256xbf16, #tpu.memory_space<vmem>>, vector<1x32x256xbf16>
    %412 = vector.shape_cast %411 : vector<1x32x256xbf16> to vector<32x256xbf16>
    %413 = arith.extf %412 : vector<32x256xbf16> to vector<32x256xf32>
    %414 = vector.extract_strided_slice %302 {offsets = [12, 0], sizes = [1, 256], strides = [1, 1]} : vector<32x256xf32> to vector<1x256xf32>
    %415 = vector.broadcast %414 : vector<1x256xf32> to vector<32x256xf32>
    %416 = arith.mulf %413, %415 : vector<32x256xf32>
    %cst_251 = arith.constant dense<0.000000e+00> : vector<32xf32>
    %417 = vector.multi_reduction <add>, %416, %cst_251 [1] : vector<32x256xf32> to vector<32xf32>
    %418 = vector.shape_cast %417 : vector<32xf32> to vector<32x1xf32>
    %c0_252 = arith.constant 0 : index
    %c12_253 = arith.constant 12 : index
    %419 = vector.load %arg8[%c0_252, %c12_253] : memref<32x32xf32, #tpu.memory_space<vmem>>, vector<32x1xf32>
    tpu.vector_store %arg8[%c0_252, %c12_253], %418 {strides = array<i32>} : memref<32x32xf32, #tpu.memory_space<vmem>>, vector<32x1xf32>,
    %c13_254 = arith.constant 13 : index
    %c0_255 = arith.constant 0 : index
    %c0_256 = arith.constant 0 : index
    %420 = vector.load %arg1[%c13_254, %c0_255, %c0_256] : memref<32x32x256xbf16, #tpu.memory_space<vmem>>, vector<1x32x256xbf16>
    %421 = vector.shape_cast %420 : vector<1x32x256xbf16> to vector<32x256xbf16>
    %422 = arith.extf %421 : vector<32x256xbf16> to vector<32x256xf32>
    %423 = vector.extract_strided_slice %302 {offsets = [13, 0], sizes = [1, 256], strides = [1, 1]} : vector<32x256xf32> to vector<1x256xf32>
    %424 = vector.broadcast %423 : vector<1x256xf32> to vector<32x256xf32>
    %425 = arith.mulf %422, %424 : vector<32x256xf32>
    %cst_257 = arith.constant dense<0.000000e+00> : vector<32xf32>
    %426 = vector.multi_reduction <add>, %425, %cst_257 [1] : vector<32x256xf32> to vector<32xf32>
    %427 = vector.shape_cast %426 : vector<32xf32> to vector<32x1xf32>
    %c0_258 = arith.constant 0 : index
    %c13_259 = arith.constant 13 : index
    %428 = vector.load %arg8[%c0_258, %c13_259] : memref<32x32xf32, #tpu.memory_space<vmem>>, vector<32x1xf32>
    tpu.vector_store %arg8[%c0_258, %c13_259], %427 {strides = array<i32>} : memref<32x32xf32, #tpu.memory_space<vmem>>, vector<32x1xf32>,
    %c14_260 = arith.constant 14 : index
    %c0_261 = arith.constant 0 : index
    %c0_262 = arith.constant 0 : index
    %429 = vector.load %arg1[%c14_260, %c0_261, %c0_262] : memref<32x32x256xbf16, #tpu.memory_space<vmem>>, vector<1x32x256xbf16>
    %430 = vector.shape_cast %429 : vector<1x32x256xbf16> to vector<32x256xbf16>
    %431 = arith.extf %430 : vector<32x256xbf16> to vector<32x256xf32>
    %432 = vector.extract_strided_slice %302 {offsets = [14, 0], sizes = [1, 256], strides = [1, 1]} : vector<32x256xf32> to vector<1x256xf32>
    %433 = vector.broadcast %432 : vector<1x256xf32> to vector<32x256xf32>
    %434 = arith.mulf %431, %433 : vector<32x256xf32>
    %cst_263 = arith.constant dense<0.000000e+00> : vector<32xf32>
    %435 = vector.multi_reduction <add>, %434, %cst_263 [1] : vector<32x256xf32> to vector<32xf32>
    %436 = vector.shape_cast %435 : vector<32xf32> to vector<32x1xf32>
    %c0_264 = arith.constant 0 : index
    %c14_265 = arith.constant 14 : index
    %437 = vector.load %arg8[%c0_264, %c14_265] : memref<32x32xf32, #tpu.memory_space<vmem>>, vector<32x1xf32>
    tpu.vector_store %arg8[%c0_264, %c14_265], %436 {strides = array<i32>} : memref<32x32xf32, #tpu.memory_space<vmem>>, vector<32x1xf32>,
    %c15_266 = arith.constant 15 : index
    %c0_267 = arith.constant 0 : index
    %c0_268 = arith.constant 0 : index
    %438 = vector.load %arg1[%c15_266, %c0_267, %c0_268] : memref<32x32x256xbf16, #tpu.memory_space<vmem>>, vector<1x32x256xbf16>
    %439 = vector.shape_cast %438 : vector<1x32x256xbf16> to vector<32x256xbf16>
    %440 = arith.extf %439 : vector<32x256xbf16> to vector<32x256xf32>
    %441 = vector.extract_strided_slice %302 {offsets = [15, 0], sizes = [1, 256], strides = [1, 1]} : vector<32x256xf32> to vector<1x256xf32>
    %442 = vector.broadcast %441 : vector<1x256xf32> to vector<32x256xf32>
    %443 = arith.mulf %440, %442 : vector<32x256xf32>
    %cst_269 = arith.constant dense<0.000000e+00> : vector<32xf32>
    %444 = vector.multi_reduction <add>, %443, %cst_269 [1] : vector<32x256xf32> to vector<32xf32>
    %445 = vector.shape_cast %444 : vector<32xf32> to vector<32x1xf32>
    %c0_270 = arith.constant 0 : index
    %c15_271 = arith.constant 15 : index
    %446 = vector.load %arg8[%c0_270, %c15_271] : memref<32x32xf32, #tpu.memory_space<vmem>>, vector<32x1xf32>
    tpu.vector_store %arg8[%c0_270, %c15_271], %445 {strides = array<i32>} : memref<32x32xf32, #tpu.memory_space<vmem>>, vector<32x1xf32>,
    %c16_272 = arith.constant 16 : index
    %c0_273 = arith.constant 0 : index
    %c0_274 = arith.constant 0 : index
    %447 = vector.load %arg1[%c16_272, %c0_273, %c0_274] : memref<32x32x256xbf16, #tpu.memory_space<vmem>>, vector<1x32x256xbf16>
    %448 = vector.shape_cast %447 : vector<1x32x256xbf16> to vector<32x256xbf16>
    %449 = arith.extf %448 : vector<32x256xbf16> to vector<32x256xf32>
    %450 = vector.extract_strided_slice %302 {offsets = [16, 0], sizes = [1, 256], strides = [1, 1]} : vector<32x256xf32> to vector<1x256xf32>
    %451 = vector.broadcast %450 : vector<1x256xf32> to vector<32x256xf32>
    %452 = arith.mulf %449, %451 : vector<32x256xf32>
    %cst_275 = arith.constant dense<0.000000e+00> : vector<32xf32>
    %453 = vector.multi_reduction <add>, %452, %cst_275 [1] : vector<32x256xf32> to vector<32xf32>
    %454 = vector.shape_cast %453 : vector<32xf32> to vector<32x1xf32>
    %c0_276 = arith.constant 0 : index
    %c16_277 = arith.constant 16 : index
    %455 = vector.load %arg8[%c0_276, %c16_277] : memref<32x32xf32, #tpu.memory_space<vmem>>, vector<32x1xf32>
    tpu.vector_store %arg8[%c0_276, %c16_277], %454 {strides = array<i32>} : memref<32x32xf32, #tpu.memory_space<vmem>>, vector<32x1xf32>,
    %c17_278 = arith.constant 17 : index
    %c0_279 = arith.constant 0 : index
    %c0_280 = arith.constant 0 : index
    %456 = vector.load %arg1[%c17_278, %c0_279, %c0_280] : memref<32x32x256xbf16, #tpu.memory_space<vmem>>, vector<1x32x256xbf16>
    %457 = vector.shape_cast %456 : vector<1x32x256xbf16> to vector<32x256xbf16>
    %458 = arith.extf %457 : vector<32x256xbf16> to vector<32x256xf32>
    %459 = vector.extract_strided_slice %302 {offsets = [17, 0], sizes = [1, 256], strides = [1, 1]} : vector<32x256xf32> to vector<1x256xf32>
    %460 = vector.broadcast %459 : vector<1x256xf32> to vector<32x256xf32>
    %461 = arith.mulf %458, %460 : vector<32x256xf32>
    %cst_281 = arith.constant dense<0.000000e+00> : vector<32xf32>
    %462 = vector.multi_reduction <add>, %461, %cst_281 [1] : vector<32x256xf32> to vector<32xf32>
    %463 = vector.shape_cast %462 : vector<32xf32> to vector<32x1xf32>
    %c0_282 = arith.constant 0 : index
    %c17_283 = arith.constant 17 : index
    %464 = vector.load %arg8[%c0_282, %c17_283] : memref<32x32xf32, #tpu.memory_space<vmem>>, vector<32x1xf32>
    tpu.vector_store %arg8[%c0_282, %c17_283], %463 {strides = array<i32>} : memref<32x32xf32, #tpu.memory_space<vmem>>, vector<32x1xf32>,
    %c18_284 = arith.constant 18 : index
    %c0_285 = arith.constant 0 : index
    %c0_286 = arith.constant 0 : index
    %465 = vector.load %arg1[%c18_284, %c0_285, %c0_286] : memref<32x32x256xbf16, #tpu.memory_space<vmem>>, vector<1x32x256xbf16>
    %466 = vector.shape_cast %465 : vector<1x32x256xbf16> to vector<32x256xbf16>
    %467 = arith.extf %466 : vector<32x256xbf16> to vector<32x256xf32>
    %468 = vector.extract_strided_slice %302 {offsets = [18, 0], sizes = [1, 256], strides = [1, 1]} : vector<32x256xf32> to vector<1x256xf32>
    %469 = vector.broadcast %468 : vector<1x256xf32> to vector<32x256xf32>
    %470 = arith.mulf %467, %469 : vector<32x256xf32>
    %cst_287 = arith.constant dense<0.000000e+00> : vector<32xf32>
    %471 = vector.multi_reduction <add>, %470, %cst_287 [1] : vector<32x256xf32> to vector<32xf32>
    %472 = vector.shape_cast %471 : vector<32xf32> to vector<32x1xf32>
    %c0_288 = arith.constant 0 : index
    %c18_289 = arith.constant 18 : index
    %473 = vector.load %arg8[%c0_288, %c18_289] : memref<32x32xf32, #tpu.memory_space<vmem>>, vector<32x1xf32>
    tpu.vector_store %arg8[%c0_288, %c18_289], %472 {strides = array<i32>} : memref<32x32xf32, #tpu.memory_space<vmem>>, vector<32x1xf32>,
    %c19_290 = arith.constant 19 : index
    %c0_291 = arith.constant 0 : index
    %c0_292 = arith.constant 0 : index
    %474 = vector.load %arg1[%c19_290, %c0_291, %c0_292] : memref<32x32x256xbf16, #tpu.memory_space<vmem>>, vector<1x32x256xbf16>
    %475 = vector.shape_cast %474 : vector<1x32x256xbf16> to vector<32x256xbf16>
    %476 = arith.extf %475 : vector<32x256xbf16> to vector<32x256xf32>
    %477 = vector.extract_strided_slice %302 {offsets = [19, 0], sizes = [1, 256], strides = [1, 1]} : vector<32x256xf32> to vector<1x256xf32>
    %478 = vector.broadcast %477 : vector<1x256xf32> to vector<32x256xf32>
    %479 = arith.mulf %476, %478 : vector<32x256xf32>
    %cst_293 = arith.constant dense<0.000000e+00> : vector<32xf32>
    %480 = vector.multi_reduction <add>, %479, %cst_293 [1] : vector<32x256xf32> to vector<32xf32>
    %481 = vector.shape_cast %480 : vector<32xf32> to vector<32x1xf32>
    %c0_294 = arith.constant 0 : index
    %c19_295 = arith.constant 19 : index
    %482 = vector.load %arg8[%c0_294, %c19_295] : memref<32x32xf32, #tpu.memory_space<vmem>>, vector<32x1xf32>
    tpu.vector_store %arg8[%c0_294, %c19_295], %481 {strides = array<i32>} : memref<32x32xf32, #tpu.memory_space<vmem>>, vector<32x1xf32>,
    %c20_296 = arith.constant 20 : index
    %c0_297 = arith.constant 0 : index
    %c0_298 = arith.constant 0 : index
    %483 = vector.load %arg1[%c20_296, %c0_297, %c0_298] : memref<32x32x256xbf16, #tpu.memory_space<vmem>>, vector<1x32x256xbf16>
    %484 = vector.shape_cast %483 : vector<1x32x256xbf16> to vector<32x256xbf16>
    %485 = arith.extf %484 : vector<32x256xbf16> to vector<32x256xf32>
    %486 = vector.extract_strided_slice %302 {offsets = [20, 0], sizes = [1, 256], strides = [1, 1]} : vector<32x256xf32> to vector<1x256xf32>
    %487 = vector.broadcast %486 : vector<1x256xf32> to vector<32x256xf32>
    %488 = arith.mulf %485, %487 : vector<32x256xf32>
    %cst_299 = arith.constant dense<0.000000e+00> : vector<32xf32>
    %489 = vector.multi_reduction <add>, %488, %cst_299 [1] : vector<32x256xf32> to vector<32xf32>
    %490 = vector.shape_cast %489 : vector<32xf32> to vector<32x1xf32>
    %c0_300 = arith.constant 0 : index
    %c20_301 = arith.constant 20 : index
    %491 = vector.load %arg8[%c0_300, %c20_301] : memref<32x32xf32, #tpu.memory_space<vmem>>, vector<32x1xf32>
    tpu.vector_store %arg8[%c0_300, %c20_301], %490 {strides = array<i32>} : memref<32x32xf32, #tpu.memory_space<vmem>>, vector<32x1xf32>,
    %c21_302 = arith.constant 21 : index
    %c0_303 = arith.constant 0 : index
    %c0_304 = arith.constant 0 : index
    %492 = vector.load %arg1[%c21_302, %c0_303, %c0_304] : memref<32x32x256xbf16, #tpu.memory_space<vmem>>, vector<1x32x256xbf16>
    %493 = vector.shape_cast %492 : vector<1x32x256xbf16> to vector<32x256xbf16>
    %494 = arith.extf %493 : vector<32x256xbf16> to vector<32x256xf32>
    %495 = vector.extract_strided_slice %302 {offsets = [21, 0], sizes = [1, 256], strides = [1, 1]} : vector<32x256xf32> to vector<1x256xf32>
    %496 = vector.broadcast %495 : vector<1x256xf32> to vector<32x256xf32>
    %497 = arith.mulf %494, %496 : vector<32x256xf32>
    %cst_305 = arith.constant dense<0.000000e+00> : vector<32xf32>
    %498 = vector.multi_reduction <add>, %497, %cst_305 [1] : vector<32x256xf32> to vector<32xf32>
    %499 = vector.shape_cast %498 : vector<32xf32> to vector<32x1xf32>
    %c0_306 = arith.constant 0 : index
    %c21_307 = arith.constant 21 : index
    %500 = vector.load %arg8[%c0_306, %c21_307] : memref<32x32xf32, #tpu.memory_space<vmem>>, vector<32x1xf32>
    tpu.vector_store %arg8[%c0_306, %c21_307], %499 {strides = array<i32>} : memref<32x32xf32, #tpu.memory_space<vmem>>, vector<32x1xf32>,
    %c22_308 = arith.constant 22 : index
    %c0_309 = arith.constant 0 : index
    %c0_310 = arith.constant 0 : index
    %501 = vector.load %arg1[%c22_308, %c0_309, %c0_310] : memref<32x32x256xbf16, #tpu.memory_space<vmem>>, vector<1x32x256xbf16>
    %502 = vector.shape_cast %501 : vector<1x32x256xbf16> to vector<32x256xbf16>
    %503 = arith.extf %502 : vector<32x256xbf16> to vector<32x256xf32>
    %504 = vector.extract_strided_slice %302 {offsets = [22, 0], sizes = [1, 256], strides = [1, 1]} : vector<32x256xf32> to vector<1x256xf32>
    %505 = vector.broadcast %504 : vector<1x256xf32> to vector<32x256xf32>
    %506 = arith.mulf %503, %505 : vector<32x256xf32>
    %cst_311 = arith.constant dense<0.000000e+00> : vector<32xf32>
    %507 = vector.multi_reduction <add>, %506, %cst_311 [1] : vector<32x256xf32> to vector<32xf32>
    %508 = vector.shape_cast %507 : vector<32xf32> to vector<32x1xf32>
    %c0_312 = arith.constant 0 : index
    %c22_313 = arith.constant 22 : index
    %509 = vector.load %arg8[%c0_312, %c22_313] : memref<32x32xf32, #tpu.memory_space<vmem>>, vector<32x1xf32>
    tpu.vector_store %arg8[%c0_312, %c22_313], %508 {strides = array<i32>} : memref<32x32xf32, #tpu.memory_space<vmem>>, vector<32x1xf32>,
    %c23_314 = arith.constant 23 : index
    %c0_315 = arith.constant 0 : index
    %c0_316 = arith.constant 0 : index
    %510 = vector.load %arg1[%c23_314, %c0_315, %c0_316] : memref<32x32x256xbf16, #tpu.memory_space<vmem>>, vector<1x32x256xbf16>
    %511 = vector.shape_cast %510 : vector<1x32x256xbf16> to vector<32x256xbf16>
    %512 = arith.extf %511 : vector<32x256xbf16> to vector<32x256xf32>
    %513 = vector.extract_strided_slice %302 {offsets = [23, 0], sizes = [1, 256], strides = [1, 1]} : vector<32x256xf32> to vector<1x256xf32>
    %514 = vector.broadcast %513 : vector<1x256xf32> to vector<32x256xf32>
    %515 = arith.mulf %512, %514 : vector<32x256xf32>
    %cst_317 = arith.constant dense<0.000000e+00> : vector<32xf32>
    %516 = vector.multi_reduction <add>, %515, %cst_317 [1] : vector<32x256xf32> to vector<32xf32>
    %517 = vector.shape_cast %516 : vector<32xf32> to vector<32x1xf32>
    %c0_318 = arith.constant 0 : index
    %c23_319 = arith.constant 23 : index
    %518 = vector.load %arg8[%c0_318, %c23_319] : memref<32x32xf32, #tpu.memory_space<vmem>>, vector<32x1xf32>
    tpu.vector_store %arg8[%c0_318, %c23_319], %517 {strides = array<i32>} : memref<32x32xf32, #tpu.memory_space<vmem>>, vector<32x1xf32>,
    %c24_320 = arith.constant 24 : index
    %c0_321 = arith.constant 0 : index
    %c0_322 = arith.constant 0 : index
    %519 = vector.load %arg1[%c24_320, %c0_321, %c0_322] : memref<32x32x256xbf16, #tpu.memory_space<vmem>>, vector<1x32x256xbf16>
    %520 = vector.shape_cast %519 : vector<1x32x256xbf16> to vector<32x256xbf16>
    %521 = arith.extf %520 : vector<32x256xbf16> to vector<32x256xf32>
    %522 = vector.extract_strided_slice %302 {offsets = [24, 0], sizes = [1, 256], strides = [1, 1]} : vector<32x256xf32> to vector<1x256xf32>
    %523 = vector.broadcast %522 : vector<1x256xf32> to vector<32x256xf32>
    %524 = arith.mulf %521, %523 : vector<32x256xf32>
    %cst_323 = arith.constant dense<0.000000e+00> : vector<32xf32>
    %525 = vector.multi_reduction <add>, %524, %cst_323 [1] : vector<32x256xf32> to vector<32xf32>
    %526 = vector.shape_cast %525 : vector<32xf32> to vector<32x1xf32>
    %c0_324 = arith.constant 0 : index
    %c24_325 = arith.constant 24 : index
    %527 = vector.load %arg8[%c0_324, %c24_325] : memref<32x32xf32, #tpu.memory_space<vmem>>, vector<32x1xf32>
    tpu.vector_store %arg8[%c0_324, %c24_325], %526 {strides = array<i32>} : memref<32x32xf32, #tpu.memory_space<vmem>>, vector<32x1xf32>,
    %c25_326 = arith.constant 25 : index
    %c0_327 = arith.constant 0 : index
    %c0_328 = arith.constant 0 : index
    %528 = vector.load %arg1[%c25_326, %c0_327, %c0_328] : memref<32x32x256xbf16, #tpu.memory_space<vmem>>, vector<1x32x256xbf16>
    %529 = vector.shape_cast %528 : vector<1x32x256xbf16> to vector<32x256xbf16>
    %530 = arith.extf %529 : vector<32x256xbf16> to vector<32x256xf32>
    %531 = vector.extract_strided_slice %302 {offsets = [25, 0], sizes = [1, 256], strides = [1, 1]} : vector<32x256xf32> to vector<1x256xf32>
    %532 = vector.broadcast %531 : vector<1x256xf32> to vector<32x256xf32>
    %533 = arith.mulf %530, %532 : vector<32x256xf32>
    %cst_329 = arith.constant dense<0.000000e+00> : vector<32xf32>
    %534 = vector.multi_reduction <add>, %533, %cst_329 [1] : vector<32x256xf32> to vector<32xf32>
    %535 = vector.shape_cast %534 : vector<32xf32> to vector<32x1xf32>
    %c0_330 = arith.constant 0 : index
    %c25_331 = arith.constant 25 : index
    %536 = vector.load %arg8[%c0_330, %c25_331] : memref<32x32xf32, #tpu.memory_space<vmem>>, vector<32x1xf32>
    tpu.vector_store %arg8[%c0_330, %c25_331], %535 {strides = array<i32>} : memref<32x32xf32, #tpu.memory_space<vmem>>, vector<32x1xf32>,
    %c26_332 = arith.constant 26 : index
    %c0_333 = arith.constant 0 : index
    %c0_334 = arith.constant 0 : index
    %537 = vector.load %arg1[%c26_332, %c0_333, %c0_334] : memref<32x32x256xbf16, #tpu.memory_space<vmem>>, vector<1x32x256xbf16>
    %538 = vector.shape_cast %537 : vector<1x32x256xbf16> to vector<32x256xbf16>
    %539 = arith.extf %538 : vector<32x256xbf16> to vector<32x256xf32>
    %540 = vector.extract_strided_slice %302 {offsets = [26, 0], sizes = [1, 256], strides = [1, 1]} : vector<32x256xf32> to vector<1x256xf32>
    %541 = vector.broadcast %540 : vector<1x256xf32> to vector<32x256xf32>
    %542 = arith.mulf %539, %541 : vector<32x256xf32>
    %cst_335 = arith.constant dense<0.000000e+00> : vector<32xf32>
    %543 = vector.multi_reduction <add>, %542, %cst_335 [1] : vector<32x256xf32> to vector<32xf32>
    %544 = vector.shape_cast %543 : vector<32xf32> to vector<32x1xf32>
    %c0_336 = arith.constant 0 : index
    %c26_337 = arith.constant 26 : index
    %545 = vector.load %arg8[%c0_336, %c26_337] : memref<32x32xf32, #tpu.memory_space<vmem>>, vector<32x1xf32>
    tpu.vector_store %arg8[%c0_336, %c26_337], %544 {strides = array<i32>} : memref<32x32xf32, #tpu.memory_space<vmem>>, vector<32x1xf32>,
    %c27_338 = arith.constant 27 : index
    %c0_339 = arith.constant 0 : index
    %c0_340 = arith.constant 0 : index
    %546 = vector.load %arg1[%c27_338, %c0_339, %c0_340] : memref<32x32x256xbf16, #tpu.memory_space<vmem>>, vector<1x32x256xbf16>
    %547 = vector.shape_cast %546 : vector<1x32x256xbf16> to vector<32x256xbf16>
    %548 = arith.extf %547 : vector<32x256xbf16> to vector<32x256xf32>
    %549 = vector.extract_strided_slice %302 {offsets = [27, 0], sizes = [1, 256], strides = [1, 1]} : vector<32x256xf32> to vector<1x256xf32>
    %550 = vector.broadcast %549 : vector<1x256xf32> to vector<32x256xf32>
    %551 = arith.mulf %548, %550 : vector<32x256xf32>
    %cst_341 = arith.constant dense<0.000000e+00> : vector<32xf32>
    %552 = vector.multi_reduction <add>, %551, %cst_341 [1] : vector<32x256xf32> to vector<32xf32>
    %553 = vector.shape_cast %552 : vector<32xf32> to vector<32x1xf32>
    %c0_342 = arith.constant 0 : index
    %c27_343 = arith.constant 27 : index
    %554 = vector.load %arg8[%c0_342, %c27_343] : memref<32x32xf32, #tpu.memory_space<vmem>>, vector<32x1xf32>
    tpu.vector_store %arg8[%c0_342, %c27_343], %553 {strides = array<i32>} : memref<32x32xf32, #tpu.memory_space<vmem>>, vector<32x1xf32>,
    %c28_344 = arith.constant 28 : index
    %c0_345 = arith.constant 0 : index
    %c0_346 = arith.constant 0 : index
    %555 = vector.load %arg1[%c28_344, %c0_345, %c0_346] : memref<32x32x256xbf16, #tpu.memory_space<vmem>>, vector<1x32x256xbf16>
    %556 = vector.shape_cast %555 : vector<1x32x256xbf16> to vector<32x256xbf16>
    %557 = arith.extf %556 : vector<32x256xbf16> to vector<32x256xf32>
    %558 = vector.extract_strided_slice %302 {offsets = [28, 0], sizes = [1, 256], strides = [1, 1]} : vector<32x256xf32> to vector<1x256xf32>
    %559 = vector.broadcast %558 : vector<1x256xf32> to vector<32x256xf32>
    %560 = arith.mulf %557, %559 : vector<32x256xf32>
    %cst_347 = arith.constant dense<0.000000e+00> : vector<32xf32>
    %561 = vector.multi_reduction <add>, %560, %cst_347 [1] : vector<32x256xf32> to vector<32xf32>
    %562 = vector.shape_cast %561 : vector<32xf32> to vector<32x1xf32>
    %c0_348 = arith.constant 0 : index
    %c28_349 = arith.constant 28 : index
    %563 = vector.load %arg8[%c0_348, %c28_349] : memref<32x32xf32, #tpu.memory_space<vmem>>, vector<32x1xf32>
    tpu.vector_store %arg8[%c0_348, %c28_349], %562 {strides = array<i32>} : memref<32x32xf32, #tpu.memory_space<vmem>>, vector<32x1xf32>,
    %c29_350 = arith.constant 29 : index
    %c0_351 = arith.constant 0 : index
    %c0_352 = arith.constant 0 : index
    %564 = vector.load %arg1[%c29_350, %c0_351, %c0_352] : memref<32x32x256xbf16, #tpu.memory_space<vmem>>, vector<1x32x256xbf16>
    %565 = vector.shape_cast %564 : vector<1x32x256xbf16> to vector<32x256xbf16>
    %566 = arith.extf %565 : vector<32x256xbf16> to vector<32x256xf32>
    %567 = vector.extract_strided_slice %302 {offsets = [29, 0], sizes = [1, 256], strides = [1, 1]} : vector<32x256xf32> to vector<1x256xf32>
    %568 = vector.broadcast %567 : vector<1x256xf32> to vector<32x256xf32>
    %569 = arith.mulf %566, %568 : vector<32x256xf32>
    %cst_353 = arith.constant dense<0.000000e+00> : vector<32xf32>
    %570 = vector.multi_reduction <add>, %569, %cst_353 [1] : vector<32x256xf32> to vector<32xf32>
    %571 = vector.shape_cast %570 : vector<32xf32> to vector<32x1xf32>
    %c0_354 = arith.constant 0 : index
    %c29_355 = arith.constant 29 : index
    %572 = vector.load %arg8[%c0_354, %c29_355] : memref<32x32xf32, #tpu.memory_space<vmem>>, vector<32x1xf32>
    tpu.vector_store %arg8[%c0_354, %c29_355], %571 {strides = array<i32>} : memref<32x32xf32, #tpu.memory_space<vmem>>, vector<32x1xf32>,
    %c30_356 = arith.constant 30 : index
    %c0_357 = arith.constant 0 : index
    %c0_358 = arith.constant 0 : index
    %573 = vector.load %arg1[%c30_356, %c0_357, %c0_358] : memref<32x32x256xbf16, #tpu.memory_space<vmem>>, vector<1x32x256xbf16>
    %574 = vector.shape_cast %573 : vector<1x32x256xbf16> to vector<32x256xbf16>
    %575 = arith.extf %574 : vector<32x256xbf16> to vector<32x256xf32>
    %576 = vector.extract_strided_slice %302 {offsets = [30, 0], sizes = [1, 256], strides = [1, 1]} : vector<32x256xf32> to vector<1x256xf32>
    %577 = vector.broadcast %576 : vector<1x256xf32> to vector<32x256xf32>
    %578 = arith.mulf %575, %577 : vector<32x256xf32>
    %cst_359 = arith.constant dense<0.000000e+00> : vector<32xf32>
    %579 = vector.multi_reduction <add>, %578, %cst_359 [1] : vector<32x256xf32> to vector<32xf32>
    %580 = vector.shape_cast %579 : vector<32xf32> to vector<32x1xf32>
    %c0_360 = arith.constant 0 : index
    %c30_361 = arith.constant 30 : index
    %581 = vector.load %arg8[%c0_360, %c30_361] : memref<32x32xf32, #tpu.memory_space<vmem>>, vector<32x1xf32>
    tpu.vector_store %arg8[%c0_360, %c30_361], %580 {strides = array<i32>} : memref<32x32xf32, #tpu.memory_space<vmem>>, vector<32x1xf32>,
    %c31_362 = arith.constant 31 : index
    %c0_363 = arith.constant 0 : index
    %c0_364 = arith.constant 0 : index
    %582 = vector.load %arg1[%c31_362, %c0_363, %c0_364] : memref<32x32x256xbf16, #tpu.memory_space<vmem>>, vector<1x32x256xbf16>
    %583 = vector.shape_cast %582 : vector<1x32x256xbf16> to vector<32x256xbf16>
    %584 = arith.extf %583 : vector<32x256xbf16> to vector<32x256xf32>
    %585 = vector.extract_strided_slice %302 {offsets = [31, 0], sizes = [1, 256], strides = [1, 1]} : vector<32x256xf32> to vector<1x256xf32>
    %586 = vector.broadcast %585 : vector<1x256xf32> to vector<32x256xf32>
    %587 = arith.mulf %584, %586 : vector<32x256xf32>
    %cst_365 = arith.constant dense<0.000000e+00> : vector<32xf32>
    %588 = vector.multi_reduction <add>, %587, %cst_365 [1] : vector<32x256xf32> to vector<32xf32>
    %589 = vector.shape_cast %588 : vector<32xf32> to vector<32x1xf32>
    %c0_366 = arith.constant 0 : index
    %c31_367 = arith.constant 31 : index
    %590 = vector.load %arg8[%c0_366, %c31_367] : memref<32x32xf32, #tpu.memory_space<vmem>>, vector<32x1xf32>
    tpu.vector_store %arg8[%c0_366, %c31_367], %589 {strides = array<i32>} : memref<32x32xf32, #tpu.memory_space<vmem>>, vector<32x1xf32>,
    %c0_368 = arith.constant 0 : index
    %c0_369 = arith.constant 0 : index
    %591 = vector.load %arg8[%c0_368, %c0_369] : memref<32x32xf32, #tpu.memory_space<vmem>>, vector<32x32xf32>
    %cst_370 = arith.constant dense<0.000000e+00> : vector<4x32xf32>
    %592 = tpu.matmul %8, %591, %cst_370 {dimension_numbers = #tpu.dot_dimension_numbers<[1], [0], [0], [1], [0, 0, 1, 1], [], []>} : vector<4x32xf32>, vector<32x32xf32>, vector<4x32xf32> -> vector<4x32xf32>
    %593 = vector.broadcast %5 : vector<4x1xf32> to vector<4x32xf32>
    %594 = arith.addf %592, %593 : vector<4x32xf32>
    %cst_371 = arith.constant dense<0.000000e+00> : vector<32xf32>
    %595 = vector.multi_reduction <add>, %594, %cst_371 [0] : vector<4x32xf32> to vector<32xf32>
    %596 = vector.shape_cast %595 : vector<32xf32> to vector<1x32xf32>
    %cst_372 = arith.constant 4.000000e+00 : f32
    %597 = vector.broadcast %cst_372 : f32 to vector<1x32xf32>
    %598 = arith.divf %596, %597 : vector<1x32xf32>
    %599 = vector.broadcast %598 : vector<1x32xf32> to vector<4x32xf32>
    %600 = arith.subf %594, %599 : vector<4x32xf32>
    %601 = arith.mulf %600, %600 : vector<4x32xf32>
    %cst_373 = arith.constant dense<0.000000e+00> : vector<32xf32>
    %602 = vector.multi_reduction <add>, %601, %cst_373 [0] : vector<4x32xf32> to vector<32xf32>
    %603 = vector.shape_cast %602 : vector<32xf32> to vector<1x32xf32>
    %cst_374 = arith.constant 4.000000e+00 : f32
    %604 = vector.broadcast %cst_374 : f32 to vector<1x32xf32>
    %605 = arith.divf %603, %604 : vector<1x32xf32>
    %606 = vector.broadcast %598 : vector<1x32xf32> to vector<4x32xf32>
    %607 = arith.subf %594, %606 : vector<4x32xf32>
    %cst_375 = arith.constant 9.99999974E-6 : f32
    %608 = vector.broadcast %cst_375 : f32 to vector<1x32xf32>
    %609 = arith.addf %605, %608 : vector<1x32xf32>
    %610 = math.rsqrt %609 : vector<1x32xf32>
    %611 = vector.broadcast %610 : vector<1x32xf32> to vector<4x32xf32>
    %612 = arith.mulf %607, %611 : vector<4x32xf32>
    %613 = vector.broadcast %6 : vector<4x1xf32> to vector<4x32xf32>
    %614 = arith.mulf %612, %613 : vector<4x32xf32>
    %615 = vector.broadcast %7 : vector<4x1xf32> to vector<4x32xf32>
    %616 = arith.addf %614, %615 : vector<4x32xf32>
    %cst_376 = arith.constant 0.000000e+00 : f32
    %617 = vector.broadcast %cst_376 : f32 to vector<4x32xf32>
    %618 = arith.maximumf %616, %617 : vector<4x32xf32>
    %cst_377 = arith.constant dense<0.000000e+00> : vector<32x32xf32>
    %619 = tpu.matmul %11, %618, %cst_377 {dimension_numbers = #tpu.dot_dimension_numbers<[1], [0], [0], [1], [0, 0, 1, 1], [], []>} : vector<32x4xf32>, vector<4x32xf32>, vector<32x32xf32> -> vector<32x32xf32>
    %620 = vector.broadcast %10 : vector<32x1xf32> to vector<32x32xf32>
    %621 = arith.addf %619, %620 : vector<32x32xf32>
    %c0_378 = arith.constant 0 : index
    %c0_379 = arith.constant 0 : index
    %c0_380 = arith.constant 0 : index
    %622 = vector.load %arg1[%c0_378, %c0_379, %c0_380] : memref<32x32x256xbf16, #tpu.memory_space<vmem>>, vector<1x32x256xbf16>
    %623 = vector.shape_cast %622 : vector<1x32x256xbf16> to vector<32x256xbf16>
    %624 = arith.extf %623 : vector<32x256xbf16> to vector<32x256xf32>
    %625 = vector.extract_strided_slice %621 {offsets = [0, 0], sizes = [32, 1], strides = [1, 1]} : vector<32x32xf32> to vector<32x1xf32>
    %626 = vector.broadcast %625 : vector<32x1xf32> to vector<32x256xf32>
    %627 = arith.addf %624, %626 : vector<32x256xf32>
    %628 = arith.truncf %627 : vector<32x256xf32> to vector<32x256xbf16>
    %c0_381 = arith.constant 0 : index
    %c0_382 = arith.constant 0 : index
    %c0_383 = arith.constant 0 : index
    %629 = vector.load %arg6[%c0_381, %c0_382, %c0_383] : memref<32x32x256xbf16, #tpu.memory_space<vmem>>, vector<1x32x256xbf16>
    %630 = vector.shape_cast %629 : vector<1x32x256xbf16> to vector<32x256xbf16>
    %631 = vector.shape_cast %628 : vector<32x256xbf16> to vector<1x32x256xbf16>
    tpu.vector_store %arg6[%c0_381, %c0_382, %c0_383], %631 {strides = array<i32>} : memref<32x32x256xbf16, #tpu.memory_space<vmem>>, vector<1x32x256xbf16>,
    %c1_384 = arith.constant 1 : index
    %c0_385 = arith.constant 0 : index
    %c0_386 = arith.constant 0 : index
    %632 = vector.load %arg1[%c1_384, %c0_385, %c0_386] : memref<32x32x256xbf16, #tpu.memory_space<vmem>>, vector<1x32x256xbf16>
    %633 = vector.shape_cast %632 : vector<1x32x256xbf16> to vector<32x256xbf16>
    %634 = arith.extf %633 : vector<32x256xbf16> to vector<32x256xf32>
    %635 = vector.extract_strided_slice %621 {offsets = [0, 1], sizes = [32, 1], strides = [1, 1]} : vector<32x32xf32> to vector<32x1xf32>
    %636 = vector.broadcast %635 : vector<32x1xf32> to vector<32x256xf32>
    %637 = arith.addf %634, %636 : vector<32x256xf32>
    %638 = arith.truncf %637 : vector<32x256xf32> to vector<32x256xbf16>
    %c1_387 = arith.constant 1 : index
    %c0_388 = arith.constant 0 : index
    %c0_389 = arith.constant 0 : index
    %639 = vector.load %arg6[%c1_387, %c0_388, %c0_389] : memref<32x32x256xbf16, #tpu.memory_space<vmem>>, vector<1x32x256xbf16>
    %640 = vector.shape_cast %639 : vector<1x32x256xbf16> to vector<32x256xbf16>
    %641 = vector.shape_cast %638 : vector<32x256xbf16> to vector<1x32x256xbf16>
    tpu.vector_store %arg6[%c1_387, %c0_388, %c0_389], %641 {strides = array<i32>} : memref<32x32x256xbf16, #tpu.memory_space<vmem>>, vector<1x32x256xbf16>,
    %c2_390 = arith.constant 2 : index
    %c0_391 = arith.constant 0 : index
    %c0_392 = arith.constant 0 : index
    %642 = vector.load %arg1[%c2_390, %c0_391, %c0_392] : memref<32x32x256xbf16, #tpu.memory_space<vmem>>, vector<1x32x256xbf16>
    %643 = vector.shape_cast %642 : vector<1x32x256xbf16> to vector<32x256xbf16>
    %644 = arith.extf %643 : vector<32x256xbf16> to vector<32x256xf32>
    %645 = vector.extract_strided_slice %621 {offsets = [0, 2], sizes = [32, 1], strides = [1, 1]} : vector<32x32xf32> to vector<32x1xf32>
    %646 = vector.broadcast %645 : vector<32x1xf32> to vector<32x256xf32>
    %647 = arith.addf %644, %646 : vector<32x256xf32>
    %648 = arith.truncf %647 : vector<32x256xf32> to vector<32x256xbf16>
    %c2_393 = arith.constant 2 : index
    %c0_394 = arith.constant 0 : index
    %c0_395 = arith.constant 0 : index
    %649 = vector.load %arg6[%c2_393, %c0_394, %c0_395] : memref<32x32x256xbf16, #tpu.memory_space<vmem>>, vector<1x32x256xbf16>
    %650 = vector.shape_cast %649 : vector<1x32x256xbf16> to vector<32x256xbf16>
    %651 = vector.shape_cast %648 : vector<32x256xbf16> to vector<1x32x256xbf16>
    tpu.vector_store %arg6[%c2_393, %c0_394, %c0_395], %651 {strides = array<i32>} : memref<32x32x256xbf16, #tpu.memory_space<vmem>>, vector<1x32x256xbf16>,
    %c3_396 = arith.constant 3 : index
    %c0_397 = arith.constant 0 : index
    %c0_398 = arith.constant 0 : index
    %652 = vector.load %arg1[%c3_396, %c0_397, %c0_398] : memref<32x32x256xbf16, #tpu.memory_space<vmem>>, vector<1x32x256xbf16>
    %653 = vector.shape_cast %652 : vector<1x32x256xbf16> to vector<32x256xbf16>
    %654 = arith.extf %653 : vector<32x256xbf16> to vector<32x256xf32>
    %655 = vector.extract_strided_slice %621 {offsets = [0, 3], sizes = [32, 1], strides = [1, 1]} : vector<32x32xf32> to vector<32x1xf32>
    %656 = vector.broadcast %655 : vector<32x1xf32> to vector<32x256xf32>
    %657 = arith.addf %654, %656 : vector<32x256xf32>
    %658 = arith.truncf %657 : vector<32x256xf32> to vector<32x256xbf16>
    %c3_399 = arith.constant 3 : index
    %c0_400 = arith.constant 0 : index
    %c0_401 = arith.constant 0 : index
    %659 = vector.load %arg6[%c3_399, %c0_400, %c0_401] : memref<32x32x256xbf16, #tpu.memory_space<vmem>>, vector<1x32x256xbf16>
    %660 = vector.shape_cast %659 : vector<1x32x256xbf16> to vector<32x256xbf16>
    %661 = vector.shape_cast %658 : vector<32x256xbf16> to vector<1x32x256xbf16>
    tpu.vector_store %arg6[%c3_399, %c0_400, %c0_401], %661 {strides = array<i32>} : memref<32x32x256xbf16, #tpu.memory_space<vmem>>, vector<1x32x256xbf16>,
    %c4_402 = arith.constant 4 : index
    %c0_403 = arith.constant 0 : index
    %c0_404 = arith.constant 0 : index
    %662 = vector.load %arg1[%c4_402, %c0_403, %c0_404] : memref<32x32x256xbf16, #tpu.memory_space<vmem>>, vector<1x32x256xbf16>
    %663 = vector.shape_cast %662 : vector<1x32x256xbf16> to vector<32x256xbf16>
    %664 = arith.extf %663 : vector<32x256xbf16> to vector<32x256xf32>
    %665 = vector.extract_strided_slice %621 {offsets = [0, 4], sizes = [32, 1], strides = [1, 1]} : vector<32x32xf32> to vector<32x1xf32>
    %666 = vector.broadcast %665 : vector<32x1xf32> to vector<32x256xf32>
    %667 = arith.addf %664, %666 : vector<32x256xf32>
    %668 = arith.truncf %667 : vector<32x256xf32> to vector<32x256xbf16>
    %c4_405 = arith.constant 4 : index
    %c0_406 = arith.constant 0 : index
    %c0_407 = arith.constant 0 : index
    %669 = vector.load %arg6[%c4_405, %c0_406, %c0_407] : memref<32x32x256xbf16, #tpu.memory_space<vmem>>, vector<1x32x256xbf16>
    %670 = vector.shape_cast %669 : vector<1x32x256xbf16> to vector<32x256xbf16>
    %671 = vector.shape_cast %668 : vector<32x256xbf16> to vector<1x32x256xbf16>
    tpu.vector_store %arg6[%c4_405, %c0_406, %c0_407], %671 {strides = array<i32>} : memref<32x32x256xbf16, #tpu.memory_space<vmem>>, vector<1x32x256xbf16>,
    %c5_408 = arith.constant 5 : index
    %c0_409 = arith.constant 0 : index
    %c0_410 = arith.constant 0 : index
    %672 = vector.load %arg1[%c5_408, %c0_409, %c0_410] : memref<32x32x256xbf16, #tpu.memory_space<vmem>>, vector<1x32x256xbf16>
    %673 = vector.shape_cast %672 : vector<1x32x256xbf16> to vector<32x256xbf16>
    %674 = arith.extf %673 : vector<32x256xbf16> to vector<32x256xf32>
    %675 = vector.extract_strided_slice %621 {offsets = [0, 5], sizes = [32, 1], strides = [1, 1]} : vector<32x32xf32> to vector<32x1xf32>
    %676 = vector.broadcast %675 : vector<32x1xf32> to vector<32x256xf32>
    %677 = arith.addf %674, %676 : vector<32x256xf32>
    %678 = arith.truncf %677 : vector<32x256xf32> to vector<32x256xbf16>
    %c5_411 = arith.constant 5 : index
    %c0_412 = arith.constant 0 : index
    %c0_413 = arith.constant 0 : index
    %679 = vector.load %arg6[%c5_411, %c0_412, %c0_413] : memref<32x32x256xbf16, #tpu.memory_space<vmem>>, vector<1x32x256xbf16>
    %680 = vector.shape_cast %679 : vector<1x32x256xbf16> to vector<32x256xbf16>
    %681 = vector.shape_cast %678 : vector<32x256xbf16> to vector<1x32x256xbf16>
    tpu.vector_store %arg6[%c5_411, %c0_412, %c0_413], %681 {strides = array<i32>} : memref<32x32x256xbf16, #tpu.memory_space<vmem>>, vector<1x32x256xbf16>,
    %c6_414 = arith.constant 6 : index
    %c0_415 = arith.constant 0 : index
    %c0_416 = arith.constant 0 : index
    %682 = vector.load %arg1[%c6_414, %c0_415, %c0_416] : memref<32x32x256xbf16, #tpu.memory_space<vmem>>, vector<1x32x256xbf16>
    %683 = vector.shape_cast %682 : vector<1x32x256xbf16> to vector<32x256xbf16>
    %684 = arith.extf %683 : vector<32x256xbf16> to vector<32x256xf32>
    %685 = vector.extract_strided_slice %621 {offsets = [0, 6], sizes = [32, 1], strides = [1, 1]} : vector<32x32xf32> to vector<32x1xf32>
    %686 = vector.broadcast %685 : vector<32x1xf32> to vector<32x256xf32>
    %687 = arith.addf %684, %686 : vector<32x256xf32>
    %688 = arith.truncf %687 : vector<32x256xf32> to vector<32x256xbf16>
    %c6_417 = arith.constant 6 : index
    %c0_418 = arith.constant 0 : index
    %c0_419 = arith.constant 0 : index
    %689 = vector.load %arg6[%c6_417, %c0_418, %c0_419] : memref<32x32x256xbf16, #tpu.memory_space<vmem>>, vector<1x32x256xbf16>
    %690 = vector.shape_cast %689 : vector<1x32x256xbf16> to vector<32x256xbf16>
    %691 = vector.shape_cast %688 : vector<32x256xbf16> to vector<1x32x256xbf16>
    tpu.vector_store %arg6[%c6_417, %c0_418, %c0_419], %691 {strides = array<i32>} : memref<32x32x256xbf16, #tpu.memory_space<vmem>>, vector<1x32x256xbf16>,
    %c7_420 = arith.constant 7 : index
    %c0_421 = arith.constant 0 : index
    %c0_422 = arith.constant 0 : index
    %692 = vector.load %arg1[%c7_420, %c0_421, %c0_422] : memref<32x32x256xbf16, #tpu.memory_space<vmem>>, vector<1x32x256xbf16>
    %693 = vector.shape_cast %692 : vector<1x32x256xbf16> to vector<32x256xbf16>
    %694 = arith.extf %693 : vector<32x256xbf16> to vector<32x256xf32>
    %695 = vector.extract_strided_slice %621 {offsets = [0, 7], sizes = [32, 1], strides = [1, 1]} : vector<32x32xf32> to vector<32x1xf32>
    %696 = vector.broadcast %695 : vector<32x1xf32> to vector<32x256xf32>
    %697 = arith.addf %694, %696 : vector<32x256xf32>
    %698 = arith.truncf %697 : vector<32x256xf32> to vector<32x256xbf16>
    %c7_423 = arith.constant 7 : index
    %c0_424 = arith.constant 0 : index
    %c0_425 = arith.constant 0 : index
    %699 = vector.load %arg6[%c7_423, %c0_424, %c0_425] : memref<32x32x256xbf16, #tpu.memory_space<vmem>>, vector<1x32x256xbf16>
    %700 = vector.shape_cast %699 : vector<1x32x256xbf16> to vector<32x256xbf16>
    %701 = vector.shape_cast %698 : vector<32x256xbf16> to vector<1x32x256xbf16>
    tpu.vector_store %arg6[%c7_423, %c0_424, %c0_425], %701 {strides = array<i32>} : memref<32x32x256xbf16, #tpu.memory_space<vmem>>, vector<1x32x256xbf16>,
    %c8_426 = arith.constant 8 : index
    %c0_427 = arith.constant 0 : index
    %c0_428 = arith.constant 0 : index
    %702 = vector.load %arg1[%c8_426, %c0_427, %c0_428] : memref<32x32x256xbf16, #tpu.memory_space<vmem>>, vector<1x32x256xbf16>
    %703 = vector.shape_cast %702 : vector<1x32x256xbf16> to vector<32x256xbf16>
    %704 = arith.extf %703 : vector<32x256xbf16> to vector<32x256xf32>
    %705 = vector.extract_strided_slice %621 {offsets = [0, 8], sizes = [32, 1], strides = [1, 1]} : vector<32x32xf32> to vector<32x1xf32>
    %706 = vector.broadcast %705 : vector<32x1xf32> to vector<32x256xf32>
    %707 = arith.addf %704, %706 : vector<32x256xf32>
    %708 = arith.truncf %707 : vector<32x256xf32> to vector<32x256xbf16>
    %c8_429 = arith.constant 8 : index
    %c0_430 = arith.constant 0 : index
    %c0_431 = arith.constant 0 : index
    %709 = vector.load %arg6[%c8_429, %c0_430, %c0_431] : memref<32x32x256xbf16, #tpu.memory_space<vmem>>, vector<1x32x256xbf16>
    %710 = vector.shape_cast %709 : vector<1x32x256xbf16> to vector<32x256xbf16>
    %711 = vector.shape_cast %708 : vector<32x256xbf16> to vector<1x32x256xbf16>
    tpu.vector_store %arg6[%c8_429, %c0_430, %c0_431], %711 {strides = array<i32>} : memref<32x32x256xbf16, #tpu.memory_space<vmem>>, vector<1x32x256xbf16>,
    %c9_432 = arith.constant 9 : index
    %c0_433 = arith.constant 0 : index
    %c0_434 = arith.constant 0 : index
    %712 = vector.load %arg1[%c9_432, %c0_433, %c0_434] : memref<32x32x256xbf16, #tpu.memory_space<vmem>>, vector<1x32x256xbf16>
    %713 = vector.shape_cast %712 : vector<1x32x256xbf16> to vector<32x256xbf16>
    %714 = arith.extf %713 : vector<32x256xbf16> to vector<32x256xf32>
    %715 = vector.extract_strided_slice %621 {offsets = [0, 9], sizes = [32, 1], strides = [1, 1]} : vector<32x32xf32> to vector<32x1xf32>
    %716 = vector.broadcast %715 : vector<32x1xf32> to vector<32x256xf32>
    %717 = arith.addf %714, %716 : vector<32x256xf32>
    %718 = arith.truncf %717 : vector<32x256xf32> to vector<32x256xbf16>
    %c9_435 = arith.constant 9 : index
    %c0_436 = arith.constant 0 : index
    %c0_437 = arith.constant 0 : index
    %719 = vector.load %arg6[%c9_435, %c0_436, %c0_437] : memref<32x32x256xbf16, #tpu.memory_space<vmem>>, vector<1x32x256xbf16>
    %720 = vector.shape_cast %719 : vector<1x32x256xbf16> to vector<32x256xbf16>
    %721 = vector.shape_cast %718 : vector<32x256xbf16> to vector<1x32x256xbf16>
    tpu.vector_store %arg6[%c9_435, %c0_436, %c0_437], %721 {strides = array<i32>} : memref<32x32x256xbf16, #tpu.memory_space<vmem>>, vector<1x32x256xbf16>,
    %c10_438 = arith.constant 10 : index
    %c0_439 = arith.constant 0 : index
    %c0_440 = arith.constant 0 : index
    %722 = vector.load %arg1[%c10_438, %c0_439, %c0_440] : memref<32x32x256xbf16, #tpu.memory_space<vmem>>, vector<1x32x256xbf16>
    %723 = vector.shape_cast %722 : vector<1x32x256xbf16> to vector<32x256xbf16>
    %724 = arith.extf %723 : vector<32x256xbf16> to vector<32x256xf32>
    %725 = vector.extract_strided_slice %621 {offsets = [0, 10], sizes = [32, 1], strides = [1, 1]} : vector<32x32xf32> to vector<32x1xf32>
    %726 = vector.broadcast %725 : vector<32x1xf32> to vector<32x256xf32>
    %727 = arith.addf %724, %726 : vector<32x256xf32>
    %728 = arith.truncf %727 : vector<32x256xf32> to vector<32x256xbf16>
    %c10_441 = arith.constant 10 : index
    %c0_442 = arith.constant 0 : index
    %c0_443 = arith.constant 0 : index
    %729 = vector.load %arg6[%c10_441, %c0_442, %c0_443] : memref<32x32x256xbf16, #tpu.memory_space<vmem>>, vector<1x32x256xbf16>
    %730 = vector.shape_cast %729 : vector<1x32x256xbf16> to vector<32x256xbf16>
    %731 = vector.shape_cast %728 : vector<32x256xbf16> to vector<1x32x256xbf16>
    tpu.vector_store %arg6[%c10_441, %c0_442, %c0_443], %731 {strides = array<i32>} : memref<32x32x256xbf16, #tpu.memory_space<vmem>>, vector<1x32x256xbf16>,
    %c11_444 = arith.constant 11 : index
    %c0_445 = arith.constant 0 : index
    %c0_446 = arith.constant 0 : index
    %732 = vector.load %arg1[%c11_444, %c0_445, %c0_446] : memref<32x32x256xbf16, #tpu.memory_space<vmem>>, vector<1x32x256xbf16>
    %733 = vector.shape_cast %732 : vector<1x32x256xbf16> to vector<32x256xbf16>
    %734 = arith.extf %733 : vector<32x256xbf16> to vector<32x256xf32>
    %735 = vector.extract_strided_slice %621 {offsets = [0, 11], sizes = [32, 1], strides = [1, 1]} : vector<32x32xf32> to vector<32x1xf32>
    %736 = vector.broadcast %735 : vector<32x1xf32> to vector<32x256xf32>
    %737 = arith.addf %734, %736 : vector<32x256xf32>
    %738 = arith.truncf %737 : vector<32x256xf32> to vector<32x256xbf16>
    %c11_447 = arith.constant 11 : index
    %c0_448 = arith.constant 0 : index
    %c0_449 = arith.constant 0 : index
    %739 = vector.load %arg6[%c11_447, %c0_448, %c0_449] : memref<32x32x256xbf16, #tpu.memory_space<vmem>>, vector<1x32x256xbf16>
    %740 = vector.shape_cast %739 : vector<1x32x256xbf16> to vector<32x256xbf16>
    %741 = vector.shape_cast %738 : vector<32x256xbf16> to vector<1x32x256xbf16>
    tpu.vector_store %arg6[%c11_447, %c0_448, %c0_449], %741 {strides = array<i32>} : memref<32x32x256xbf16, #tpu.memory_space<vmem>>, vector<1x32x256xbf16>,
    %c12_450 = arith.constant 12 : index
    %c0_451 = arith.constant 0 : index
    %c0_452 = arith.constant 0 : index
    %742 = vector.load %arg1[%c12_450, %c0_451, %c0_452] : memref<32x32x256xbf16, #tpu.memory_space<vmem>>, vector<1x32x256xbf16>
    %743 = vector.shape_cast %742 : vector<1x32x256xbf16> to vector<32x256xbf16>
    %744 = arith.extf %743 : vector<32x256xbf16> to vector<32x256xf32>
    %745 = vector.extract_strided_slice %621 {offsets = [0, 12], sizes = [32, 1], strides = [1, 1]} : vector<32x32xf32> to vector<32x1xf32>
    %746 = vector.broadcast %745 : vector<32x1xf32> to vector<32x256xf32>
    %747 = arith.addf %744, %746 : vector<32x256xf32>
    %748 = arith.truncf %747 : vector<32x256xf32> to vector<32x256xbf16>
    %c12_453 = arith.constant 12 : index
    %c0_454 = arith.constant 0 : index
    %c0_455 = arith.constant 0 : index
    %749 = vector.load %arg6[%c12_453, %c0_454, %c0_455] : memref<32x32x256xbf16, #tpu.memory_space<vmem>>, vector<1x32x256xbf16>
    %750 = vector.shape_cast %749 : vector<1x32x256xbf16> to vector<32x256xbf16>
    %751 = vector.shape_cast %748 : vector<32x256xbf16> to vector<1x32x256xbf16>
    tpu.vector_store %arg6[%c12_453, %c0_454, %c0_455], %751 {strides = array<i32>} : memref<32x32x256xbf16, #tpu.memory_space<vmem>>, vector<1x32x256xbf16>,
    %c13_456 = arith.constant 13 : index
    %c0_457 = arith.constant 0 : index
    %c0_458 = arith.constant 0 : index
    %752 = vector.load %arg1[%c13_456, %c0_457, %c0_458] : memref<32x32x256xbf16, #tpu.memory_space<vmem>>, vector<1x32x256xbf16>
    %753 = vector.shape_cast %752 : vector<1x32x256xbf16> to vector<32x256xbf16>
    %754 = arith.extf %753 : vector<32x256xbf16> to vector<32x256xf32>
    %755 = vector.extract_strided_slice %621 {offsets = [0, 13], sizes = [32, 1], strides = [1, 1]} : vector<32x32xf32> to vector<32x1xf32>
    %756 = vector.broadcast %755 : vector<32x1xf32> to vector<32x256xf32>
    %757 = arith.addf %754, %756 : vector<32x256xf32>
    %758 = arith.truncf %757 : vector<32x256xf32> to vector<32x256xbf16>
    %c13_459 = arith.constant 13 : index
    %c0_460 = arith.constant 0 : index
    %c0_461 = arith.constant 0 : index
    %759 = vector.load %arg6[%c13_459, %c0_460, %c0_461] : memref<32x32x256xbf16, #tpu.memory_space<vmem>>, vector<1x32x256xbf16>
    %760 = vector.shape_cast %759 : vector<1x32x256xbf16> to vector<32x256xbf16>
    %761 = vector.shape_cast %758 : vector<32x256xbf16> to vector<1x32x256xbf16>
    tpu.vector_store %arg6[%c13_459, %c0_460, %c0_461], %761 {strides = array<i32>} : memref<32x32x256xbf16, #tpu.memory_space<vmem>>, vector<1x32x256xbf16>,
    %c14_462 = arith.constant 14 : index
    %c0_463 = arith.constant 0 : index
    %c0_464 = arith.constant 0 : index
    %762 = vector.load %arg1[%c14_462, %c0_463, %c0_464] : memref<32x32x256xbf16, #tpu.memory_space<vmem>>, vector<1x32x256xbf16>
    %763 = vector.shape_cast %762 : vector<1x32x256xbf16> to vector<32x256xbf16>
    %764 = arith.extf %763 : vector<32x256xbf16> to vector<32x256xf32>
    %765 = vector.extract_strided_slice %621 {offsets = [0, 14], sizes = [32, 1], strides = [1, 1]} : vector<32x32xf32> to vector<32x1xf32>
    %766 = vector.broadcast %765 : vector<32x1xf32> to vector<32x256xf32>
    %767 = arith.addf %764, %766 : vector<32x256xf32>
    %768 = arith.truncf %767 : vector<32x256xf32> to vector<32x256xbf16>
    %c14_465 = arith.constant 14 : index
    %c0_466 = arith.constant 0 : index
    %c0_467 = arith.constant 0 : index
    %769 = vector.load %arg6[%c14_465, %c0_466, %c0_467] : memref<32x32x256xbf16, #tpu.memory_space<vmem>>, vector<1x32x256xbf16>
    %770 = vector.shape_cast %769 : vector<1x32x256xbf16> to vector<32x256xbf16>
    %771 = vector.shape_cast %768 : vector<32x256xbf16> to vector<1x32x256xbf16>
    tpu.vector_store %arg6[%c14_465, %c0_466, %c0_467], %771 {strides = array<i32>} : memref<32x32x256xbf16, #tpu.memory_space<vmem>>, vector<1x32x256xbf16>,
    %c15_468 = arith.constant 15 : index
    %c0_469 = arith.constant 0 : index
    %c0_470 = arith.constant 0 : index
    %772 = vector.load %arg1[%c15_468, %c0_469, %c0_470] : memref<32x32x256xbf16, #tpu.memory_space<vmem>>, vector<1x32x256xbf16>
    %773 = vector.shape_cast %772 : vector<1x32x256xbf16> to vector<32x256xbf16>
    %774 = arith.extf %773 : vector<32x256xbf16> to vector<32x256xf32>
    %775 = vector.extract_strided_slice %621 {offsets = [0, 15], sizes = [32, 1], strides = [1, 1]} : vector<32x32xf32> to vector<32x1xf32>
    %776 = vector.broadcast %775 : vector<32x1xf32> to vector<32x256xf32>
    %777 = arith.addf %774, %776 : vector<32x256xf32>
    %778 = arith.truncf %777 : vector<32x256xf32> to vector<32x256xbf16>
    %c15_471 = arith.constant 15 : index
    %c0_472 = arith.constant 0 : index
    %c0_473 = arith.constant 0 : index
    %779 = vector.load %arg6[%c15_471, %c0_472, %c0_473] : memref<32x32x256xbf16, #tpu.memory_space<vmem>>, vector<1x32x256xbf16>
    %780 = vector.shape_cast %779 : vector<1x32x256xbf16> to vector<32x256xbf16>
    %781 = vector.shape_cast %778 : vector<32x256xbf16> to vector<1x32x256xbf16>
    tpu.vector_store %arg6[%c15_471, %c0_472, %c0_473], %781 {strides = array<i32>} : memref<32x32x256xbf16, #tpu.memory_space<vmem>>, vector<1x32x256xbf16>,
    %c16_474 = arith.constant 16 : index
    %c0_475 = arith.constant 0 : index
    %c0_476 = arith.constant 0 : index
    %782 = vector.load %arg1[%c16_474, %c0_475, %c0_476] : memref<32x32x256xbf16, #tpu.memory_space<vmem>>, vector<1x32x256xbf16>
    %783 = vector.shape_cast %782 : vector<1x32x256xbf16> to vector<32x256xbf16>
    %784 = arith.extf %783 : vector<32x256xbf16> to vector<32x256xf32>
    %785 = vector.extract_strided_slice %621 {offsets = [0, 16], sizes = [32, 1], strides = [1, 1]} : vector<32x32xf32> to vector<32x1xf32>
    %786 = vector.broadcast %785 : vector<32x1xf32> to vector<32x256xf32>
    %787 = arith.addf %784, %786 : vector<32x256xf32>
    %788 = arith.truncf %787 : vector<32x256xf32> to vector<32x256xbf16>
    %c16_477 = arith.constant 16 : index
    %c0_478 = arith.constant 0 : index
    %c0_479 = arith.constant 0 : index
    %789 = vector.load %arg6[%c16_477, %c0_478, %c0_479] : memref<32x32x256xbf16, #tpu.memory_space<vmem>>, vector<1x32x256xbf16>
    %790 = vector.shape_cast %789 : vector<1x32x256xbf16> to vector<32x256xbf16>
    %791 = vector.shape_cast %788 : vector<32x256xbf16> to vector<1x32x256xbf16>
    tpu.vector_store %arg6[%c16_477, %c0_478, %c0_479], %791 {strides = array<i32>} : memref<32x32x256xbf16, #tpu.memory_space<vmem>>, vector<1x32x256xbf16>,
    %c17_480 = arith.constant 17 : index
    %c0_481 = arith.constant 0 : index
    %c0_482 = arith.constant 0 : index
    %792 = vector.load %arg1[%c17_480, %c0_481, %c0_482] : memref<32x32x256xbf16, #tpu.memory_space<vmem>>, vector<1x32x256xbf16>
    %793 = vector.shape_cast %792 : vector<1x32x256xbf16> to vector<32x256xbf16>
    %794 = arith.extf %793 : vector<32x256xbf16> to vector<32x256xf32>
    %795 = vector.extract_strided_slice %621 {offsets = [0, 17], sizes = [32, 1], strides = [1, 1]} : vector<32x32xf32> to vector<32x1xf32>
    %796 = vector.broadcast %795 : vector<32x1xf32> to vector<32x256xf32>
    %797 = arith.addf %794, %796 : vector<32x256xf32>
    %798 = arith.truncf %797 : vector<32x256xf32> to vector<32x256xbf16>
    %c17_483 = arith.constant 17 : index
    %c0_484 = arith.constant 0 : index
    %c0_485 = arith.constant 0 : index
    %799 = vector.load %arg6[%c17_483, %c0_484, %c0_485] : memref<32x32x256xbf16, #tpu.memory_space<vmem>>, vector<1x32x256xbf16>
    %800 = vector.shape_cast %799 : vector<1x32x256xbf16> to vector<32x256xbf16>
    %801 = vector.shape_cast %798 : vector<32x256xbf16> to vector<1x32x256xbf16>
    tpu.vector_store %arg6[%c17_483, %c0_484, %c0_485], %801 {strides = array<i32>} : memref<32x32x256xbf16, #tpu.memory_space<vmem>>, vector<1x32x256xbf16>,
    %c18_486 = arith.constant 18 : index
    %c0_487 = arith.constant 0 : index
    %c0_488 = arith.constant 0 : index
    %802 = vector.load %arg1[%c18_486, %c0_487, %c0_488] : memref<32x32x256xbf16, #tpu.memory_space<vmem>>, vector<1x32x256xbf16>
    %803 = vector.shape_cast %802 : vector<1x32x256xbf16> to vector<32x256xbf16>
    %804 = arith.extf %803 : vector<32x256xbf16> to vector<32x256xf32>
    %805 = vector.extract_strided_slice %621 {offsets = [0, 18], sizes = [32, 1], strides = [1, 1]} : vector<32x32xf32> to vector<32x1xf32>
    %806 = vector.broadcast %805 : vector<32x1xf32> to vector<32x256xf32>
    %807 = arith.addf %804, %806 : vector<32x256xf32>
    %808 = arith.truncf %807 : vector<32x256xf32> to vector<32x256xbf16>
    %c18_489 = arith.constant 18 : index
    %c0_490 = arith.constant 0 : index
    %c0_491 = arith.constant 0 : index
    %809 = vector.load %arg6[%c18_489, %c0_490, %c0_491] : memref<32x32x256xbf16, #tpu.memory_space<vmem>>, vector<1x32x256xbf16>
    %810 = vector.shape_cast %809 : vector<1x32x256xbf16> to vector<32x256xbf16>
    %811 = vector.shape_cast %808 : vector<32x256xbf16> to vector<1x32x256xbf16>
    tpu.vector_store %arg6[%c18_489, %c0_490, %c0_491], %811 {strides = array<i32>} : memref<32x32x256xbf16, #tpu.memory_space<vmem>>, vector<1x32x256xbf16>,
    %c19_492 = arith.constant 19 : index
    %c0_493 = arith.constant 0 : index
    %c0_494 = arith.constant 0 : index
    %812 = vector.load %arg1[%c19_492, %c0_493, %c0_494] : memref<32x32x256xbf16, #tpu.memory_space<vmem>>, vector<1x32x256xbf16>
    %813 = vector.shape_cast %812 : vector<1x32x256xbf16> to vector<32x256xbf16>
    %814 = arith.extf %813 : vector<32x256xbf16> to vector<32x256xf32>
    %815 = vector.extract_strided_slice %621 {offsets = [0, 19], sizes = [32, 1], strides = [1, 1]} : vector<32x32xf32> to vector<32x1xf32>
    %816 = vector.broadcast %815 : vector<32x1xf32> to vector<32x256xf32>
    %817 = arith.addf %814, %816 : vector<32x256xf32>
    %818 = arith.truncf %817 : vector<32x256xf32> to vector<32x256xbf16>
    %c19_495 = arith.constant 19 : index
    %c0_496 = arith.constant 0 : index
    %c0_497 = arith.constant 0 : index
    %819 = vector.load %arg6[%c19_495, %c0_496, %c0_497] : memref<32x32x256xbf16, #tpu.memory_space<vmem>>, vector<1x32x256xbf16>
    %820 = vector.shape_cast %819 : vector<1x32x256xbf16> to vector<32x256xbf16>
    %821 = vector.shape_cast %818 : vector<32x256xbf16> to vector<1x32x256xbf16>
    tpu.vector_store %arg6[%c19_495, %c0_496, %c0_497], %821 {strides = array<i32>} : memref<32x32x256xbf16, #tpu.memory_space<vmem>>, vector<1x32x256xbf16>,
    %c20_498 = arith.constant 20 : index
    %c0_499 = arith.constant 0 : index
    %c0_500 = arith.constant 0 : index
    %822 = vector.load %arg1[%c20_498, %c0_499, %c0_500] : memref<32x32x256xbf16, #tpu.memory_space<vmem>>, vector<1x32x256xbf16>
    %823 = vector.shape_cast %822 : vector<1x32x256xbf16> to vector<32x256xbf16>
    %824 = arith.extf %823 : vector<32x256xbf16> to vector<32x256xf32>
    %825 = vector.extract_strided_slice %621 {offsets = [0, 20], sizes = [32, 1], strides = [1, 1]} : vector<32x32xf32> to vector<32x1xf32>
    %826 = vector.broadcast %825 : vector<32x1xf32> to vector<32x256xf32>
    %827 = arith.addf %824, %826 : vector<32x256xf32>
    %828 = arith.truncf %827 : vector<32x256xf32> to vector<32x256xbf16>
    %c20_501 = arith.constant 20 : index
    %c0_502 = arith.constant 0 : index
    %c0_503 = arith.constant 0 : index
    %829 = vector.load %arg6[%c20_501, %c0_502, %c0_503] : memref<32x32x256xbf16, #tpu.memory_space<vmem>>, vector<1x32x256xbf16>
    %830 = vector.shape_cast %829 : vector<1x32x256xbf16> to vector<32x256xbf16>
    %831 = vector.shape_cast %828 : vector<32x256xbf16> to vector<1x32x256xbf16>
    tpu.vector_store %arg6[%c20_501, %c0_502, %c0_503], %831 {strides = array<i32>} : memref<32x32x256xbf16, #tpu.memory_space<vmem>>, vector<1x32x256xbf16>,
    %c21_504 = arith.constant 21 : index
    %c0_505 = arith.constant 0 : index
    %c0_506 = arith.constant 0 : index
    %832 = vector.load %arg1[%c21_504, %c0_505, %c0_506] : memref<32x32x256xbf16, #tpu.memory_space<vmem>>, vector<1x32x256xbf16>
    %833 = vector.shape_cast %832 : vector<1x32x256xbf16> to vector<32x256xbf16>
    %834 = arith.extf %833 : vector<32x256xbf16> to vector<32x256xf32>
    %835 = vector.extract_strided_slice %621 {offsets = [0, 21], sizes = [32, 1], strides = [1, 1]} : vector<32x32xf32> to vector<32x1xf32>
    %836 = vector.broadcast %835 : vector<32x1xf32> to vector<32x256xf32>
    %837 = arith.addf %834, %836 : vector<32x256xf32>
    %838 = arith.truncf %837 : vector<32x256xf32> to vector<32x256xbf16>
    %c21_507 = arith.constant 21 : index
    %c0_508 = arith.constant 0 : index
    %c0_509 = arith.constant 0 : index
    %839 = vector.load %arg6[%c21_507, %c0_508, %c0_509] : memref<32x32x256xbf16, #tpu.memory_space<vmem>>, vector<1x32x256xbf16>
    %840 = vector.shape_cast %839 : vector<1x32x256xbf16> to vector<32x256xbf16>
    %841 = vector.shape_cast %838 : vector<32x256xbf16> to vector<1x32x256xbf16>
    tpu.vector_store %arg6[%c21_507, %c0_508, %c0_509], %841 {strides = array<i32>} : memref<32x32x256xbf16, #tpu.memory_space<vmem>>, vector<1x32x256xbf16>,
    %c22_510 = arith.constant 22 : index
    %c0_511 = arith.constant 0 : index
    %c0_512 = arith.constant 0 : index
    %842 = vector.load %arg1[%c22_510, %c0_511, %c0_512] : memref<32x32x256xbf16, #tpu.memory_space<vmem>>, vector<1x32x256xbf16>
    %843 = vector.shape_cast %842 : vector<1x32x256xbf16> to vector<32x256xbf16>
    %844 = arith.extf %843 : vector<32x256xbf16> to vector<32x256xf32>
    %845 = vector.extract_strided_slice %621 {offsets = [0, 22], sizes = [32, 1], strides = [1, 1]} : vector<32x32xf32> to vector<32x1xf32>
    %846 = vector.broadcast %845 : vector<32x1xf32> to vector<32x256xf32>
    %847 = arith.addf %844, %846 : vector<32x256xf32>
    %848 = arith.truncf %847 : vector<32x256xf32> to vector<32x256xbf16>
    %c22_513 = arith.constant 22 : index
    %c0_514 = arith.constant 0 : index
    %c0_515 = arith.constant 0 : index
    %849 = vector.load %arg6[%c22_513, %c0_514, %c0_515] : memref<32x32x256xbf16, #tpu.memory_space<vmem>>, vector<1x32x256xbf16>
    %850 = vector.shape_cast %849 : vector<1x32x256xbf16> to vector<32x256xbf16>
    %851 = vector.shape_cast %848 : vector<32x256xbf16> to vector<1x32x256xbf16>
    tpu.vector_store %arg6[%c22_513, %c0_514, %c0_515], %851 {strides = array<i32>} : memref<32x32x256xbf16, #tpu.memory_space<vmem>>, vector<1x32x256xbf16>,
    %c23_516 = arith.constant 23 : index
    %c0_517 = arith.constant 0 : index
    %c0_518 = arith.constant 0 : index
    %852 = vector.load %arg1[%c23_516, %c0_517, %c0_518] : memref<32x32x256xbf16, #tpu.memory_space<vmem>>, vector<1x32x256xbf16>
    %853 = vector.shape_cast %852 : vector<1x32x256xbf16> to vector<32x256xbf16>
    %854 = arith.extf %853 : vector<32x256xbf16> to vector<32x256xf32>
    %855 = vector.extract_strided_slice %621 {offsets = [0, 23], sizes = [32, 1], strides = [1, 1]} : vector<32x32xf32> to vector<32x1xf32>
    %856 = vector.broadcast %855 : vector<32x1xf32> to vector<32x256xf32>
    %857 = arith.addf %854, %856 : vector<32x256xf32>
    %858 = arith.truncf %857 : vector<32x256xf32> to vector<32x256xbf16>
    %c23_519 = arith.constant 23 : index
    %c0_520 = arith.constant 0 : index
    %c0_521 = arith.constant 0 : index
    %859 = vector.load %arg6[%c23_519, %c0_520, %c0_521] : memref<32x32x256xbf16, #tpu.memory_space<vmem>>, vector<1x32x256xbf16>
    %860 = vector.shape_cast %859 : vector<1x32x256xbf16> to vector<32x256xbf16>
    %861 = vector.shape_cast %858 : vector<32x256xbf16> to vector<1x32x256xbf16>
    tpu.vector_store %arg6[%c23_519, %c0_520, %c0_521], %861 {strides = array<i32>} : memref<32x32x256xbf16, #tpu.memory_space<vmem>>, vector<1x32x256xbf16>,
    %c24_522 = arith.constant 24 : index
    %c0_523 = arith.constant 0 : index
    %c0_524 = arith.constant 0 : index
    %862 = vector.load %arg1[%c24_522, %c0_523, %c0_524] : memref<32x32x256xbf16, #tpu.memory_space<vmem>>, vector<1x32x256xbf16>
    %863 = vector.shape_cast %862 : vector<1x32x256xbf16> to vector<32x256xbf16>
    %864 = arith.extf %863 : vector<32x256xbf16> to vector<32x256xf32>
    %865 = vector.extract_strided_slice %621 {offsets = [0, 24], sizes = [32, 1], strides = [1, 1]} : vector<32x32xf32> to vector<32x1xf32>
    %866 = vector.broadcast %865 : vector<32x1xf32> to vector<32x256xf32>
    %867 = arith.addf %864, %866 : vector<32x256xf32>
    %868 = arith.truncf %867 : vector<32x256xf32> to vector<32x256xbf16>
    %c24_525 = arith.constant 24 : index
    %c0_526 = arith.constant 0 : index
    %c0_527 = arith.constant 0 : index
    %869 = vector.load %arg6[%c24_525, %c0_526, %c0_527] : memref<32x32x256xbf16, #tpu.memory_space<vmem>>, vector<1x32x256xbf16>
    %870 = vector.shape_cast %869 : vector<1x32x256xbf16> to vector<32x256xbf16>
    %871 = vector.shape_cast %868 : vector<32x256xbf16> to vector<1x32x256xbf16>
    tpu.vector_store %arg6[%c24_525, %c0_526, %c0_527], %871 {strides = array<i32>} : memref<32x32x256xbf16, #tpu.memory_space<vmem>>, vector<1x32x256xbf16>,
    %c25_528 = arith.constant 25 : index
    %c0_529 = arith.constant 0 : index
    %c0_530 = arith.constant 0 : index
    %872 = vector.load %arg1[%c25_528, %c0_529, %c0_530] : memref<32x32x256xbf16, #tpu.memory_space<vmem>>, vector<1x32x256xbf16>
    %873 = vector.shape_cast %872 : vector<1x32x256xbf16> to vector<32x256xbf16>
    %874 = arith.extf %873 : vector<32x256xbf16> to vector<32x256xf32>
    %875 = vector.extract_strided_slice %621 {offsets = [0, 25], sizes = [32, 1], strides = [1, 1]} : vector<32x32xf32> to vector<32x1xf32>
    %876 = vector.broadcast %875 : vector<32x1xf32> to vector<32x256xf32>
    %877 = arith.addf %874, %876 : vector<32x256xf32>
    %878 = arith.truncf %877 : vector<32x256xf32> to vector<32x256xbf16>
    %c25_531 = arith.constant 25 : index
    %c0_532 = arith.constant 0 : index
    %c0_533 = arith.constant 0 : index
    %879 = vector.load %arg6[%c25_531, %c0_532, %c0_533] : memref<32x32x256xbf16, #tpu.memory_space<vmem>>, vector<1x32x256xbf16>
    %880 = vector.shape_cast %879 : vector<1x32x256xbf16> to vector<32x256xbf16>
    %881 = vector.shape_cast %878 : vector<32x256xbf16> to vector<1x32x256xbf16>
    tpu.vector_store %arg6[%c25_531, %c0_532, %c0_533], %881 {strides = array<i32>} : memref<32x32x256xbf16, #tpu.memory_space<vmem>>, vector<1x32x256xbf16>,
    %c26_534 = arith.constant 26 : index
    %c0_535 = arith.constant 0 : index
    %c0_536 = arith.constant 0 : index
    %882 = vector.load %arg1[%c26_534, %c0_535, %c0_536] : memref<32x32x256xbf16, #tpu.memory_space<vmem>>, vector<1x32x256xbf16>
    %883 = vector.shape_cast %882 : vector<1x32x256xbf16> to vector<32x256xbf16>
    %884 = arith.extf %883 : vector<32x256xbf16> to vector<32x256xf32>
    %885 = vector.extract_strided_slice %621 {offsets = [0, 26], sizes = [32, 1], strides = [1, 1]} : vector<32x32xf32> to vector<32x1xf32>
    %886 = vector.broadcast %885 : vector<32x1xf32> to vector<32x256xf32>
    %887 = arith.addf %884, %886 : vector<32x256xf32>
    %888 = arith.truncf %887 : vector<32x256xf32> to vector<32x256xbf16>
    %c26_537 = arith.constant 26 : index
    %c0_538 = arith.constant 0 : index
    %c0_539 = arith.constant 0 : index
    %889 = vector.load %arg6[%c26_537, %c0_538, %c0_539] : memref<32x32x256xbf16, #tpu.memory_space<vmem>>, vector<1x32x256xbf16>
    %890 = vector.shape_cast %889 : vector<1x32x256xbf16> to vector<32x256xbf16>
    %891 = vector.shape_cast %888 : vector<32x256xbf16> to vector<1x32x256xbf16>
    tpu.vector_store %arg6[%c26_537, %c0_538, %c0_539], %891 {strides = array<i32>} : memref<32x32x256xbf16, #tpu.memory_space<vmem>>, vector<1x32x256xbf16>,
    %c27_540 = arith.constant 27 : index
    %c0_541 = arith.constant 0 : index
    %c0_542 = arith.constant 0 : index
    %892 = vector.load %arg1[%c27_540, %c0_541, %c0_542] : memref<32x32x256xbf16, #tpu.memory_space<vmem>>, vector<1x32x256xbf16>
    %893 = vector.shape_cast %892 : vector<1x32x256xbf16> to vector<32x256xbf16>
    %894 = arith.extf %893 : vector<32x256xbf16> to vector<32x256xf32>
    %895 = vector.extract_strided_slice %621 {offsets = [0, 27], sizes = [32, 1], strides = [1, 1]} : vector<32x32xf32> to vector<32x1xf32>
    %896 = vector.broadcast %895 : vector<32x1xf32> to vector<32x256xf32>
    %897 = arith.addf %894, %896 : vector<32x256xf32>
    %898 = arith.truncf %897 : vector<32x256xf32> to vector<32x256xbf16>
    %c27_543 = arith.constant 27 : index
    %c0_544 = arith.constant 0 : index
    %c0_545 = arith.constant 0 : index
    %899 = vector.load %arg6[%c27_543, %c0_544, %c0_545] : memref<32x32x256xbf16, #tpu.memory_space<vmem>>, vector<1x32x256xbf16>
    %900 = vector.shape_cast %899 : vector<1x32x256xbf16> to vector<32x256xbf16>
    %901 = vector.shape_cast %898 : vector<32x256xbf16> to vector<1x32x256xbf16>
    tpu.vector_store %arg6[%c27_543, %c0_544, %c0_545], %901 {strides = array<i32>} : memref<32x32x256xbf16, #tpu.memory_space<vmem>>, vector<1x32x256xbf16>,
    %c28_546 = arith.constant 28 : index
    %c0_547 = arith.constant 0 : index
    %c0_548 = arith.constant 0 : index
    %902 = vector.load %arg1[%c28_546, %c0_547, %c0_548] : memref<32x32x256xbf16, #tpu.memory_space<vmem>>, vector<1x32x256xbf16>
    %903 = vector.shape_cast %902 : vector<1x32x256xbf16> to vector<32x256xbf16>
    %904 = arith.extf %903 : vector<32x256xbf16> to vector<32x256xf32>
    %905 = vector.extract_strided_slice %621 {offsets = [0, 28], sizes = [32, 1], strides = [1, 1]} : vector<32x32xf32> to vector<32x1xf32>
    %906 = vector.broadcast %905 : vector<32x1xf32> to vector<32x256xf32>
    %907 = arith.addf %904, %906 : vector<32x256xf32>
    %908 = arith.truncf %907 : vector<32x256xf32> to vector<32x256xbf16>
    %c28_549 = arith.constant 28 : index
    %c0_550 = arith.constant 0 : index
    %c0_551 = arith.constant 0 : index
    %909 = vector.load %arg6[%c28_549, %c0_550, %c0_551] : memref<32x32x256xbf16, #tpu.memory_space<vmem>>, vector<1x32x256xbf16>
    %910 = vector.shape_cast %909 : vector<1x32x256xbf16> to vector<32x256xbf16>
    %911 = vector.shape_cast %908 : vector<32x256xbf16> to vector<1x32x256xbf16>
    tpu.vector_store %arg6[%c28_549, %c0_550, %c0_551], %911 {strides = array<i32>} : memref<32x32x256xbf16, #tpu.memory_space<vmem>>, vector<1x32x256xbf16>,
    %c29_552 = arith.constant 29 : index
    %c0_553 = arith.constant 0 : index
    %c0_554 = arith.constant 0 : index
    %912 = vector.load %arg1[%c29_552, %c0_553, %c0_554] : memref<32x32x256xbf16, #tpu.memory_space<vmem>>, vector<1x32x256xbf16>
    %913 = vector.shape_cast %912 : vector<1x32x256xbf16> to vector<32x256xbf16>
    %914 = arith.extf %913 : vector<32x256xbf16> to vector<32x256xf32>
    %915 = vector.extract_strided_slice %621 {offsets = [0, 29], sizes = [32, 1], strides = [1, 1]} : vector<32x32xf32> to vector<32x1xf32>
    %916 = vector.broadcast %915 : vector<32x1xf32> to vector<32x256xf32>
    %917 = arith.addf %914, %916 : vector<32x256xf32>
    %918 = arith.truncf %917 : vector<32x256xf32> to vector<32x256xbf16>
    %c29_555 = arith.constant 29 : index
    %c0_556 = arith.constant 0 : index
    %c0_557 = arith.constant 0 : index
    %919 = vector.load %arg6[%c29_555, %c0_556, %c0_557] : memref<32x32x256xbf16, #tpu.memory_space<vmem>>, vector<1x32x256xbf16>
    %920 = vector.shape_cast %919 : vector<1x32x256xbf16> to vector<32x256xbf16>
    %921 = vector.shape_cast %918 : vector<32x256xbf16> to vector<1x32x256xbf16>
    tpu.vector_store %arg6[%c29_555, %c0_556, %c0_557], %921 {strides = array<i32>} : memref<32x32x256xbf16, #tpu.memory_space<vmem>>, vector<1x32x256xbf16>,
    %c30_558 = arith.constant 30 : index
    %c0_559 = arith.constant 0 : index
    %c0_560 = arith.constant 0 : index
    %922 = vector.load %arg1[%c30_558, %c0_559, %c0_560] : memref<32x32x256xbf16, #tpu.memory_space<vmem>>, vector<1x32x256xbf16>
    %923 = vector.shape_cast %922 : vector<1x32x256xbf16> to vector<32x256xbf16>
    %924 = arith.extf %923 : vector<32x256xbf16> to vector<32x256xf32>
    %925 = vector.extract_strided_slice %621 {offsets = [0, 30], sizes = [32, 1], strides = [1, 1]} : vector<32x32xf32> to vector<32x1xf32>
    %926 = vector.broadcast %925 : vector<32x1xf32> to vector<32x256xf32>
    %927 = arith.addf %924, %926 : vector<32x256xf32>
    %928 = arith.truncf %927 : vector<32x256xf32> to vector<32x256xbf16>
    %c30_561 = arith.constant 30 : index
    %c0_562 = arith.constant 0 : index
    %c0_563 = arith.constant 0 : index
    %929 = vector.load %arg6[%c30_561, %c0_562, %c0_563] : memref<32x32x256xbf16, #tpu.memory_space<vmem>>, vector<1x32x256xbf16>
    %930 = vector.shape_cast %929 : vector<1x32x256xbf16> to vector<32x256xbf16>
    %931 = vector.shape_cast %928 : vector<32x256xbf16> to vector<1x32x256xbf16>
    tpu.vector_store %arg6[%c30_561, %c0_562, %c0_563], %931 {strides = array<i32>} : memref<32x32x256xbf16, #tpu.memory_space<vmem>>, vector<1x32x256xbf16>,
    %c31_564 = arith.constant 31 : index
    %c0_565 = arith.constant 0 : index
    %c0_566 = arith.constant 0 : index
    %932 = vector.load %arg1[%c31_564, %c0_565, %c0_566] : memref<32x32x256xbf16, #tpu.memory_space<vmem>>, vector<1x32x256xbf16>
    %933 = vector.shape_cast %932 : vector<1x32x256xbf16> to vector<32x256xbf16>
    %934 = arith.extf %933 : vector<32x256xbf16> to vector<32x256xf32>
    %935 = vector.extract_strided_slice %621 {offsets = [0, 31], sizes = [32, 1], strides = [1, 1]} : vector<32x32xf32> to vector<32x1xf32>
    %936 = vector.broadcast %935 : vector<32x1xf32> to vector<32x256xf32>
    %937 = arith.addf %934, %936 : vector<32x256xf32>
    %938 = arith.truncf %937 : vector<32x256xf32> to vector<32x256xbf16>
    %c31_567 = arith.constant 31 : index
    %c0_568 = arith.constant 0 : index
    %c0_569 = arith.constant 0 : index
    %939 = vector.load %arg6[%c31_567, %c0_568, %c0_569] : memref<32x32x256xbf16, #tpu.memory_space<vmem>>, vector<1x32x256xbf16>
    %940 = vector.shape_cast %939 : vector<1x32x256xbf16> to vector<32x256xbf16>
    %941 = vector.shape_cast %938 : vector<32x256xbf16> to vector<1x32x256xbf16>
    tpu.vector_store %arg6[%c31_567, %c0_568, %c0_569], %941 {strides = array<i32>} : memref<32x32x256xbf16, #tpu.memory_space<vmem>>, vector<1x32x256xbf16>,
    return
  }
  func.func @transform_0(%arg0: i32) -> (i32, i32, i32) {
    %c0_i32 = arith.constant 0 : i32
    %c0_i32_0 = arith.constant 0 : i32
    %c0_i32_1 = arith.constant 0 : i32
    return %arg0, %c0_i32, %c0_i32_0 : i32, i32, i32
  }
  func.func @transform_1(%arg0: i32) -> (i32, i32) {
    %c0_i32 = arith.constant 0 : i32
    %c0_i32_0 = arith.constant 0 : i32
    %c0_i32_1 = arith.constant 0 : i32
    return %c0_i32, %c0_i32_0 : i32, i32
  }
  func.func @transform_2(%arg0: i32) -> (i32, i32) {
    %c0_i32 = arith.constant 0 : i32
    %c0_i32_0 = arith.constant 0 : i32
    %c0_i32_1 = arith.constant 0 : i32
    return %c0_i32, %c0_i32_0 : i32, i32
  }
  func.func @transform_3(%arg0: i32) -> (i32, i32) {
    %c0_i32 = arith.constant 0 : i32
    %c0_i32_0 = arith.constant 0 : i32
    %c0_i32_1 = arith.constant 0 : i32
    return %c0_i32, %c0_i32_0 : i32, i32
  }
  func.func @transform_4(%arg0: i32) -> (i32, i32) {
    %c0_i32 = arith.constant 0 : i32
    %c0_i32_0 = arith.constant 0 : i32
    %c0_i32_1 = arith.constant 0 : i32
    return %c0_i32, %c0_i32_0 : i32, i32
  }
  func.func @transform_5(%arg0: i32) -> (i32, i32, i32) {
    %c0_i32 = arith.constant 0 : i32
    %c0_i32_0 = arith.constant 0 : i32
    %c0_i32_1 = arith.constant 0 : i32
    return %arg0, %c0_i32, %c0_i32_0 : i32, i32, i32
  }
}

</mosaic_0001>

<llo_original>
// kernel: ms_context_block2d.1
$region0: #{ms_context_block2d.1}
  #allocation0 [shape = 'u32[]', space=smem, size = 0x4, offset = 0x4, fixed_abs, tag = 'smem constant byte address 0x4 - core index']
  #allocation1 [shape = 'u32[144,128]{1,0:T(1,128)}', space=vmem, size = 0x12000, scoped, tag = 'internal scratch']
  #allocation2 [shape = 'f32[32,256]{1,0:T(8,128)}', space=vmem, size = 0x8000, scoped, tag = 'scratch operand']
  #allocation3 [shape = 'f32[32,32]{1,0:T(8,128)}', space=vmem, size = 0x4000, scoped, tag = 'scratch operand']
  %s0 = inlined_call_operand.vmem [shape: bf16[64,32,256], index: 0, kind: input, shape index: {}]
  %s1 = inlined_call_operand.vmem [shape: bf16[256,128], index: 1, kind: input, shape index: {}]
  %s2 = inlined_call_operand.vmem [shape: f32[4,35], index: 2, kind: input, shape index: {}]
  %s3 = inlined_call_operand.vmem [shape: f32[32,6], index: 3, kind: input, shape index: {}]
  %s4 = inlined_call_operand.vmem [shape: f32[3,128], index: 4, kind: input, shape index: {}]
  %s5 = inlined_call_operand.vmem [shape: bf16[64,32,256], index: 5, kind: output, shape index: {}]
  %s6 = sld [smem:[#allocation0]]
  $region53: #{ms_context_block2d.1} parent=0
    _
  %s8 = ssub.s32 1, %s6
  %s9 = scalar_select 0, %s8, %s6
  loop: start=0, step=1, limit=4
  $region2: #{ms_context_block2d.1} parent=0 // loop_pre_header
    _
  $region3: #{ms_context_block2d.1} parent=0 // loop_header
    %s11 = sphi 0, %s15
    %p12 = scmp.ge.s32.totalorder %s11, 4
    %s21 = sphi 0, %s23
    %s24 = sphi 0, %s21
    %s25 = sphi 0, %s24
    %s41 = sphi 0, %s25
    %s45 = sphi 0, %s45
    %s47 = sphi 0, %s45
    %s48 = sphi 0, %s47
    %s62 = sphi 0, %s48
    %s66 = sphi 0, %s66
    %s68 = sphi 0, %s66
    %s69 = sphi 0, %s68
    %s83 = sphi 0, %s69
    %s87 = sphi 0, %s87
    %s89 = sphi 0, %s87
    %s90 = sphi 0, %s89
    %s104 = sphi 0, %s90
    %s108 = sphi 0, %s108
    %s110 = sphi 0, %s108
    %s111 = sphi 0, %s110
    %s125 = sphi 0, %s111
    %s131 = sphi 0, %s133
    %s134 = sphi 0, %s131
    %s135 = sphi 0, %s134
    %s151 = sphi 0, %s135
  $region4: #{ms_context_block2d.1} parent=0 // loop_header_branch
    %14 = sbr.rel (%p12) target = $region8
  $region5: #{ms_context_block2d.1} parent=0 // loop_body
    %s16 = ssub.s32 %s11, 1
    %s17 = ssub.s32 %s11, 2
    %s18 = sadd.s32 %s11, 1
    %s19 = ssub.s32 %s11, %s18
    %p20 = scmp.eq.s32.totalorder %s19, 0
    %s22 = sadd.s32 %s21, 1
    %s23 = scalar_select %p20, %s21, %s22
    %p26 = pneg %p20
    %p27 = scmp.eq.s32.totalorder %s11, 1
    %p28 = por %p26, %p27
    %p29 = scmp.ne.s32.totalorder %s21, %s24
    %p30 = scmp.eq.s32.totalorder %s11, 0
    %p31 = por %p29, %p30
    %p32 = scmp.ne.s32.totalorder %s21, %s24
    %p33 = scmp.eq.s32.totalorder %s16, 1
    %p34 = por %p32, %p33
    %p35 = scmp.ne.s32.totalorder %s24, %s25
    %p36 = scmp.eq.s32.totalorder %s16, 0
    %p37 = por %p35, %p36
    %p38 = scmp.ne.s32.totalorder %s24, %s25
    %p39 = scmp.eq.s32.totalorder %s17, 1
    %p40 = por %p38, %p39
    %p42 = scmp.ne.s32.totalorder %s25, %s41
    %p43 = scmp.eq.s32.totalorder %s17, 0
    %p44 = por %p42, %p43
    %s46 = sadd.s32 %s45, 1
    %p49 = scmp.eq.s32.totalorder %s11, 1
    %p50 = scmp.ne.s32.totalorder %s45, %s47
    %p51 = scmp.eq.s32.totalorder %s11, 0
    %p52 = por %p50, %p51
    %p53 = scmp.ne.s32.totalorder %s45, %s47
    %p54 = scmp.eq.s32.totalorder %s16, 1
    %p55 = por %p53, %p54
    %p56 = scmp.ne.s32.totalorder %s47, %s48
    %p57 = scmp.eq.s32.totalorder %s16, 0
    %p58 = por %p56, %p57
    %p59 = scmp.ne.s32.totalorder %s47, %s48
    %p60 = scmp.eq.s32.totalorder %s17, 1
    %p61 = por %p59, %p60
    %p63 = scmp.ne.s32.totalorder %s48, %s62
    %p64 = scmp.eq.s32.totalorder %s17, 0
    %p65 = por %p63, %p64
    %s67 = sadd.s32 %s66, 1
    %p70 = scmp.eq.s32.totalorder %s11, 1
    %p71 = scmp.ne.s32.totalorder %s66, %s68
    %p72 = scmp.eq.s32.totalorder %s11, 0
    %p73 = por %p71, %p72
    %p74 = scmp.ne.s32.totalorder %s66, %s68
    %p75 = scmp.eq.s32.totalorder %s16, 1
    %p76 = por %p74, %p75
    %p77 = scmp.ne.s32.totalorder %s68, %s69
    %p78 = scmp.eq.s32.totalorder %s16, 0
    %p79 = por %p77, %p78
    %p80 = scmp.ne.s32.totalorder %s68, %s69
    %p81 = scmp.eq.s32.totalorder %s17, 1
    %p82 = por %p80, %p81
    %p84 = scmp.ne.s32.totalorder %s69, %s83
    %p85 = scmp.eq.s32.totalorder %s17, 0
    %p86 = por %p84, %p85
    %s88 = sadd.s32 %s87, 1
    %p91 = scmp.eq.s32.totalorder %s11, 1
    %p92 = scmp.ne.s32.totalorder %s87, %s89
    %p93 = scmp.eq.s32.totalorder %s11, 0
    %p94 = por %p92, %p93
    %p95 = scmp.ne.s32.totalorder %s87, %s89
    %p96 = scmp.eq.s32.totalorder %s16, 1
    %p97 = por %p95, %p96
    %p98 = scmp.ne.s32.totalorder %s89, %s90
    %p99 = scmp.eq.s32.totalorder %s16, 0
    %p100 = por %p98, %p99
    %p101 = scmp.ne.s32.totalorder %s89, %s90
    %p102 = scmp.eq.s32.totalorder %s17, 1
    %p103 = por %p101, %p102
    %p105 = scmp.ne.s32.totalorder %s90, %s104
    %p106 = scmp.eq.s32.totalorder %s17, 0
    %p107 = por %p105, %p106
    %s109 = sadd.s32 %s108, 1
    %p112 = scmp.eq.s32.totalorder %s11, 1
    %p113 = scmp.ne.s32.totalorder %s108, %s110
    %p114 = scmp.eq.s32.totalorder %s11, 0
    %p115 = por %p113, %p114
    %p116 = scmp.ne.s32.totalorder %s108, %s110
    %p117 = scmp.eq.s32.totalorder %s16, 1
    %p118 = por %p116, %p117
    %p119 = scmp.ne.s32.totalorder %s110, %s111
    %p120 = scmp.eq.s32.totalorder %s16, 0
    %p121 = por %p119, %p120
    %p122 = scmp.ne.s32.totalorder %s110, %s111
    %p123 = scmp.eq.s32.totalorder %s17, 1
    %p124 = por %p122, %p123
    %p126 = scmp.ne.s32.totalorder %s111, %s125
    %p127 = scmp.eq.s32.totalorder %s17, 0
    %p128 = por %p126, %p127
    %s129 = ssub.s32 %s11, %s18
    %p130 = scmp.eq.s32.totalorder %s129, 0
    %s132 = sadd.s32 %s131, 1
    %s133 = scalar_select %p130, %s131, %s132
    %p136 = pneg %p130
    %p137 = scmp.eq.s32.totalorder %s11, 1
    %p138 = por %p136, %p137
    %p139 = scmp.ne.s32.totalorder %s131, %s134
    %p140 = scmp.eq.s32.totalorder %s11, 0
    %p141 = por %p139, %p140
    %p142 = scmp.ne.s32.totalorder %s131, %s134
    %p143 = scmp.eq.s32.totalorder %s16, 1
    %p144 = por %p142, %p143
    %p145 = scmp.ne.s32.totalorder %s134, %s135
    %p146 = scmp.eq.s32.totalorder %s16, 0
    %p147 = por %p145, %p146
    %p148 = scmp.ne.s32.totalorder %s134, %s135
    %p149 = scmp.eq.s32.totalorder %s17, 1
    %p150 = por %p148, %p149
    %p152 = scmp.ne.s32.totalorder %s135, %s151
    %p153 = scmp.eq.s32.totalorder %s17, 0
    %p154 = por %p152, %p153
    %p155 = scmp.le.s32.totalorder 1, %s11
    %p156 = scmp.lt.s32.totalorder %s11, 3
    %p157 = pnand %p155, %p156
    %p158 = pneg %p157
    // Predicated region
    $region9: #{ms_context_block2d.1} parent=5 // pred_check
      _
    $region10: #{ms_context_block2d.1} parent=5 // pred_check_branch
      %160 = sbr.rel (%p157) target = $region12
    $region11: #{ms_context_block2d.1} parent=5 // pred_region
      %s161 = ssub.s32 %s11, 1
      // Predicated region
      $region13: #{ms_context_block2d.1} parent=11 // pred_check
        %p162 = pneg %p58
      $region14: #{ms_context_block2d.1} parent=11 // pred_check_branch
        %164 = sbr.rel (%p162) target = $region16
      $region15: #{ms_context_block2d.1} parent=11 // pred_region
        _
      $region16: #{ms_context_block2d.1} parent=11 // pred_fallthru
        _
      // Predicated region
      $region17: #{ms_context_block2d.1} parent=11 // pred_check
        %p165 = pneg %p79
      $region18: #{ms_context_block2d.1} parent=11 // pred_check_branch
        %167 = sbr.rel (%p165) target = $region20
      $region19: #{ms_context_block2d.1} parent=11 // pred_region
        _
      $region20: #{ms_context_block2d.1} parent=11 // pred_fallthru
        _
      // Predicated region
      $region21: #{ms_context_block2d.1} parent=11 // pred_check
        %p168 = pneg %p100
      $region22: #{ms_context_block2d.1} parent=11 // pred_check_branch
        %170 = sbr.rel (%p168) target = $region24
      $region23: #{ms_context_block2d.1} parent=11 // pred_region
        _
      $region24: #{ms_context_block2d.1} parent=11 // pred_fallthru
        _
      // Predicated region
      $region25: #{ms_context_block2d.1} parent=11 // pred_check
        %p171 = pneg %p121
      $region26: #{ms_context_block2d.1} parent=11 // pred_check_branch
        %173 = sbr.rel (%p171) target = $region28
      $region27: #{ms_context_block2d.1} parent=11 // pred_region
        _
      $region28: #{ms_context_block2d.1} parent=11 // pred_fallthru
        _
    $region12: #{ms_context_block2d.1} parent=5 // pred_fallthru
      _
    %p174 = scmp.lt.s32.totalorder %s11, 2
    // Predicated region
    $region29: #{ms_context_block2d.1} parent=5 // pred_check
      %p175 = pneg %p174
    $region30: #{ms_context_block2d.1} parent=5 // pred_check_branch
      %177 = sbr.rel (%p175) target = $region32
    $region31: #{ms_context_block2d.1} parent=5 // pred_region
      // Predicated region
      $region33: #{ms_context_block2d.1} parent=31 // pred_check
        %p178 = pneg %p31
      $region34: #{ms_context_block2d.1} parent=31 // pred_check_branch
        %180 = sbr.rel (%p178) target = $region36
      $region35: #{ms_context_block2d.1} parent=31 // pred_region
        %s181 = smul.u32 32, %s11
        %p182 = scmp.lt.s32.totalorder %s181, 63
        %s183 = scalar_select %p182, %s181, 63
        %s184 = smul.addr %s183, 8
        %s185 = smul.addr %s184, 4
        %s186 = scalar_lea.vmem %s0, %s185
        %s187 = smul.u32 32, %s11
      $region36: #{ms_context_block2d.1} parent=31 // pred_fallthru
        _
    $region32: #{ms_context_block2d.1} parent=5 // pred_fallthru
      _
    %p188 = scmp.le.s32.totalorder 1, %s11
    %p189 = scmp.lt.s32.totalorder %s11, 3
    %p190 = pnand %p188, %p189
    %p191 = pneg %p190
    // Predicated region
    $region37: #{ms_context_block2d.1} parent=5 // pred_check
      _
    $region38: #{ms_context_block2d.1} parent=5 // pred_check_branch
      %193 = sbr.rel (%p190) target = $region40
    $region39: #{ms_context_block2d.1} parent=5 // pred_region
      %s194 = ssub.s32 %s11, 1
      %s195 = smul.u32 32, %s16
      %p196 = scmp.lt.s32.totalorder %s195, 63
      %s197 = scalar_select %p196, %s195, 63
      %s198 = smul.addr %s197, 8
      %s199 = smul.addr %s198, 4
      %s200 = scalar_lea.vmem %s0, %s199
      %p201 = pneg %p37
      %p202 = pneg %p34
      %p203 = pneg %p58
      %p204 = pneg %p55
      %p205 = pneg %p79
      %p206 = pneg %p76
      %p207 = pneg %p100
      %p208 = pneg %p97
      %p209 = pneg %p121
      %p210 = pneg %p118
      %p211 = pneg %p147
      %p212 = pneg %p144
      %s213 = smul.u32 32, %s16
      %p214 = scmp.lt.s32.totalorder %s213, 63
      %s215 = scalar_select %p214, %s213, 63
      %s216 = smul.addr %s215, 8
      %s217 = smul.addr %s216, 4
      %s218 = scalar_lea.vmem %s5, %s217
      %s219 = smul.u32 32, %s16
      %p220 = scmp.lt.s32.totalorder %s219, 63
      %s221 = scalar_select %p220, %s219, 63
      %s222 = smul.addr %s221, 8
      %s223 = smul.addr %s222, 4
      %s224 = scalar_lea.vmem %s0, %s223
      %s225 = smul.u32 32, %s16
      %s226 = smul.u32 32, %s16
      %p227 = scmp.lt.s32.totalorder %s226, 63
      %s228 = scalar_select %p227, %s226, 63
      %s229 = smul.addr %s228, 8
      %s230 = smul.addr %s229, 4
      %s231 = scalar_lea.vmem %s5, %s230
      %s232 = smul.u32 32, %s16
      %v233 = vld [vmem:[%s1] sm:$0xf]
      %v234 = vld [vmem:[%s1 + $0x4] sm:$0xf]
      %v235 = vld [vmem:[%s1 + $0x8] sm:$0xf]
      %v236 = vld [vmem:[%s1 + $0xc] sm:$0xf]
      %v237 = vld [vmem:[%s1 + $0x10] sm:$0xf]
      %v238 = vld [vmem:[%s1 + $0x14] sm:$0xf]
      %v239 = vld [vmem:[%s1 + $0x18] sm:$0xf]
      %v240 = vld [vmem:[%s1 + $0x1c] sm:$0xf]
      %v241 = vld [vmem:[%s1 + $0x20] sm:$0xf]
      %v242 = vld [vmem:[%s1 + $0x24] sm:$0xf]
      %v243 = vld [vmem:[%s1 + $0x28] sm:$0xf]
      %v244 = vld [vmem:[%s1 + $0x2c] sm:$0xf]
      %v245 = vld [vmem:[%s1 + $0x30] sm:$0xf]
      %v246 = vld [vmem:[%s1 + $0x34] sm:$0xf]
      %v247 = vld [vmem:[%s1 + $0x38] sm:$0xf]
      %v248 = vld [vmem:[%s1 + $0x3c] sm:$0xf]
      %v249 = vld [vmem:[%s1 + $0x40] sm:$0xf]
      %v250 = vld [vmem:[%s1 + $0x44] sm:$0xf]
      %v251 = vld [vmem:[%s1 + $0x48] sm:$0xf]
      %v252 = vld [vmem:[%s1 + $0x4c] sm:$0xf]
      %v253 = vld [vmem:[%s1 + $0x50] sm:$0xf]
      %v254 = vld [vmem:[%s1 + $0x54] sm:$0xf]
      %v255 = vld [vmem:[%s1 + $0x58] sm:$0xf]
      %v256 = vld [vmem:[%s1 + $0x5c] sm:$0xf]
      %v257 = vld [vmem:[%s1 + $0x60] sm:$0xf]
      %v258 = vld [vmem:[%s1 + $0x64] sm:$0xf]
      %v259 = vld [vmem:[%s1 + $0x68] sm:$0xf]
      %v260 = vld [vmem:[%s1 + $0x6c] sm:$0xf]
      %v261 = vld [vmem:[%s1 + $0x70] sm:$0xf]
      %v262 = vld [vmem:[%s1 + $0x74] sm:$0xf]
      %v263 = vld [vmem:[%s1 + $0x78] sm:$0xf]
      %v264 = vld [vmem:[%s1 + $0x7c] sm:$0xf]
      %v265 = vunpack.c.l.bf16 %v233
      %v266 = vunpack.c.l.bf16 %v234
      %v267 = vunpack.c.l.bf16 %v235
      %v268 = vunpack.c.l.bf16 %v236
      %v269 = vunpack.c.l.bf16 %v237
      %v270 = vunpack.c.l.bf16 %v238
      %v271 = vunpack.c.l.bf16 %v239
      %v272 = vunpack.c.l.bf16 %v240
      %v273 = vunpack.c.l.bf16 %v241
      %v274 = vunpack.c.l.bf16 %v242
      %v275 = vunpack.c.l.bf16 %v243
      %v276 = vunpack.c.l.bf16 %v244
      %v277 = vunpack.c.l.bf16 %v245
      %v278 = vunpack.c.l.bf16 %v246
      %v279 = vunpack.c.l.bf16 %v247
      %v280 = vunpack.c.l.bf16 %v248
      %v281 = vunpack.c.l.bf16 %v249
      %v282 = vunpack.c.l.bf16 %v250
      %v283 = vunpack.c.l.bf16 %v251
      %v284 = vunpack.c.l.bf16 %v252
      %v285 = vunpack.c.l.bf16 %v253
      %v286 = vunpack.c.l.bf16 %v254
      %v287 = vunpack.c.l.bf16 %v255
      %v288 = vunpack.c.l.bf16 %v256
      %v289 = vunpack.c.l.bf16 %v257
      %v290 = vunpack.c.l.bf16 %v258
      %v291 = vunpack.c.l.bf16 %v259
      %v292 = vunpack.c.l.bf16 %v260
      %v293 = vunpack.c.l.bf16 %v261
      %v294 = vunpack.c.l.bf16 %v262
      %v295 = vunpack.c.l.bf16 %v263
      %v296 = vunpack.c.l.bf16 %v264
      %v297 = vld [vmem:[%s2] sm:$0xf]
      %v298 = vld [vmem:[%s3] sm:$0xff]
      %v299 = vld [vmem:[%s3 + $0x8] sm:$0xff]
      %v300 = vld [vmem:[%s3 + $0x10] sm:$0xff]
      %v301 = vld [vmem:[%s3 + $0x18] sm:$0xff]
      %v302 = vld [vmem:[%s4] sm:$0x7]
      %v303 = vld [vmem:[%s224] sm:$0xff]
      %v304 = vld [vmem:[%s224 + $0x8] sm:$0xff]
      %v305 = vld [vmem:[%s224 + $0x10] sm:$0xff]
      %v306 = vld [vmem:[%s224 + $0x18] sm:$0xff]
      %v307 = vunpack.c.l.bf16 %v303
      %v308 = vunpack.c.h.bf16 %v303
      %v309 = vunpack.c.l.bf16 %v304
      %v310 = vunpack.c.h.bf16 %v304
      %v311 = vunpack.c.l.bf16 %v305
      %v312 = vunpack.c.h.bf16 %v305
      %v313 = vunpack.c.l.bf16 %v306
      %v314 = vunpack.c.h.bf16 %v306
      %316 = vset.pattern.permute.xlu0 0
      %317 = vperm.xlu0 %316, %v298
      %v318 = vpop.permute.xlu0 %317
      %321 = vset.pattern.permute.xlu0 0
      %322 = vperm.xlu0 %321, %v299
      %v323 = vpop.permute.xlu0 %322
      %326 = vset.pattern.permute.xlu0 0
      %327 = vperm.xlu0 %326, %v300
      %v328 = vpop.permute.xlu0 %327
      %331 = vset.pattern.permute.xlu0 0
      %332 = vperm.xlu0 %331, %v301
      %v333 = vpop.permute.xlu0 %332
      %v335 = vmul.f32 %v307, %v318
      %v336 = vmul.f32 %v308, %v318
      %v337 = vmul.f32 %v309, %v323
      %v338 = vmul.f32 %v310, %v323
      %v339 = vmul.f32 %v311, %v328
      %v340 = vmul.f32 %v312, %v328
      %v341 = vmul.f32 %v313, %v333
      %v342 = vmul.f32 %v314, %v333
      %v343 = vadd.f32 %v335, %v337
      %v344 = vadd.f32 %v343, %v339
      %v345 = vadd.f32 %v344, %v341
      %v346 = vrot.slane %v345, 4
      %v347 = vadd.f32 %v345, %v346
      %v348 = vrot.slane %v347, 2
      %v349 = vadd.f32 %v347, %v348
      %v350 = vrot.slane %v349, 1
      %v351 = vadd.f32 %v349, %v350
      %v352 = vadd.f32 %v336, %v338
      %v353 = vadd.f32 %v352, %v340
      %v354 = vadd.f32 %v353, %v342
      %v355 = vrot.slane %v354, 4
      %v356 = vadd.f32 %v354, %v355
      %v357 = vrot.slane %v356, 2
      %v358 = vadd.f32 %v356, %v357
      %v359 = vrot.slane %v358, 1
      %v360 = vadd.f32 %v358, %v359
      %v363 = vcombine.low %v351, %v360
      %v365 = vunpack.c.l.s4 1966171168
      %v366 = vunpack.c.0.s8 %v365
      %v367 = vlaneseq
      %v368 = vshrl.u32 %v367, 7
      %v369 = vsub.s32 %v366, %v368
      %v370 = vrot.slane %v363, %v369
      %v372 = vunpack.c.l.s4 1966171168
      %v373 = vunpack.c.0.s8 %v372
      %v374 = vlaneseq
      %v375 = vshrl.u32 %v374, 7
      %v376 = vsub.s32 %v373, %v375
      %v377 = vrot.slane %v370, %v376
      %v379 = vlaneseq
      %vm380 = vcmp.ge.s32.totalorder %v379, 0
      %vm381 = vcmp.lt.s32.totalorder %v379, 256
      %vm382 = vmand %vm380, %vm381
      %383 = vst.msk [vmem:[#allocation2] ss:$8 sm:$0x3] %vm382, %v377
      %384 = vst.msk [vmem:[#allocation2] ss:$8 sm:$0x0] %vm382, %v377
      %s385 = scalar_lea.vmem %s224, 32
      %v386 = vld [vmem:[%s385] sm:$0xff]
      %v387 = vld [vmem:[%s385 + $0x8] sm:$0xff]
      %v388 = vld [vmem:[%s385 + $0x10] sm:$0xff]
      %v389 = vld [vmem:[%s385 + $0x18] sm:$0xff]
      %v390 = vunpack.c.l.bf16 %v386
      %v391 = vunpack.c.h.bf16 %v386
      %v392 = vunpack.c.l.bf16 %v387
      %v393 = vunpack.c.h.bf16 %v387
      %v394 = vunpack.c.l.bf16 %v388
      %v395 = vunpack.c.h.bf16 %v388
      %v396 = vunpack.c.l.bf16 %v389
      %v397 = vunpack.c.h.bf16 %v389
      %v398 = vmul.f32 %v390, %v318
      %v399 = vmul.f32 %v391, %v318
      %v400 = vmul.f32 %v392, %v323
      %v401 = vmul.f32 %v393, %v323
      %v402 = vmul.f32 %v394, %v328
      %v403 = vmul.f32 %v395, %v328
      %v404 = vmul.f32 %v396, %v333
      %v405 = vmul.f32 %v397, %v333
      %v406 = vadd.f32 %v398, %v400
      %v407 = vadd.f32 %v406, %v402
      %v408 = vadd.f32 %v407, %v404
      %v409 = vrot.slane %v408, 4
      %v410 = vadd.f32 %v408, %v409
      %v411 = vrot.slane %v410, 2
      %v412 = vadd.f32 %v410, %v411
      %v413 = vrot.slane %v412, 1
      %v414 = vadd.f32 %v412, %v413
      %v415 = vadd.f32 %v399, %v401
      %v416 = vadd.f32 %v415, %v403
      %v417 = vadd.f32 %v416, %v405
      %v418 = vrot.slane %v417, 4
      %v419 = vadd.f32 %v417, %v418
      %v420 = vrot.slane %v419, 2
      %v421 = vadd.f32 %v419, %v420
      %v422 = vrot.slane %v421, 1
      %v423 = vadd.f32 %v421, %v422
      %v426 = vcombine.low %v414, %v423
      %v428 = vunpack.c.l.s4 1966171168
      %v429 = vunpack.c.0.s8 %v428
      %v430 = vlaneseq
      %v431 = vshrl.u32 %v430, 7
      %v432 = vsub.s32 %v429, %v431
      %v433 = vrot.slane %v426, %v432
      %v435 = vunpack.c.l.s4 1966171168
      %v436 = vunpack.c.0.s8 %v435
      %v437 = vlaneseq
      %v438 = vshrl.u32 %v437, 7
      %v439 = vsub.s32 %v436, %v438
      %v440 = vrot.slane %v433, %v439
      %s442 = scalar_lea.vmem [#allocation2], 1
      %443 = vst.msk [vmem:[%s442] ss:$8 sm:$0x3] %vm382, %v440
      %444 = vst.msk [vmem:[%s442] ss:$8 sm:$0x0] %vm382, %v440
      %s445 = scalar_lea.vmem %s224, 64
      %v446 = vld [vmem:[%s445] sm:$0xff]
      %v447 = vld [vmem:[%s445 + $0x8] sm:$0xff]
      %v448 = vld [vmem:[%s445 + $0x10] sm:$0xff]
      %v449 = vld [vmem:[%s445 + $0x18] sm:$0xff]
      %v450 = vunpack.c.l.bf16 %v446
      %v451 = vunpack.c.h.bf16 %v446
      %v452 = vunpack.c.l.bf16 %v447
      %v453 = vunpack.c.h.bf16 %v447
      %v454 = vunpack.c.l.bf16 %v448
      %v455 = vunpack.c.h.bf16 %v448
      %v456 = vunpack.c.l.bf16 %v449
      %v457 = vunpack.c.h.bf16 %v449
      %v458 = vmul.f32 %v450, %v318
      %v459 = vmul.f32 %v451, %v318
      %v460 = vmul.f32 %v452, %v323
      %v461 = vmul.f32 %v453, %v323
      %v462 = vmul.f32 %v454, %v328
      %v463 = vmul.f32 %v455, %v328
      %v464 = vmul.f32 %v456, %v333
      %v465 = vmul.f32 %v457, %v333
      %v466 = vadd.f32 %v458, %v460
      %v467 = vadd.f32 %v466, %v462
      %v468 = vadd.f32 %v467, %v464
      %v469 = vrot.slane %v468, 4
      %v470 = vadd.f32 %v468, %v469
      %v471 = vrot.slane %v470, 2
      %v472 = vadd.f32 %v470, %v471
      %v473 = vrot.slane %v472, 1
      %v474 = vadd.f32 %v472, %v473
      %v475 = vadd.f32 %v459, %v461
      %v476 = vadd.f32 %v475, %v463
      %v477 = vadd.f32 %v476, %v465
      %v478 = vrot.slane %v477, 4
      %v479 = vadd.f32 %v477, %v478
      %v480 = vrot.slane %v479, 2
      %v481 = vadd.f32 %v479, %v480
      %v482 = vrot.slane %v481, 1
      %v483 = vadd.f32 %v481, %v482
      %v486 = vcombine.low %v474, %v483
      %v488 = vunpack.c.l.s4 1966171168
      %v489 = vunpack.c.0.s8 %v488
      %v490 = vlaneseq
      %v491 = vshrl.u32 %v490, 7
      %v492 = vsub.s32 %v489, %v491
      %v493 = vrot.slane %v486, %v492
      %v495 = vunpack.c.l.s4 1966171168
      %v496 = vunpack.c.0.s8 %v495
      %v497 = vlaneseq
      %v498 = vshrl.u32 %v497, 7
      %v499 = vsub.s32 %v496, %v498
      %v500 = vrot.slane %v493, %v499
      %s502 = scalar_lea.vmem [#allocation2], 2
      %503 = vst.msk [vmem:[%s502] ss:$8 sm:$0x3] %vm382, %v500
      %504 = vst.msk [vmem:[%s502] ss:$8 sm:$0x0] %vm382, %v500
      %s505 = scalar_lea.vmem %s224, 96
      %v506 = vld [vmem:[%s505] sm:$0xff]
      %v507 = vld [vmem:[%s505 + $0x8] sm:$0xff]
      %v508 = vld [vmem:[%s505 + $0x10] sm:$0xff]
      %v509 = vld [vmem:[%s505 + $0x18] sm:$0xff]
      %v510 = vunpack.c.l.bf16 %v506
      %v511 = vunpack.c.h.bf16 %v506
      %v512 = vunpack.c.l.bf16 %v507
      %v513 = vunpack.c.h.bf16 %v507
      %v514 = vunpack.c.l.bf16 %v508
      %v515 = vunpack.c.h.bf16 %v508
      %v516 = vunpack.c.l.bf16 %v509
      %v517 = vunpack.c.h.bf16 %v509
      %v518 = vmul.f32 %v510, %v318
      %v519 = vmul.f32 %v511, %v318
      %v520 = vmul.f32 %v512, %v323
      %v521 = vmul.f32 %v513, %v323
      %v522 = vmul.f32 %v514, %v328
      %v523 = vmul.f32 %v515, %v328
      %v524 = vmul.f32 %v516, %v333
      %v525 = vmul.f32 %v517, %v333
      %v526 = vadd.f32 %v518, %v520
      %v527 = vadd.f32 %v526, %v522
      %v528 = vadd.f32 %v527, %v524
      %v529 = vrot.slane %v528, 4
      %v530 = vadd.f32 %v528, %v529
      %v531 = vrot.slane %v530, 2
      %v532 = vadd.f32 %v530, %v531
      %v533 = vrot.slane %v532, 1
      %v534 = vadd.f32 %v532, %v533
      %v535 = vadd.f32 %v519, %v521
      %v536 = vadd.f32 %v535, %v523
      %v537 = vadd.f32 %v536, %v525
      %v538 = vrot.slane %v537, 4
      %v539 = vadd.f32 %v537, %v538
      %v540 = vrot.slane %v539, 2
      %v541 = vadd.f32 %v539, %v540
      %v542 = vrot.slane %v541, 1
      %v543 = vadd.f32 %v541, %v542
      %v546 = vcombine.low %v534, %v543
      %v548 = vunpack.c.l.s4 1966171168
      %v549 = vunpack.c.0.s8 %v548
      %v550 = vlaneseq
      %v551 = vshrl.u32 %v550, 7
      %v552 = vsub.s32 %v549, %v551
      %v553 = vrot.slane %v546, %v552
      %v555 = vunpack.c.l.s4 1966171168
      %v556 = vunpack.c.0.s8 %v555
      %v557 = vlaneseq
      %v558 = vshrl.u32 %v557, 7
      %v559 = vsub.s32 %v556, %v558
      %v560 = vrot.slane %v553, %v559
      %s562 = scalar_lea.vmem [#allocation2], 3
      %563 = vst.msk [vmem:[%s562] ss:$8 sm:$0x3] %vm382, %v560
      %564 = vst.msk [vmem:[%s562] ss:$8 sm:$0x0] %vm382, %v560
      %s565 = scalar_lea.vmem %s224, 128
      %v566 = vld [vmem:[%s565] sm:$0xff]
      %v567 = vld [vmem:[%s565 + $0x8] sm:$0xff]
      %v568 = vld [vmem:[%s565 + $0x10] sm:$0xff]
      %v569 = vld [vmem:[%s565 + $0x18] sm:$0xff]
      %v570 = vunpack.c.l.bf16 %v566
      %v571 = vunpack.c.h.bf16 %v566
      %v572 = vunpack.c.l.bf16 %v567
      %v573 = vunpack.c.h.bf16 %v567
      %v574 = vunpack.c.l.bf16 %v568
      %v575 = vunpack.c.h.bf16 %v568
      %v576 = vunpack.c.l.bf16 %v569
      %v577 = vunpack.c.h.bf16 %v569
      %v578 = vmul.f32 %v570, %v318
      %v579 = vmul.f32 %v571, %v318
      %v580 = vmul.f32 %v572, %v323
      %v581 = vmul.f32 %v573, %v323
      %v582 = vmul.f32 %v574, %v328
      %v583 = vmul.f32 %v575, %v328
      %v584 = vmul.f32 %v576, %v333
      %v585 = vmul.f32 %v577, %v333
      %v586 = vadd.f32 %v578, %v580
      %v587 = vadd.f32 %v586, %v582
      %v588 = vadd.f32 %v587, %v584
      %v589 = vrot.slane %v588, 4
      %v590 = vadd.f32 %v588, %v589
      %v591 = vrot.slane %v590, 2
      %v592 = vadd.f32 %v590, %v591
      %v593 = vrot.slane %v592, 1
      %v594 = vadd.f32 %v592, %v593
      %v595 = vadd.f32 %v579, %v581
      %v596 = vadd.f32 %v595, %v583
      %v597 = vadd.f32 %v596, %v585
      %v598 = vrot.slane %v597, 4
      %v599 = vadd.f32 %v597, %v598
      %v600 = vrot.slane %v599, 2
      %v601 = vadd.f32 %v599, %v600
      %v602 = vrot.slane %v601, 1
      %v603 = vadd.f32 %v601, %v602
      %v606 = vcombine.low %v594, %v603
      %v608 = vunpack.c.l.s4 1966171168
      %v609 = vunpack.c.0.s8 %v608
      %v610 = vlaneseq
      %v611 = vshrl.u32 %v610, 7
      %v612 = vsub.s32 %v609, %v611
      %v613 = vrot.slane %v606, %v612
      %v615 = vunpack.c.l.s4 1966171168
      %v616 = vunpack.c.0.s8 %v615
      %v617 = vlaneseq
      %v618 = vshrl.u32 %v617, 7
      %v619 = vsub.s32 %v616, %v618
      %v620 = vrot.slane %v613, %v619
      %s622 = scalar_lea.vmem [#allocation2], 4
      %623 = vst.msk [vmem:[%s622] ss:$8 sm:$0x3] %vm382, %v620
      %624 = vst.msk [vmem:[%s622] ss:$8 sm:$0x0] %vm382, %v620
      %s625 = scalar_lea.vmem %s224, 160
      %v626 = vld [vmem:[%s625] sm:$0xff]
      %v627 = vld [vmem:[%s625 + $0x8] sm:$0xff]
      %v628 = vld [vmem:[%s625 + $0x10] sm:$0xff]
      %v629 = vld [vmem:[%s625 + $0x18] sm:$0xff]
      %v630 = vunpack.c.l.bf16 %v626
      %v631 = vunpack.c.h.bf16 %v626
      %v632 = vunpack.c.l.bf16 %v627
      %v633 = vunpack.c.h.bf16 %v627
      %v634 = vunpack.c.l.bf16 %v628
      %v635 = vunpack.c.h.bf16 %v628
      %v636 = vunpack.c.l.bf16 %v629
      %v637 = vunpack.c.h.bf16 %v629
      %v638 = vmul.f32 %v630, %v318
      %v639 = vmul.f32 %v631, %v318
      %v640 = vmul.f32 %v632, %v323
      %v641 = vmul.f32 %v633, %v323
      %v642 = vmul.f32 %v634, %v328
      %v643 = vmul.f32 %v635, %v328
      %v644 = vmul.f32 %v636, %v333
      %v645 = vmul.f32 %v637, %v333
      %v646 = vadd.f32 %v638, %v640
      %v647 = vadd.f32 %v646, %v642
      %v648 = vadd.f32 %v647, %v644
      %v649 = vrot.slane %v648, 4
      %v650 = vadd.f32 %v648, %v649
      %v651 = vrot.slane %v650, 2
      %v652 = vadd.f32 %v650, %v651
      %v653 = vrot.slane %v652, 1
      %v654 = vadd.f32 %v652, %v653
      %v655 = vadd.f32 %v639, %v641
      %v656 = vadd.f32 %v655, %v643
      %v657 = vadd.f32 %v656, %v645
      %v658 = vrot.slane %v657, 4
      %v659 = vadd.f32 %v657, %v658
      %v660 = vrot.slane %v659, 2
      %v661 = vadd.f32 %v659, %v660
      %v662 = vrot.slane %v661, 1
      %v663 = vadd.f32 %v661, %v662
      %v666 = vcombine.low %v654, %v663
      %v668 = vunpack.c.l.s4 1966171168
      %v669 = vunpack.c.0.s8 %v668
      %v670 = vlaneseq
      %v671 = vshrl.u32 %v670, 7
      %v672 = vsub.s32 %v669, %v671
      %v673 = vrot.slane %v666, %v672
      %v675 = vunpack.c.l.s4 1966171168
      %v676 = vunpack.c.0.s8 %v675
      %v677 = vlaneseq
      %v678 = vshrl.u32 %v677, 7
      %v679 = vsub.s32 %v676, %v678
      %v680 = vrot.slane %v673, %v679
      %s682 = scalar_lea.vmem [#allocation2], 5
      %683 = vst.msk [vmem:[%s682] ss:$8 sm:$0x3] %vm382, %v680
      %684 = vst.msk [vmem:[%s682] ss:$8 sm:$0x0] %vm382, %v680
      %s685 = scalar_lea.vmem %s224, 192
      %v686 = vld [vmem:[%s685] sm:$0xff]
      %v687 = vld [vmem:[%s685 + $0x8] sm:$0xff]
      %v688 = vld [vmem:[%s685 + $0x10] sm:$0xff]
      %v689 = vld [vmem:[%s685 + $0x18] sm:$0xff]
      %v690 = vunpack.c.l.bf16 %v686
      %v691 = vunpack.c.h.bf16 %v686
      %v692 = vunpack.c.l.bf16 %v687
      %v693 = vunpack.c.h.bf16 %v687
      %v694 = vunpack.c.l.bf16 %v688
      %v695 = vunpack.c.h.bf16 %v688
      %v696 = vunpack.c.l.bf16 %v689
      %v697 = vunpack.c.h.bf16 %v689
      %v698 = vmul.f32 %v690, %v318
      %v699 = vmul.f32 %v691, %v318
      %v700 = vmul.f32 %v692, %v323
      %v701 = vmul.f32 %v693, %v323
      %v702 = vmul.f32 %v694, %v328
      %v703 = vmul.f32 %v695, %v328
      %v704 = vmul.f32 %v696, %v333
      %v705 = vmul.f32 %v697, %v333
      %v706 = vadd.f32 %v698, %v700
      %v707 = vadd.f32 %v706, %v702
      %v708 = vadd.f32 %v707, %v704
      %v709 = vrot.slane %v708, 4
      %v710 = vadd.f32 %v708, %v709
      %v711 = vrot.slane %v710, 2
      %v712 = vadd.f32 %v710, %v711
      %v713 = vrot.slane %v712, 1
      %v714 = vadd.f32 %v712, %v713
      %v715 = vadd.f32 %v699, %v701
      %v716 = vadd.f32 %v715, %v703
      %v717 = vadd.f32 %v716, %v705
      %v718 = vrot.slane %v717, 4
      %v719 = vadd.f32 %v717, %v718
      %v720 = vrot.slane %v719, 2
      %v721 = vadd.f32 %v719, %v720
      %v722 = vrot.slane %v721, 1
      %v723 = vadd.f32 %v721, %v722
      %v726 = vcombine.low %v714, %v723
      %v728 = vunpack.c.l.s4 1966171168
      %v729 = vunpack.c.0.s8 %v728
      %v730 = vlaneseq
      %v731 = vshrl.u32 %v730, 7
      %v732 = vsub.s32 %v729, %v731
      %v733 = vrot.slane %v726, %v732
      %v735 = vunpack.c.l.s4 1966171168
      %v736 = vunpack.c.0.s8 %v735
      %v737 = vlaneseq
      %v738 = vshrl.u32 %v737, 7
      %v739 = vsub.s32 %v736, %v738
      %v740 = vrot.slane %v733, %v739
      %s742 = scalar_lea.vmem [#allocation2], 6
      %743 = vst.msk [vmem:[%s742] ss:$8 sm:$0x3] %vm382, %v740
      %744 = vst.msk [vmem:[%s742] ss:$8 sm:$0x0] %vm382, %v740
      %s745 = scalar_lea.vmem %s224, 224
      %v746 = vld [vmem:[%s745] sm:$0xff]
      %v747 = vld [vmem:[%s745 + $0x8] sm:$0xff]
      %v748 = vld [vmem:[%s745 + $0x10] sm:$0xff]
      %v749 = vld [vmem:[%s745 + $0x18] sm:$0xff]
      %v750 = vunpack.c.l.bf16 %v746
      %v751 = vunpack.c.h.bf16 %v746
      %v752 = vunpack.c.l.bf16 %v747
      %v753 = vunpack.c.h.bf16 %v747
      %v754 = vunpack.c.l.bf16 %v748
      %v755 = vunpack.c.h.bf16 %v748
      %v756 = vunpack.c.l.bf16 %v749
      %v757 = vunpack.c.h.bf16 %v749
      %v758 = vmul.f32 %v750, %v318
      %v759 = vmul.f32 %v751, %v318
      %v760 = vmul.f32 %v752, %v323
      %v761 = vmul.f32 %v753, %v323
      %v762 = vmul.f32 %v754, %v328
      %v763 = vmul.f32 %v755, %v328
      %v764 = vmul.f32 %v756, %v333
      %v765 = vmul.f32 %v757, %v333
      %v766 = vadd.f32 %v758, %v760
      %v767 = vadd.f32 %v766, %v762
      %v768 = vadd.f32 %v767, %v764
      %v769 = vrot.slane %v768, 4
      %v770 = vadd.f32 %v768, %v769
      %v771 = vrot.slane %v770, 2
      %v772 = vadd.f32 %v770, %v771
      %v773 = vrot.slane %v772, 1
      %v774 = vadd.f32 %v772, %v773
      %v775 = vadd.f32 %v759, %v761
      %v776 = vadd.f32 %v775, %v763
      %v777 = vadd.f32 %v776, %v765
      %v778 = vrot.slane %v777, 4
      %v779 = vadd.f32 %v777, %v778
      %v780 = vrot.slane %v779, 2
      %v781 = vadd.f32 %v779, %v780
      %v782 = vrot.slane %v781, 1
      %v783 = vadd.f32 %v781, %v782
      %v786 = vcombine.low %v774, %v783
      %v788 = vunpack.c.l.s4 1966171168
      %v789 = vunpack.c.0.s8 %v788
      %v790 = vlaneseq
      %v791 = vshrl.u32 %v790, 7
      %v792 = vsub.s32 %v789, %v791
      %v793 = vrot.slane %v786, %v792
      %v795 = vunpack.c.l.s4 1966171168
      %v796 = vunpack.c.0.s8 %v795
      %v797 = vlaneseq
      %v798 = vshrl.u32 %v797, 7
      %v799 = vsub.s32 %v796, %v798
      %v800 = vrot.slane %v793, %v799
      %s802 = scalar_lea.vmem [#allocation2], 7
      %803 = vst.msk [vmem:[%s802] ss:$8 sm:$0x3] %vm382, %v800
      %804 = vst.msk [vmem:[%s802] ss:$8 sm:$0x0] %vm382, %v800
      %s805 = scalar_lea.vmem %s224, 256
      %v806 = vld [vmem:[%s805] sm:$0xff]
      %v807 = vld [vmem:[%s805 + $0x8] sm:$0xff]
      %v808 = vld [vmem:[%s805 + $0x10] sm:$0xff]
      %v809 = vld [vmem:[%s805 + $0x18] sm:$0xff]
      %v810 = vunpack.c.l.bf16 %v806
      %v811 = vunpack.c.h.bf16 %v806
      %v812 = vunpack.c.l.bf16 %v807
      %v813 = vunpack.c.h.bf16 %v807
      %v814 = vunpack.c.l.bf16 %v808
      %v815 = vunpack.c.h.bf16 %v808
      %v816 = vunpack.c.l.bf16 %v809
      %v817 = vunpack.c.h.bf16 %v809
      %v818 = vmul.f32 %v810, %v318
      %v819 = vmul.f32 %v811, %v318
      %v820 = vmul.f32 %v812, %v323
      %v821 = vmul.f32 %v813, %v323
      %v822 = vmul.f32 %v814, %v328
      %v823 = vmul.f32 %v815, %v328
      %v824 = vmul.f32 %v816, %v333
      %v825 = vmul.f32 %v817, %v333
      %v826 = vadd.f32 %v818, %v820
      %v827 = vadd.f32 %v826, %v822
      %v828 = vadd.f32 %v827, %v824
      %v829 = vrot.slane %v828, 4
      %v830 = vadd.f32 %v828, %v829
      %v831 = vrot.slane %v830, 2
      %v832 = vadd.f32 %v830, %v831
      %v833 = vrot.slane %v832, 1
      %v834 = vadd.f32 %v832, %v833
      %v835 = vadd.f32 %v819, %v821
      %v836 = vadd.f32 %v835, %v823
      %v837 = vadd.f32 %v836, %v825
      %v838 = vrot.slane %v837, 4
      %v839 = vadd.f32 %v837, %v838
      %v840 = vrot.slane %v839, 2
      %v841 = vadd.f32 %v839, %v840
      %v842 = vrot.slane %v841, 1
      %v843 = vadd.f32 %v841, %v842
      %v846 = vcombine.low %v834, %v843
      %v848 = vunpack.c.l.s4 1966171168
      %v849 = vunpack.c.0.s8 %v848
      %v850 = vlaneseq
      %v851 = vshrl.u32 %v850, 7
      %v852 = vsub.s32 %v849, %v851
      %v853 = vrot.slane %v846, %v852
      %v855 = vunpack.c.l.s4 1966171168
      %v856 = vunpack.c.0.s8 %v855
      %v857 = vlaneseq
      %v858 = vshrl.u32 %v857, 7
      %v859 = vsub.s32 %v856, %v858
      %v860 = vrot.slane %v853, %v859
      %s862 = scalar_lea.vmem [#allocation2], 16
      %863 = vst.msk [vmem:[%s862] ss:$8 sm:$0x3] %vm382, %v860
      %864 = vst.msk [vmem:[%s862] ss:$8 sm:$0x0] %vm382, %v860
      %s865 = scalar_lea.vmem %s224, 288
      %v866 = vld [vmem:[%s865] sm:$0xff]
      %v867 = vld [vmem:[%s865 + $0x8] sm:$0xff]
      %v868 = vld [vmem:[%s865 + $0x10] sm:$0xff]
      %v869 = vld [vmem:[%s865 + $0x18] sm:$0xff]
      %v870 = vunpack.c.l.bf16 %v866
      %v871 = vunpack.c.h.bf16 %v866
      %v872 = vunpack.c.l.bf16 %v867
      %v873 = vunpack.c.h.bf16 %v867
      %v874 = vunpack.c.l.bf16 %v868
      %v875 = vunpack.c.h.bf16 %v868
      %v876 = vunpack.c.l.bf16 %v869
      %v877 = vunpack.c.h.bf16 %v869
      %v878 = vmul.f32 %v870, %v318
      %v879 = vmul.f32 %v871, %v318
      %v880 = vmul.f32 %v872, %v323
      %v881 = vmul.f32 %v873, %v323
      %v882 = vmul.f32 %v874, %v328
      %v883 = vmul.f32 %v875, %v328
      %v884 = vmul.f32 %v876, %v333
      %v885 = vmul.f32 %v877, %v333
      %v886 = vadd.f32 %v878, %v880
      %v887 = vadd.f32 %v886, %v882
      %v888 = vadd.f32 %v887, %v884
      %v889 = vrot.slane %v888, 4
      %v890 = vadd.f32 %v888, %v889
      %v891 = vrot.slane %v890, 2
      %v892 = vadd.f32 %v890, %v891
      %v893 = vrot.slane %v892, 1
      %v894 = vadd.f32 %v892, %v893
      %v895 = vadd.f32 %v879, %v881
      %v896 = vadd.f32 %v895, %v883
      %v897 = vadd.f32 %v896, %v885
      %v898 = vrot.slane %v897, 4
      %v899 = vadd.f32 %v897, %v898
      %v900 = vrot.slane %v899, 2
      %v901 = vadd.f32 %v899, %v900
      %v902 = vrot.slane %v901, 1
      %v903 = vadd.f32 %v901, %v902
      %v906 = vcombine.low %v894, %v903
      %v908 = vunpack.c.l.s4 1966171168
      %v909 = vunpack.c.0.s8 %v908
      %v910 = vlaneseq
      %v911 = vshrl.u32 %v910, 7
      %v912 = vsub.s32 %v909, %v911
      %v913 = vrot.slane %v906, %v912
      %v915 = vunpack.c.l.s4 1966171168
      %v916 = vunpack.c.0.s8 %v915
      %v917 = vlaneseq
      %v918 = vshrl.u32 %v917, 7
      %v919 = vsub.s32 %v916, %v918
      %v920 = vrot.slane %v913, %v919
      %s922 = scalar_lea.vmem [#allocation2], 17
      %923 = vst.msk [vmem:[%s922] ss:$8 sm:$0x3] %vm382, %v920
      %924 = vst.msk [vmem:[%s922] ss:$8 sm:$0x0] %vm382, %v920
      %s925 = scalar_lea.vmem %s224, 320
      %v926 = vld [vmem:[%s925] sm:$0xff]
      %v927 = vld [vmem:[%s925 + $0x8] sm:$0xff]
      %v928 = vld [vmem:[%s925 + $0x10] sm:$0xff]
      %v929 = vld [vmem:[%s925 + $0x18] sm:$0xff]
      %v930 = vunpack.c.l.bf16 %v926
      %v931 = vunpack.c.h.bf16 %v926
      %v932 = vunpack.c.l.bf16 %v927
      %v933 = vunpack.c.h.bf16 %v927
      %v934 = vunpack.c.l.bf16 %v928
      %v935 = vunpack.c.h.bf16 %v928
      %v936 = vunpack.c.l.bf16 %v929
      %v937 = vunpack.c.h.bf16 %v929
      %v938 = vmul.f32 %v930, %v318
      %v939 = vmul.f32 %v931, %v318
      %v940 = vmul.f32 %v932, %v323
      %v941 = vmul.f32 %v933, %v323
      %v942 = vmul.f32 %v934, %v328
      %v943 = vmul.f32 %v935, %v328
      %v944 = vmul.f32 %v936, %v333
      %v945 = vmul.f32 %v937, %v333
      %v946 = vadd.f32 %v938, %v940
      %v947 = vadd.f32 %v946, %v942
      %v948 = vadd.f32 %v947, %v944
      %v949 = vrot.slane %v948, 4
      %v950 = vadd.f32 %v948, %v949
      %v951 = vrot.slane %v950, 2
      %v952 = vadd.f32 %v950, %v951
      %v953 = vrot.slane %v952, 1
      %v954 = vadd.f32 %v952, %v953
      %v955 = vadd.f32 %v939, %v941
      %v956 = vadd.f32 %v955, %v943
      %v957 = vadd.f32 %v956, %v945
      %v958 = vrot.slane %v957, 4
      %v959 = vadd.f32 %v957, %v958
      %v960 = vrot.slane %v959, 2
      %v961 = vadd.f32 %v959, %v960
      %v962 = vrot.slane %v961, 1
      %v963 = vadd.f32 %v961, %v962
      %v966 = vcombine.low %v954, %v963
      %v968 = vunpack.c.l.s4 1966171168
      %v969 = vunpack.c.0.s8 %v968
      %v970 = vlaneseq
      %v971 = vshrl.u32 %v970, 7
      %v972 = vsub.s32 %v969, %v971
      %v973 = vrot.slane %v966, %v972
      %v975 = vunpack.c.l.s4 1966171168
      %v976 = vunpack.c.0.s8 %v975
      %v977 = vlaneseq
      %v978 = vshrl.u32 %v977, 7
      %v979 = vsub.s32 %v976, %v978
      %v980 = vrot.slane %v973, %v979
      %s982 = scalar_lea.vmem [#allocation2], 18
      %983 = vst.msk [vmem:[%s982] ss:$8 sm:$0x3] %vm382, %v980
      %984 = vst.msk [vmem:[%s982] ss:$8 sm:$0x0] %vm382, %v980
      %s985 = scalar_lea.vmem %s224, 352
      %v986 = vld [vmem:[%s985] sm:$0xff]
      %v987 = vld [vmem:[%s985 + $0x8] sm:$0xff]
      %v988 = vld [vmem:[%s985 + $0x10] sm:$0xff]
      %v989 = vld [vmem:[%s985 + $0x18] sm:$0xff]
      %v990 = vunpack.c.l.bf16 %v986
      %v991 = vunpack.c.h.bf16 %v986
      %v992 = vunpack.c.l.bf16 %v987
      %v993 = vunpack.c.h.bf16 %v987
      %v994 = vunpack.c.l.bf16 %v988
      %v995 = vunpack.c.h.bf16 %v988
      %v996 = vunpack.c.l.bf16 %v989
      %v997 = vunpack.c.h.bf16 %v989
      %v998 = vmul.f32 %v990, %v318
      %v999 = vmul.f32 %v991, %v318
      %v1000 = vmul.f32 %v992, %v323
      %v1001 = vmul.f32 %v993, %v323
      %v1002 = vmul.f32 %v994, %v328
      %v1003 = vmul.f32 %v995, %v328
      %v1004 = vmul.f32 %v996, %v333
      %v1005 = vmul.f32 %v997, %v333
      %v1006 = vadd.f32 %v998, %v1000
      %v1007 = vadd.f32 %v1006, %v1002
      %v1008 = vadd.f32 %v1007, %v1004
      %v1009 = vrot.slane %v1008, 4
      %v1010 = vadd.f32 %v1008, %v1009
      %v1011 = vrot.slane %v1010, 2
      %v1012 = vadd.f32 %v1010, %v1011
      %v1013 = vrot.slane %v1012, 1
      %v1014 = vadd.f32 %v1012, %v1013
      %v1015 = vadd.f32 %v999, %v1001
      %v1016 = vadd.f32 %v1015, %v1003
      %v1017 = vadd.f32 %v1016, %v1005
      %v1018 = vrot.slane %v1017, 4
      %v1019 = vadd.f32 %v1017, %v1018
      %v1020 = vrot.slane %v1019, 2
      %v1021 = vadd.f32 %v1019, %v1020
      %v1022 = vrot.slane %v1021, 1
      %v1023 = vadd.f32 %v1021, %v1022
      %v1026 = vcombine.low %v1014, %v1023
      %v1028 = vunpack.c.l.s4 1966171168
      %v1029 = vunpack.c.0.s8 %v1028
      %v1030 = vlaneseq
      %v1031 = vshrl.u32 %v1030, 7
      %v1032 = vsub.s32 %v1029, %v1031
      %v1033 = vrot.slane %v1026, %v1032
      %v1035 = vunpack.c.l.s4 1966171168
      %v1036 = vunpack.c.0.s8 %v1035
      %v1037 = vlaneseq
      %v1038 = vshrl.u32 %v1037, 7
      %v1039 = vsub.s32 %v1036, %v1038
      %v1040 = vrot.slane %v1033, %v1039
      %s1042 = scalar_lea.vmem [#allocation2], 19
      %1043 = vst.msk [vmem:[%s1042] ss:$8 sm:$0x3] %vm382, %v1040
      %1044 = vst.msk [vmem:[%s1042] ss:$8 sm:$0x0] %vm382, %v1040
      %s1045 = scalar_lea.vmem %s224, 384
      %v1046 = vld [vmem:[%s1045] sm:$0xff]
      %v1047 = vld [vmem:[%s1045 + $0x8] sm:$0xff]
      %v1048 = vld [vmem:[%s1045 + $0x10] sm:$0xff]
      %v1049 = vld [vmem:[%s1045 + $0x18] sm:$0xff]
      %v1050 = vunpack.c.l.bf16 %v1046
      %v1051 = vunpack.c.h.bf16 %v1046
      %v1052 = vunpack.c.l.bf16 %v1047
      %v1053 = vunpack.c.h.bf16 %v1047
      %v1054 = vunpack.c.l.bf16 %v1048
      %v1055 = vunpack.c.h.bf16 %v1048
      %v1056 = vunpack.c.l.bf16 %v1049
      %v1057 = vunpack.c.h.bf16 %v1049
      %v1058 = vmul.f32 %v1050, %v318
      %v1059 = vmul.f32 %v1051, %v318
      %v1060 = vmul.f32 %v1052, %v323
      %v1061 = vmul.f32 %v1053, %v323
      %v1062 = vmul.f32 %v1054, %v328
      %v1063 = vmul.f32 %v1055, %v328
      %v1064 = vmul.f32 %v1056, %v333
      %v1065 = vmul.f32 %v1057, %v333
      %v1066 = vadd.f32 %v1058, %v1060
      %v1067 = vadd.f32 %v1066, %v1062
      %v1068 = vadd.f32 %v1067, %v1064
      %v1069 = vrot.slane %v1068, 4
      %v1070 = vadd.f32 %v1068, %v1069
      %v1071 = vrot.slane %v1070, 2
      %v1072 = vadd.f32 %v1070, %v1071
      %v1073 = vrot.slane %v1072, 1
      %v1074 = vadd.f32 %v1072, %v1073
      %v1075 = vadd.f32 %v1059, %v1061
      %v1076 = vadd.f32 %v1075, %v1063
      %v1077 = vadd.f32 %v1076, %v1065
      %v1078 = vrot.slane %v1077, 4
      %v1079 = vadd.f32 %v1077, %v1078
      %v1080 = vrot.slane %v1079, 2
      %v1081 = vadd.f32 %v1079, %v1080
      %v1082 = vrot.slane %v1081, 1
      %v1083 = vadd.f32 %v1081, %v1082
      %v1086 = vcombine.low %v1074, %v1083
      %v1088 = vunpack.c.l.s4 1966171168
      %v1089 = vunpack.c.0.s8 %v1088
      %v1090 = vlaneseq
      %v1091 = vshrl.u32 %v1090, 7
      %v1092 = vsub.s32 %v1089, %v1091
      %v1093 = vrot.slane %v1086, %v1092
      %v1095 = vunpack.c.l.s4 1966171168
      %v1096 = vunpack.c.0.s8 %v1095
      %v1097 = vlaneseq
      %v1098 = vshrl.u32 %v1097, 7
      %v1099 = vsub.s32 %v1096, %v1098
      %v1100 = vrot.slane %v1093, %v1099
      %s1102 = scalar_lea.vmem [#allocation2], 20
      %1103 = vst.msk [vmem:[%s1102] ss:$8 sm:$0x3] %vm382, %v1100
      %1104 = vst.msk [vmem:[%s1102] ss:$8 sm:$0x0] %vm382, %v1100
      %s1105 = scalar_lea.vmem %s224, 416
      %v1106 = vld [vmem:[%s1105] sm:$0xff]
      %v1107 = vld [vmem:[%s1105 + $0x8] sm:$0xff]
      %v1108 = vld [vmem:[%s1105 + $0x10] sm:$0xff]
      %v1109 = vld [vmem:[%s1105 + $0x18] sm:$0xff]
      %v1110 = vunpack.c.l.bf16 %v1106
      %v1111 = vunpack.c.h.bf16 %v1106
      %v1112 = vunpack.c.l.bf16 %v1107
      %v1113 = vunpack.c.h.bf16 %v1107
      %v1114 = vunpack.c.l.bf16 %v1108
      %v1115 = vunpack.c.h.bf16 %v1108
      %v1116 = vunpack.c.l.bf16 %v1109
      %v1117 = vunpack.c.h.bf16 %v1109
      %v1118 = vmul.f32 %v1110, %v318
      %v1119 = vmul.f32 %v1111, %v318
      %v1120 = vmul.f32 %v1112, %v323
      %v1121 = vmul.f32 %v1113, %v323
      %v1122 = vmul.f32 %v1114, %v328
      %v1123 = vmul.f32 %v1115, %v328
      %v1124 = vmul.f32 %v1116, %v333
      %v1125 = vmul.f32 %v1117, %v333
      %v1126 = vadd.f32 %v1118, %v1120
      %v1127 = vadd.f32 %v1126, %v1122
      %v1128 = vadd.f32 %v1127, %v1124
      %v1129 = vrot.slane %v1128, 4
      %v1130 = vadd.f32 %v1128, %v1129
      %v1131 = vrot.slane %v1130, 2
      %v1132 = vadd.f32 %v1130, %v1131
      %v1133 = vrot.slane %v1132, 1
      %v1134 = vadd.f32 %v1132, %v1133
      %v1135 = vadd.f32 %v1119, %v1121
      %v1136 = vadd.f32 %v1135, %v1123
      %v1137 = vadd.f32 %v1136, %v1125
      %v1138 = vrot.slane %v1137, 4
      %v1139 = vadd.f32 %v1137, %v1138
      %v1140 = vrot.slane %v1139, 2
      %v1141 = vadd.f32 %v1139, %v1140
      %v1142 = vrot.slane %v1141, 1
      %v1143 = vadd.f32 %v1141, %v1142
      %v1146 = vcombine.low %v1134, %v1143
      %v1148 = vunpack.c.l.s4 1966171168
      %v1149 = vunpack.c.0.s8 %v1148
      %v1150 = vlaneseq
      %v1151 = vshrl.u32 %v1150, 7
      %v1152 = vsub.s32 %v1149, %v1151
      %v1153 = vrot.slane %v1146, %v1152
      %v1155 = vunpack.c.l.s4 1966171168
      %v1156 = vunpack.c.0.s8 %v1155
      %v1157 = vlaneseq
      %v1158 = vshrl.u32 %v1157, 7
      %v1159 = vsub.s32 %v1156, %v1158
      %v1160 = vrot.slane %v1153, %v1159
      %s1162 = scalar_lea.vmem [#allocation2], 21
      %1163 = vst.msk [vmem:[%s1162] ss:$8 sm:$0x3] %vm382, %v1160
      %1164 = vst.msk [vmem:[%s1162] ss:$8 sm:$0x0] %vm382, %v1160
      %s1165 = scalar_lea.vmem %s224, 448
      %v1166 = vld [vmem:[%s1165] sm:$0xff]
      %v1167 = vld [vmem:[%s1165 + $0x8] sm:$0xff]
      %v1168 = vld [vmem:[%s1165 + $0x10] sm:$0xff]
      %v1169 = vld [vmem:[%s1165 + $0x18] sm:$0xff]
      %v1170 = vunpack.c.l.bf16 %v1166
      %v1171 = vunpack.c.h.bf16 %v1166
      %v1172 = vunpack.c.l.bf16 %v1167
      %v1173 = vunpack.c.h.bf16 %v1167
      %v1174 = vunpack.c.l.bf16 %v1168
      %v1175 = vunpack.c.h.bf16 %v1168
      %v1176 = vunpack.c.l.bf16 %v1169
      %v1177 = vunpack.c.h.bf16 %v1169
      %v1178 = vmul.f32 %v1170, %v318
      %v1179 = vmul.f32 %v1171, %v318
      %v1180 = vmul.f32 %v1172, %v323
      %v1181 = vmul.f32 %v1173, %v323
      %v1182 = vmul.f32 %v1174, %v328
      %v1183 = vmul.f32 %v1175, %v328
      %v1184 = vmul.f32 %v1176, %v333
      %v1185 = vmul.f32 %v1177, %v333
      %v1186 = vadd.f32 %v1178, %v1180
      %v1187 = vadd.f32 %v1186, %v1182
      %v1188 = vadd.f32 %v1187, %v1184
      %v1189 = vrot.slane %v1188, 4
      %v1190 = vadd.f32 %v1188, %v1189
      %v1191 = vrot.slane %v1190, 2
      %v1192 = vadd.f32 %v1190, %v1191
      %v1193 = vrot.slane %v1192, 1
      %v1194 = vadd.f32 %v1192, %v1193
      %v1195 = vadd.f32 %v1179, %v1181
      %v1196 = vadd.f32 %v1195, %v1183
      %v1197 = vadd.f32 %v1196, %v1185
      %v1198 = vrot.slane %v1197, 4
      %v1199 = vadd.f32 %v1197, %v1198
      %v1200 = vrot.slane %v1199, 2
      %v1201 = vadd.f32 %v1199, %v1200
      %v1202 = vrot.slane %v1201, 1
      %v1203 = vadd.f32 %v1201, %v1202
      %v1206 = vcombine.low %v1194, %v1203
      %v1208 = vunpack.c.l.s4 1966171168
      %v1209 = vunpack.c.0.s8 %v1208
      %v1210 = vlaneseq
      %v1211 = vshrl.u32 %v1210, 7
      %v1212 = vsub.s32 %v1209, %v1211
      %v1213 = vrot.slane %v1206, %v1212
      %v1215 = vunpack.c.l.s4 1966171168
      %v1216 = vunpack.c.0.s8 %v1215
      %v1217 = vlaneseq
      %v1218 = vshrl.u32 %v1217, 7
      %v1219 = vsub.s32 %v1216, %v1218
      %v1220 = vrot.slane %v1213, %v1219
      %s1222 = scalar_lea.vmem [#allocation2], 22
      %1223 = vst.msk [vmem:[%s1222] ss:$8 sm:$0x3] %vm382, %v1220
      %1224 = vst.msk [vmem:[%s1222] ss:$8 sm:$0x0] %vm382, %v1220
      %s1225 = scalar_lea.vmem %s224, 480
      %v1226 = vld [vmem:[%s1225] sm:$0xff]
      %v1227 = vld [vmem:[%s1225 + $0x8] sm:$0xff]
      %v1228 = vld [vmem:[%s1225 + $0x10] sm:$0xff]
      %v1229 = vld [vmem:[%s1225 + $0x18] sm:$0xff]
      %v1230 = vunpack.c.l.bf16 %v1226
      %v1231 = vunpack.c.h.bf16 %v1226
      %v1232 = vunpack.c.l.bf16 %v1227
      %v1233 = vunpack.c.h.bf16 %v1227
      %v1234 = vunpack.c.l.bf16 %v1228
      %v1235 = vunpack.c.h.bf16 %v1228
      %v1236 = vunpack.c.l.bf16 %v1229
      %v1237 = vunpack.c.h.bf16 %v1229
      %v1238 = vmul.f32 %v1230, %v318
      %v1239 = vmul.f32 %v1231, %v318
      %v1240 = vmul.f32 %v1232, %v323
      %v1241 = vmul.f32 %v1233, %v323
      %v1242 = vmul.f32 %v1234, %v328
      %v1243 = vmul.f32 %v1235, %v328
      %v1244 = vmul.f32 %v1236, %v333
      %v1245 = vmul.f32 %v1237, %v333
      %v1246 = vadd.f32 %v1238, %v1240
      %v1247 = vadd.f32 %v1246, %v1242
      %v1248 = vadd.f32 %v1247, %v1244
      %v1249 = vrot.slane %v1248, 4
      %v1250 = vadd.f32 %v1248, %v1249
      %v1251 = vrot.slane %v1250, 2
      %v1252 = vadd.f32 %v1250, %v1251
      %v1253 = vrot.slane %v1252, 1
      %v1254 = vadd.f32 %v1252, %v1253
      %v1255 = vadd.f32 %v1239, %v1241
      %v1256 = vadd.f32 %v1255, %v1243
      %v1257 = vadd.f32 %v1256, %v1245
      %v1258 = vrot.slane %v1257, 4
      %v1259 = vadd.f32 %v1257, %v1258
      %v1260 = vrot.slane %v1259, 2
      %v1261 = vadd.f32 %v1259, %v1260
      %v1262 = vrot.slane %v1261, 1
      %v1263 = vadd.f32 %v1261, %v1262
      %v1266 = vcombine.low %v1254, %v1263
      %v1268 = vunpack.c.l.s4 1966171168
      %v1269 = vunpack.c.0.s8 %v1268
      %v1270 = vlaneseq
      %v1271 = vshrl.u32 %v1270, 7
      %v1272 = vsub.s32 %v1269, %v1271
      %v1273 = vrot.slane %v1266, %v1272
      %v1275 = vunpack.c.l.s4 1966171168
      %v1276 = vunpack.c.0.s8 %v1275
      %v1277 = vlaneseq
      %v1278 = vshrl.u32 %v1277, 7
      %v1279 = vsub.s32 %v1276, %v1278
      %v1280 = vrot.slane %v1273, %v1279
      %s1282 = scalar_lea.vmem [#allocation2], 23
      %1283 = vst.msk [vmem:[%s1282] ss:$8 sm:$0x3] %vm382, %v1280
      %1284 = vst.msk [vmem:[%s1282] ss:$8 sm:$0x0] %vm382, %v1280
      %s1285 = scalar_lea.vmem %s224, 512
      %v1286 = vld [vmem:[%s1285] sm:$0xff]
      %v1287 = vld [vmem:[%s1285 + $0x8] sm:$0xff]
      %v1288 = vld [vmem:[%s1285 + $0x10] sm:$0xff]
      %v1289 = vld [vmem:[%s1285 + $0x18] sm:$0xff]
      %v1290 = vunpack.c.l.bf16 %v1286
      %v1291 = vunpack.c.h.bf16 %v1286
      %v1292 = vunpack.c.l.bf16 %v1287
      %v1293 = vunpack.c.h.bf16 %v1287
      %v1294 = vunpack.c.l.bf16 %v1288
      %v1295 = vunpack.c.h.bf16 %v1288
      %v1296 = vunpack.c.l.bf16 %v1289
      %v1297 = vunpack.c.h.bf16 %v1289
      %v1298 = vmul.f32 %v1290, %v318
      %v1299 = vmul.f32 %v1291, %v318
      %v1300 = vmul.f32 %v1292, %v323
      %v1301 = vmul.f32 %v1293, %v323
      %v1302 = vmul.f32 %v1294, %v328
      %v1303 = vmul.f32 %v1295, %v328
      %v1304 = vmul.f32 %v1296, %v333
      %v1305 = vmul.f32 %v1297, %v333
      %v1306 = vadd.f32 %v1298, %v1300
      %v1307 = vadd.f32 %v1306, %v1302
      %v1308 = vadd.f32 %v1307, %v1304
      %v1309 = vrot.slane %v1308, 4
      %v1310 = vadd.f32 %v1308, %v1309
      %v1311 = vrot.slane %v1310, 2
      %v1312 = vadd.f32 %v1310, %v1311
      %v1313 = vrot.slane %v1312, 1
      %v1314 = vadd.f32 %v1312, %v1313
      %v1315 = vadd.f32 %v1299, %v1301
      %v1316 = vadd.f32 %v1315, %v1303
      %v1317 = vadd.f32 %v1316, %v1305
      %v1318 = vrot.slane %v1317, 4
      %v1319 = vadd.f32 %v1317, %v1318
      %v1320 = vrot.slane %v1319, 2
      %v1321 = vadd.f32 %v1319, %v1320
      %v1322 = vrot.slane %v1321, 1
      %v1323 = vadd.f32 %v1321, %v1322
      %v1326 = vcombine.low %v1314, %v1323
      %v1328 = vunpack.c.l.s4 1966171168
      %v1329 = vunpack.c.0.s8 %v1328
      %v1330 = vlaneseq
      %v1331 = vshrl.u32 %v1330, 7
      %v1332 = vsub.s32 %v1329, %v1331
      %v1333 = vrot.slane %v1326, %v1332
      %v1335 = vunpack.c.l.s4 1966171168
      %v1336 = vunpack.c.0.s8 %v1335
      %v1337 = vlaneseq
      %v1338 = vshrl.u32 %v1337, 7
      %v1339 = vsub.s32 %v1336, %v1338
      %v1340 = vrot.slane %v1333, %v1339
      %s1342 = scalar_lea.vmem [#allocation2], 32
      %1343 = vst.msk [vmem:[%s1342] ss:$8 sm:$0x3] %vm382, %v1340
      %1344 = vst.msk [vmem:[%s1342] ss:$8 sm:$0x0] %vm382, %v1340
      %s1345 = scalar_lea.vmem %s224, 544
      %v1346 = vld [vmem:[%s1345] sm:$0xff]
      %v1347 = vld [vmem:[%s1345 + $0x8] sm:$0xff]
      %v1348 = vld [vmem:[%s1345 + $0x10] sm:$0xff]
      %v1349 = vld [vmem:[%s1345 + $0x18] sm:$0xff]
      %v1350 = vunpack.c.l.bf16 %v1346
      %v1351 = vunpack.c.h.bf16 %v1346
      %v1352 = vunpack.c.l.bf16 %v1347
      %v1353 = vunpack.c.h.bf16 %v1347
      %v1354 = vunpack.c.l.bf16 %v1348
      %v1355 = vunpack.c.h.bf16 %v1348
      %v1356 = vunpack.c.l.bf16 %v1349
      %v1357 = vunpack.c.h.bf16 %v1349
      %v1358 = vmul.f32 %v1350, %v318
      %v1359 = vmul.f32 %v1351, %v318
      %v1360 = vmul.f32 %v1352, %v323
      %v1361 = vmul.f32 %v1353, %v323
      %v1362 = vmul.f32 %v1354, %v328
      %v1363 = vmul.f32 %v1355, %v328
      %v1364 = vmul.f32 %v1356, %v333
      %v1365 = vmul.f32 %v1357, %v333
      %v1366 = vadd.f32 %v1358, %v1360
      %v1367 = vadd.f32 %v1366, %v1362
      %v1368 = vadd.f32 %v1367, %v1364
      %v1369 = vrot.slane %v1368, 4
      %v1370 = vadd.f32 %v1368, %v1369
      %v1371 = vrot.slane %v1370, 2
      %v1372 = vadd.f32 %v1370, %v1371
      %v1373 = vrot.slane %v1372, 1
      %v1374 = vadd.f32 %v1372, %v1373
      %v1375 = vadd.f32 %v1359, %v1361
      %v1376 = vadd.f32 %v1375, %v1363
      %v1377 = vadd.f32 %v1376, %v1365
      %v1378 = vrot.slane %v1377, 4
      %v1379 = vadd.f32 %v1377, %v1378
      %v1380 = vrot.slane %v1379, 2
      %v1381 = vadd.f32 %v1379, %v1380
      %v1382 = vrot.slane %v1381, 1
      %v1383 = vadd.f32 %v1381, %v1382
      %v1386 = vcombine.low %v1374, %v1383
      %v1388 = vunpack.c.l.s4 1966171168
      %v1389 = vunpack.c.0.s8 %v1388
      %v1390 = vlaneseq
      %v1391 = vshrl.u32 %v1390, 7
      %v1392 = vsub.s32 %v1389, %v1391
      %v1393 = vrot.slane %v1386, %v1392
      %v1395 = vunpack.c.l.s4 1966171168
      %v1396 = vunpack.c.0.s8 %v1395
      %v1397 = vlaneseq
      %v1398 = vshrl.u32 %v1397, 7
      %v1399 = vsub.s32 %v1396, %v1398
      %v1400 = vrot.slane %v1393, %v1399
      %s1402 = scalar_lea.vmem [#allocation2], 33
      %1403 = vst.msk [vmem:[%s1402] ss:$8 sm:$0x3] %vm382, %v1400
      %1404 = vst.msk [vmem:[%s1402] ss:$8 sm:$0x0] %vm382, %v1400
      %s1405 = scalar_lea.vmem %s224, 576
      %v1406 = vld [vmem:[%s1405] sm:$0xff]
      %v1407 = vld [vmem:[%s1405 + $0x8] sm:$0xff]
      %v1408 = vld [vmem:[%s1405 + $0x10] sm:$0xff]
      %v1409 = vld [vmem:[%s1405 + $0x18] sm:$0xff]
      %v1410 = vunpack.c.l.bf16 %v1406
      %v1411 = vunpack.c.h.bf16 %v1406
      %v1412 = vunpack.c.l.bf16 %v1407
      %v1413 = vunpack.c.h.bf16 %v1407
      %v1414 = vunpack.c.l.bf16 %v1408
      %v1415 = vunpack.c.h.bf16 %v1408
      %v1416 = vunpack.c.l.bf16 %v1409
      %v1417 = vunpack.c.h.bf16 %v1409
      %v1418 = vmul.f32 %v1410, %v318
      %v1419 = vmul.f32 %v1411, %v318
      %v1420 = vmul.f32 %v1412, %v323
      %v1421 = vmul.f32 %v1413, %v323
      %v1422 = vmul.f32 %v1414, %v328
      %v1423 = vmul.f32 %v1415, %v328
      %v1424 = vmul.f32 %v1416, %v333
      %v1425 = vmul.f32 %v1417, %v333
      %v1426 = vadd.f32 %v1418, %v1420
      %v1427 = vadd.f32 %v1426, %v1422
      %v1428 = vadd.f32 %v1427, %v1424
      %v1429 = vrot.slane %v1428, 4
      %v1430 = vadd.f32 %v1428, %v1429
      %v1431 = vrot.slane %v1430, 2
      %v1432 = vadd.f32 %v1430, %v1431
      %v1433 = vrot.slane %v1432, 1
      %v1434 = vadd.f32 %v1432, %v1433
      %v1435 = vadd.f32 %v1419, %v1421
      %v1436 = vadd.f32 %v1435, %v1423
      %v1437 = vadd.f32 %v1436, %v1425
      %v1438 = vrot.slane %v1437, 4
      %v1439 = vadd.f32 %v1437, %v1438
      %v1440 = vrot.slane %v1439, 2
      %v1441 = vadd.f32 %v1439, %v1440
      %v1442 = vrot.slane %v1441, 1
      %v1443 = vadd.f32 %v1441, %v1442
      %v1446 = vcombine.low %v1434, %v1443
      %v1448 = vunpack.c.l.s4 1966171168
      %v1449 = vunpack.c.0.s8 %v1448
      %v1450 = vlaneseq
      %v1451 = vshrl.u32 %v1450, 7
      %v1452 = vsub.s32 %v1449, %v1451
      %v1453 = vrot.slane %v1446, %v1452
      %v1455 = vunpack.c.l.s4 1966171168
      %v1456 = vunpack.c.0.s8 %v1455
      %v1457 = vlaneseq
      %v1458 = vshrl.u32 %v1457, 7
      %v1459 = vsub.s32 %v1456, %v1458
      %v1460 = vrot.slane %v1453, %v1459
      %s1462 = scalar_lea.vmem [#allocation2], 34
      %1463 = vst.msk [vmem:[%s1462] ss:$8 sm:$0x3] %vm382, %v1460
      %1464 = vst.msk [vmem:[%s1462] ss:$8 sm:$0x0] %vm382, %v1460
      %s1465 = scalar_lea.vmem %s224, 608
      %v1466 = vld [vmem:[%s1465] sm:$0xff]
      %v1467 = vld [vmem:[%s1465 + $0x8] sm:$0xff]
      %v1468 = vld [vmem:[%s1465 + $0x10] sm:$0xff]
      %v1469 = vld [vmem:[%s1465 + $0x18] sm:$0xff]
      %v1470 = vunpack.c.l.bf16 %v1466
      %v1471 = vunpack.c.h.bf16 %v1466
      %v1472 = vunpack.c.l.bf16 %v1467
      %v1473 = vunpack.c.h.bf16 %v1467
      %v1474 = vunpack.c.l.bf16 %v1468
      %v1475 = vunpack.c.h.bf16 %v1468
      %v1476 = vunpack.c.l.bf16 %v1469
      %v1477 = vunpack.c.h.bf16 %v1469
      %v1478 = vmul.f32 %v1470, %v318
      %v1479 = vmul.f32 %v1471, %v318
      %v1480 = vmul.f32 %v1472, %v323
      %v1481 = vmul.f32 %v1473, %v323
      %v1482 = vmul.f32 %v1474, %v328
      %v1483 = vmul.f32 %v1475, %v328
      %v1484 = vmul.f32 %v1476, %v333
      %v1485 = vmul.f32 %v1477, %v333
      %v1486 = vadd.f32 %v1478, %v1480
      %v1487 = vadd.f32 %v1486, %v1482
      %v1488 = vadd.f32 %v1487, %v1484
      %v1489 = vrot.slane %v1488, 4
      %v1490 = vadd.f32 %v1488, %v1489
      %v1491 = vrot.slane %v1490, 2
      %v1492 = vadd.f32 %v1490, %v1491
      %v1493 = vrot.slane %v1492, 1
      %v1494 = vadd.f32 %v1492, %v1493
      %v1495 = vadd.f32 %v1479, %v1481
      %v1496 = vadd.f32 %v1495, %v1483
      %v1497 = vadd.f32 %v1496, %v1485
      %v1498 = vrot.slane %v1497, 4
      %v1499 = vadd.f32 %v1497, %v1498
      %v1500 = vrot.slane %v1499, 2
      %v1501 = vadd.f32 %v1499, %v1500
      %v1502 = vrot.slane %v1501, 1
      %v1503 = vadd.f32 %v1501, %v1502
      %v1506 = vcombine.low %v1494, %v1503
      %v1508 = vunpack.c.l.s4 1966171168
      %v1509 = vunpack.c.0.s8 %v1508
      %v1510 = vlaneseq
      %v1511 = vshrl.u32 %v1510, 7
      %v1512 = vsub.s32 %v1509, %v1511
      %v1513 = vrot.slane %v1506, %v1512
      %v1515 = vunpack.c.l.s4 1966171168
      %v1516 = vunpack.c.0.s8 %v1515
      %v1517 = vlaneseq
      %v1518 = vshrl.u32 %v1517, 7
      %v1519 = vsub.s32 %v1516, %v1518
      %v1520 = vrot.slane %v1513, %v1519
      %s1522 = scalar_lea.vmem [#allocation2], 35
      %1523 = vst.msk [vmem:[%s1522] ss:$8 sm:$0x3] %vm382, %v1520
      %1524 = vst.msk [vmem:[%s1522] ss:$8 sm:$0x0] %vm382, %v1520
      %s1525 = scalar_lea.vmem %s224, 640
      %v1526 = vld [vmem:[%s1525] sm:$0xff]
      %v1527 = vld [vmem:[%s1525 + $0x8] sm:$0xff]
      %v1528 = vld [vmem:[%s1525 + $0x10] sm:$0xff]
      %v1529 = vld [vmem:[%s1525 + $0x18] sm:$0xff]
      %v1530 = vunpack.c.l.bf16 %v1526
      %v1531 = vunpack.c.h.bf16 %v1526
      %v1532 = vunpack.c.l.bf16 %v1527
      %v1533 = vunpack.c.h.bf16 %v1527
      %v1534 = vunpack.c.l.bf16 %v1528
      %v1535 = vunpack.c.h.bf16 %v1528
      %v1536 = vunpack.c.l.bf16 %v1529
      %v1537 = vunpack.c.h.bf16 %v1529
      %v1538 = vmul.f32 %v1530, %v318
      %v1539 = vmul.f32 %v1531, %v318
      %v1540 = vmul.f32 %v1532, %v323
      %v1541 = vmul.f32 %v1533, %v323
      %v1542 = vmul.f32 %v1534, %v328
      %v1543 = vmul.f32 %v1535, %v328
      %v1544 = vmul.f32 %v1536, %v333
      %v1545 = vmul.f32 %v1537, %v333
      %v1546 = vadd.f32 %v1538, %v1540
      %v1547 = vadd.f32 %v1546, %v1542
      %v1548 = vadd.f32 %v1547, %v1544
      %v1549 = vrot.slane %v1548, 4
      %v1550 = vadd.f32 %v1548, %v1549
      %v1551 = vrot.slane %v1550, 2
      %v1552 = vadd.f32 %v1550, %v1551
      %v1553 = vrot.slane %v1552, 1
      %v1554 = vadd.f32 %v1552, %v1553
      %v1555 = vadd.f32 %v1539, %v1541
      %v1556 = vadd.f32 %v1555, %v1543
      %v1557 = vadd.f32 %v1556, %v1545
      %v1558 = vrot.slane %v1557, 4
      %v1559 = vadd.f32 %v1557, %v1558
      %v1560 = vrot.slane %v1559, 2
      %v1561 = vadd.f32 %v1559, %v1560
      %v1562 = vrot.slane %v1561, 1
      %v1563 = vadd.f32 %v1561, %v1562
      %v1566 = vcombine.low %v1554, %v1563
      %v1568 = vunpack.c.l.s4 1966171168
      %v1569 = vunpack.c.0.s8 %v1568
      %v1570 = vlaneseq
      %v1571 = vshrl.u32 %v1570, 7
      %v1572 = vsub.s32 %v1569, %v1571
      %v1573 = vrot.slane %v1566, %v1572
      %v1575 = vunpack.c.l.s4 1966171168
      %v1576 = vunpack.c.0.s8 %v1575
      %v1577 = vlaneseq
      %v1578 = vshrl.u32 %v1577, 7
      %v1579 = vsub.s32 %v1576, %v1578
      %v1580 = vrot.slane %v1573, %v1579
      %s1582 = scalar_lea.vmem [#allocation2], 36
      %1583 = vst.msk [vmem:[%s1582] ss:$8 sm:$0x3] %vm382, %v1580
      %1584 = vst.msk [vmem:[%s1582] ss:$8 sm:$0x0] %vm382, %v1580
      %s1585 = scalar_lea.vmem %s224, 672
      %v1586 = vld [vmem:[%s1585] sm:$0xff]
      %v1587 = vld [vmem:[%s1585 + $0x8] sm:$0xff]
      %v1588 = vld [vmem:[%s1585 + $0x10] sm:$0xff]
      %v1589 = vld [vmem:[%s1585 + $0x18] sm:$0xff]
      %v1590 = vunpack.c.l.bf16 %v1586
      %v1591 = vunpack.c.h.bf16 %v1586
      %v1592 = vunpack.c.l.bf16 %v1587
      %v1593 = vunpack.c.h.bf16 %v1587
      %v1594 = vunpack.c.l.bf16 %v1588
      %v1595 = vunpack.c.h.bf16 %v1588
      %v1596 = vunpack.c.l.bf16 %v1589
      %v1597 = vunpack.c.h.bf16 %v1589
      %v1598 = vmul.f32 %v1590, %v318
      %v1599 = vmul.f32 %v1591, %v318
      %v1600 = vmul.f32 %v1592, %v323
      %v1601 = vmul.f32 %v1593, %v323
      %v1602 = vmul.f32 %v1594, %v328
      %v1603 = vmul.f32 %v1595, %v328
      %v1604 = vmul.f32 %v1596, %v333
      %v1605 = vmul.f32 %v1597, %v333
      %v1606 = vadd.f32 %v1598, %v1600
      %v1607 = vadd.f32 %v1606, %v1602
      %v1608 = vadd.f32 %v1607, %v1604
      %v1609 = vrot.slane %v1608, 4
      %v1610 = vadd.f32 %v1608, %v1609
      %v1611 = vrot.slane %v1610, 2
      %v1612 = vadd.f32 %v1610, %v1611
      %v1613 = vrot.slane %v1612, 1
      %v1614 = vadd.f32 %v1612, %v1613
      %v1615 = vadd.f32 %v1599, %v1601
      %v1616 = vadd.f32 %v1615, %v1603
      %v1617 = vadd.f32 %v1616, %v1605
      %v1618 = vrot.slane %v1617, 4
      %v1619 = vadd.f32 %v1617, %v1618
      %v1620 = vrot.slane %v1619, 2
      %v1621 = vadd.f32 %v1619, %v1620
      %v1622 = vrot.slane %v1621, 1
      %v1623 = vadd.f32 %v1621, %v1622
      %v1626 = vcombine.low %v1614, %v1623
      %v1628 = vunpack.c.l.s4 1966171168
      %v1629 = vunpack.c.0.s8 %v1628
      %v1630 = vlaneseq
      %v1631 = vshrl.u32 %v1630, 7
      %v1632 = vsub.s32 %v1629, %v1631
      %v1633 = vrot.slane %v1626, %v1632
      %v1635 = vunpack.c.l.s4 1966171168
      %v1636 = vunpack.c.0.s8 %v1635
      %v1637 = vlaneseq
      %v1638 = vshrl.u32 %v1637, 7
      %v1639 = vsub.s32 %v1636, %v1638
      %v1640 = vrot.slane %v1633, %v1639
      %s1642 = scalar_lea.vmem [#allocation2], 37
      %1643 = vst.msk [vmem:[%s1642] ss:$8 sm:$0x3] %vm382, %v1640
      %1644 = vst.msk [vmem:[%s1642] ss:$8 sm:$0x0] %vm382, %v1640
      %s1645 = scalar_lea.vmem %s224, 704
      %v1646 = vld [vmem:[%s1645] sm:$0xff]
      %v1647 = vld [vmem:[%s1645 + $0x8] sm:$0xff]
      %v1648 = vld [vmem:[%s1645 + $0x10] sm:$0xff]
      %v1649 = vld [vmem:[%s1645 + $0x18] sm:$0xff]
      %v1650 = vunpack.c.l.bf16 %v1646
      %v1651 = vunpack.c.h.bf16 %v1646
      %v1652 = vunpack.c.l.bf16 %v1647
      %v1653 = vunpack.c.h.bf16 %v1647
      %v1654 = vunpack.c.l.bf16 %v1648
      %v1655 = vunpack.c.h.bf16 %v1648
      %v1656 = vunpack.c.l.bf16 %v1649
      %v1657 = vunpack.c.h.bf16 %v1649
      %v1658 = vmul.f32 %v1650, %v318
      %v1659 = vmul.f32 %v1651, %v318
      %v1660 = vmul.f32 %v1652, %v323
      %v1661 = vmul.f32 %v1653, %v323
      %v1662 = vmul.f32 %v1654, %v328
      %v1663 = vmul.f32 %v1655, %v328
      %v1664 = vmul.f32 %v1656, %v333
      %v1665 = vmul.f32 %v1657, %v333
      %v1666 = vadd.f32 %v1658, %v1660
      %v1667 = vadd.f32 %v1666, %v1662
      %v1668 = vadd.f32 %v1667, %v1664
      %v1669 = vrot.slane %v1668, 4
      %v1670 = vadd.f32 %v1668, %v1669
      %v1671 = vrot.slane %v1670, 2
      %v1672 = vadd.f32 %v1670, %v1671
      %v1673 = vrot.slane %v1672, 1
      %v1674 = vadd.f32 %v1672, %v1673
      %v1675 = vadd.f32 %v1659, %v1661
      %v1676 = vadd.f32 %v1675, %v1663
      %v1677 = vadd.f32 %v1676, %v1665
      %v1678 = vrot.slane %v1677, 4
      %v1679 = vadd.f32 %v1677, %v1678
      %v1680 = vrot.slane %v1679, 2
      %v1681 = vadd.f32 %v1679, %v1680
      %v1682 = vrot.slane %v1681, 1
      %v1683 = vadd.f32 %v1681, %v1682
      %v1686 = vcombine.low %v1674, %v1683
      %v1688 = vunpack.c.l.s4 1966171168
      %v1689 = vunpack.c.0.s8 %v1688
      %v1690 = vlaneseq
      %v1691 = vshrl.u32 %v1690, 7
      %v1692 = vsub.s32 %v1689, %v1691
      %v1693 = vrot.slane %v1686, %v1692
      %v1695 = vunpack.c.l.s4 1966171168
      %v1696 = vunpack.c.0.s8 %v1695
      %v1697 = vlaneseq
      %v1698 = vshrl.u32 %v1697, 7
      %v1699 = vsub.s32 %v1696, %v1698
      %v1700 = vrot.slane %v1693, %v1699
      %s1702 = scalar_lea.vmem [#allocation2], 38
      %1703 = vst.msk [vmem:[%s1702] ss:$8 sm:$0x3] %vm382, %v1700
      %1704 = vst.msk [vmem:[%s1702] ss:$8 sm:$0x0] %vm382, %v1700
      %s1705 = scalar_lea.vmem %s224, 736
      %v1706 = vld [vmem:[%s1705] sm:$0xff]
      %v1707 = vld [vmem:[%s1705 + $0x8] sm:$0xff]
      %v1708 = vld [vmem:[%s1705 + $0x10] sm:$0xff]
      %v1709 = vld [vmem:[%s1705 + $0x18] sm:$0xff]
      %v1710 = vunpack.c.l.bf16 %v1706
      %v1711 = vunpack.c.h.bf16 %v1706
      %v1712 = vunpack.c.l.bf16 %v1707
      %v1713 = vunpack.c.h.bf16 %v1707
      %v1714 = vunpack.c.l.bf16 %v1708
      %v1715 = vunpack.c.h.bf16 %v1708
      %v1716 = vunpack.c.l.bf16 %v1709
      %v1717 = vunpack.c.h.bf16 %v1709
      %v1718 = vmul.f32 %v1710, %v318
      %v1719 = vmul.f32 %v1711, %v318
      %v1720 = vmul.f32 %v1712, %v323
      %v1721 = vmul.f32 %v1713, %v323
      %v1722 = vmul.f32 %v1714, %v328
      %v1723 = vmul.f32 %v1715, %v328
      %v1724 = vmul.f32 %v1716, %v333
      %v1725 = vmul.f32 %v1717, %v333
      %v1726 = vadd.f32 %v1718, %v1720
      %v1727 = vadd.f32 %v1726, %v1722
      %v1728 = vadd.f32 %v1727, %v1724
      %v1729 = vrot.slane %v1728, 4
      %v1730 = vadd.f32 %v1728, %v1729
      %v1731 = vrot.slane %v1730, 2
      %v1732 = vadd.f32 %v1730, %v1731
      %v1733 = vrot.slane %v1732, 1
      %v1734 = vadd.f32 %v1732, %v1733
      %v1735 = vadd.f32 %v1719, %v1721
      %v1736 = vadd.f32 %v1735, %v1723
      %v1737 = vadd.f32 %v1736, %v1725
      %v1738 = vrot.slane %v1737, 4
      %v1739 = vadd.f32 %v1737, %v1738
      %v1740 = vrot.slane %v1739, 2
      %v1741 = vadd.f32 %v1739, %v1740
      %v1742 = vrot.slane %v1741, 1
      %v1743 = vadd.f32 %v1741, %v1742
      %v1746 = vcombine.low %v1734, %v1743
      %v1748 = vunpack.c.l.s4 1966171168
      %v1749 = vunpack.c.0.s8 %v1748
      %v1750 = vlaneseq
      %v1751 = vshrl.u32 %v1750, 7
      %v1752 = vsub.s32 %v1749, %v1751
      %v1753 = vrot.slane %v1746, %v1752
      %v1755 = vunpack.c.l.s4 1966171168
      %v1756 = vunpack.c.0.s8 %v1755
      %v1757 = vlaneseq
      %v1758 = vshrl.u32 %v1757, 7
      %v1759 = vsub.s32 %v1756, %v1758
      %v1760 = vrot.slane %v1753, %v1759
      %s1762 = scalar_lea.vmem [#allocation2], 39
      %1763 = vst.msk [vmem:[%s1762] ss:$8 sm:$0x3] %vm382, %v1760
      %1764 = vst.msk [vmem:[%s1762] ss:$8 sm:$0x0] %vm382, %v1760
      %s1765 = scalar_lea.vmem %s224, 768
      %v1766 = vld [vmem:[%s1765] sm:$0xff]
      %v1767 = vld [vmem:[%s1765 + $0x8] sm:$0xff]
      %v1768 = vld [vmem:[%s1765 + $0x10] sm:$0xff]
      %v1769 = vld [vmem:[%s1765 + $0x18] sm:$0xff]
      %v1770 = vunpack.c.l.bf16 %v1766
      %v1771 = vunpack.c.h.bf16 %v1766
      %v1772 = vunpack.c.l.bf16 %v1767
      %v1773 = vunpack.c.h.bf16 %v1767
      %v1774 = vunpack.c.l.bf16 %v1768
      %v1775 = vunpack.c.h.bf16 %v1768
      %v1776 = vunpack.c.l.bf16 %v1769
      %v1777 = vunpack.c.h.bf16 %v1769
      %v1778 = vmul.f32 %v1770, %v318
      %v1779 = vmul.f32 %v1771, %v318
      %v1780 = vmul.f32 %v1772, %v323
      %v1781 = vmul.f32 %v1773, %v323
      %v1782 = vmul.f32 %v1774, %v328
      %v1783 = vmul.f32 %v1775, %v328
      %v1784 = vmul.f32 %v1776, %v333
      %v1785 = vmul.f32 %v1777, %v333
      %v1786 = vadd.f32 %v1778, %v1780
      %v1787 = vadd.f32 %v1786, %v1782
      %v1788 = vadd.f32 %v1787, %v1784
      %v1789 = vrot.slane %v1788, 4
      %v1790 = vadd.f32 %v1788, %v1789
      %v1791 = vrot.slane %v1790, 2
      %v1792 = vadd.f32 %v1790, %v1791
      %v1793 = vrot.slane %v1792, 1
      %v1794 = vadd.f32 %v1792, %v1793
      %v1795 = vadd.f32 %v1779, %v1781
      %v1796 = vadd.f32 %v1795, %v1783
      %v1797 = vadd.f32 %v1796, %v1785
      %v1798 = vrot.slane %v1797, 4
      %v1799 = vadd.f32 %v1797, %v1798
      %v1800 = vrot.slane %v1799, 2
      %v1801 = vadd.f32 %v1799, %v1800
      %v1802 = vrot.slane %v1801, 1
      %v1803 = vadd.f32 %v1801, %v1802
      %v1806 = vcombine.low %v1794, %v1803
      %v1808 = vunpack.c.l.s4 1966171168
      %v1809 = vunpack.c.0.s8 %v1808
      %v1810 = vlaneseq
      %v1811 = vshrl.u32 %v1810, 7
      %v1812 = vsub.s32 %v1809, %v1811
      %v1813 = vrot.slane %v1806, %v1812
      %v1815 = vunpack.c.l.s4 1966171168
      %v1816 = vunpack.c.0.s8 %v1815
      %v1817 = vlaneseq
      %v1818 = vshrl.u32 %v1817, 7
      %v1819 = vsub.s32 %v1816, %v1818
      %v1820 = vrot.slane %v1813, %v1819
      %s1822 = scalar_lea.vmem [#allocation2], 48
      %1823 = vst.msk [vmem:[%s1822] ss:$8 sm:$0x3] %vm382, %v1820
      %1824 = vst.msk [vmem:[%s1822] ss:$8 sm:$0x0] %vm382, %v1820
      %s1825 = scalar_lea.vmem %s224, 800
      %v1826 = vld [vmem:[%s1825] sm:$0xff]
      %v1827 = vld [vmem:[%s1825 + $0x8] sm:$0xff]
      %v1828 = vld [vmem:[%s1825 + $0x10] sm:$0xff]
      %v1829 = vld [vmem:[%s1825 + $0x18] sm:$0xff]
      %v1830 = vunpack.c.l.bf16 %v1826
      %v1831 = vunpack.c.h.bf16 %v1826
      %v1832 = vunpack.c.l.bf16 %v1827
      %v1833 = vunpack.c.h.bf16 %v1827
      %v1834 = vunpack.c.l.bf16 %v1828
      %v1835 = vunpack.c.h.bf16 %v1828
      %v1836 = vunpack.c.l.bf16 %v1829
      %v1837 = vunpack.c.h.bf16 %v1829
      %v1838 = vmul.f32 %v1830, %v318
      %v1839 = vmul.f32 %v1831, %v318
      %v1840 = vmul.f32 %v1832, %v323
      %v1841 = vmul.f32 %v1833, %v323
      %v1842 = vmul.f32 %v1834, %v328
      %v1843 = vmul.f32 %v1835, %v328
      %v1844 = vmul.f32 %v1836, %v333
      %v1845 = vmul.f32 %v1837, %v333
      %v1846 = vadd.f32 %v1838, %v1840
      %v1847 = vadd.f32 %v1846, %v1842
      %v1848 = vadd.f32 %v1847, %v1844
      %v1849 = vrot.slane %v1848, 4
      %v1850 = vadd.f32 %v1848, %v1849
      %v1851 = vrot.slane %v1850, 2
      %v1852 = vadd.f32 %v1850, %v1851
      %v1853 = vrot.slane %v1852, 1
      %v1854 = vadd.f32 %v1852, %v1853
      %v1855 = vadd.f32 %v1839, %v1841
      %v1856 = vadd.f32 %v1855, %v1843
      %v1857 = vadd.f32 %v1856, %v1845
      %v1858 = vrot.slane %v1857, 4
      %v1859 = vadd.f32 %v1857, %v1858
      %v1860 = vrot.slane %v1859, 2
      %v1861 = vadd.f32 %v1859, %v1860
      %v1862 = vrot.slane %v1861, 1
      %v1863 = vadd.f32 %v1861, %v1862
      %v1866 = vcombine.low %v1854, %v1863
      %v1868 = vunpack.c.l.s4 1966171168
      %v1869 = vunpack.c.0.s8 %v1868
      %v1870 = vlaneseq
      %v1871 = vshrl.u32 %v1870, 7
      %v1872 = vsub.s32 %v1869, %v1871
      %v1873 = vrot.slane %v1866, %v1872
      %v1875 = vunpack.c.l.s4 1966171168
      %v1876 = vunpack.c.0.s8 %v1875
      %v1877 = vlaneseq
      %v1878 = vshrl.u32 %v1877, 7
      %v1879 = vsub.s32 %v1876, %v1878
      %v1880 = vrot.slane %v1873, %v1879
      %s1882 = scalar_lea.vmem [#allocation2], 49
      %1883 = vst.msk [vmem:[%s1882] ss:$8 sm:$0x3] %vm382, %v1880
      %1884 = vst.msk [vmem:[%s1882] ss:$8 sm:$0x0] %vm382, %v1880
      %s1885 = scalar_lea.vmem %s224, 832
      %v1886 = vld [vmem:[%s1885] sm:$0xff]
      %v1887 = vld [vmem:[%s1885 + $0x8] sm:$0xff]
      %v1888 = vld [vmem:[%s1885 + $0x10] sm:$0xff]
      %v1889 = vld [vmem:[%s1885 + $0x18] sm:$0xff]
      %v1890 = vunpack.c.l.bf16 %v1886
      %v1891 = vunpack.c.h.bf16 %v1886
      %v1892 = vunpack.c.l.bf16 %v1887
      %v1893 = vunpack.c.h.bf16 %v1887
      %v1894 = vunpack.c.l.bf16 %v1888
      %v1895 = vunpack.c.h.bf16 %v1888
      %v1896 = vunpack.c.l.bf16 %v1889
      %v1897 = vunpack.c.h.bf16 %v1889
      %v1898 = vmul.f32 %v1890, %v318
      %v1899 = vmul.f32 %v1891, %v318
      %v1900 = vmul.f32 %v1892, %v323
      %v1901 = vmul.f32 %v1893, %v323
      %v1902 = vmul.f32 %v1894, %v328
      %v1903 = vmul.f32 %v1895, %v328
      %v1904 = vmul.f32 %v1896, %v333
      %v1905 = vmul.f32 %v1897, %v333
      %v1906 = vadd.f32 %v1898, %v1900
      %v1907 = vadd.f32 %v1906, %v1902
      %v1908 = vadd.f32 %v1907, %v1904
      %v1909 = vrot.slane %v1908, 4
      %v1910 = vadd.f32 %v1908, %v1909
      %v1911 = vrot.slane %v1910, 2
      %v1912 = vadd.f32 %v1910, %v1911
      %v1913 = vrot.slane %v1912, 1
      %v1914 = vadd.f32 %v1912, %v1913
      %v1915 = vadd.f32 %v1899, %v1901
      %v1916 = vadd.f32 %v1915, %v1903
      %v1917 = vadd.f32 %v1916, %v1905
      %v1918 = vrot.slane %v1917, 4
      %v1919 = vadd.f32 %v1917, %v1918
      %v1920 = vrot.slane %v1919, 2
      %v1921 = vadd.f32 %v1919, %v1920
      %v1922 = vrot.slane %v1921, 1
      %v1923 = vadd.f32 %v1921, %v1922
      %v1926 = vcombine.low %v1914, %v1923
      %v1928 = vunpack.c.l.s4 1966171168
      %v1929 = vunpack.c.0.s8 %v1928
      %v1930 = vlaneseq
      %v1931 = vshrl.u32 %v1930, 7
      %v1932 = vsub.s32 %v1929, %v1931
      %v1933 = vrot.slane %v1926, %v1932
      %v1935 = vunpack.c.l.s4 1966171168
      %v1936 = vunpack.c.0.s8 %v1935
      %v1937 = vlaneseq
      %v1938 = vshrl.u32 %v1937, 7
      %v1939 = vsub.s32 %v1936, %v1938
      %v1940 = vrot.slane %v1933, %v1939
      %s1942 = scalar_lea.vmem [#allocation2], 50
      %1943 = vst.msk [vmem:[%s1942] ss:$8 sm:$0x3] %vm382, %v1940
      %1944 = vst.msk [vmem:[%s1942] ss:$8 sm:$0x0] %vm382, %v1940
      %s1945 = scalar_lea.vmem %s224, 864
      %v1946 = vld [vmem:[%s1945] sm:$0xff]
      %v1947 = vld [vmem:[%s1945 + $0x8] sm:$0xff]
      %v1948 = vld [vmem:[%s1945 + $0x10] sm:$0xff]
      %v1949 = vld [vmem:[%s1945 + $0x18] sm:$0xff]
      %v1950 = vunpack.c.l.bf16 %v1946
      %v1951 = vunpack.c.h.bf16 %v1946
      %v1952 = vunpack.c.l.bf16 %v1947
      %v1953 = vunpack.c.h.bf16 %v1947
      %v1954 = vunpack.c.l.bf16 %v1948
      %v1955 = vunpack.c.h.bf16 %v1948
      %v1956 = vunpack.c.l.bf16 %v1949
      %v1957 = vunpack.c.h.bf16 %v1949
      %v1958 = vmul.f32 %v1950, %v318
      %v1959 = vmul.f32 %v1951, %v318
      %v1960 = vmul.f32 %v1952, %v323
      %v1961 = vmul.f32 %v1953, %v323
      %v1962 = vmul.f32 %v1954, %v328
      %v1963 = vmul.f32 %v1955, %v328
      %v1964 = vmul.f32 %v1956, %v333
      %v1965 = vmul.f32 %v1957, %v333
      %v1966 = vadd.f32 %v1958, %v1960
      %v1967 = vadd.f32 %v1966, %v1962
      %v1968 = vadd.f32 %v1967, %v1964
      %v1969 = vrot.slane %v1968, 4
      %v1970 = vadd.f32 %v1968, %v1969
      %v1971 = vrot.slane %v1970, 2
      %v1972 = vadd.f32 %v1970, %v1971
      %v1973 = vrot.slane %v1972, 1
      %v1974 = vadd.f32 %v1972, %v1973
      %v1975 = vadd.f32 %v1959, %v1961
      %v1976 = vadd.f32 %v1975, %v1963
      %v1977 = vadd.f32 %v1976, %v1965
      %v1978 = vrot.slane %v1977, 4
      %v1979 = vadd.f32 %v1977, %v1978
      %v1980 = vrot.slane %v1979, 2
      %v1981 = vadd.f32 %v1979, %v1980
      %v1982 = vrot.slane %v1981, 1
      %v1983 = vadd.f32 %v1981, %v1982
      %v1986 = vcombine.low %v1974, %v1983
      %v1988 = vunpack.c.l.s4 1966171168
      %v1989 = vunpack.c.0.s8 %v1988
      %v1990 = vlaneseq
      %v1991 = vshrl.u32 %v1990, 7
      %v1992 = vsub.s32 %v1989, %v1991
      %v1993 = vrot.slane %v1986, %v1992
      %v1995 = vunpack.c.l.s4 1966171168
      %v1996 = vunpack.c.0.s8 %v1995
      %v1997 = vlaneseq
      %v1998 = vshrl.u32 %v1997, 7
      %v1999 = vsub.s32 %v1996, %v1998
      %v2000 = vrot.slane %v1993, %v1999
      %s2002 = scalar_lea.vmem [#allocation2], 51
      %2003 = vst.msk [vmem:[%s2002] ss:$8 sm:$0x3] %vm382, %v2000
      %2004 = vst.msk [vmem:[%s2002] ss:$8 sm:$0x0] %vm382, %v2000
      %s2005 = scalar_lea.vmem %s224, 896
      %v2006 = vld [vmem:[%s2005] sm:$0xff]
      %v2007 = vld [vmem:[%s2005 + $0x8] sm:$0xff]
      %v2008 = vld [vmem:[%s2005 + $0x10] sm:$0xff]
      %v2009 = vld [vmem:[%s2005 + $0x18] sm:$0xff]
      %v2010 = vunpack.c.l.bf16 %v2006
      %v2011 = vunpack.c.h.bf16 %v2006
      %v2012 = vunpack.c.l.bf16 %v2007
      %v2013 = vunpack.c.h.bf16 %v2007
      %v2014 = vunpack.c.l.bf16 %v2008
      %v2015 = vunpack.c.h.bf16 %v2008
      %v2016 = vunpack.c.l.bf16 %v2009
      %v2017 = vunpack.c.h.bf16 %v2009
      %v2018 = vmul.f32 %v2010, %v318
      %v2019 = vmul.f32 %v2011, %v318
      %v2020 = vmul.f32 %v2012, %v323
      %v2021 = vmul.f32 %v2013, %v323
      %v2022 = vmul.f32 %v2014, %v328
      %v2023 = vmul.f32 %v2015, %v328
      %v2024 = vmul.f32 %v2016, %v333
      %v2025 = vmul.f32 %v2017, %v333
      %v2026 = vadd.f32 %v2018, %v2020
      %v2027 = vadd.f32 %v2026, %v2022
      %v2028 = vadd.f32 %v2027, %v2024
      %v2029 = vrot.slane %v2028, 4
      %v2030 = vadd.f32 %v2028, %v2029
      %v2031 = vrot.slane %v2030, 2
      %v2032 = vadd.f32 %v2030, %v2031
      %v2033 = vrot.slane %v2032, 1
      %v2034 = vadd.f32 %v2032, %v2033
      %v2035 = vadd.f32 %v2019, %v2021
      %v2036 = vadd.f32 %v2035, %v2023
      %v2037 = vadd.f32 %v2036, %v2025
      %v2038 = vrot.slane %v2037, 4
      %v2039 = vadd.f32 %v2037, %v2038
      %v2040 = vrot.slane %v2039, 2
      %v2041 = vadd.f32 %v2039, %v2040
      %v2042 = vrot.slane %v2041, 1
      %v2043 = vadd.f32 %v2041, %v2042
      %v2046 = vcombine.low %v2034, %v2043
      %v2048 = vunpack.c.l.s4 1966171168
      %v2049 = vunpack.c.0.s8 %v2048
      %v2050 = vlaneseq
      %v2051 = vshrl.u32 %v2050, 7
      %v2052 = vsub.s32 %v2049, %v2051
      %v2053 = vrot.slane %v2046, %v2052
      %v2055 = vunpack.c.l.s4 1966171168
      %v2056 = vunpack.c.0.s8 %v2055
      %v2057 = vlaneseq
      %v2058 = vshrl.u32 %v2057, 7
      %v2059 = vsub.s32 %v2056, %v2058
      %v2060 = vrot.slane %v2053, %v2059
      %s2062 = scalar_lea.vmem [#allocation2], 52
      %2063 = vst.msk [vmem:[%s2062] ss:$8 sm:$0x3] %vm382, %v2060
      %2064 = vst.msk [vmem:[%s2062] ss:$8 sm:$0x0] %vm382, %v2060
      %s2065 = scalar_lea.vmem %s224, 928
      %v2066 = vld [vmem:[%s2065] sm:$0xff]
      %v2067 = vld [vmem:[%s2065 + $0x8] sm:$0xff]
      %v2068 = vld [vmem:[%s2065 + $0x10] sm:$0xff]
      %v2069 = vld [vmem:[%s2065 + $0x18] sm:$0xff]
      %v2070 = vunpack.c.l.bf16 %v2066
      %v2071 = vunpack.c.h.bf16 %v2066
      %v2072 = vunpack.c.l.bf16 %v2067
      %v2073 = vunpack.c.h.bf16 %v2067
      %v2074 = vunpack.c.l.bf16 %v2068
      %v2075 = vunpack.c.h.bf16 %v2068
      %v2076 = vunpack.c.l.bf16 %v2069
      %v2077 = vunpack.c.h.bf16 %v2069
      %v2078 = vmul.f32 %v2070, %v318
      %v2079 = vmul.f32 %v2071, %v318
      %v2080 = vmul.f32 %v2072, %v323
      %v2081 = vmul.f32 %v2073, %v323
      %v2082 = vmul.f32 %v2074, %v328
      %v2083 = vmul.f32 %v2075, %v328
      %v2084 = vmul.f32 %v2076, %v333
      %v2085 = vmul.f32 %v2077, %v333
      %v2086 = vadd.f32 %v2078, %v2080
      %v2087 = vadd.f32 %v2086, %v2082
      %v2088 = vadd.f32 %v2087, %v2084
      %v2089 = vrot.slane %v2088, 4
      %v2090 = vadd.f32 %v2088, %v2089
      %v2091 = vrot.slane %v2090, 2
      %v2092 = vadd.f32 %v2090, %v2091
      %v2093 = vrot.slane %v2092, 1
      %v2094 = vadd.f32 %v2092, %v2093
      %v2095 = vadd.f32 %v2079, %v2081
      %v2096 = vadd.f32 %v2095, %v2083
      %v2097 = vadd.f32 %v2096, %v2085
      %v2098 = vrot.slane %v2097, 4
      %v2099 = vadd.f32 %v2097, %v2098
      %v2100 = vrot.slane %v2099, 2
      %v2101 = vadd.f32 %v2099, %v2100
      %v2102 = vrot.slane %v2101, 1
      %v2103 = vadd.f32 %v2101, %v2102
      %v2106 = vcombine.low %v2094, %v2103
      %v2108 = vunpack.c.l.s4 1966171168
      %v2109 = vunpack.c.0.s8 %v2108
      %v2110 = vlaneseq
      %v2111 = vshrl.u32 %v2110, 7
      %v2112 = vsub.s32 %v2109, %v2111
      %v2113 = vrot.slane %v2106, %v2112
      %v2115 = vunpack.c.l.s4 1966171168
      %v2116 = vunpack.c.0.s8 %v2115
      %v2117 = vlaneseq
      %v2118 = vshrl.u32 %v2117, 7
      %v2119 = vsub.s32 %v2116, %v2118
      %v2120 = vrot.slane %v2113, %v2119
      %s2122 = scalar_lea.vmem [#allocation2], 53
      %2123 = vst.msk [vmem:[%s2122] ss:$8 sm:$0x3] %vm382, %v2120
      %2124 = vst.msk [vmem:[%s2122] ss:$8 sm:$0x0] %vm382, %v2120
      %s2125 = scalar_lea.vmem %s224, 960
      %v2126 = vld [vmem:[%s2125] sm:$0xff]
      %v2127 = vld [vmem:[%s2125 + $0x8] sm:$0xff]
      %v2128 = vld [vmem:[%s2125 + $0x10] sm:$0xff]
      %v2129 = vld [vmem:[%s2125 + $0x18] sm:$0xff]
      %v2130 = vunpack.c.l.bf16 %v2126
      %v2131 = vunpack.c.h.bf16 %v2126
      %v2132 = vunpack.c.l.bf16 %v2127
      %v2133 = vunpack.c.h.bf16 %v2127
      %v2134 = vunpack.c.l.bf16 %v2128
      %v2135 = vunpack.c.h.bf16 %v2128
      %v2136 = vunpack.c.l.bf16 %v2129
      %v2137 = vunpack.c.h.bf16 %v2129
      %v2138 = vmul.f32 %v2130, %v318
      %v2139 = vmul.f32 %v2131, %v318
      %v2140 = vmul.f32 %v2132, %v323
      %v2141 = vmul.f32 %v2133, %v323
      %v2142 = vmul.f32 %v2134, %v328
      %v2143 = vmul.f32 %v2135, %v328
      %v2144 = vmul.f32 %v2136, %v333
      %v2145 = vmul.f32 %v2137, %v333
      %v2146 = vadd.f32 %v2138, %v2140
      %v2147 = vadd.f32 %v2146, %v2142
      %v2148 = vadd.f32 %v2147, %v2144
      %v2149 = vrot.slane %v2148, 4
      %v2150 = vadd.f32 %v2148, %v2149
      %v2151 = vrot.slane %v2150, 2
      %v2152 = vadd.f32 %v2150, %v2151
      %v2153 = vrot.slane %v2152, 1
      %v2154 = vadd.f32 %v2152, %v2153
      %v2155 = vadd.f32 %v2139, %v2141
      %v2156 = vadd.f32 %v2155, %v2143
      %v2157 = vadd.f32 %v2156, %v2145
      %v2158 = vrot.slane %v2157, 4
      %v2159 = vadd.f32 %v2157, %v2158
      %v2160 = vrot.slane %v2159, 2
      %v2161 = vadd.f32 %v2159, %v2160
      %v2162 = vrot.slane %v2161, 1
      %v2163 = vadd.f32 %v2161, %v2162
      %v2166 = vcombine.low %v2154, %v2163
      %v2168 = vunpack.c.l.s4 1966171168
      %v2169 = vunpack.c.0.s8 %v2168
      %v2170 = vlaneseq
      %v2171 = vshrl.u32 %v2170, 7
      %v2172 = vsub.s32 %v2169, %v2171
      %v2173 = vrot.slane %v2166, %v2172
      %v2175 = vunpack.c.l.s4 1966171168
      %v2176 = vunpack.c.0.s8 %v2175
      %v2177 = vlaneseq
      %v2178 = vshrl.u32 %v2177, 7
      %v2179 = vsub.s32 %v2176, %v2178
      %v2180 = vrot.slane %v2173, %v2179
      %s2182 = scalar_lea.vmem [#allocation2], 54
      %2183 = vst.msk [vmem:[%s2182] ss:$8 sm:$0x3] %vm382, %v2180
      %2184 = vst.msk [vmem:[%s2182] ss:$8 sm:$0x0] %vm382, %v2180
      %s2185 = scalar_lea.vmem %s224, 992
      %v2186 = vld [vmem:[%s2185] sm:$0xff]
      %v2187 = vld [vmem:[%s2185 + $0x8] sm:$0xff]
      %v2188 = vld [vmem:[%s2185 + $0x10] sm:$0xff]
      %v2189 = vld [vmem:[%s2185 + $0x18] sm:$0xff]
      %v2190 = vunpack.c.l.bf16 %v2186
      %v2191 = vunpack.c.h.bf16 %v2186
      %v2192 = vunpack.c.l.bf16 %v2187
      %v2193 = vunpack.c.h.bf16 %v2187
      %v2194 = vunpack.c.l.bf16 %v2188
      %v2195 = vunpack.c.h.bf16 %v2188
      %v2196 = vunpack.c.l.bf16 %v2189
      %v2197 = vunpack.c.h.bf16 %v2189
      %v2198 = vmul.f32 %v2190, %v318
      %v2199 = vmul.f32 %v2191, %v318
      %v2200 = vmul.f32 %v2192, %v323
      %v2201 = vmul.f32 %v2193, %v323
      %v2202 = vmul.f32 %v2194, %v328
      %v2203 = vmul.f32 %v2195, %v328
      %v2204 = vmul.f32 %v2196, %v333
      %v2205 = vmul.f32 %v2197, %v333
      %v2206 = vadd.f32 %v2198, %v2200
      %v2207 = vadd.f32 %v2206, %v2202
      %v2208 = vadd.f32 %v2207, %v2204
      %v2209 = vrot.slane %v2208, 4
      %v2210 = vadd.f32 %v2208, %v2209
      %v2211 = vrot.slane %v2210, 2
      %v2212 = vadd.f32 %v2210, %v2211
      %v2213 = vrot.slane %v2212, 1
      %v2214 = vadd.f32 %v2212, %v2213
      %v2215 = vadd.f32 %v2199, %v2201
      %v2216 = vadd.f32 %v2215, %v2203
      %v2217 = vadd.f32 %v2216, %v2205
      %v2218 = vrot.slane %v2217, 4
      %v2219 = vadd.f32 %v2217, %v2218
      %v2220 = vrot.slane %v2219, 2
      %v2221 = vadd.f32 %v2219, %v2220
      %v2222 = vrot.slane %v2221, 1
      %v2223 = vadd.f32 %v2221, %v2222
      %v2226 = vcombine.low %v2214, %v2223
      %v2228 = vunpack.c.l.s4 1966171168
      %v2229 = vunpack.c.0.s8 %v2228
      %v2230 = vlaneseq
      %v2231 = vshrl.u32 %v2230, 7
      %v2232 = vsub.s32 %v2229, %v2231
      %v2233 = vrot.slane %v2226, %v2232
      %v2235 = vunpack.c.l.s4 1966171168
      %v2236 = vunpack.c.0.s8 %v2235
      %v2237 = vlaneseq
      %v2238 = vshrl.u32 %v2237, 7
      %v2239 = vsub.s32 %v2236, %v2238
      %v2240 = vrot.slane %v2233, %v2239
      %s2242 = scalar_lea.vmem [#allocation2], 55
      %2243 = vst.msk [vmem:[%s2242] ss:$8 sm:$0x3] %vm382, %v2240
      %2244 = vst.msk [vmem:[%s2242] ss:$8 sm:$0x0] %vm382, %v2240
      %v2245 = vld [vmem:[#allocation2] sm:$0xff]
      %v2246 = vld [vmem:[#allocation2 + $0x8] sm:$0xff]
      %v2247 = vld [vmem:[#allocation2 + $0x10] sm:$0xff]
      %v2248 = vld [vmem:[#allocation2 + $0x18] sm:$0xff]
      %v2249 = vld [vmem:[#allocation2 + $0x20] sm:$0xff]
      %v2250 = vld [vmem:[#allocation2 + $0x28] sm:$0xff]
      %v2251 = vld [vmem:[#allocation2 + $0x30] sm:$0xff]
      %v2252 = vld [vmem:[#allocation2 + $0x38] sm:$0xff]
      %v2254 = vrot.slane %v302, 2
      %s2255 = vtos %v2254
      %v2256 = vstv %s2255
      %v2258 = vadd.f32 %v2245, %v2256
      %v2259 = vadd.f32 %v2246, %v2256
      %v2260 = vadd.f32 %v2247, %v2256
      %v2261 = vadd.f32 %v2248, %v2256
      %v2262 = vadd.f32 %v2249, %v2256
      %v2263 = vadd.f32 %v2250, %v2256
      %v2264 = vadd.f32 %v2251, %v2256
      %v2265 = vadd.f32 %v2252, %v2256
      %2266 = vmatprep.subr.mxu0 0.0
      %2267 = vmatpush1.msra.mxu0 %v265
      %2268 = vmatprep.subr.mxu0 0.0
      %2269 = vmatpush1.msra.mxu0 %v266
      %2270 = vmatprep.subr.mxu0 0.0
      %2271 = vmatpush1.msra.mxu0 %v267
      %2272 = vmatprep.subr.mxu0 0.0
      %2273 = vmatpush1.msra.mxu0 %v268
      %2274 = vmatprep.subr.mxu0 0.0
      %2275 = vmatpush1.msra.mxu0 %v269
      %2276 = vmatprep.subr.mxu0 0.0
      %2277 = vmatpush1.msra.mxu0 %v270
      %2278 = vmatprep.subr.mxu0 0.0
      %2279 = vmatpush1.msra.mxu0 %v271
      %2280 = vmatprep.subr.mxu0 0.0
      %2281 = vmatpush1.msra.mxu0 %v272
      %2282 = vmatprep.subr.mxu0 0.0
      %2283 = vmatpush1.msra.mxu0 %v273
      %2284 = vmatprep.subr.mxu0 0.0
      %2285 = vmatpush1.msra.mxu0 %v274
      %2286 = vmatprep.subr.mxu0 0.0
      %2287 = vmatpush1.msra.mxu0 %v275
      %2288 = vmatprep.subr.mxu0 0.0
      %2289 = vmatpush1.msra.mxu0 %v276
      %2290 = vmatprep.subr.mxu0 0.0
      %2291 = vmatpush1.msra.mxu0 %v277
      %2292 = vmatprep.subr.mxu0 0.0
      %2293 = vmatpush1.msra.mxu0 %v278
      %2294 = vmatprep.subr.mxu0 0.0
      %2295 = vmatpush1.msra.mxu0 %v279
      %2296 = vmatprep.subr.mxu0 0.0
      %2297 = vmatpush1.msra.mxu0 %v280
      %2298 = vmatprep.subr.mxu0 0.0
      %2299 = vmatpush1.msra.mxu0 %v281
      %2300 = vmatprep.subr.mxu0 0.0
      %2301 = vmatpush1.msra.mxu0 %v282
      %2302 = vmatprep.subr.mxu0 0.0
      %2303 = vmatpush1.msra.mxu0 %v283
      %2304 = vmatprep.subr.mxu0 0.0
      %2305 = vmatpush1.msra.mxu0 %v284
      %2306 = vmatprep.subr.mxu0 0.0
      %2307 = vmatpush1.msra.mxu0 %v285
      %2308 = vmatprep.subr.mxu0 0.0
      %2309 = vmatpush1.msra.mxu0 %v286
      %2310 = vmatprep.subr.mxu0 0.0
      %2311 = vmatpush1.msra.mxu0 %v287
      %2312 = vmatprep.subr.mxu0 0.0
      %2313 = vmatpush1.msra.mxu0 %v288
      %2314 = vmatprep.subr.mxu0 0.0
      %2315 = vmatpush1.msra.mxu0 %v289
      %2316 = vmatprep.subr.mxu0 0.0
      %2317 = vmatpush1.msra.mxu0 %v290
      %2318 = vmatprep.subr.mxu0 0.0
      %2319 = vmatpush1.msra.mxu0 %v291
      %2320 = vmatprep.subr.mxu0 0.0
      %2321 = vmatpush1.msra.mxu0 %v292
      %2322 = vmatprep.subr.mxu0 0.0
      %2323 = vmatpush1.msra.mxu0 %v293
      %2324 = vmatprep.subr.mxu0 0.0
      %2325 = vmatpush1.msra.mxu0 %v294
      %2326 = vmatprep.subr.mxu0 0.0
      %2327 = vmatpush1.msra.mxu0 %v295
      %2328 = vmatprep.subr.mxu0 0.0
      %2329 = vmatpush1.msra.mxu0 %v296
      %2330 = vmatprep.mubr.f32.mxu0 %v2246
      %2331 = vmatmul.mubr.f32.gmra.mrb[0].mxu0 %v2245
      %v2332 = vpop.f32.mrb[0].mxu0
      %v2333 = vadd.f32 0.0, %v2332
      %v2334 = vpop.f32.mrb[0].mxu0
      %2335 = vmatprep.mubr.f32.mxu0 %v2248
      %2336 = vmatmul.mubr.f32.gmra.mrb[0].mxu0 %v2247
      %v2337 = vpop.f32.mrb[0].mxu0
      %v2338 = vadd.f32 0.0, %v2337
      %v2339 = vpop.f32.mrb[0].mxu0
      %2340 = vmatprep.mubr.f32.mxu0 %v2250
      %2341 = vmatmul.mubr.f32.gmra.mrb[0].mxu0 %v2249
      %v2342 = vpop.f32.mrb[0].mxu0
      %v2343 = vadd.f32 0.0, %v2342
      %v2344 = vpop.f32.mrb[0].mxu0
      %2345 = vmatprep.mubr.f32.mxu0 %v2252
      %2346 = vmatmul.mubr.f32.gmra.mrb[0].mxu0 %v2251
      %v2347 = vpop.f32.mrb[0].mxu0
      %v2348 = vadd.f32 0.0, %v2347
      %v2349 = vpop.f32.mrb[0].mxu0
      %2350 = vdwg.mxu0
      %v2351 = vlaneseq
      %v2352 = vshrl.u32 %v2351, 7
      %v2353 = vsub.s32 0, %v2352
      %v2354 = vrot.slane %v302, %v2353
      %v2355 = vmul.f32 %v2333, %v2354
      %v2356 = vmul.f32 %v2338, %v2354
      %v2357 = vmul.f32 %v2343, %v2354
      %v2358 = vmul.f32 %v2348, %v2354
      %v2359 = vlaneseq
      %v2360 = vshrl.u32 %v2359, 7
      %v2361 = vsub.s32 1, %v2360
      %v2362 = vrot.slane %v302, %v2361
      %v2363 = vadd.f32 %v2355, %v2362
      %v2364 = vadd.f32 %v2356, %v2362
      %v2365 = vadd.f32 %v2357, %v2362
      %v2366 = vadd.f32 %v2358, %v2362
      %v2367 = vmax.f32 %v2258, %v2259
      %2368 = vmax.xlane.f32.xlu0 %v2367
      %v2369 = vpop.xlane.xlu0 %2368
      %v2370 = vmax.f32 %v2260, %v2261
      %2371 = vmax.xlane.f32.xlu0 %v2370
      %v2372 = vpop.xlane.xlu0 %2371
      %v2373 = vmax.f32 %v2262, %v2263
      %2374 = vmax.xlane.f32.xlu0 %v2373
      %v2375 = vpop.xlane.xlu0 %2374
      %v2376 = vmax.f32 %v2264, %v2265
      %2377 = vmax.xlane.f32.xlu0 %v2376
      %v2378 = vpop.xlane.xlu0 %2377
      %2379 = vmax.xlane.f32.xlu0 %v2363
      %v2380 = vpop.xlane.xlu0 %2379
      %2381 = vmax.xlane.f32.xlu0 %v2364
      %v2382 = vpop.xlane.xlu0 %2381
      %2383 = vmax.xlane.f32.xlu0 %v2365
      %v2384 = vpop.xlane.xlu0 %2383
      %2385 = vmax.xlane.f32.xlu0 %v2366
      %v2386 = vpop.xlane.xlu0 %2385
      %v2387 = vmax.f32 %v2369, %v2380
      %v2388 = vmax.f32 %v2372, %v2382
      %v2389 = vmax.f32 %v2375, %v2384
      %v2390 = vmax.f32 %v2378, %v2386
      %v2391 = vsub.f32 %v2258, %v2387
      %v2392 = vsub.f32 %v2259, %v2387
      %v2393 = vsub.f32 %v2260, %v2388
      %v2394 = vsub.f32 %v2261, %v2388
      %v2395 = vsub.f32 %v2262, %v2389
      %v2396 = vsub.f32 %v2263, %v2389
      %v2397 = vsub.f32 %v2264, %v2390
      %v2398 = vsub.f32 %v2265, %v2390
      %v2399 = vmul.f32 %v2391, 1.442695
      %v2400 = vpow.pop %v2399
      %v2401 = vmul.f32 %v2392, 1.442695
      %v2402 = vpow.pop %v2401
      %v2403 = vmul.f32 %v2393, 1.442695
      %v2404 = vpow.pop %v2403
      %v2405 = vmul.f32 %v2394, 1.442695
      %v2406 = vpow.pop %v2405
      %v2407 = vmul.f32 %v2395, 1.442695
      %v2408 = vpow.pop %v2407
      %v2409 = vmul.f32 %v2396, 1.442695
      %v2410 = vpow.pop %v2409
      %v2411 = vmul.f32 %v2397, 1.442695
      %v2412 = vpow.pop %v2411
      %v2413 = vmul.f32 %v2398, 1.442695
      %v2414 = vpow.pop %v2413
      %v2415 = vsub.f32 %v2363, %v2387
      %v2416 = vsub.f32 %v2364, %v2388
      %v2417 = vsub.f32 %v2365, %v2389
      %v2418 = vsub.f32 %v2366, %v2390
      %v2419 = vmul.f32 %v2415, 1.442695
      %v2420 = vpow.pop %v2419
      %v2421 = vmul.f32 %v2416, 1.442695
      %v2422 = vpow.pop %v2421
      %v2423 = vmul.f32 %v2417, 1.442695
      %v2424 = vpow.pop %v2423
      %v2425 = vmul.f32 %v2418, 1.442695
      %v2426 = vpow.pop %v2425
      %v2427 = vadd.f32 %v2400, %v2402
      %2428 = vadd.xlane.f32.xlu0 %v2427
      %v2429 = vpop.xlane.xlu0 %2428
      %v2430 = vadd.f32 %v2404, %v2406
      %2431 = vadd.xlane.f32.xlu0 %v2430
      %v2432 = vpop.xlane.xlu0 %2431
      %v2433 = vadd.f32 %v2408, %v2410
      %2434 = vadd.xlane.f32.xlu0 %v2433
      %v2435 = vpop.xlane.xlu0 %2434
      %v2436 = vadd.f32 %v2412, %v2414
      %2437 = vadd.xlane.f32.xlu0 %v2436
      %v2438 = vpop.xlane.xlu0 %2437
      %2439 = vadd.xlane.f32.xlu0 %v2420
      %v2440 = vpop.xlane.xlu0 %2439
      %2441 = vadd.xlane.f32.xlu0 %v2422
      %v2442 = vpop.xlane.xlu0 %2441
      %2443 = vadd.xlane.f32.xlu0 %v2424
      %v2444 = vpop.xlane.xlu0 %2443
      %2445 = vadd.xlane.f32.xlu0 %v2426
      %v2446 = vpop.xlane.xlu0 %2445
      %v2447 = vadd.f32 %v2429, %v2440
      %v2448 = vadd.f32 %v2432, %v2442
      %v2449 = vadd.f32 %v2435, %v2444
      %v2450 = vadd.f32 %v2438, %v2446
      %v2451 = vrcp.pop %v2447
      %v2452 = vmul.f32 1.0, %v2451
      %v2453 = vrcp.pop %v2448
      %v2454 = vmul.f32 1.0, %v2453
      %v2455 = vrcp.pop %v2449
      %v2456 = vmul.f32 1.0, %v2455
      %v2457 = vrcp.pop %v2450
      %v2458 = vmul.f32 1.0, %v2457
      %v2459 = vmul.f32 %v2400, %v2452
      %v2460 = vmul.f32 %v2402, %v2452
      %v2461 = vmul.f32 %v2404, %v2454
      %v2462 = vmul.f32 %v2406, %v2454
      %v2463 = vmul.f32 %v2408, %v2456
      %v2464 = vmul.f32 %v2410, %v2456
      %v2465 = vmul.f32 %v2412, %v2458
      %v2466 = vmul.f32 %v2414, %v2458
      %v2467 = vmul.f32 %v2420, %v2452
      %v2468 = vmul.f32 %v2422, %v2454
      %v2469 = vmul.f32 %v2424, %v2456
      %v2470 = vmul.f32 %v2426, %v2458
      %2471 = vmatprep.subr.mxu0 0.0
      %2472 = vmatpush1.xpose.msra.mxu0 %v265
      %2473 = vmatprep.subr.mxu0 0.0
      %2474 = vmatpush1.xpose.msra.mxu0 %v266
      %2475 = vmatprep.subr.mxu0 0.0
      %2476 = vmatpush1.xpose.msra.mxu0 %v267
      %2477 = vmatprep.subr.mxu0 0.0
      %2478 = vmatpush1.xpose.msra.mxu0 %v268
      %2479 = vmatprep.subr.mxu0 0.0
      %2480 = vmatpush1.xpose.msra.mxu0 %v269
      %2481 = vmatprep.subr.mxu0 0.0
      %2482 = vmatpush1.xpose.msra.mxu0 %v270
      %2483 = vmatprep.subr.mxu0 0.0
      %2484 = vmatpush1.xpose.msra.mxu0 %v271
      %2485 = vmatprep.subr.mxu0 0.0
      %2486 = vmatpush1.xpose.msra.mxu0 %v272
      %2487 = vmatprep.subr.mxu0 0.0
      %2488 = vmatpush1.xpose.msra.mxu0 %v273
      %2489 = vmatprep.subr.mxu0 0.0
      %2490 = vmatpush1.xpose.msra.mxu0 %v274
      %2491 = vmatprep.subr.mxu0 0.0
      %2492 = vmatpush1.xpose.msra.mxu0 %v275
      %2493 = vmatprep.subr.mxu0 0.0
      %2494 = vmatpush1.xpose.msra.mxu0 %v276
      %2495 = vmatprep.subr.mxu0 0.0
      %2496 = vmatpush1.xpose.msra.mxu0 %v277
      %2497 = vmatprep.subr.mxu0 0.0
      %2498 = vmatpush1.xpose.msra.mxu0 %v278
      %2499 = vmatprep.subr.mxu0 0.0
      %2500 = vmatpush1.xpose.msra.mxu0 %v279
      %2501 = vmatprep.subr.mxu0 0.0
      %2502 = vmatpush1.xpose.msra.mxu0 %v280
      %2503 = vmatprep.subr.mxu0 0.0
      %2504 = vmatpush1.xpose.msra.mxu0 %v281
      %2505 = vmatprep.subr.mxu0 0.0
      %2506 = vmatpush1.xpose.msra.mxu0 %v282
      %2507 = vmatprep.subr.mxu0 0.0
      %2508 = vmatpush1.xpose.msra.mxu0 %v283
      %2509 = vmatprep.subr.mxu0 0.0
      %2510 = vmatpush1.xpose.msra.mxu0 %v284
      %2511 = vmatprep.subr.mxu0 0.0
      %2512 = vmatpush1.xpose.msra.mxu0 %v285
      %2513 = vmatprep.subr.mxu0 0.0
      %2514 = vmatpush1.xpose.msra.mxu0 %v286
      %2515 = vmatprep.subr.mxu0 0.0
      %2516 = vmatpush1.xpose.msra.mxu0 %v287
      %2517 = vmatprep.subr.mxu0 0.0
      %2518 = vmatpush1.xpose.msra.mxu0 %v288
      %2519 = vmatprep.subr.mxu0 0.0
      %2520 = vmatpush1.xpose.msra.mxu0 %v289
      %2521 = vmatprep.subr.mxu0 0.0
      %2522 = vmatpush1.xpose.msra.mxu0 %v290
      %2523 = vmatprep.subr.mxu0 0.0
      %2524 = vmatpush1.xpose.msra.mxu0 %v291
      %2525 = vmatprep.subr.mxu0 0.0
      %2526 = vmatpush1.xpose.msra.mxu0 %v292
      %2527 = vmatprep.subr.mxu0 0.0
      %2528 = vmatpush1.xpose.msra.mxu0 %v293
      %2529 = vmatprep.subr.mxu0 0.0
      %2530 = vmatpush1.xpose.msra.mxu0 %v294
      %2531 = vmatprep.subr.mxu0 0.0
      %2532 = vmatpush1.xpose.msra.mxu0 %v295
      %2533 = vmatprep.subr.mxu0 0.0
      %2534 = vmatpush1.xpose.msra.mxu0 %v296
      %2535 = vmatprep.mubr.f32.mxu0 0.0
      %2536 = vmatmul.mubr.f32.gmra.mrb[0].mxu0 %v2467
      %v2537 = vpop.f32.mrb[0].mxu0
      %v2538 = vadd.f32 0.0, %v2537
      %v2539 = vpop.f32.mrb[0].mxu0
      %v2540 = vadd.f32 0.0, %v2539
      %2541 = vmatprep.mubr.f32.mxu0 0.0
      %2542 = vmatmul.mubr.f32.gmra.mrb[0].mxu0 %v2468
      %v2543 = vpop.f32.mrb[0].mxu0
      %v2544 = vadd.f32 0.0, %v2543
      %v2545 = vpop.f32.mrb[0].mxu0
      %v2546 = vadd.f32 0.0, %v2545
      %2547 = vmatprep.mubr.f32.mxu0 0.0
      %2548 = vmatmul.mubr.f32.gmra.mrb[0].mxu0 %v2469
      %v2549 = vpop.f32.mrb[0].mxu0
      %v2550 = vadd.f32 0.0, %v2549
      %v2551 = vpop.f32.mrb[0].mxu0
      %v2552 = vadd.f32 0.0, %v2551
      %2553 = vmatprep.mubr.f32.mxu0 0.0
      %2554 = vmatmul.mubr.f32.gmra.mrb[0].mxu0 %v2470
      %v2555 = vpop.f32.mrb[0].mxu0
      %v2556 = vadd.f32 0.0, %v2555
      %v2557 = vpop.f32.mrb[0].mxu0
      %v2558 = vadd.f32 0.0, %v2557
      %2559 = vdwg.mxu0
      %v2560 = vadd.f32 %v2459, %v2538
      %v2561 = vadd.f32 %v2460, %v2540
      %v2562 = vadd.f32 %v2461, %v2544
      %v2563 = vadd.f32 %v2462, %v2546
      %v2564 = vadd.f32 %v2463, %v2550
      %v2565 = vadd.f32 %v2464, %v2552
      %v2566 = vadd.f32 %v2465, %v2556
      %v2567 = vadd.f32 %v2466, %v2558
      %v2568 = vld [vmem:[%s224] sm:$0xff]
      %v2569 = vld [vmem:[%s224 + $0x8] sm:$0xff]
      %v2570 = vld [vmem:[%s224 + $0x10] sm:$0xff]
      %v2571 = vld [vmem:[%s224 + $0x18] sm:$0xff]
      %v2572 = vunpack.c.l.bf16 %v2568
      %v2573 = vunpack.c.h.bf16 %v2568
      %v2574 = vunpack.c.l.bf16 %v2569
      %v2575 = vunpack.c.h.bf16 %v2569
      %v2576 = vunpack.c.l.bf16 %v2570
      %v2577 = vunpack.c.h.bf16 %v2570
      %v2578 = vunpack.c.l.bf16 %v2571
      %v2579 = vunpack.c.h.bf16 %v2571
      %v2580 = vlaneseq
      %v2581 = vshrl.u32 %v2580, 7
      %v2582 = vsub.s32 0, %v2581
      %v2583 = vrot.slane %v2560, %v2582
      %v2584 = vlaneseq
      %v2585 = vshrl.u32 %v2584, 7
      %v2586 = vsub.s32 0, %v2585
      %v2587 = vrot.slane %v2561, %v2586
      %v2588 = vmul.f32 %v2572, %v2583
      %v2589 = vmul.f32 %v2573, %v2587
      %v2590 = vmul.f32 %v2574, %v2583
      %v2591 = vmul.f32 %v2575, %v2587
      %v2592 = vmul.f32 %v2576, %v2583
      %v2593 = vmul.f32 %v2577, %v2587
      %v2594 = vmul.f32 %v2578, %v2583
      %v2595 = vmul.f32 %v2579, %v2587
      %v2596 = vadd.f32 %v2588, %v2589
      %2597 = vadd.xlane.f32.xlu0 %v2596
      %v2598 = vpop.xlane.xlu0 %2597
      %v2599 = vadd.f32 %v2590, %v2591
      %2600 = vadd.xlane.f32.xlu0 %v2599
      %v2601 = vpop.xlane.xlu0 %2600
      %v2602 = vadd.f32 %v2592, %v2593
      %2603 = vadd.xlane.f32.xlu0 %v2602
      %v2604 = vpop.xlane.xlu0 %2603
      %v2605 = vadd.f32 %v2594, %v2595
      %2606 = vadd.xlane.f32.xlu0 %v2605
      %v2607 = vpop.xlane.xlu0 %2606
      %vm2608 = vcmask 7168
      %2609 = vst.msk [vmem:[#allocation3] sm:$0xff] %vm2608, %v2598
      %2610 = vst.msk [vmem:[#allocation3 + $0x8] sm:$0xff] %vm2608, %v2601
      %2611 = vst.msk [vmem:[#allocation3 + $0x10] sm:$0xff] %vm2608, %v2604
      %2612 = vst.msk [vmem:[#allocation3 + $0x18] sm:$0xff] %vm2608, %v2607
      %v2613 = vld [vmem:[%s385] sm:$0xff]
      %v2614 = vld [vmem:[%s385 + $0x8] sm:$0xff]
      %v2615 = vld [vmem:[%s385 + $0x10] sm:$0xff]
      %v2616 = vld [vmem:[%s385 + $0x18] sm:$0xff]
      %v2617 = vunpack.c.l.bf16 %v2613
      %v2618 = vunpack.c.h.bf16 %v2613
      %v2619 = vunpack.c.l.bf16 %v2614
      %v2620 = vunpack.c.h.bf16 %v2614
      %v2621 = vunpack.c.l.bf16 %v2615
      %v2622 = vunpack.c.h.bf16 %v2615
      %v2623 = vunpack.c.l.bf16 %v2616
      %v2624 = vunpack.c.h.bf16 %v2616
      %v2625 = vlaneseq
      %v2626 = vshrl.u32 %v2625, 7
      %v2627 = vsub.s32 1, %v2626
      %v2628 = vrot.slane %v2560, %v2627
      %v2629 = vlaneseq
      %v2630 = vshrl.u32 %v2629, 7
      %v2631 = vsub.s32 1, %v2630
      %v2632 = vrot.slane %v2561, %v2631
      %v2633 = vmul.f32 %v2617, %v2628
      %v2634 = vmul.f32 %v2618, %v2632
      %v2635 = vmul.f32 %v2619, %v2628
      %v2636 = vmul.f32 %v2620, %v2632
      %v2637 = vmul.f32 %v2621, %v2628
      %v2638 = vmul.f32 %v2622, %v2632
      %v2639 = vmul.f32 %v2623, %v2628
      %v2640 = vmul.f32 %v2624, %v2632
      %v2641 = vadd.f32 %v2633, %v2634
      %2642 = vadd.xlane.f32.xlu0 %v2641
      %v2643 = vpop.xlane.xlu0 %2642
      %v2644 = vadd.f32 %v2635, %v2636
      %2645 = vadd.xlane.f32.xlu0 %v2644
      %v2646 = vpop.xlane.xlu0 %2645
      %v2647 = vadd.f32 %v2637, %v2638
      %2648 = vadd.xlane.f32.xlu0 %v2647
      %v2649 = vpop.xlane.xlu0 %2648
      %v2650 = vadd.f32 %v2639, %v2640
      %2651 = vadd.xlane.f32.xlu0 %v2650
      %v2652 = vpop.xlane.xlu0 %2651
      %vm2653 = vcmask 15368
      %2654 = vst.msk [vmem:[#allocation3] sm:$0xff] %vm2653, %v2643
      %2655 = vst.msk [vmem:[#allocation3 + $0x8] sm:$0xff] %vm2653, %v2646
      %2656 = vst.msk [vmem:[#allocation3 + $0x10] sm:$0xff] %vm2653, %v2649
      %2657 = vst.msk [vmem:[#allocation3 + $0x18] sm:$0xff] %vm2653, %v2652
      %v2658 = vld [vmem:[%s445] sm:$0xff]
      %v2659 = vld [vmem:[%s445 + $0x8] sm:$0xff]
      %v2660 = vld [vmem:[%s445 + $0x10] sm:$0xff]
      %v2661 = vld [vmem:[%s445 + $0x18] sm:$0xff]
      %v2662 = vunpack.c.l.bf16 %v2658
      %v2663 = vunpack.c.h.bf16 %v2658
      %v2664 = vunpack.c.l.bf16 %v2659
      %v2665 = vunpack.c.h.bf16 %v2659
      %v2666 = vunpack.c.l.bf16 %v2660
      %v2667 = vunpack.c.h.bf16 %v2660
      %v2668 = vunpack.c.l.bf16 %v2661
      %v2669 = vunpack.c.h.bf16 %v2661
      %v2670 = vlaneseq
      %v2671 = vshrl.u32 %v2670, 7
      %v2672 = vsub.s32 2, %v2671
      %v2673 = vrot.slane %v2560, %v2672
      %v2674 = vlaneseq
      %v2675 = vshrl.u32 %v2674, 7
      %v2676 = vsub.s32 2, %v2675
      %v2677 = vrot.slane %v2561, %v2676
      %v2678 = vmul.f32 %v2662, %v2673
      %v2679 = vmul.f32 %v2663, %v2677
      %v2680 = vmul.f32 %v2664, %v2673
      %v2681 = vmul.f32 %v2665, %v2677
      %v2682 = vmul.f32 %v2666, %v2673
      %v2683 = vmul.f32 %v2667, %v2677
      %v2684 = vmul.f32 %v2668, %v2673
      %v2685 = vmul.f32 %v2669, %v2677
      %v2686 = vadd.f32 %v2678, %v2679
      %2687 = vadd.xlane.f32.xlu0 %v2686
      %v2688 = vpop.xlane.xlu0 %2687
      %v2689 = vadd.f32 %v2680, %v2681
      %2690 = vadd.xlane.f32.xlu0 %v2689
      %v2691 = vpop.xlane.xlu0 %2690
      %v2692 = vadd.f32 %v2682, %v2683
      %2693 = vadd.xlane.f32.xlu0 %v2692
      %v2694 = vpop.xlane.xlu0 %2693
      %v2695 = vadd.f32 %v2684, %v2685
      %2696 = vadd.xlane.f32.xlu0 %v2695
      %v2697 = vpop.xlane.xlu0 %2696
      %vm2698 = vcmask 23568
      %2699 = vst.msk [vmem:[#allocation3] sm:$0xff] %vm2698, %v2688
      %2700 = vst.msk [vmem:[#allocation3 + $0x8] sm:$0xff] %vm2698, %v2691
      %2701 = vst.msk [vmem:[#allocation3 + $0x10] sm:$0xff] %vm2698, %v2694
      %2702 = vst.msk [vmem:[#allocation3 + $0x18] sm:$0xff] %vm2698, %v2697
      %v2703 = vld [vmem:[%s505] sm:$0xff]
      %v2704 = vld [vmem:[%s505 + $0x8] sm:$0xff]
      %v2705 = vld [vmem:[%s505 + $0x10] sm:$0xff]
      %v2706 = vld [vmem:[%s505 + $0x18] sm:$0xff]
      %v2707 = vunpack.c.l.bf16 %v2703
      %v2708 = vunpack.c.h.bf16 %v2703
      %v2709 = vunpack.c.l.bf16 %v2704
      %v2710 = vunpack.c.h.bf16 %v2704
      %v2711 = vunpack.c.l.bf16 %v2705
      %v2712 = vunpack.c.h.bf16 %v2705
      %v2713 = vunpack.c.l.bf16 %v2706
      %v2714 = vunpack.c.h.bf16 %v2706
      %v2715 = vlaneseq
      %v2716 = vshrl.u32 %v2715, 7
      %v2717 = vsub.s32 3, %v2716
      %v2718 = vrot.slane %v2560, %v2717
      %v2719 = vlaneseq
      %v2720 = vshrl.u32 %v2719, 7
      %v2721 = vsub.s32 3, %v2720
      %v2722 = vrot.slane %v2561, %v2721
      %v2723 = vmul.f32 %v2707, %v2718
      %v2724 = vmul.f32 %v2708, %v2722
      %v2725 = vmul.f32 %v2709, %v2718
      %v2726 = vmul.f32 %v2710, %v2722
      %v2727 = vmul.f32 %v2711, %v2718
      %v2728 = vmul.f32 %v2712, %v2722
      %v2729 = vmul.f32 %v2713, %v2718
      %v2730 = vmul.f32 %v2714, %v2722
      %v2731 = vadd.f32 %v2723, %v2724
      %2732 = vadd.xlane.f32.xlu0 %v2731
      %v2733 = vpop.xlane.xlu0 %2732
      %v2734 = vadd.f32 %v2725, %v2726
      %2735 = vadd.xlane.f32.xlu0 %v2734
      %v2736 = vpop.xlane.xlu0 %2735
      %v2737 = vadd.f32 %v2727, %v2728
      %2738 = vadd.xlane.f32.xlu0 %v2737
      %v2739 = vpop.xlane.xlu0 %2738
      %v2740 = vadd.f32 %v2729, %v2730
      %2741 = vadd.xlane.f32.xlu0 %v2740
      %v2742 = vpop.xlane.xlu0 %2741
      %vm2743 = vcmask 31768
      %2744 = vst.msk [vmem:[#allocation3] sm:$0xff] %vm2743, %v2733
      %2745 = vst.msk [vmem:[#allocation3 + $0x8] sm:$0xff] %vm2743, %v2736
      %2746 = vst.msk [vmem:[#allocation3 + $0x10] sm:$0xff] %vm2743, %v2739
      %2747 = vst.msk [vmem:[#allocation3 + $0x18] sm:$0xff] %vm2743, %v2742
      %v2748 = vld [vmem:[%s565] sm:$0xff]
      %v2749 = vld [vmem:[%s565 + $0x8] sm:$0xff]
      %v2750 = vld [vmem:[%s565 + $0x10] sm:$0xff]
      %v2751 = vld [vmem:[%s565 + $0x18] sm:$0xff]
      %v2752 = vunpack.c.l.bf16 %v2748
      %v2753 = vunpack.c.h.bf16 %v2748
      %v2754 = vunpack.c.l.bf16 %v2749
      %v2755 = vunpack.c.h.bf16 %v2749
      %v2756 = vunpack.c.l.bf16 %v2750
      %v2757 = vunpack.c.h.bf16 %v2750
      %v2758 = vunpack.c.l.bf16 %v2751
      %v2759 = vunpack.c.h.bf16 %v2751
      %v2760 = vlaneseq
      %v2761 = vshrl.u32 %v2760, 7
      %v2762 = vsub.s32 4, %v2761
      %v2763 = vrot.slane %v2560, %v2762
      %v2764 = vlaneseq
      %v2765 = vshrl.u32 %v2764, 7
      %v2766 = vsub.s32 4, %v2765
      %v2767 = vrot.slane %v2561, %v2766
      %v2768 = vmul.f32 %v2752, %v2763
      %v2769 = vmul.f32 %v2753, %v2767
      %v2770 = vmul.f32 %v2754, %v2763
      %v2771 = vmul.f32 %v2755, %v2767
      %v2772 = vmul.f32 %v2756, %v2763
      %v2773 = vmul.f32 %v2757, %v2767
      %v2774 = vmul.f32 %v2758, %v2763
      %v2775 = vmul.f32 %v2759, %v2767
      %v2776 = vadd.f32 %v2768, %v2769
      %2777 = vadd.xlane.f32.xlu0 %v2776
      %v2778 = vpop.xlane.xlu0 %2777
      %v2779 = vadd.f32 %v2770, %v2771
      %2780 = vadd.xlane.f32.xlu0 %v2779
      %v2781 = vpop.xlane.xlu0 %2780
      %v2782 = vadd.f32 %v2772, %v2773
      %2783 = vadd.xlane.f32.xlu0 %v2782
      %v2784 = vpop.xlane.xlu0 %2783
      %v2785 = vadd.f32 %v2774, %v2775
      %2786 = vadd.xlane.f32.xlu0 %v2785
      %v2787 = vpop.xlane.xlu0 %2786
      %vm2788 = vcmask 39968
      %2789 = vst.msk [vmem:[#allocation3] sm:$0xff] %vm2788, %v2778
      %2790 = vst.msk [vmem:[#allocation3 + $0x8] sm:$0xff] %vm2788, %v2781
      %2791 = vst.msk [vmem:[#allocation3 + $0x10] sm:$0xff] %vm2788, %v2784
      %2792 = vst.msk [vmem:[#allocation3 + $0x18] sm:$0xff] %vm2788, %v2787
      %v2793 = vld [vmem:[%s625] sm:$0xff]
      %v2794 = vld [vmem:[%s625 + $0x8] sm:$0xff]
      %v2795 = vld [vmem:[%s625 + $0x10] sm:$0xff]
      %v2796 = vld [vmem:[%s625 + $0x18] sm:$0xff]
      %v2797 = vunpack.c.l.bf16 %v2793
      %v2798 = vunpack.c.h.bf16 %v2793
      %v2799 = vunpack.c.l.bf16 %v2794
      %v2800 = vunpack.c.h.bf16 %v2794
      %v2801 = vunpack.c.l.bf16 %v2795
      %v2802 = vunpack.c.h.bf16 %v2795
      %v2803 = vunpack.c.l.bf16 %v2796
      %v2804 = vunpack.c.h.bf16 %v2796
      %v2805 = vlaneseq
      %v2806 = vshrl.u32 %v2805, 7
      %v2807 = vsub.s32 5, %v2806
      %v2808 = vrot.slane %v2560, %v2807
      %v2809 = vlaneseq
      %v2810 = vshrl.u32 %v2809, 7
      %v2811 = vsub.s32 5, %v2810
      %v2812 = vrot.slane %v2561, %v2811
      %v2813 = vmul.f32 %v2797, %v2808
      %v2814 = vmul.f32 %v2798, %v2812
      %v2815 = vmul.f32 %v2799, %v2808
      %v2816 = vmul.f32 %v2800, %v2812
      %v2817 = vmul.f32 %v2801, %v2808
      %v2818 = vmul.f32 %v2802, %v2812
      %v2819 = vmul.f32 %v2803, %v2808
      %v2820 = vmul.f32 %v2804, %v2812
      %v2821 = vadd.f32 %v2813, %v2814
      %2822 = vadd.xlane.f32.xlu0 %v2821
      %v2823 = vpop.xlane.xlu0 %2822
      %v2824 = vadd.f32 %v2815, %v2816
      %2825 = vadd.xlane.f32.xlu0 %v2824
      %v2826 = vpop.xlane.xlu0 %2825
      %v2827 = vadd.f32 %v2817, %v2818
      %2828 = vadd.xlane.f32.xlu0 %v2827
      %v2829 = vpop.xlane.xlu0 %2828
      %v2830 = vadd.f32 %v2819, %v2820
      %2831 = vadd.xlane.f32.xlu0 %v2830
      %v2832 = vpop.xlane.xlu0 %2831
      %vm2833 = vcmask 48168
      %2834 = vst.msk [vmem:[#allocation3] sm:$0xff] %vm2833, %v2823
      %2835 = vst.msk [vmem:[#allocation3 + $0x8] sm:$0xff] %vm2833, %v2826
      %2836 = vst.msk [vmem:[#allocation3 + $0x10] sm:$0xff] %vm2833, %v2829
      %2837 = vst.msk [vmem:[#allocation3 + $0x18] sm:$0xff] %vm2833, %v2832
      %v2838 = vld [vmem:[%s685] sm:$0xff]
      %v2839 = vld [vmem:[%s685 + $0x8] sm:$0xff]
      %v2840 = vld [vmem:[%s685 + $0x10] sm:$0xff]
      %v2841 = vld [vmem:[%s685 + $0x18] sm:$0xff]
      %v2842 = vunpack.c.l.bf16 %v2838
      %v2843 = vunpack.c.h.bf16 %v2838
      %v2844 = vunpack.c.l.bf16 %v2839
      %v2845 = vunpack.c.h.bf16 %v2839
      %v2846 = vunpack.c.l.bf16 %v2840
      %v2847 = vunpack.c.h.bf16 %v2840
      %v2848 = vunpack.c.l.bf16 %v2841
      %v2849 = vunpack.c.h.bf16 %v2841
      %v2850 = vlaneseq
      %v2851 = vshrl.u32 %v2850, 7
      %v2852 = vsub.s32 6, %v2851
      %v2853 = vrot.slane %v2560, %v2852
      %v2854 = vlaneseq
      %v2855 = vshrl.u32 %v2854, 7
      %v2856 = vsub.s32 6, %v2855
      %v2857 = vrot.slane %v2561, %v2856
      %v2858 = vmul.f32 %v2842, %v2853
      %v2859 = vmul.f32 %v2843, %v2857
      %v2860 = vmul.f32 %v2844, %v2853
      %v2861 = vmul.f32 %v2845, %v2857
      %v2862 = vmul.f32 %v2846, %v2853
      %v2863 = vmul.f32 %v2847, %v2857
      %v2864 = vmul.f32 %v2848, %v2853
      %v2865 = vmul.f32 %v2849, %v2857
      %v2866 = vadd.f32 %v2858, %v2859
      %2867 = vadd.xlane.f32.xlu0 %v2866
      %v2868 = vpop.xlane.xlu0 %2867
      %v2869 = vadd.f32 %v2860, %v2861
      %2870 = vadd.xlane.f32.xlu0 %v2869
      %v2871 = vpop.xlane.xlu0 %2870
      %v2872 = vadd.f32 %v2862, %v2863
      %2873 = vadd.xlane.f32.xlu0 %v2872
      %v2874 = vpop.xlane.xlu0 %2873
      %v2875 = vadd.f32 %v2864, %v2865
      %2876 = vadd.xlane.f32.xlu0 %v2875
      %v2877 = vpop.xlane.xlu0 %2876
      %vm2878 = vcmask 56368
      %2879 = vst.msk [vmem:[#allocation3] sm:$0xff] %vm2878, %v2868
      %2880 = vst.msk [vmem:[#allocation3 + $0x8] sm:$0xff] %vm2878, %v2871
      %2881 = vst.msk [vmem:[#allocation3 + $0x10] sm:$0xff] %vm2878, %v2874
      %2882 = vst.msk [vmem:[#allocation3 + $0x18] sm:$0xff] %vm2878, %v2877
      %v2883 = vld [vmem:[%s745] sm:$0xff]
      %v2884 = vld [vmem:[%s745 + $0x8] sm:$0xff]
      %v2885 = vld [vmem:[%s745 + $0x10] sm:$0xff]
      %v2886 = vld [vmem:[%s745 + $0x18] sm:$0xff]
      %v2887 = vunpack.c.l.bf16 %v2883
      %v2888 = vunpack.c.h.bf16 %v2883
      %v2889 = vunpack.c.l.bf16 %v2884
      %v2890 = vunpack.c.h.bf16 %v2884
      %v2891 = vunpack.c.l.bf16 %v2885
      %v2892 = vunpack.c.h.bf16 %v2885
      %v2893 = vunpack.c.l.bf16 %v2886
      %v2894 = vunpack.c.h.bf16 %v2886
      %v2895 = vlaneseq
      %v2896 = vshrl.u32 %v2895, 7
      %v2897 = vsub.s32 7, %v2896
      %v2898 = vrot.slane %v2560, %v2897
      %v2899 = vlaneseq
      %v2900 = vshrl.u32 %v2899, 7
      %v2901 = vsub.s32 7, %v2900
      %v2902 = vrot.slane %v2561, %v2901
      %v2903 = vmul.f32 %v2887, %v2898
      %v2904 = vmul.f32 %v2888, %v2902
      %v2905 = vmul.f32 %v2889, %v2898
      %v2906 = vmul.f32 %v2890, %v2902
      %v2907 = vmul.f32 %v2891, %v2898
      %v2908 = vmul.f32 %v2892, %v2902
      %v2909 = vmul.f32 %v2893, %v2898
      %v2910 = vmul.f32 %v2894, %v2902
      %v2911 = vadd.f32 %v2903, %v2904
      %2912 = vadd.xlane.f32.xlu0 %v2911
      %v2913 = vpop.xlane.xlu0 %2912
      %v2914 = vadd.f32 %v2905, %v2906
      %2915 = vadd.xlane.f32.xlu0 %v2914
      %v2916 = vpop.xlane.xlu0 %2915
      %v2917 = vadd.f32 %v2907, %v2908
      %2918 = vadd.xlane.f32.xlu0 %v2917
      %v2919 = vpop.xlane.xlu0 %2918
      %v2920 = vadd.f32 %v2909, %v2910
      %2921 = vadd.xlane.f32.xlu0 %v2920
      %v2922 = vpop.xlane.xlu0 %2921
      %vm2923 = vcmask 64568
      %2924 = vst.msk [vmem:[#allocation3] sm:$0xff] %vm2923, %v2913
      %2925 = vst.msk [vmem:[#allocation3 + $0x8] sm:$0xff] %vm2923, %v2916
      %2926 = vst.msk [vmem:[#allocation3 + $0x10] sm:$0xff] %vm2923, %v2919
      %2927 = vst.msk [vmem:[#allocation3 + $0x18] sm:$0xff] %vm2923, %v2922
      %v2928 = vld [vmem:[%s805] sm:$0xff]
      %v2929 = vld [vmem:[%s805 + $0x8] sm:$0xff]
      %v2930 = vld [vmem:[%s805 + $0x10] sm:$0xff]
      %v2931 = vld [vmem:[%s805 + $0x18] sm:$0xff]
      %v2932 = vunpack.c.l.bf16 %v2928
      %v2933 = vunpack.c.h.bf16 %v2928
      %v2934 = vunpack.c.l.bf16 %v2929
      %v2935 = vunpack.c.h.bf16 %v2929
      %v2936 = vunpack.c.l.bf16 %v2930
      %v2937 = vunpack.c.h.bf16 %v2930
      %v2938 = vunpack.c.l.bf16 %v2931
      %v2939 = vunpack.c.h.bf16 %v2931
      %v2940 = vlaneseq
      %v2941 = vshrl.u32 %v2940, 7
      %v2942 = vsub.s32 0, %v2941
      %v2943 = vrot.slane %v2562, %v2942
      %v2944 = vlaneseq
      %v2945 = vshrl.u32 %v2944, 7
      %v2946 = vsub.s32 0, %v2945
      %v2947 = vrot.slane %v2563, %v2946
      %v2948 = vmul.f32 %v2932, %v2943
      %v2949 = vmul.f32 %v2933, %v2947
      %v2950 = vmul.f32 %v2934, %v2943
      %v2951 = vmul.f32 %v2935, %v2947
      %v2952 = vmul.f32 %v2936, %v2943
      %v2953 = vmul.f32 %v2937, %v2947
      %v2954 = vmul.f32 %v2938, %v2943
      %v2955 = vmul.f32 %v2939, %v2947
      %v2956 = vadd.f32 %v2948, %v2949
      %2957 = vadd.xlane.f32.xlu0 %v2956
      %v2958 = vpop.xlane.xlu0 %2957
      %v2959 = vadd.f32 %v2950, %v2951
      %2960 = vadd.xlane.f32.xlu0 %v2959
      %v2961 = vpop.xlane.xlu0 %2960
      %v2962 = vadd.f32 %v2952, %v2953
      %2963 = vadd.xlane.f32.xlu0 %v2962
      %v2964 = vpop.xlane.xlu0 %2963
      %v2965 = vadd.f32 %v2954, %v2955
      %2966 = vadd.xlane.f32.xlu0 %v2965
      %v2967 = vpop.xlane.xlu0 %2966
      %vm2968 = vcmask 72768
      %2969 = vst.msk [vmem:[#allocation3] sm:$0xff] %vm2968, %v2958
      %2970 = vst.msk [vmem:[#allocation3 + $0x8] sm:$0xff] %vm2968, %v2961
      %2971 = vst.msk [vmem:[#allocation3 + $0x10] sm:$0xff] %vm2968, %v2964
      %2972 = vst.msk [vmem:[#allocation3 + $0x18] sm:$0xff] %vm2968, %v2967
      %v2973 = vld [vmem:[%s865] sm:$0xff]
      %v2974 = vld [vmem:[%s865 + $0x8] sm:$0xff]
      %v2975 = vld [vmem:[%s865 + $0x10] sm:$0xff]
      %v2976 = vld [vmem:[%s865 + $0x18] sm:$0xff]
      %v2977 = vunpack.c.l.bf16 %v2973
      %v2978 = vunpack.c.h.bf16 %v2973
      %v2979 = vunpack.c.l.bf16 %v2974
      %v2980 = vunpack.c.h.bf16 %v2974
      %v2981 = vunpack.c.l.bf16 %v2975
      %v2982 = vunpack.c.h.bf16 %v2975
      %v2983 = vunpack.c.l.bf16 %v2976
      %v2984 = vunpack.c.h.bf16 %v2976
      %v2985 = vlaneseq
      %v2986 = vshrl.u32 %v2985, 7
      %v2987 = vsub.s32 1, %v2986
      %v2988 = vrot.slane %v2562, %v2987
      %v2989 = vlaneseq
      %v2990 = vshrl.u32 %v2989, 7
      %v2991 = vsub.s32 1, %v2990
      %v2992 = vrot.slane %v2563, %v2991
      %v2993 = vmul.f32 %v2977, %v2988
      %v2994 = vmul.f32 %v2978, %v2992
      %v2995 = vmul.f32 %v2979, %v2988
      %v2996 = vmul.f32 %v2980, %v2992
      %v2997 = vmul.f32 %v2981, %v2988
      %v2998 = vmul.f32 %v2982, %v2992
      %v2999 = vmul.f32 %v2983, %v2988
      %v3000 = vmul.f32 %v2984, %v2992
      %v3001 = vadd.f32 %v2993, %v2994
      %3002 = vadd.xlane.f32.xlu0 %v3001
      %v3003 = vpop.xlane.xlu0 %3002
      %v3004 = vadd.f32 %v2995, %v2996
      %3005 = vadd.xlane.f32.xlu0 %v3004
      %v3006 = vpop.xlane.xlu0 %3005
      %v3007 = vadd.f32 %v2997, %v2998
      %3008 = vadd.xlane.f32.xlu0 %v3007
      %v3009 = vpop.xlane.xlu0 %3008
      %v3010 = vadd.f32 %v2999, %v3000
      %3011 = vadd.xlane.f32.xlu0 %v3010
      %v3012 = vpop.xlane.xlu0 %3011
      %vm3013 = vcmask 80968
      %3014 = vst.msk [vmem:[#allocation3] sm:$0xff] %vm3013, %v3003
      %3015 = vst.msk [vmem:[#allocation3 + $0x8] sm:$0xff] %vm3013, %v3006
      %3016 = vst.msk [vmem:[#allocation3 + $0x10] sm:$0xff] %vm3013, %v3009
      %3017 = vst.msk [vmem:[#allocation3 + $0x18] sm:$0xff] %vm3013, %v3012
      %v3018 = vld [vmem:[%s925] sm:$0xff]
      %v3019 = vld [vmem:[%s925 + $0x8] sm:$0xff]
      %v3020 = vld [vmem:[%s925 + $0x10] sm:$0xff]
      %v3021 = vld [vmem:[%s925 + $0x18] sm:$0xff]
      %v3022 = vunpack.c.l.bf16 %v3018
      %v3023 = vunpack.c.h.bf16 %v3018
      %v3024 = vunpack.c.l.bf16 %v3019
      %v3025 = vunpack.c.h.bf16 %v3019
      %v3026 = vunpack.c.l.bf16 %v3020
      %v3027 = vunpack.c.h.bf16 %v3020
      %v3028 = vunpack.c.l.bf16 %v3021
      %v3029 = vunpack.c.h.bf16 %v3021
      %v3030 = vlaneseq
      %v3031 = vshrl.u32 %v3030, 7
      %v3032 = vsub.s32 2, %v3031
      %v3033 = vrot.slane %v2562, %v3032
      %v3034 = vlaneseq
      %v3035 = vshrl.u32 %v3034, 7
      %v3036 = vsub.s32 2, %v3035
      %v3037 = vrot.slane %v2563, %v3036
      %v3038 = vmul.f32 %v3022, %v3033
      %v3039 = vmul.f32 %v3023, %v3037
      %v3040 = vmul.f32 %v3024, %v3033
      %v3041 = vmul.f32 %v3025, %v3037
      %v3042 = vmul.f32 %v3026, %v3033
      %v3043 = vmul.f32 %v3027, %v3037
      %v3044 = vmul.f32 %v3028, %v3033
      %v3045 = vmul.f32 %v3029, %v3037
      %v3046 = vadd.f32 %v3038, %v3039
      %3047 = vadd.xlane.f32.xlu0 %v3046
      %v3048 = vpop.xlane.xlu0 %3047
      %v3049 = vadd.f32 %v3040, %v3041
      %3050 = vadd.xlane.f32.xlu0 %v3049
      %v3051 = vpop.xlane.xlu0 %3050
      %v3052 = vadd.f32 %v3042, %v3043
      %3053 = vadd.xlane.f32.xlu0 %v3052
      %v3054 = vpop.xlane.xlu0 %3053
      %v3055 = vadd.f32 %v3044, %v3045
      %3056 = vadd.xlane.f32.xlu0 %v3055
      %v3057 = vpop.xlane.xlu0 %3056
      %vm3058 = vcmask 89168
      %3059 = vst.msk [vmem:[#allocation3] sm:$0xff] %vm3058, %v3048
      %3060 = vst.msk [vmem:[#allocation3 + $0x8] sm:$0xff] %vm3058, %v3051
      %3061 = vst.msk [vmem:[#allocation3 + $0x10] sm:$0xff] %vm3058, %v3054
      %3062 = vst.msk [vmem:[#allocation3 + $0x18] sm:$0xff] %vm3058, %v3057
      %v3063 = vld [vmem:[%s985] sm:$0xff]
      %v3064 = vld [vmem:[%s985 + $0x8] sm:$0xff]
      %v3065 = vld [vmem:[%s985 + $0x10] sm:$0xff]
      %v3066 = vld [vmem:[%s985 + $0x18] sm:$0xff]
      %v3067 = vunpack.c.l.bf16 %v3063
      %v3068 = vunpack.c.h.bf16 %v3063
      %v3069 = vunpack.c.l.bf16 %v3064
      %v3070 = vunpack.c.h.bf16 %v3064
      %v3071 = vunpack.c.l.bf16 %v3065
      %v3072 = vunpack.c.h.bf16 %v3065
      %v3073 = vunpack.c.l.bf16 %v3066
      %v3074 = vunpack.c.h.bf16 %v3066
      %v3075 = vlaneseq
      %v3076 = vshrl.u32 %v3075, 7
      %v3077 = vsub.s32 3, %v3076
      %v3078 = vrot.slane %v2562, %v3077
      %v3079 = vlaneseq
      %v3080 = vshrl.u32 %v3079, 7
      %v3081 = vsub.s32 3, %v3080
      %v3082 = vrot.slane %v2563, %v3081
      %v3083 = vmul.f32 %v3067, %v3078
      %v3084 = vmul.f32 %v3068, %v3082
      %v3085 = vmul.f32 %v3069, %v3078
      %v3086 = vmul.f32 %v3070, %v3082
      %v3087 = vmul.f32 %v3071, %v3078
      %v3088 = vmul.f32 %v3072, %v3082
      %v3089 = vmul.f32 %v3073, %v3078
      %v3090 = vmul.f32 %v3074, %v3082
      %v3091 = vadd.f32 %v3083, %v3084
      %3092 = vadd.xlane.f32.xlu0 %v3091
      %v3093 = vpop.xlane.xlu0 %3092
      %v3094 = vadd.f32 %v3085, %v3086
      %3095 = vadd.xlane.f32.xlu0 %v3094
      %v3096 = vpop.xlane.xlu0 %3095
      %v3097 = vadd.f32 %v3087, %v3088
      %3098 = vadd.xlane.f32.xlu0 %v3097
      %v3099 = vpop.xlane.xlu0 %3098
      %v3100 = vadd.f32 %v3089, %v3090
      %3101 = vadd.xlane.f32.xlu0 %v3100
      %v3102 = vpop.xlane.xlu0 %3101
      %vm3103 = vcmask 97368
      %3104 = vst.msk [vmem:[#allocation3] sm:$0xff] %vm3103, %v3093
      %3105 = vst.msk [vmem:[#allocation3 + $0x8] sm:$0xff] %vm3103, %v3096
      %3106 = vst.msk [vmem:[#allocation3 + $0x10] sm:$0xff] %vm3103, %v3099
      %3107 = vst.msk [vmem:[#allocation3 + $0x18] sm:$0xff] %vm3103, %v3102
      %v3108 = vld [vmem:[%s1045] sm:$0xff]
      %v3109 = vld [vmem:[%s1045 + $0x8] sm:$0xff]
      %v3110 = vld [vmem:[%s1045 + $0x10] sm:$0xff]
      %v3111 = vld [vmem:[%s1045 + $0x18] sm:$0xff]
      %v3112 = vunpack.c.l.bf16 %v3108
      %v3113 = vunpack.c.h.bf16 %v3108
      %v3114 = vunpack.c.l.bf16 %v3109
      %v3115 = vunpack.c.h.bf16 %v3109
      %v3116 = vunpack.c.l.bf16 %v3110
      %v3117 = vunpack.c.h.bf16 %v3110
      %v3118 = vunpack.c.l.bf16 %v3111
      %v3119 = vunpack.c.h.bf16 %v3111
      %v3120 = vlaneseq
      %v3121 = vshrl.u32 %v3120, 7
      %v3122 = vsub.s32 4, %v3121
      %v3123 = vrot.slane %v2562, %v3122
      %v3124 = vlaneseq
      %v3125 = vshrl.u32 %v3124, 7
      %v3126 = vsub.s32 4, %v3125
      %v3127 = vrot.slane %v2563, %v3126
      %v3128 = vmul.f32 %v3112, %v3123
      %v3129 = vmul.f32 %v3113, %v3127
      %v3130 = vmul.f32 %v3114, %v3123
      %v3131 = vmul.f32 %v3115, %v3127
      %v3132 = vmul.f32 %v3116, %v3123
      %v3133 = vmul.f32 %v3117, %v3127
      %v3134 = vmul.f32 %v3118, %v3123
      %v3135 = vmul.f32 %v3119, %v3127
      %v3136 = vadd.f32 %v3128, %v3129
      %3137 = vadd.xlane.f32.xlu0 %v3136
      %v3138 = vpop.xlane.xlu0 %3137
      %v3139 = vadd.f32 %v3130, %v3131
      %3140 = vadd.xlane.f32.xlu0 %v3139
      %v3141 = vpop.xlane.xlu0 %3140
      %v3142 = vadd.f32 %v3132, %v3133
      %3143 = vadd.xlane.f32.xlu0 %v3142
      %v3144 = vpop.xlane.xlu0 %3143
      %v3145 = vadd.f32 %v3134, %v3135
      %3146 = vadd.xlane.f32.xlu0 %v3145
      %v3147 = vpop.xlane.xlu0 %3146
      %vm3148 = vcmask 105568
      %3149 = vst.msk [vmem:[#allocation3] sm:$0xff] %vm3148, %v3138
      %3150 = vst.msk [vmem:[#allocation3 + $0x8] sm:$0xff] %vm3148, %v3141
      %3151 = vst.msk [vmem:[#allocation3 + $0x10] sm:$0xff] %vm3148, %v3144
      %3152 = vst.msk [vmem:[#allocation3 + $0x18] sm:$0xff] %vm3148, %v3147
      %v3153 = vld [vmem:[%s1105] sm:$0xff]
      %v3154 = vld [vmem:[%s1105 + $0x8] sm:$0xff]
      %v3155 = vld [vmem:[%s1105 + $0x10] sm:$0xff]
      %v3156 = vld [vmem:[%s1105 + $0x18] sm:$0xff]
      %v3157 = vunpack.c.l.bf16 %v3153
      %v3158 = vunpack.c.h.bf16 %v3153
      %v3159 = vunpack.c.l.bf16 %v3154
      %v3160 = vunpack.c.h.bf16 %v3154
      %v3161 = vunpack.c.l.bf16 %v3155
      %v3162 = vunpack.c.h.bf16 %v3155
      %v3163 = vunpack.c.l.bf16 %v3156
      %v3164 = vunpack.c.h.bf16 %v3156
      %v3165 = vlaneseq
      %v3166 = vshrl.u32 %v3165, 7
      %v3167 = vsub.s32 5, %v3166
      %v3168 = vrot.slane %v2562, %v3167
      %v3169 = vlaneseq
      %v3170 = vshrl.u32 %v3169, 7
      %v3171 = vsub.s32 5, %v3170
      %v3172 = vrot.slane %v2563, %v3171
      %v3173 = vmul.f32 %v3157, %v3168
      %v3174 = vmul.f32 %v3158, %v3172
      %v3175 = vmul.f32 %v3159, %v3168
      %v3176 = vmul.f32 %v3160, %v3172
      %v3177 = vmul.f32 %v3161, %v3168
      %v3178 = vmul.f32 %v3162, %v3172
      %v3179 = vmul.f32 %v3163, %v3168
      %v3180 = vmul.f32 %v3164, %v3172
      %v3181 = vadd.f32 %v3173, %v3174
      %3182 = vadd.xlane.f32.xlu0 %v3181
      %v3183 = vpop.xlane.xlu0 %3182
      %v3184 = vadd.f32 %v3175, %v3176
      %3185 = vadd.xlane.f32.xlu0 %v3184
      %v3186 = vpop.xlane.xlu0 %3185
      %v3187 = vadd.f32 %v3177, %v3178
      %3188 = vadd.xlane.f32.xlu0 %v3187
      %v3189 = vpop.xlane.xlu0 %3188
      %v3190 = vadd.f32 %v3179, %v3180
      %3191 = vadd.xlane.f32.xlu0 %v3190
      %v3192 = vpop.xlane.xlu0 %3191
      %vm3193 = vcmask 113768
      %3194 = vst.msk [vmem:[#allocation3] sm:$0xff] %vm3193, %v3183
      %3195 = vst.msk [vmem:[#allocation3 + $0x8] sm:$0xff] %vm3193, %v3186
      %3196 = vst.msk [vmem:[#allocation3 + $0x10] sm:$0xff] %vm3193, %v3189
      %3197 = vst.msk [vmem:[#allocation3 + $0x18] sm:$0xff] %vm3193, %v3192
      %v3198 = vld [vmem:[%s1165] sm:$0xff]
      %v3199 = vld [vmem:[%s1165 + $0x8] sm:$0xff]
      %v3200 = vld [vmem:[%s1165 + $0x10] sm:$0xff]
      %v3201 = vld [vmem:[%s1165 + $0x18] sm:$0xff]
      %v3202 = vunpack.c.l.bf16 %v3198
      %v3203 = vunpack.c.h.bf16 %v3198
      %v3204 = vunpack.c.l.bf16 %v3199
      %v3205 = vunpack.c.h.bf16 %v3199
      %v3206 = vunpack.c.l.bf16 %v3200
      %v3207 = vunpack.c.h.bf16 %v3200
      %v3208 = vunpack.c.l.bf16 %v3201
      %v3209 = vunpack.c.h.bf16 %v3201
      %v3210 = vlaneseq
      %v3211 = vshrl.u32 %v3210, 7
      %v3212 = vsub.s32 6, %v3211
      %v3213 = vrot.slane %v2562, %v3212
      %v3214 = vlaneseq
      %v3215 = vshrl.u32 %v3214, 7
      %v3216 = vsub.s32 6, %v3215
      %v3217 = vrot.slane %v2563, %v3216
      %v3218 = vmul.f32 %v3202, %v3213
      %v3219 = vmul.f32 %v3203, %v3217
      %v3220 = vmul.f32 %v3204, %v3213
      %v3221 = vmul.f32 %v3205, %v3217
      %v3222 = vmul.f32 %v3206, %v3213
      %v3223 = vmul.f32 %v3207, %v3217
      %v3224 = vmul.f32 %v3208, %v3213
      %v3225 = vmul.f32 %v3209, %v3217
      %v3226 = vadd.f32 %v3218, %v3219
      %3227 = vadd.xlane.f32.xlu0 %v3226
      %v3228 = vpop.xlane.xlu0 %3227
      %v3229 = vadd.f32 %v3220, %v3221
      %3230 = vadd.xlane.f32.xlu0 %v3229
      %v3231 = vpop.xlane.xlu0 %3230
      %v3232 = vadd.f32 %v3222, %v3223
      %3233 = vadd.xlane.f32.xlu0 %v3232
      %v3234 = vpop.xlane.xlu0 %3233
      %v3235 = vadd.f32 %v3224, %v3225
      %3236 = vadd.xlane.f32.xlu0 %v3235
      %v3237 = vpop.xlane.xlu0 %3236
      %vm3238 = vcmask 121968
      %3239 = vst.msk [vmem:[#allocation3] sm:$0xff] %vm3238, %v3228
      %3240 = vst.msk [vmem:[#allocation3 + $0x8] sm:$0xff] %vm3238, %v3231
      %3241 = vst.msk [vmem:[#allocation3 + $0x10] sm:$0xff] %vm3238, %v3234
      %3242 = vst.msk [vmem:[#allocation3 + $0x18] sm:$0xff] %vm3238, %v3237
      %v3243 = vld [vmem:[%s1225] sm:$0xff]
      %v3244 = vld [vmem:[%s1225 + $0x8] sm:$0xff]
      %v3245 = vld [vmem:[%s1225 + $0x10] sm:$0xff]
      %v3246 = vld [vmem:[%s1225 + $0x18] sm:$0xff]
      %v3247 = vunpack.c.l.bf16 %v3243
      %v3248 = vunpack.c.h.bf16 %v3243
      %v3249 = vunpack.c.l.bf16 %v3244
      %v3250 = vunpack.c.h.bf16 %v3244
      %v3251 = vunpack.c.l.bf16 %v3245
      %v3252 = vunpack.c.h.bf16 %v3245
      %v3253 = vunpack.c.l.bf16 %v3246
      %v3254 = vunpack.c.h.bf16 %v3246
      %v3255 = vlaneseq
      %v3256 = vshrl.u32 %v3255, 7
      %v3257 = vsub.s32 7, %v3256
      %v3258 = vrot.slane %v2562, %v3257
      %v3259 = vlaneseq
      %v3260 = vshrl.u32 %v3259, 7
      %v3261 = vsub.s32 7, %v3260
      %v3262 = vrot.slane %v2563, %v3261
      %v3263 = vmul.f32 %v3247, %v3258
      %v3264 = vmul.f32 %v3248, %v3262
      %v3265 = vmul.f32 %v3249, %v3258
      %v3266 = vmul.f32 %v3250, %v3262
      %v3267 = vmul.f32 %v3251, %v3258
      %v3268 = vmul.f32 %v3252, %v3262
      %v3269 = vmul.f32 %v3253, %v3258
      %v3270 = vmul.f32 %v3254, %v3262
      %v3271 = vadd.f32 %v3263, %v3264
      %3272 = vadd.xlane.f32.xlu0 %v3271
      %v3273 = vpop.xlane.xlu0 %3272
      %v3274 = vadd.f32 %v3265, %v3266
      %3275 = vadd.xlane.f32.xlu0 %v3274
      %v3276 = vpop.xlane.xlu0 %3275
      %v3277 = vadd.f32 %v3267, %v3268
      %3278 = vadd.xlane.f32.xlu0 %v3277
      %v3279 = vpop.xlane.xlu0 %3278
      %v3280 = vadd.f32 %v3269, %v3270
      %3281 = vadd.xlane.f32.xlu0 %v3280
      %v3282 = vpop.xlane.xlu0 %3281
      %vm3283 = vcmask 130168
      %3284 = vst.msk [vmem:[#allocation3] sm:$0xff] %vm3283, %v3273
      %3285 = vst.msk [vmem:[#allocation3 + $0x8] sm:$0xff] %vm3283, %v3276
      %3286 = vst.msk [vmem:[#allocation3 + $0x10] sm:$0xff] %vm3283, %v3279
      %3287 = vst.msk [vmem:[#allocation3 + $0x18] sm:$0xff] %vm3283, %v3282
      %v3288 = vld [vmem:[%s1285] sm:$0xff]
      %v3289 = vld [vmem:[%s1285 + $0x8] sm:$0xff]
      %v3290 = vld [vmem:[%s1285 + $0x10] sm:$0xff]
      %v3291 = vld [vmem:[%s1285 + $0x18] sm:$0xff]
      %v3292 = vunpack.c.l.bf16 %v3288
      %v3293 = vunpack.c.h.bf16 %v3288
      %v3294 = vunpack.c.l.bf16 %v3289
      %v3295 = vunpack.c.h.bf16 %v3289
      %v3296 = vunpack.c.l.bf16 %v3290
      %v3297 = vunpack.c.h.bf16 %v3290
      %v3298 = vunpack.c.l.bf16 %v3291
      %v3299 = vunpack.c.h.bf16 %v3291
      %v3300 = vlaneseq
      %v3301 = vshrl.u32 %v3300, 7
      %v3302 = vsub.s32 0, %v3301
      %v3303 = vrot.slane %v2564, %v3302
      %v3304 = vlaneseq
      %v3305 = vshrl.u32 %v3304, 7
      %v3306 = vsub.s32 0, %v3305
      %v3307 = vrot.slane %v2565, %v3306
      %v3308 = vmul.f32 %v3292, %v3303
      %v3309 = vmul.f32 %v3293, %v3307
      %v3310 = vmul.f32 %v3294, %v3303
      %v3311 = vmul.f32 %v3295, %v3307
      %v3312 = vmul.f32 %v3296, %v3303
      %v3313 = vmul.f32 %v3297, %v3307
      %v3314 = vmul.f32 %v3298, %v3303
      %v3315 = vmul.f32 %v3299, %v3307
      %v3316 = vadd.f32 %v3308, %v3309
      %3317 = vadd.xlane.f32.xlu0 %v3316
      %v3318 = vpop.xlane.xlu0 %3317
      %v3319 = vadd.f32 %v3310, %v3311
      %3320 = vadd.xlane.f32.xlu0 %v3319
      %v3321 = vpop.xlane.xlu0 %3320
      %v3322 = vadd.f32 %v3312, %v3313
      %3323 = vadd.xlane.f32.xlu0 %v3322
      %v3324 = vpop.xlane.xlu0 %3323
      %v3325 = vadd.f32 %v3314, %v3315
      %3326 = vadd.xlane.f32.xlu0 %v3325
      %v3327 = vpop.xlane.xlu0 %3326
      %vm3328 = vcmask 138368
      %3329 = vst.msk [vmem:[#allocation3] sm:$0xff] %vm3328, %v3318
      %3330 = vst.msk [vmem:[#allocation3 + $0x8] sm:$0xff] %vm3328, %v3321
      %3331 = vst.msk [vmem:[#allocation3 + $0x10] sm:$0xff] %vm3328, %v3324
      %3332 = vst.msk [vmem:[#allocation3 + $0x18] sm:$0xff] %vm3328, %v3327
      %v3333 = vld [vmem:[%s1345] sm:$0xff]
      %v3334 = vld [vmem:[%s1345 + $0x8] sm:$0xff]
      %v3335 = vld [vmem:[%s1345 + $0x10] sm:$0xff]
      %v3336 = vld [vmem:[%s1345 + $0x18] sm:$0xff]
      %v3337 = vunpack.c.l.bf16 %v3333
      %v3338 = vunpack.c.h.bf16 %v3333
      %v3339 = vunpack.c.l.bf16 %v3334
      %v3340 = vunpack.c.h.bf16 %v3334
      %v3341 = vunpack.c.l.bf16 %v3335
      %v3342 = vunpack.c.h.bf16 %v3335
      %v3343 = vunpack.c.l.bf16 %v3336
      %v3344 = vunpack.c.h.bf16 %v3336
      %v3345 = vlaneseq
      %v3346 = vshrl.u32 %v3345, 7
      %v3347 = vsub.s32 1, %v3346
      %v3348 = vrot.slane %v2564, %v3347
      %v3349 = vlaneseq
      %v3350 = vshrl.u32 %v3349, 7
      %v3351 = vsub.s32 1, %v3350
      %v3352 = vrot.slane %v2565, %v3351
      %v3353 = vmul.f32 %v3337, %v3348
      %v3354 = vmul.f32 %v3338, %v3352
      %v3355 = vmul.f32 %v3339, %v3348
      %v3356 = vmul.f32 %v3340, %v3352
      %v3357 = vmul.f32 %v3341, %v3348
      %v3358 = vmul.f32 %v3342, %v3352
      %v3359 = vmul.f32 %v3343, %v3348
      %v3360 = vmul.f32 %v3344, %v3352
      %v3361 = vadd.f32 %v3353, %v3354
      %3362 = vadd.xlane.f32.xlu0 %v3361
      %v3363 = vpop.xlane.xlu0 %3362
      %v3364 = vadd.f32 %v3355, %v3356
      %3365 = vadd.xlane.f32.xlu0 %v3364
      %v3366 = vpop.xlane.xlu0 %3365
      %v3367 = vadd.f32 %v3357, %v3358
      %3368 = vadd.xlane.f32.xlu0 %v3367
      %v3369 = vpop.xlane.xlu0 %3368
      %v3370 = vadd.f32 %v3359, %v3360
      %3371 = vadd.xlane.f32.xlu0 %v3370
      %v3372 = vpop.xlane.xlu0 %3371
      %vm3373 = vcmask 146568
      %3374 = vst.msk [vmem:[#allocation3] sm:$0xff] %vm3373, %v3363
      %3375 = vst.msk [vmem:[#allocation3 + $0x8] sm:$0xff] %vm3373, %v3366
      %3376 = vst.msk [vmem:[#allocation3 + $0x10] sm:$0xff] %vm3373, %v3369
      %3377 = vst.msk [vmem:[#allocation3 + $0x18] sm:$0xff] %vm3373, %v3372
      %v3378 = vld [vmem:[%s1405] sm:$0xff]
      %v3379 = vld [vmem:[%s1405 + $0x8] sm:$0xff]
      %v3380 = vld [vmem:[%s1405 + $0x10] sm:$0xff]
      %v3381 = vld [vmem:[%s1405 + $0x18] sm:$0xff]
      %v3382 = vunpack.c.l.bf16 %v3378
      %v3383 = vunpack.c.h.bf16 %v3378
      %v3384 = vunpack.c.l.bf16 %v3379
      %v3385 = vunpack.c.h.bf16 %v3379
      %v3386 = vunpack.c.l.bf16 %v3380
      %v3387 = vunpack.c.h.bf16 %v3380
      %v3388 = vunpack.c.l.bf16 %v3381
      %v3389 = vunpack.c.h.bf16 %v3381
      %v3390 = vlaneseq
      %v3391 = vshrl.u32 %v3390, 7
      %v3392 = vsub.s32 2, %v3391
      %v3393 = vrot.slane %v2564, %v3392
      %v3394 = vlaneseq
      %v3395 = vshrl.u32 %v3394, 7
      %v3396 = vsub.s32 2, %v3395
      %v3397 = vrot.slane %v2565, %v3396
      %v3398 = vmul.f32 %v3382, %v3393
      %v3399 = vmul.f32 %v3383, %v3397
      %v3400 = vmul.f32 %v3384, %v3393
      %v3401 = vmul.f32 %v3385, %v3397
      %v3402 = vmul.f32 %v3386, %v3393
      %v3403 = vmul.f32 %v3387, %v3397
      %v3404 = vmul.f32 %v3388, %v3393
      %v3405 = vmul.f32 %v3389, %v3397
      %v3406 = vadd.f32 %v3398, %v3399
      %3407 = vadd.xlane.f32.xlu0 %v3406
      %v3408 = vpop.xlane.xlu0 %3407
      %v3409 = vadd.f32 %v3400, %v3401
      %3410 = vadd.xlane.f32.xlu0 %v3409
      %v3411 = vpop.xlane.xlu0 %3410
      %v3412 = vadd.f32 %v3402, %v3403
      %3413 = vadd.xlane.f32.xlu0 %v3412
      %v3414 = vpop.xlane.xlu0 %3413
      %v3415 = vadd.f32 %v3404, %v3405
      %3416 = vadd.xlane.f32.xlu0 %v3415
      %v3417 = vpop.xlane.xlu0 %3416
      %vm3418 = vcmask 154768
      %3419 = vst.msk [vmem:[#allocation3] sm:$0xff] %vm3418, %v3408
      %3420 = vst.msk [vmem:[#allocation3 + $0x8] sm:$0xff] %vm3418, %v3411
      %3421 = vst.msk [vmem:[#allocation3 + $0x10] sm:$0xff] %vm3418, %v3414
      %3422 = vst.msk [vmem:[#allocation3 + $0x18] sm:$0xff] %vm3418, %v3417
      %v3423 = vld [vmem:[%s1465] sm:$0xff]
      %v3424 = vld [vmem:[%s1465 + $0x8] sm:$0xff]
      %v3425 = vld [vmem:[%s1465 + $0x10] sm:$0xff]
      %v3426 = vld [vmem:[%s1465 + $0x18] sm:$0xff]
      %v3427 = vunpack.c.l.bf16 %v3423
      %v3428 = vunpack.c.h.bf16 %v3423
      %v3429 = vunpack.c.l.bf16 %v3424
      %v3430 = vunpack.c.h.bf16 %v3424
      %v3431 = vunpack.c.l.bf16 %v3425
      %v3432 = vunpack.c.h.bf16 %v3425
      %v3433 = vunpack.c.l.bf16 %v3426
      %v3434 = vunpack.c.h.bf16 %v3426
      %v3435 = vlaneseq
      %v3436 = vshrl.u32 %v3435, 7
      %v3437 = vsub.s32 3, %v3436
      %v3438 = vrot.slane %v2564, %v3437
      %v3439 = vlaneseq
      %v3440 = vshrl.u32 %v3439, 7
      %v3441 = vsub.s32 3, %v3440
      %v3442 = vrot.slane %v2565, %v3441
      %v3443 = vmul.f32 %v3427, %v3438
      %v3444 = vmul.f32 %v3428, %v3442
      %v3445 = vmul.f32 %v3429, %v3438
      %v3446 = vmul.f32 %v3430, %v3442
      %v3447 = vmul.f32 %v3431, %v3438
      %v3448 = vmul.f32 %v3432, %v3442
      %v3449 = vmul.f32 %v3433, %v3438
      %v3450 = vmul.f32 %v3434, %v3442
      %v3451 = vadd.f32 %v3443, %v3444
      %3452 = vadd.xlane.f32.xlu0 %v3451
      %v3453 = vpop.xlane.xlu0 %3452
      %v3454 = vadd.f32 %v3445, %v3446
      %3455 = vadd.xlane.f32.xlu0 %v3454
      %v3456 = vpop.xlane.xlu0 %3455
      %v3457 = vadd.f32 %v3447, %v3448
      %3458 = vadd.xlane.f32.xlu0 %v3457
      %v3459 = vpop.xlane.xlu0 %3458
      %v3460 = vadd.f32 %v3449, %v3450
      %3461 = vadd.xlane.f32.xlu0 %v3460
      %v3462 = vpop.xlane.xlu0 %3461
      %vm3463 = vcmask 162968
      %3464 = vst.msk [vmem:[#allocation3] sm:$0xff] %vm3463, %v3453
      %3465 = vst.msk [vmem:[#allocation3 + $0x8] sm:$0xff] %vm3463, %v3456
      %3466 = vst.msk [vmem:[#allocation3 + $0x10] sm:$0xff] %vm3463, %v3459
      %3467 = vst.msk [vmem:[#allocation3 + $0x18] sm:$0xff] %vm3463, %v3462
      %v3468 = vld [vmem:[%s1525] sm:$0xff]
      %v3469 = vld [vmem:[%s1525 + $0x8] sm:$0xff]
      %v3470 = vld [vmem:[%s1525 + $0x10] sm:$0xff]
      %v3471 = vld [vmem:[%s1525 + $0x18] sm:$0xff]
      %v3472 = vunpack.c.l.bf16 %v3468
      %v3473 = vunpack.c.h.bf16 %v3468
      %v3474 = vunpack.c.l.bf16 %v3469
      %v3475 = vunpack.c.h.bf16 %v3469
      %v3476 = vunpack.c.l.bf16 %v3470
      %v3477 = vunpack.c.h.bf16 %v3470
      %v3478 = vunpack.c.l.bf16 %v3471
      %v3479 = vunpack.c.h.bf16 %v3471
      %v3480 = vlaneseq
      %v3481 = vshrl.u32 %v3480, 7
      %v3482 = vsub.s32 4, %v3481
      %v3483 = vrot.slane %v2564, %v3482
      %v3484 = vlaneseq
      %v3485 = vshrl.u32 %v3484, 7
      %v3486 = vsub.s32 4, %v3485
      %v3487 = vrot.slane %v2565, %v3486
      %v3488 = vmul.f32 %v3472, %v3483
      %v3489 = vmul.f32 %v3473, %v3487
      %v3490 = vmul.f32 %v3474, %v3483
      %v3491 = vmul.f32 %v3475, %v3487
      %v3492 = vmul.f32 %v3476, %v3483
      %v3493 = vmul.f32 %v3477, %v3487
      %v3494 = vmul.f32 %v3478, %v3483
      %v3495 = vmul.f32 %v3479, %v3487
      %v3496 = vadd.f32 %v3488, %v3489
      %3497 = vadd.xlane.f32.xlu0 %v3496
      %v3498 = vpop.xlane.xlu0 %3497
      %v3499 = vadd.f32 %v3490, %v3491
      %3500 = vadd.xlane.f32.xlu0 %v3499
      %v3501 = vpop.xlane.xlu0 %3500
      %v3502 = vadd.f32 %v3492, %v3493
      %3503 = vadd.xlane.f32.xlu0 %v3502
      %v3504 = vpop.xlane.xlu0 %3503
      %v3505 = vadd.f32 %v3494, %v3495
      %3506 = vadd.xlane.f32.xlu0 %v3505
      %v3507 = vpop.xlane.xlu0 %3506
      %vm3508 = vcmask 171168
      %3509 = vst.msk [vmem:[#allocation3] sm:$0xff] %vm3508, %v3498
      %3510 = vst.msk [vmem:[#allocation3 + $0x8] sm:$0xff] %vm3508, %v3501
      %3511 = vst.msk [vmem:[#allocation3 + $0x10] sm:$0xff] %vm3508, %v3504
      %3512 = vst.msk [vmem:[#allocation3 + $0x18] sm:$0xff] %vm3508, %v3507
      %v3513 = vld [vmem:[%s1585] sm:$0xff]
      %v3514 = vld [vmem:[%s1585 + $0x8] sm:$0xff]
      %v3515 = vld [vmem:[%s1585 + $0x10] sm:$0xff]
      %v3516 = vld [vmem:[%s1585 + $0x18] sm:$0xff]
      %v3517 = vunpack.c.l.bf16 %v3513
      %v3518 = vunpack.c.h.bf16 %v3513
      %v3519 = vunpack.c.l.bf16 %v3514
      %v3520 = vunpack.c.h.bf16 %v3514
      %v3521 = vunpack.c.l.bf16 %v3515
      %v3522 = vunpack.c.h.bf16 %v3515
      %v3523 = vunpack.c.l.bf16 %v3516
      %v3524 = vunpack.c.h.bf16 %v3516
      %v3525 = vlaneseq
      %v3526 = vshrl.u32 %v3525, 7
      %v3527 = vsub.s32 5, %v3526
      %v3528 = vrot.slane %v2564, %v3527
      %v3529 = vlaneseq
      %v3530 = vshrl.u32 %v3529, 7
      %v3531 = vsub.s32 5, %v3530
      %v3532 = vrot.slane %v2565, %v3531
      %v3533 = vmul.f32 %v3517, %v3528
      %v3534 = vmul.f32 %v3518, %v3532
      %v3535 = vmul.f32 %v3519, %v3528
      %v3536 = vmul.f32 %v3520, %v3532
      %v3537 = vmul.f32 %v3521, %v3528
      %v3538 = vmul.f32 %v3522, %v3532
      %v3539 = vmul.f32 %v3523, %v3528
      %v3540 = vmul.f32 %v3524, %v3532
      %v3541 = vadd.f32 %v3533, %v3534
      %3542 = vadd.xlane.f32.xlu0 %v3541
      %v3543 = vpop.xlane.xlu0 %3542
      %v3544 = vadd.f32 %v3535, %v3536
      %3545 = vadd.xlane.f32.xlu0 %v3544
      %v3546 = vpop.xlane.xlu0 %3545
      %v3547 = vadd.f32 %v3537, %v3538
      %3548 = vadd.xlane.f32.xlu0 %v3547
      %v3549 = vpop.xlane.xlu0 %3548
      %v3550 = vadd.f32 %v3539, %v3540
      %3551 = vadd.xlane.f32.xlu0 %v3550
      %v3552 = vpop.xlane.xlu0 %3551
      %vm3553 = vcmask 179368
      %3554 = vst.msk [vmem:[#allocation3] sm:$0xff] %vm3553, %v3543
      %3555 = vst.msk [vmem:[#allocation3 + $0x8] sm:$0xff] %vm3553, %v3546
      %3556 = vst.msk [vmem:[#allocation3 + $0x10] sm:$0xff] %vm3553, %v3549
      %3557 = vst.msk [vmem:[#allocation3 + $0x18] sm:$0xff] %vm3553, %v3552
      %v3558 = vld [vmem:[%s1645] sm:$0xff]
      %v3559 = vld [vmem:[%s1645 + $0x8] sm:$0xff]
      %v3560 = vld [vmem:[%s1645 + $0x10] sm:$0xff]
      %v3561 = vld [vmem:[%s1645 + $0x18] sm:$0xff]
      %v3562 = vunpack.c.l.bf16 %v3558
      %v3563 = vunpack.c.h.bf16 %v3558
      %v3564 = vunpack.c.l.bf16 %v3559
      %v3565 = vunpack.c.h.bf16 %v3559
      %v3566 = vunpack.c.l.bf16 %v3560
      %v3567 = vunpack.c.h.bf16 %v3560
      %v3568 = vunpack.c.l.bf16 %v3561
      %v3569 = vunpack.c.h.bf16 %v3561
      %v3570 = vlaneseq
      %v3571 = vshrl.u32 %v3570, 7
      %v3572 = vsub.s32 6, %v3571
      %v3573 = vrot.slane %v2564, %v3572
      %v3574 = vlaneseq
      %v3575 = vshrl.u32 %v3574, 7
      %v3576 = vsub.s32 6, %v3575
      %v3577 = vrot.slane %v2565, %v3576
      %v3578 = vmul.f32 %v3562, %v3573
      %v3579 = vmul.f32 %v3563, %v3577
      %v3580 = vmul.f32 %v3564, %v3573
      %v3581 = vmul.f32 %v3565, %v3577
      %v3582 = vmul.f32 %v3566, %v3573
      %v3583 = vmul.f32 %v3567, %v3577
      %v3584 = vmul.f32 %v3568, %v3573
      %v3585 = vmul.f32 %v3569, %v3577
      %v3586 = vadd.f32 %v3578, %v3579
      %3587 = vadd.xlane.f32.xlu0 %v3586
      %v3588 = vpop.xlane.xlu0 %3587
      %v3589 = vadd.f32 %v3580, %v3581
      %3590 = vadd.xlane.f32.xlu0 %v3589
      %v3591 = vpop.xlane.xlu0 %3590
      %v3592 = vadd.f32 %v3582, %v3583
      %3593 = vadd.xlane.f32.xlu0 %v3592
      %v3594 = vpop.xlane.xlu0 %3593
      %v3595 = vadd.f32 %v3584, %v3585
      %3596 = vadd.xlane.f32.xlu0 %v3595
      %v3597 = vpop.xlane.xlu0 %3596
      %vm3598 = vcmask 187568
      %3599 = vst.msk [vmem:[#allocation3] sm:$0xff] %vm3598, %v3588
      %3600 = vst.msk [vmem:[#allocation3 + $0x8] sm:$0xff] %vm3598, %v3591
      %3601 = vst.msk [vmem:[#allocation3 + $0x10] sm:$0xff] %vm3598, %v3594
      %3602 = vst.msk [vmem:[#allocation3 + $0x18] sm:$0xff] %vm3598, %v3597
      %v3603 = vld [vmem:[%s1705] sm:$0xff]
      %v3604 = vld [vmem:[%s1705 + $0x8] sm:$0xff]
      %v3605 = vld [vmem:[%s1705 + $0x10] sm:$0xff]
      %v3606 = vld [vmem:[%s1705 + $0x18] sm:$0xff]
      %v3607 = vunpack.c.l.bf16 %v3603
      %v3608 = vunpack.c.h.bf16 %v3603
      %v3609 = vunpack.c.l.bf16 %v3604
      %v3610 = vunpack.c.h.bf16 %v3604
      %v3611 = vunpack.c.l.bf16 %v3605
      %v3612 = vunpack.c.h.bf16 %v3605
      %v3613 = vunpack.c.l.bf16 %v3606
      %v3614 = vunpack.c.h.bf16 %v3606
      %v3615 = vlaneseq
      %v3616 = vshrl.u32 %v3615, 7
      %v3617 = vsub.s32 7, %v3616
      %v3618 = vrot.slane %v2564, %v3617
      %v3619 = vlaneseq
      %v3620 = vshrl.u32 %v3619, 7
      %v3621 = vsub.s32 7, %v3620
      %v3622 = vrot.slane %v2565, %v3621
      %v3623 = vmul.f32 %v3607, %v3618
      %v3624 = vmul.f32 %v3608, %v3622
      %v3625 = vmul.f32 %v3609, %v3618
      %v3626 = vmul.f32 %v3610, %v3622
      %v3627 = vmul.f32 %v3611, %v3618
      %v3628 = vmul.f32 %v3612, %v3622
      %v3629 = vmul.f32 %v3613, %v3618
      %v3630 = vmul.f32 %v3614, %v3622
      %v3631 = vadd.f32 %v3623, %v3624
      %3632 = vadd.xlane.f32.xlu0 %v3631
      %v3633 = vpop.xlane.xlu0 %3632
      %v3634 = vadd.f32 %v3625, %v3626
      %3635 = vadd.xlane.f32.xlu0 %v3634
      %v3636 = vpop.xlane.xlu0 %3635
      %v3637 = vadd.f32 %v3627, %v3628
      %3638 = vadd.xlane.f32.xlu0 %v3637
      %v3639 = vpop.xlane.xlu0 %3638
      %v3640 = vadd.f32 %v3629, %v3630
      %3641 = vadd.xlane.f32.xlu0 %v3640
      %v3642 = vpop.xlane.xlu0 %3641
      %vm3643 = vcmask 195768
      %3644 = vst.msk [vmem:[#allocation3] sm:$0xff] %vm3643, %v3633
      %3645 = vst.msk [vmem:[#allocation3 + $0x8] sm:$0xff] %vm3643, %v3636
      %3646 = vst.msk [vmem:[#allocation3 + $0x10] sm:$0xff] %vm3643, %v3639
      %3647 = vst.msk [vmem:[#allocation3 + $0x18] sm:$0xff] %vm3643, %v3642
      %v3648 = vld [vmem:[%s1765] sm:$0xff]
      %v3649 = vld [vmem:[%s1765 + $0x8] sm:$0xff]
      %v3650 = vld [vmem:[%s1765 + $0x10] sm:$0xff]
      %v3651 = vld [vmem:[%s1765 + $0x18] sm:$0xff]
      %v3652 = vunpack.c.l.bf16 %v3648
      %v3653 = vunpack.c.h.bf16 %v3648
      %v3654 = vunpack.c.l.bf16 %v3649
      %v3655 = vunpack.c.h.bf16 %v3649
      %v3656 = vunpack.c.l.bf16 %v3650
      %v3657 = vunpack.c.h.bf16 %v3650
      %v3658 = vunpack.c.l.bf16 %v3651
      %v3659 = vunpack.c.h.bf16 %v3651
      %v3660 = vlaneseq
      %v3661 = vshrl.u32 %v3660, 7
      %v3662 = vsub.s32 0, %v3661
      %v3663 = vrot.slane %v2566, %v3662
      %v3664 = vlaneseq
      %v3665 = vshrl.u32 %v3664, 7
      %v3666 = vsub.s32 0, %v3665
      %v3667 = vrot.slane %v2567, %v3666
      %v3668 = vmul.f32 %v3652, %v3663
      %v3669 = vmul.f32 %v3653, %v3667
      %v3670 = vmul.f32 %v3654, %v3663
      %v3671 = vmul.f32 %v3655, %v3667
      %v3672 = vmul.f32 %v3656, %v3663
      %v3673 = vmul.f32 %v3657, %v3667
      %v3674 = vmul.f32 %v3658, %v3663
      %v3675 = vmul.f32 %v3659, %v3667
      %v3676 = vadd.f32 %v3668, %v3669
      %3677 = vadd.xlane.f32.xlu0 %v3676
      %v3678 = vpop.xlane.xlu0 %3677
      %v3679 = vadd.f32 %v3670, %v3671
      %3680 = vadd.xlane.f32.xlu0 %v3679
      %v3681 = vpop.xlane.xlu0 %3680
      %v3682 = vadd.f32 %v3672, %v3673
      %3683 = vadd.xlane.f32.xlu0 %v3682
      %v3684 = vpop.xlane.xlu0 %3683
      %v3685 = vadd.f32 %v3674, %v3675
      %3686 = vadd.xlane.f32.xlu0 %v3685
      %v3687 = vpop.xlane.xlu0 %3686
      %vm3688 = vcmask 203968
      %3689 = vst.msk [vmem:[#allocation3] sm:$0xff] %vm3688, %v3678
      %3690 = vst.msk [vmem:[#allocation3 + $0x8] sm:$0xff] %vm3688, %v3681
      %3691 = vst.msk [vmem:[#allocation3 + $0x10] sm:$0xff] %vm3688, %v3684
      %3692 = vst.msk [vmem:[#allocation3 + $0x18] sm:$0xff] %vm3688, %v3687
      %v3693 = vld [vmem:[%s1825] sm:$0xff]
      %v3694 = vld [vmem:[%s1825 + $0x8] sm:$0xff]
      %v3695 = vld [vmem:[%s1825 + $0x10] sm:$0xff]
      %v3696 = vld [vmem:[%s1825 + $0x18] sm:$0xff]
      %v3697 = vunpack.c.l.bf16 %v3693
      %v3698 = vunpack.c.h.bf16 %v3693
      %v3699 = vunpack.c.l.bf16 %v3694
      %v3700 = vunpack.c.h.bf16 %v3694
      %v3701 = vunpack.c.l.bf16 %v3695
      %v3702 = vunpack.c.h.bf16 %v3695
      %v3703 = vunpack.c.l.bf16 %v3696
      %v3704 = vunpack.c.h.bf16 %v3696
      %v3705 = vlaneseq
      %v3706 = vshrl.u32 %v3705, 7
      %v3707 = vsub.s32 1, %v3706
      %v3708 = vrot.slane %v2566, %v3707
      %v3709 = vlaneseq
      %v3710 = vshrl.u32 %v3709, 7
      %v3711 = vsub.s32 1, %v3710
      %v3712 = vrot.slane %v2567, %v3711
      %v3713 = vmul.f32 %v3697, %v3708
      %v3714 = vmul.f32 %v3698, %v3712
      %v3715 = vmul.f32 %v3699, %v3708
      %v3716 = vmul.f32 %v3700, %v3712
      %v3717 = vmul.f32 %v3701, %v3708
      %v3718 = vmul.f32 %v3702, %v3712
      %v3719 = vmul.f32 %v3703, %v3708
      %v3720 = vmul.f32 %v3704, %v3712
      %v3721 = vadd.f32 %v3713, %v3714
      %3722 = vadd.xlane.f32.xlu0 %v3721
      %v3723 = vpop.xlane.xlu0 %3722
      %v3724 = vadd.f32 %v3715, %v3716
      %3725 = vadd.xlane.f32.xlu0 %v3724
      %v3726 = vpop.xlane.xlu0 %3725
      %v3727 = vadd.f32 %v3717, %v3718
      %3728 = vadd.xlane.f32.xlu0 %v3727
      %v3729 = vpop.xlane.xlu0 %3728
      %v3730 = vadd.f32 %v3719, %v3720
      %3731 = vadd.xlane.f32.xlu0 %v3730
      %v3732 = vpop.xlane.xlu0 %3731
      %vm3733 = vcmask 212168
      %3734 = vst.msk [vmem:[#allocation3] sm:$0xff] %vm3733, %v3723
      %3735 = vst.msk [vmem:[#allocation3 + $0x8] sm:$0xff] %vm3733, %v3726
      %3736 = vst.msk [vmem:[#allocation3 + $0x10] sm:$0xff] %vm3733, %v3729
      %3737 = vst.msk [vmem:[#allocation3 + $0x18] sm:$0xff] %vm3733, %v3732
      %v3738 = vld [vmem:[%s1885] sm:$0xff]
      %v3739 = vld [vmem:[%s1885 + $0x8] sm:$0xff]
      %v3740 = vld [vmem:[%s1885 + $0x10] sm:$0xff]
      %v3741 = vld [vmem:[%s1885 + $0x18] sm:$0xff]
      %v3742 = vunpack.c.l.bf16 %v3738
      %v3743 = vunpack.c.h.bf16 %v3738
      %v3744 = vunpack.c.l.bf16 %v3739
      %v3745 = vunpack.c.h.bf16 %v3739
      %v3746 = vunpack.c.l.bf16 %v3740
      %v3747 = vunpack.c.h.bf16 %v3740
      %v3748 = vunpack.c.l.bf16 %v3741
      %v3749 = vunpack.c.h.bf16 %v3741
      %v3750 = vlaneseq
      %v3751 = vshrl.u32 %v3750, 7
      %v3752 = vsub.s32 2, %v3751
      %v3753 = vrot.slane %v2566, %v3752
      %v3754 = vlaneseq
      %v3755 = vshrl.u32 %v3754, 7
      %v3756 = vsub.s32 2, %v3755
      %v3757 = vrot.slane %v2567, %v3756
      %v3758 = vmul.f32 %v3742, %v3753
      %v3759 = vmul.f32 %v3743, %v3757
      %v3760 = vmul.f32 %v3744, %v3753
      %v3761 = vmul.f32 %v3745, %v3757
      %v3762 = vmul.f32 %v3746, %v3753
      %v3763 = vmul.f32 %v3747, %v3757
      %v3764 = vmul.f32 %v3748, %v3753
      %v3765 = vmul.f32 %v3749, %v3757
      %v3766 = vadd.f32 %v3758, %v3759
      %3767 = vadd.xlane.f32.xlu0 %v3766
      %v3768 = vpop.xlane.xlu0 %3767
      %v3769 = vadd.f32 %v3760, %v3761
      %3770 = vadd.xlane.f32.xlu0 %v3769
      %v3771 = vpop.xlane.xlu0 %3770
      %v3772 = vadd.f32 %v3762, %v3763
      %3773 = vadd.xlane.f32.xlu0 %v3772
      %v3774 = vpop.xlane.xlu0 %3773
      %v3775 = vadd.f32 %v3764, %v3765
      %3776 = vadd.xlane.f32.xlu0 %v3775
      %v3777 = vpop.xlane.xlu0 %3776
      %vm3778 = vcmask 220368
      %3779 = vst.msk [vmem:[#allocation3] sm:$0xff] %vm3778, %v3768
      %3780 = vst.msk [vmem:[#allocation3 + $0x8] sm:$0xff] %vm3778, %v3771
      %3781 = vst.msk [vmem:[#allocation3 + $0x10] sm:$0xff] %vm3778, %v3774
      %3782 = vst.msk [vmem:[#allocation3 + $0x18] sm:$0xff] %vm3778, %v3777
      %v3783 = vld [vmem:[%s1945] sm:$0xff]
      %v3784 = vld [vmem:[%s1945 + $0x8] sm:$0xff]
      %v3785 = vld [vmem:[%s1945 + $0x10] sm:$0xff]
      %v3786 = vld [vmem:[%s1945 + $0x18] sm:$0xff]
      %v3787 = vunpack.c.l.bf16 %v3783
      %v3788 = vunpack.c.h.bf16 %v3783
      %v3789 = vunpack.c.l.bf16 %v3784
      %v3790 = vunpack.c.h.bf16 %v3784
      %v3791 = vunpack.c.l.bf16 %v3785
      %v3792 = vunpack.c.h.bf16 %v3785
      %v3793 = vunpack.c.l.bf16 %v3786
      %v3794 = vunpack.c.h.bf16 %v3786
      %v3795 = vlaneseq
      %v3796 = vshrl.u32 %v3795, 7
      %v3797 = vsub.s32 3, %v3796
      %v3798 = vrot.slane %v2566, %v3797
      %v3799 = vlaneseq
      %v3800 = vshrl.u32 %v3799, 7
      %v3801 = vsub.s32 3, %v3800
      %v3802 = vrot.slane %v2567, %v3801
      %v3803 = vmul.f32 %v3787, %v3798
      %v3804 = vmul.f32 %v3788, %v3802
      %v3805 = vmul.f32 %v3789, %v3798
      %v3806 = vmul.f32 %v3790, %v3802
      %v3807 = vmul.f32 %v3791, %v3798
      %v3808 = vmul.f32 %v3792, %v3802
      %v3809 = vmul.f32 %v3793, %v3798
      %v3810 = vmul.f32 %v3794, %v3802
      %v3811 = vadd.f32 %v3803, %v3804
      %3812 = vadd.xlane.f32.xlu0 %v3811
      %v3813 = vpop.xlane.xlu0 %3812
      %v3814 = vadd.f32 %v3805, %v3806
      %3815 = vadd.xlane.f32.xlu0 %v3814
      %v3816 = vpop.xlane.xlu0 %3815
      %v3817 = vadd.f32 %v3807, %v3808
      %3818 = vadd.xlane.f32.xlu0 %v3817
      %v3819 = vpop.xlane.xlu0 %3818
      %v3820 = vadd.f32 %v3809, %v3810
      %3821 = vadd.xlane.f32.xlu0 %v3820
      %v3822 = vpop.xlane.xlu0 %3821
      %vm3823 = vcmask 228568
      %3824 = vst.msk [vmem:[#allocation3] sm:$0xff] %vm3823, %v3813
      %3825 = vst.msk [vmem:[#allocation3 + $0x8] sm:$0xff] %vm3823, %v3816
      %3826 = vst.msk [vmem:[#allocation3 + $0x10] sm:$0xff] %vm3823, %v3819
      %3827 = vst.msk [vmem:[#allocation3 + $0x18] sm:$0xff] %vm3823, %v3822
      %v3828 = vld [vmem:[%s2005] sm:$0xff]
      %v3829 = vld [vmem:[%s2005 + $0x8] sm:$0xff]
      %v3830 = vld [vmem:[%s2005 + $0x10] sm:$0xff]
      %v3831 = vld [vmem:[%s2005 + $0x18] sm:$0xff]
      %v3832 = vunpack.c.l.bf16 %v3828
      %v3833 = vunpack.c.h.bf16 %v3828
      %v3834 = vunpack.c.l.bf16 %v3829
      %v3835 = vunpack.c.h.bf16 %v3829
      %v3836 = vunpack.c.l.bf16 %v3830
      %v3837 = vunpack.c.h.bf16 %v3830
      %v3838 = vunpack.c.l.bf16 %v3831
      %v3839 = vunpack.c.h.bf16 %v3831
      %v3840 = vlaneseq
      %v3841 = vshrl.u32 %v3840, 7
      %v3842 = vsub.s32 4, %v3841
      %v3843 = vrot.slane %v2566, %v3842
      %v3844 = vlaneseq
      %v3845 = vshrl.u32 %v3844, 7
      %v3846 = vsub.s32 4, %v3845
      %v3847 = vrot.slane %v2567, %v3846
      %v3848 = vmul.f32 %v3832, %v3843
      %v3849 = vmul.f32 %v3833, %v3847
      %v3850 = vmul.f32 %v3834, %v3843
      %v3851 = vmul.f32 %v3835, %v3847
      %v3852 = vmul.f32 %v3836, %v3843
      %v3853 = vmul.f32 %v3837, %v3847
      %v3854 = vmul.f32 %v3838, %v3843
      %v3855 = vmul.f32 %v3839, %v3847
      %v3856 = vadd.f32 %v3848, %v3849
      %3857 = vadd.xlane.f32.xlu0 %v3856
      %v3858 = vpop.xlane.xlu0 %3857
      %v3859 = vadd.f32 %v3850, %v3851
      %3860 = vadd.xlane.f32.xlu0 %v3859
      %v3861 = vpop.xlane.xlu0 %3860
      %v3862 = vadd.f32 %v3852, %v3853
      %3863 = vadd.xlane.f32.xlu0 %v3862
      %v3864 = vpop.xlane.xlu0 %3863
      %v3865 = vadd.f32 %v3854, %v3855
      %3866 = vadd.xlane.f32.xlu0 %v3865
      %v3867 = vpop.xlane.xlu0 %3866
      %vm3868 = vcmask 236768
      %3869 = vst.msk [vmem:[#allocation3] sm:$0xff] %vm3868, %v3858
      %3870 = vst.msk [vmem:[#allocation3 + $0x8] sm:$0xff] %vm3868, %v3861
      %3871 = vst.msk [vmem:[#allocation3 + $0x10] sm:$0xff] %vm3868, %v3864
      %3872 = vst.msk [vmem:[#allocation3 + $0x18] sm:$0xff] %vm3868, %v3867
      %v3873 = vld [vmem:[%s2065] sm:$0xff]
      %v3874 = vld [vmem:[%s2065 + $0x8] sm:$0xff]
      %v3875 = vld [vmem:[%s2065 + $0x10] sm:$0xff]
      %v3876 = vld [vmem:[%s2065 + $0x18] sm:$0xff]
      %v3877 = vunpack.c.l.bf16 %v3873
      %v3878 = vunpack.c.h.bf16 %v3873
      %v3879 = vunpack.c.l.bf16 %v3874
      %v3880 = vunpack.c.h.bf16 %v3874
      %v3881 = vunpack.c.l.bf16 %v3875
      %v3882 = vunpack.c.h.bf16 %v3875
      %v3883 = vunpack.c.l.bf16 %v3876
      %v3884 = vunpack.c.h.bf16 %v3876
      %v3885 = vlaneseq
      %v3886 = vshrl.u32 %v3885, 7
      %v3887 = vsub.s32 5, %v3886
      %v3888 = vrot.slane %v2566, %v3887
      %v3889 = vlaneseq
      %v3890 = vshrl.u32 %v3889, 7
      %v3891 = vsub.s32 5, %v3890
      %v3892 = vrot.slane %v2567, %v3891
      %v3893 = vmul.f32 %v3877, %v3888
      %v3894 = vmul.f32 %v3878, %v3892
      %v3895 = vmul.f32 %v3879, %v3888
      %v3896 = vmul.f32 %v3880, %v3892
      %v3897 = vmul.f32 %v3881, %v3888
      %v3898 = vmul.f32 %v3882, %v3892
      %v3899 = vmul.f32 %v3883, %v3888
      %v3900 = vmul.f32 %v3884, %v3892
      %v3901 = vadd.f32 %v3893, %v3894
      %3902 = vadd.xlane.f32.xlu0 %v3901
      %v3903 = vpop.xlane.xlu0 %3902
      %v3904 = vadd.f32 %v3895, %v3896
      %3905 = vadd.xlane.f32.xlu0 %v3904
      %v3906 = vpop.xlane.xlu0 %3905
      %v3907 = vadd.f32 %v3897, %v3898
      %3908 = vadd.xlane.f32.xlu0 %v3907
      %v3909 = vpop.xlane.xlu0 %3908
      %v3910 = vadd.f32 %v3899, %v3900
      %3911 = vadd.xlane.f32.xlu0 %v3910
      %v3912 = vpop.xlane.xlu0 %3911
      %vm3913 = vcmask 244968
      %3914 = vst.msk [vmem:[#allocation3] sm:$0xff] %vm3913, %v3903
      %3915 = vst.msk [vmem:[#allocation3 + $0x8] sm:$0xff] %vm3913, %v3906
      %3916 = vst.msk [vmem:[#allocation3 + $0x10] sm:$0xff] %vm3913, %v3909
      %3917 = vst.msk [vmem:[#allocation3 + $0x18] sm:$0xff] %vm3913, %v3912
      %v3918 = vld [vmem:[%s2125] sm:$0xff]
      %v3919 = vld [vmem:[%s2125 + $0x8] sm:$0xff]
      %v3920 = vld [vmem:[%s2125 + $0x10] sm:$0xff]
      %v3921 = vld [vmem:[%s2125 + $0x18] sm:$0xff]
      %v3922 = vunpack.c.l.bf16 %v3918
      %v3923 = vunpack.c.h.bf16 %v3918
      %v3924 = vunpack.c.l.bf16 %v3919
      %v3925 = vunpack.c.h.bf16 %v3919
      %v3926 = vunpack.c.l.bf16 %v3920
      %v3927 = vunpack.c.h.bf16 %v3920
      %v3928 = vunpack.c.l.bf16 %v3921
      %v3929 = vunpack.c.h.bf16 %v3921
      %v3930 = vlaneseq
      %v3931 = vshrl.u32 %v3930, 7
      %v3932 = vsub.s32 6, %v3931
      %v3933 = vrot.slane %v2566, %v3932
      %v3934 = vlaneseq
      %v3935 = vshrl.u32 %v3934, 7
      %v3936 = vsub.s32 6, %v3935
      %v3937 = vrot.slane %v2567, %v3936
      %v3938 = vmul.f32 %v3922, %v3933
      %v3939 = vmul.f32 %v3923, %v3937
      %v3940 = vmul.f32 %v3924, %v3933
      %v3941 = vmul.f32 %v3925, %v3937
      %v3942 = vmul.f32 %v3926, %v3933
      %v3943 = vmul.f32 %v3927, %v3937
      %v3944 = vmul.f32 %v3928, %v3933
      %v3945 = vmul.f32 %v3929, %v3937
      %v3946 = vadd.f32 %v3938, %v3939
      %3947 = vadd.xlane.f32.xlu0 %v3946
      %v3948 = vpop.xlane.xlu0 %3947
      %v3949 = vadd.f32 %v3940, %v3941
      %3950 = vadd.xlane.f32.xlu0 %v3949
      %v3951 = vpop.xlane.xlu0 %3950
      %v3952 = vadd.f32 %v3942, %v3943
      %3953 = vadd.xlane.f32.xlu0 %v3952
      %v3954 = vpop.xlane.xlu0 %3953
      %v3955 = vadd.f32 %v3944, %v3945
      %3956 = vadd.xlane.f32.xlu0 %v3955
      %v3957 = vpop.xlane.xlu0 %3956
      %vm3958 = vcmask 253168
      %3959 = vst.msk [vmem:[#allocation3] sm:$0xff] %vm3958, %v3948
      %3960 = vst.msk [vmem:[#allocation3 + $0x8] sm:$0xff] %vm3958, %v3951
      %3961 = vst.msk [vmem:[#allocation3 + $0x10] sm:$0xff] %vm3958, %v3954
      %3962 = vst.msk [vmem:[#allocation3 + $0x18] sm:$0xff] %vm3958, %v3957
      %v3963 = vld [vmem:[%s2185] sm:$0xff]
      %v3964 = vld [vmem:[%s2185 + $0x8] sm:$0xff]
      %v3965 = vld [vmem:[%s2185 + $0x10] sm:$0xff]
      %v3966 = vld [vmem:[%s2185 + $0x18] sm:$0xff]
      %v3967 = vunpack.c.l.bf16 %v3963
      %v3968 = vunpack.c.h.bf16 %v3963
      %v3969 = vunpack.c.l.bf16 %v3964
      %v3970 = vunpack.c.h.bf16 %v3964
      %v3971 = vunpack.c.l.bf16 %v3965
      %v3972 = vunpack.c.h.bf16 %v3965
      %v3973 = vunpack.c.l.bf16 %v3966
      %v3974 = vunpack.c.h.bf16 %v3966
      %v3975 = vlaneseq
      %v3976 = vshrl.u32 %v3975, 7
      %v3977 = vsub.s32 7, %v3976
      %v3978 = vrot.slane %v2566, %v3977
      %v3979 = vlaneseq
      %v3980 = vshrl.u32 %v3979, 7
      %v3981 = vsub.s32 7, %v3980
      %v3982 = vrot.slane %v2567, %v3981
      %v3983 = vmul.f32 %v3967, %v3978
      %v3984 = vmul.f32 %v3968, %v3982
      %v3985 = vmul.f32 %v3969, %v3978
      %v3986 = vmul.f32 %v3970, %v3982
      %v3987 = vmul.f32 %v3971, %v3978
      %v3988 = vmul.f32 %v3972, %v3982
      %v3989 = vmul.f32 %v3973, %v3978
      %v3990 = vmul.f32 %v3974, %v3982
      %v3991 = vadd.f32 %v3983, %v3984
      %3992 = vadd.xlane.f32.xlu0 %v3991
      %v3993 = vpop.xlane.xlu0 %3992
      %v3994 = vadd.f32 %v3985, %v3986
      %3995 = vadd.xlane.f32.xlu0 %v3994
      %v3996 = vpop.xlane.xlu0 %3995
      %v3997 = vadd.f32 %v3987, %v3988
      %3998 = vadd.xlane.f32.xlu0 %v3997
      %v3999 = vpop.xlane.xlu0 %3998
      %v4000 = vadd.f32 %v3989, %v3990
      %4001 = vadd.xlane.f32.xlu0 %v4000
      %v4002 = vpop.xlane.xlu0 %4001
      %vm4003 = vcmask 261368
      %4004 = vst.msk [vmem:[#allocation3] sm:$0xff] %vm4003, %v3993
      %4005 = vst.msk [vmem:[#allocation3 + $0x8] sm:$0xff] %vm4003, %v3996
      %4006 = vst.msk [vmem:[#allocation3 + $0x10] sm:$0xff] %vm4003, %v3999
      %4007 = vst.msk [vmem:[#allocation3 + $0x18] sm:$0xff] %vm4003, %v4002
      %v4008 = vld [vmem:[#allocation3] sm:$0xff]
      %v4009 = vld [vmem:[#allocation3 + $0x8] sm:$0xff]
      %v4010 = vld [vmem:[#allocation3 + $0x10] sm:$0xff]
      %v4011 = vld [vmem:[#allocation3 + $0x18] sm:$0xff]
      %4013 = vset.pattern.permute.xlu0 0
      %4014 = vperm.xlu0 %4013, %v297
      %v4015 = vpop.permute.xlu0 %4014
      %4017 = vrot.lane.b32.xlu0 %v297, 125
      %v4018 = vpop.permute.xlu0 %4017
      %vm4019 = vcmask 261120
      %v4020 = vsel %vm4019, %v4018, 0
      %4022 = vmatprep.subr.mxu0 0.0
      %4023 = vmatpush1.msra.mxu0 %v4008
      %4024 = vmatprep.subr.mxu0 0.0
      %4025 = vmatpush1.msra.mxu0 %v4009
      %4026 = vmatprep.subr.mxu0 0.0
      %4027 = vmatpush1.msra.mxu0 %v4010
      %4028 = vmatprep.subr.mxu0 0.0
      %4029 = vmatpush1.msra.mxu0 %v4011
      %4030 = vmatprep.subr.mxu0 0.0
      %4031 = vmatpush1.msra.mxu0 0.0
      %4032 = vmatprep.subr.mxu0 0.0
      %4033 = vmatpush1.msra.mxu0 0.0
      %4034 = vmatprep.subr.mxu0 0.0
      %4035 = vmatpush1.msra.mxu0 0.0
      %4036 = vmatprep.subr.mxu0 0.0
      %4037 = vmatpush1.msra.mxu0 0.0
      %4038 = vmatprep.subr.mxu0 0.0
      %4039 = vmatpush1.msra.mxu0 0.0
      %4040 = vmatprep.subr.mxu0 0.0
      %4041 = vmatpush1.msra.mxu0 0.0
      %4042 = vmatprep.subr.mxu0 0.0
      %4043 = vmatpush1.msra.mxu0 0.0
      %4044 = vmatprep.subr.mxu0 0.0
      %4045 = vmatpush1.msra.mxu0 0.0
      %4046 = vmatprep.subr.mxu0 0.0
      %4047 = vmatpush1.msra.mxu0 0.0
      %4048 = vmatprep.subr.mxu0 0.0
      %4049 = vmatpush1.msra.mxu0 0.0
      %4050 = vmatprep.subr.mxu0 0.0
      %4051 = vmatpush1.msra.mxu0 0.0
      %4052 = vmatprep.subr.mxu0 0.0
      %4053 = vmatpush1.msra.mxu0 0.0
      %4054 = vmatprep.subr.mxu0 0.0
      %4055 = vmatpush1.msra.mxu0 0.0
      %4056 = vmatprep.subr.mxu0 0.0
      %4057 = vmatpush1.msra.mxu0 0.0
      %4058 = vmatprep.subr.mxu0 0.0
      %4059 = vmatpush1.msra.mxu0 0.0
      %4060 = vmatprep.subr.mxu0 0.0
      %4061 = vmatpush1.msra.mxu0 0.0
      %4062 = vmatprep.subr.mxu0 0.0
      %4063 = vmatpush1.msra.mxu0 0.0
      %4064 = vmatprep.subr.mxu0 0.0
      %4065 = vmatpush1.msra.mxu0 0.0
      %4066 = vmatprep.subr.mxu0 0.0
      %4067 = vmatpush1.msra.mxu0 0.0
      %4068 = vmatprep.subr.mxu0 0.0
      %4069 = vmatpush1.msra.mxu0 0.0
      %4070 = vmatprep.subr.mxu0 0.0
      %4071 = vmatpush1.msra.mxu0 0.0
      %4072 = vmatprep.subr.mxu0 0.0
      %4073 = vmatpush1.msra.mxu0 0.0
      %4074 = vmatprep.subr.mxu0 0.0
      %4075 = vmatpush1.msra.mxu0 0.0
      %4076 = vmatprep.subr.mxu0 0.0
      %4077 = vmatpush1.msra.mxu0 0.0
      %4078 = vmatprep.subr.mxu0 0.0
      %4079 = vmatpush1.msra.mxu0 0.0
      %4080 = vmatprep.subr.mxu0 0.0
      %4081 = vmatpush1.msra.mxu0 0.0
      %4082 = vmatprep.subr.mxu0 0.0
      %4083 = vmatpush1.msra.mxu0 0.0
      %4084 = vmatprep.subr.mxu0 0.0
      %4085 = vmatpush1.msra.mxu0 0.0
      %4086 = vmatprep.mubr.f32.mxu0 0.0
      %4087 = vmatmul.mubr.f32.gmra.mrb[0].mxu0 %v4020
      %v4088 = vpop.f32.mrb[0].mxu0
      %v4089 = vadd.f32 %v4015, %v4088
      %v4090 = vpop.f32.mrb[0].mxu0
      %4091 = vdwg.mxu0
      %vm4092 = vcmask 257024
      %v4093 = vsel %vm4092, %v4089, 0.0
      %v4094 = vrot.slane %v4093, 4
      %v4095 = vadd.f32 %v4093, %v4094
      %v4096 = vrot.slane %v4095, 2
      %v4097 = vadd.f32 %v4095, %v4096
      %v4098 = vrot.slane %v4097, 1
      %v4099 = vadd.f32 %v4097, %v4098
      %v4100 = vrcp.pop 4.0
      %v4101 = vmul.f32 %v4099, %v4100
      %v4102 = vsub.f32 %v4089, %v4101
      %v4103 = vmul.f32 %v4102, %v4102
      %v4104 = vsel %vm4092, %v4103, 0.0
      %v4105 = vrot.slane %v4104, 4
      %v4106 = vadd.f32 %v4104, %v4105
      %v4107 = vrot.slane %v4106, 2
      %v4108 = vadd.f32 %v4106, %v4107
      %v4109 = vrot.slane %v4108, 1
      %v4110 = vadd.f32 %v4108, %v4109
      %v4111 = vmul.f32 %v4110, %v4100
      %v4112 = vadd.f32 %v4111, 1e-05
      %v4113 = vrsqrt.pop %v4112
      %v4114 = vmul.f32 %v4102, %v4113
      %4115 = vset.pattern.permute.xlu0 1
      %4116 = vperm.xlu0 %4115, %v297
      %v4117 = vpop.permute.xlu0 %4116
      %v4119 = vmul.f32 %v4114, %v4117
      %4120 = vset.pattern.permute.xlu0 2
      %4121 = vperm.xlu0 %4120, %v297
      %v4122 = vpop.permute.xlu0 %4121
      %v4124 = vadd.f32 %v4119, %v4122
      %v4125 = vmax.f32 %v4124, 0.0
      %4126 = vset.pattern.permute.xlu0 1
      %4127 = vperm.xlu0 %4126, %v298
      %v4128 = vpop.permute.xlu0 %4127
      %4130 = vset.pattern.permute.xlu0 1
      %4131 = vperm.xlu0 %4130, %v299
      %v4132 = vpop.permute.xlu0 %4131
      %4134 = vset.pattern.permute.xlu0 1
      %4135 = vperm.xlu0 %4134, %v300
      %v4136 = vpop.permute.xlu0 %4135
      %4138 = vset.pattern.permute.xlu0 1
      %4139 = vperm.xlu0 %4138, %v301
      %v4140 = vpop.permute.xlu0 %4139
      %4142 = vrot.lane.b32.xlu0 %v298, 126
      %v4143 = vpop.permute.xlu0 %4142
      %4144 = vrot.lane.b32.xlu0 %v299, 126
      %v4145 = vpop.permute.xlu0 %4144
      %4146 = vrot.lane.b32.xlu0 %v300, 126
      %v4147 = vpop.permute.xlu0 %4146
      %4148 = vrot.lane.b32.xlu0 %v301, 126
      %v4149 = vpop.permute.xlu0 %4148
      %vm4150 = vcmask 31744
      %v4151 = vsel %vm4150, %v4143, 0
      %v4153 = vsel %vm4150, %v4145, 0
      %v4155 = vsel %vm4150, %v4147, 0
      %v4157 = vsel %vm4150, %v4149, 0
      %vm4159 = vcmask 1043456
      %v4161 = vsel %vm4159, %v4125, 0
      %4163 = vmatprep.subr.mxu0 0.0
      %4164 = vmatpush1.msra.mxu0 %v4161
      %4165 = vmatprep.subr.mxu0 0.0
      %4166 = vmatpush1.msra.mxu0 0.0
      %4167 = vmatprep.subr.mxu0 0.0
      %4168 = vmatpush1.msra.mxu0 0.0
      %4169 = vmatprep.subr.mxu0 0.0
      %4170 = vmatpush1.msra.mxu0 0.0
      %4171 = vmatprep.subr.mxu0 0.0
      %4172 = vmatpush1.msra.mxu0 0.0
      %4173 = vmatprep.subr.mxu0 0.0
      %4174 = vmatpush1.msra.mxu0 0.0
      %4175 = vmatprep.subr.mxu0 0.0
      %4176 = vmatpush1.msra.mxu0 0.0
      %4177 = vmatprep.subr.mxu0 0.0
      %4178 = vmatpush1.msra.mxu0 0.0
      %4179 = vmatprep.subr.mxu0 0.0
      %4180 = vmatpush1.msra.mxu0 0.0
      %4181 = vmatprep.subr.mxu0 0.0
      %4182 = vmatpush1.msra.mxu0 0.0
      %4183 = vmatprep.subr.mxu0 0.0
      %4184 = vmatpush1.msra.mxu0 0.0
      %4185 = vmatprep.subr.mxu0 0.0
      %4186 = vmatpush1.msra.mxu0 0.0
      %4187 = vmatprep.subr.mxu0 0.0
      %4188 = vmatpush1.msra.mxu0 0.0
      %4189 = vmatprep.subr.mxu0 0.0
      %4190 = vmatpush1.msra.mxu0 0.0
      %4191 = vmatprep.subr.mxu0 0.0
      %4192 = vmatpush1.msra.mxu0 0.0
      %4193 = vmatprep.subr.mxu0 0.0
      %4194 = vmatpush1.msra.mxu0 0.0
      %4195 = vmatprep.subr.mxu0 0.0
      %4196 = vmatpush1.msra.mxu0 0.0
      %4197 = vmatprep.subr.mxu0 0.0
      %4198 = vmatpush1.msra.mxu0 0.0
      %4199 = vmatprep.subr.mxu0 0.0
      %4200 = vmatpush1.msra.mxu0 0.0
      %4201 = vmatprep.subr.mxu0 0.0
      %4202 = vmatpush1.msra.mxu0 0.0
      %4203 = vmatprep.subr.mxu0 0.0
      %4204 = vmatpush1.msra.mxu0 0.0
      %4205 = vmatprep.subr.mxu0 0.0
      %4206 = vmatpush1.msra.mxu0 0.0
      %4207 = vmatprep.subr.mxu0 0.0
      %4208 = vmatpush1.msra.mxu0 0.0
      %4209 = vmatprep.subr.mxu0 0.0
      %4210 = vmatpush1.msra.mxu0 0.0
      %4211 = vmatprep.subr.mxu0 0.0
      %4212 = vmatpush1.msra.mxu0 0.0
      %4213 = vmatprep.subr.mxu0 0.0
      %4214 = vmatpush1.msra.mxu0 0.0
      %4215 = vmatprep.subr.mxu0 0.0
      %4216 = vmatpush1.msra.mxu0 0.0
      %4217 = vmatprep.subr.mxu0 0.0
      %4218 = vmatpush1.msra.mxu0 0.0
      %4219 = vmatprep.subr.mxu0 0.0
      %4220 = vmatpush1.msra.mxu0 0.0
      %4221 = vmatprep.subr.mxu0 0.0
      %4222 = vmatpush1.msra.mxu0 0.0
      %4223 = vmatprep.subr.mxu0 0.0
      %4224 = vmatpush1.msra.mxu0 0.0
      %4225 = vmatprep.subr.mxu0 0.0
      %4226 = vmatpush1.msra.mxu0 0.0
      %4227 = vmatprep.mubr.f32.mxu0 0.0
      %4228 = vmatmul.mubr.f32.gmra.mrb[0].mxu0 %v4151
      %v4229 = vpop.f32.mrb[0].mxu0
      %v4230 = vadd.f32 %v4128, %v4229
      %v4231 = vpop.f32.mrb[0].mxu0
      %4232 = vmatprep.mubr.f32.mxu0 0.0
      %4233 = vmatmul.mubr.f32.gmra.mrb[0].mxu0 %v4153
      %v4234 = vpop.f32.mrb[0].mxu0
      %v4235 = vadd.f32 %v4132, %v4234
      %v4236 = vpop.f32.mrb[0].mxu0
      %4237 = vmatprep.mubr.f32.mxu0 0.0
      %4238 = vmatmul.mubr.f32.gmra.mrb[0].mxu0 %v4155
      %v4239 = vpop.f32.mrb[0].mxu0
      %v4240 = vadd.f32 %v4136, %v4239
      %v4241 = vpop.f32.mrb[0].mxu0
      %4242 = vmatprep.mubr.f32.mxu0 0.0
      %4243 = vmatmul.mubr.f32.gmra.mrb[0].mxu0 %v4157
      %v4244 = vpop.f32.mrb[0].mxu0
      %v4245 = vadd.f32 %v4140, %v4244
      %v4246 = vpop.f32.mrb[0].mxu0
      %4247 = vdwg.mxu0
      %v4248 = vld [vmem:[%s224] sm:$0xff]
      %v4249 = vld [vmem:[%s224 + $0x8] sm:$0xff]
      %v4250 = vld [vmem:[%s224 + $0x10] sm:$0xff]
      %v4251 = vld [vmem:[%s224 + $0x18] sm:$0xff]
      %v4252 = vunpack.c.l.bf16 %v4248
      %v4253 = vunpack.c.h.bf16 %v4248
      %v4254 = vunpack.c.l.bf16 %v4249
      %v4255 = vunpack.c.h.bf16 %v4249
      %v4256 = vunpack.c.l.bf16 %v4250
      %v4257 = vunpack.c.h.bf16 %v4250
      %v4258 = vunpack.c.l.bf16 %v4251
      %v4259 = vunpack.c.h.bf16 %v4251
      %4261 = vset.pattern.permute.xlu0 0
      %4262 = vperm.xlu0 %4261, %v4230
      %v4263 = vpop.permute.xlu0 %4262
      %4266 = vset.pattern.permute.xlu0 0
      %4267 = vperm.xlu0 %4266, %v4235
      %v4268 = vpop.permute.xlu0 %4267
      %4271 = vset.pattern.permute.xlu0 0
      %4272 = vperm.xlu0 %4271, %v4240
      %v4273 = vpop.permute.xlu0 %4272
      %4276 = vset.pattern.permute.xlu0 0
      %4277 = vperm.xlu0 %4276, %v4245
      %v4278 = vpop.permute.xlu0 %4277
      %v4280 = vadd.f32 %v4252, %v4263
      %v4281 = vadd.f32 %v4253, %v4263
      %v4282 = vadd.f32 %v4254, %v4268
      %v4283 = vadd.f32 %v4255, %v4268
      %v4284 = vadd.f32 %v4256, %v4273
      %v4285 = vadd.f32 %v4257, %v4273
      %v4286 = vadd.f32 %v4258, %v4278
      %v4287 = vadd.f32 %v4259, %v4278
      %v4288 = vpack.c.bf16 %v4282, %v4280
      %v4289 = vpack.c.bf16 %v4283, %v4281
      %v4290 = vpack.c.bf16 %v4286, %v4284
      %v4291 = vpack.c.bf16 %v4287, %v4285
      %v4296 = vunpack.c.l.b16 %v4288
      %v4297 = vunpack.c.l.b16 %v4289
      %v4298 = vunpack.c.h.b16 %v4288
      %v4299 = vunpack.c.h.b16 %v4289
      %v4300 = vunpack.c.l.b16 %v4290
      %v4301 = vunpack.c.l.b16 %v4291
      %v4302 = vunpack.c.h.b16 %v4290
      %v4303 = vunpack.c.h.b16 %v4291
      %v4304 = vpack.c.b16 %v4297, %v4296
      %v4305 = vpack.c.b16 %v4299, %v4298
      %v4306 = vpack.c.b16 %v4301, %v4300
      %v4307 = vpack.c.b16 %v4303, %v4302
      %4312 = vst [vmem:[%s231] sm:$0xff] %v4304
      %4313 = vst [vmem:[%s231 + $0x8] sm:$0xff] %v4305
      %4314 = vst [vmem:[%s231 + $0x10] sm:$0xff] %v4306
      %4315 = vst [vmem:[%s231 + $0x18] sm:$0xff] %v4307
      %v4316 = vld [vmem:[%s385] sm:$0xff]
      %v4317 = vld [vmem:[%s385 + $0x8] sm:$0xff]
      %v4318 = vld [vmem:[%s385 + $0x10] sm:$0xff]
      %v4319 = vld [vmem:[%s385 + $0x18] sm:$0xff]
      %v4320 = vunpack.c.l.bf16 %v4316
      %v4321 = vunpack.c.h.bf16 %v4316
      %v4322 = vunpack.c.l.bf16 %v4317
      %v4323 = vunpack.c.h.bf16 %v4317
      %v4324 = vunpack.c.l.bf16 %v4318
      %v4325 = vunpack.c.h.bf16 %v4318
      %v4326 = vunpack.c.l.bf16 %v4319
      %v4327 = vunpack.c.h.bf16 %v4319
      %4328 = vset.pattern.permute.xlu0 1
      %4329 = vperm.xlu0 %4328, %v4230
      %v4330 = vpop.permute.xlu0 %4329
      %4332 = vset.pattern.permute.xlu0 1
      %4333 = vperm.xlu0 %4332, %v4235
      %v4334 = vpop.permute.xlu0 %4333
      %4336 = vset.pattern.permute.xlu0 1
      %4337 = vperm.xlu0 %4336, %v4240
      %v4338 = vpop.permute.xlu0 %4337
      %4340 = vset.pattern.permute.xlu0 1
      %4341 = vperm.xlu0 %4340, %v4245
      %v4342 = vpop.permute.xlu0 %4341
      %v4344 = vadd.f32 %v4320, %v4330
      %v4345 = vadd.f32 %v4321, %v4330
      %v4346 = vadd.f32 %v4322, %v4334
      %v4347 = vadd.f32 %v4323, %v4334
      %v4348 = vadd.f32 %v4324, %v4338
      %v4349 = vadd.f32 %v4325, %v4338
      %v4350 = vadd.f32 %v4326, %v4342
      %v4351 = vadd.f32 %v4327, %v4342
      %v4352 = vpack.c.bf16 %v4346, %v4344
      %v4353 = vpack.c.bf16 %v4347, %v4345
      %v4354 = vpack.c.bf16 %v4350, %v4348
      %v4355 = vpack.c.bf16 %v4351, %v4349
      %v4360 = vunpack.c.l.b16 %v4352
      %v4361 = vunpack.c.l.b16 %v4353
      %v4362 = vunpack.c.h.b16 %v4352
      %v4363 = vunpack.c.h.b16 %v4353
      %v4364 = vunpack.c.l.b16 %v4354
      %v4365 = vunpack.c.l.b16 %v4355
      %v4366 = vunpack.c.h.b16 %v4354
      %v4367 = vunpack.c.h.b16 %v4355
      %v4368 = vpack.c.b16 %v4361, %v4360
      %v4369 = vpack.c.b16 %v4363, %v4362
      %v4370 = vpack.c.b16 %v4365, %v4364
      %v4371 = vpack.c.b16 %v4367, %v4366
      %s4376 = scalar_lea.vmem %s231, 32
      %4377 = vst [vmem:[%s4376] sm:$0xff] %v4368
      %4378 = vst [vmem:[%s4376 + $0x8] sm:$0xff] %v4369
      %4379 = vst [vmem:[%s4376 + $0x10] sm:$0xff] %v4370
      %4380 = vst [vmem:[%s4376 + $0x18] sm:$0xff] %v4371
      %v4381 = vld [vmem:[%s445] sm:$0xff]
      %v4382 = vld [vmem:[%s445 + $0x8] sm:$0xff]
      %v4383 = vld [vmem:[%s445 + $0x10] sm:$0xff]
      %v4384 = vld [vmem:[%s445 + $0x18] sm:$0xff]
      %v4385 = vunpack.c.l.bf16 %v4381
      %v4386 = vunpack.c.h.bf16 %v4381
      %v4387 = vunpack.c.l.bf16 %v4382
      %v4388 = vunpack.c.h.bf16 %v4382
      %v4389 = vunpack.c.l.bf16 %v4383
      %v4390 = vunpack.c.h.bf16 %v4383
      %v4391 = vunpack.c.l.bf16 %v4384
      %v4392 = vunpack.c.h.bf16 %v4384
      %4393 = vset.pattern.permute.xlu0 2
      %4394 = vperm.xlu0 %4393, %v4230
      %v4395 = vpop.permute.xlu0 %4394
      %4397 = vset.pattern.permute.xlu0 2
      %4398 = vperm.xlu0 %4397, %v4235
      %v4399 = vpop.permute.xlu0 %4398
      %4401 = vset.pattern.permute.xlu0 2
      %4402 = vperm.xlu0 %4401, %v4240
      %v4403 = vpop.permute.xlu0 %4402
      %4405 = vset.pattern.permute.xlu0 2
      %4406 = vperm.xlu0 %4405, %v4245
      %v4407 = vpop.permute.xlu0 %4406
      %v4409 = vadd.f32 %v4385, %v4395
      %v4410 = vadd.f32 %v4386, %v4395
      %v4411 = vadd.f32 %v4387, %v4399
      %v4412 = vadd.f32 %v4388, %v4399
      %v4413 = vadd.f32 %v4389, %v4403
      %v4414 = vadd.f32 %v4390, %v4403
      %v4415 = vadd.f32 %v4391, %v4407
      %v4416 = vadd.f32 %v4392, %v4407
      %v4417 = vpack.c.bf16 %v4411, %v4409
      %v4418 = vpack.c.bf16 %v4412, %v4410
      %v4419 = vpack.c.bf16 %v4415, %v4413
      %v4420 = vpack.c.bf16 %v4416, %v4414
      %v4425 = vunpack.c.l.b16 %v4417
      %v4426 = vunpack.c.l.b16 %v4418
      %v4427 = vunpack.c.h.b16 %v4417
      %v4428 = vunpack.c.h.b16 %v4418
      %v4429 = vunpack.c.l.b16 %v4419
      %v4430 = vunpack.c.l.b16 %v4420
      %v4431 = vunpack.c.h.b16 %v4419
      %v4432 = vunpack.c.h.b16 %v4420
      %v4433 = vpack.c.b16 %v4426, %v4425
      %v4434 = vpack.c.b16 %v4428, %v4427
      %v4435 = vpack.c.b16 %v4430, %v4429
      %v4436 = vpack.c.b16 %v4432, %v4431
      %s4441 = scalar_lea.vmem %s231, 64
      %4442 = vst [vmem:[%s4441] sm:$0xff] %v4433
      %4443 = vst [vmem:[%s4441 + $0x8] sm:$0xff] %v4434
      %4444 = vst [vmem:[%s4441 + $0x10] sm:$0xff] %v4435
      %4445 = vst [vmem:[%s4441 + $0x18] sm:$0xff] %v4436
      %v4446 = vld [vmem:[%s505] sm:$0xff]
      %v4447 = vld [vmem:[%s505 + $0x8] sm:$0xff]
      %v4448 = vld [vmem:[%s505 + $0x10] sm:$0xff]
      %v4449 = vld [vmem:[%s505 + $0x18] sm:$0xff]
      %v4450 = vunpack.c.l.bf16 %v4446
      %v4451 = vunpack.c.h.bf16 %v4446
      %v4452 = vunpack.c.l.bf16 %v4447
      %v4453 = vunpack.c.h.bf16 %v4447
      %v4454 = vunpack.c.l.bf16 %v4448
      %v4455 = vunpack.c.h.bf16 %v4448
      %v4456 = vunpack.c.l.bf16 %v4449
      %v4457 = vunpack.c.h.bf16 %v4449
      %4458 = vset.pattern.permute.xlu0 3
      %4459 = vperm.xlu0 %4458, %v4230
      %v4460 = vpop.permute.xlu0 %4459
      %4462 = vset.pattern.permute.xlu0 3
      %4463 = vperm.xlu0 %4462, %v4235
      %v4464 = vpop.permute.xlu0 %4463
      %4466 = vset.pattern.permute.xlu0 3
      %4467 = vperm.xlu0 %4466, %v4240
      %v4468 = vpop.permute.xlu0 %4467
      %4470 = vset.pattern.permute.xlu0 3
      %4471 = vperm.xlu0 %4470, %v4245
      %v4472 = vpop.permute.xlu0 %4471
      %v4474 = vadd.f32 %v4450, %v4460
      %v4475 = vadd.f32 %v4451, %v4460
      %v4476 = vadd.f32 %v4452, %v4464
      %v4477 = vadd.f32 %v4453, %v4464
      %v4478 = vadd.f32 %v4454, %v4468
      %v4479 = vadd.f32 %v4455, %v4468
      %v4480 = vadd.f32 %v4456, %v4472
      %v4481 = vadd.f32 %v4457, %v4472
      %v4482 = vpack.c.bf16 %v4476, %v4474
      %v4483 = vpack.c.bf16 %v4477, %v4475
      %v4484 = vpack.c.bf16 %v4480, %v4478
      %v4485 = vpack.c.bf16 %v4481, %v4479
      %v4490 = vunpack.c.l.b16 %v4482
      %v4491 = vunpack.c.l.b16 %v4483
      %v4492 = vunpack.c.h.b16 %v4482
      %v4493 = vunpack.c.h.b16 %v4483
      %v4494 = vunpack.c.l.b16 %v4484
      %v4495 = vunpack.c.l.b16 %v4485
      %v4496 = vunpack.c.h.b16 %v4484
      %v4497 = vunpack.c.h.b16 %v4485
      %v4498 = vpack.c.b16 %v4491, %v4490
      %v4499 = vpack.c.b16 %v4493, %v4492
      %v4500 = vpack.c.b16 %v4495, %v4494
      %v4501 = vpack.c.b16 %v4497, %v4496
      %s4506 = scalar_lea.vmem %s231, 96
      %4507 = vst [vmem:[%s4506] sm:$0xff] %v4498
      %4508 = vst [vmem:[%s4506 + $0x8] sm:$0xff] %v4499
      %4509 = vst [vmem:[%s4506 + $0x10] sm:$0xff] %v4500
      %4510 = vst [vmem:[%s4506 + $0x18] sm:$0xff] %v4501
      %v4511 = vld [vmem:[%s565] sm:$0xff]
      %v4512 = vld [vmem:[%s565 + $0x8] sm:$0xff]
      %v4513 = vld [vmem:[%s565 + $0x10] sm:$0xff]
      %v4514 = vld [vmem:[%s565 + $0x18] sm:$0xff]
      %v4515 = vunpack.c.l.bf16 %v4511
      %v4516 = vunpack.c.h.bf16 %v4511
      %v4517 = vunpack.c.l.bf16 %v4512
      %v4518 = vunpack.c.h.bf16 %v4512
      %v4519 = vunpack.c.l.bf16 %v4513
      %v4520 = vunpack.c.h.bf16 %v4513
      %v4521 = vunpack.c.l.bf16 %v4514
      %v4522 = vunpack.c.h.bf16 %v4514
      %4523 = vset.pattern.permute.xlu0 4
      %4524 = vperm.xlu0 %4523, %v4230
      %v4525 = vpop.permute.xlu0 %4524
      %4527 = vset.pattern.permute.xlu0 4
      %4528 = vperm.xlu0 %4527, %v4235
      %v4529 = vpop.permute.xlu0 %4528
      %4531 = vset.pattern.permute.xlu0 4
      %4532 = vperm.xlu0 %4531, %v4240
      %v4533 = vpop.permute.xlu0 %4532
      %4535 = vset.pattern.permute.xlu0 4
      %4536 = vperm.xlu0 %4535, %v4245
      %v4537 = vpop.permute.xlu0 %4536
      %v4539 = vadd.f32 %v4515, %v4525
      %v4540 = vadd.f32 %v4516, %v4525
      %v4541 = vadd.f32 %v4517, %v4529
      %v4542 = vadd.f32 %v4518, %v4529
      %v4543 = vadd.f32 %v4519, %v4533
      %v4544 = vadd.f32 %v4520, %v4533
      %v4545 = vadd.f32 %v4521, %v4537
      %v4546 = vadd.f32 %v4522, %v4537
      %v4547 = vpack.c.bf16 %v4541, %v4539
      %v4548 = vpack.c.bf16 %v4542, %v4540
      %v4549 = vpack.c.bf16 %v4545, %v4543
      %v4550 = vpack.c.bf16 %v4546, %v4544
      %v4555 = vunpack.c.l.b16 %v4547
      %v4556 = vunpack.c.l.b16 %v4548
      %v4557 = vunpack.c.h.b16 %v4547
      %v4558 = vunpack.c.h.b16 %v4548
      %v4559 = vunpack.c.l.b16 %v4549
      %v4560 = vunpack.c.l.b16 %v4550
      %v4561 = vunpack.c.h.b16 %v4549
      %v4562 = vunpack.c.h.b16 %v4550
      %v4563 = vpack.c.b16 %v4556, %v4555
      %v4564 = vpack.c.b16 %v4558, %v4557
      %v4565 = vpack.c.b16 %v4560, %v4559
      %v4566 = vpack.c.b16 %v4562, %v4561
      %s4571 = scalar_lea.vmem %s231, 128
      %4572 = vst [vmem:[%s4571] sm:$0xff] %v4563
      %4573 = vst [vmem:[%s4571 + $0x8] sm:$0xff] %v4564
      %4574 = vst [vmem:[%s4571 + $0x10] sm:$0xff] %v4565
      %4575 = vst [vmem:[%s4571 + $0x18] sm:$0xff] %v4566
      %v4576 = vld [vmem:[%s625] sm:$0xff]
      %v4577 = vld [vmem:[%s625 + $0x8] sm:$0xff]
      %v4578 = vld [vmem:[%s625 + $0x10] sm:$0xff]
      %v4579 = vld [vmem:[%s625 + $0x18] sm:$0xff]
      %v4580 = vunpack.c.l.bf16 %v4576
      %v4581 = vunpack.c.h.bf16 %v4576
      %v4582 = vunpack.c.l.bf16 %v4577
      %v4583 = vunpack.c.h.bf16 %v4577
      %v4584 = vunpack.c.l.bf16 %v4578
      %v4585 = vunpack.c.h.bf16 %v4578
      %v4586 = vunpack.c.l.bf16 %v4579
      %v4587 = vunpack.c.h.bf16 %v4579
      %4588 = vset.pattern.permute.xlu0 5
      %4589 = vperm.xlu0 %4588, %v4230
      %v4590 = vpop.permute.xlu0 %4589
      %4592 = vset.pattern.permute.xlu0 5
      %4593 = vperm.xlu0 %4592, %v4235
      %v4594 = vpop.permute.xlu0 %4593
      %4596 = vset.pattern.permute.xlu0 5
      %4597 = vperm.xlu0 %4596, %v4240
      %v4598 = vpop.permute.xlu0 %4597
      %4600 = vset.pattern.permute.xlu0 5
      %4601 = vperm.xlu0 %4600, %v4245
      %v4602 = vpop.permute.xlu0 %4601
      %v4604 = vadd.f32 %v4580, %v4590
      %v4605 = vadd.f32 %v4581, %v4590
      %v4606 = vadd.f32 %v4582, %v4594
      %v4607 = vadd.f32 %v4583, %v4594
      %v4608 = vadd.f32 %v4584, %v4598
      %v4609 = vadd.f32 %v4585, %v4598
      %v4610 = vadd.f32 %v4586, %v4602
      %v4611 = vadd.f32 %v4587, %v4602
      %v4612 = vpack.c.bf16 %v4606, %v4604
      %v4613 = vpack.c.bf16 %v4607, %v4605
      %v4614 = vpack.c.bf16 %v4610, %v4608
      %v4615 = vpack.c.bf16 %v4611, %v4609
      %v4620 = vunpack.c.l.b16 %v4612
      %v4621 = vunpack.c.l.b16 %v4613
      %v4622 = vunpack.c.h.b16 %v4612
      %v4623 = vunpack.c.h.b16 %v4613
      %v4624 = vunpack.c.l.b16 %v4614
      %v4625 = vunpack.c.l.b16 %v4615
      %v4626 = vunpack.c.h.b16 %v4614
      %v4627 = vunpack.c.h.b16 %v4615
      %v4628 = vpack.c.b16 %v4621, %v4620
      %v4629 = vpack.c.b16 %v4623, %v4622
      %v4630 = vpack.c.b16 %v4625, %v4624
      %v4631 = vpack.c.b16 %v4627, %v4626
      %s4636 = scalar_lea.vmem %s231, 160
      %4637 = vst [vmem:[%s4636] sm:$0xff] %v4628
      %4638 = vst [vmem:[%s4636 + $0x8] sm:$0xff] %v4629
      %4639 = vst [vmem:[%s4636 + $0x10] sm:$0xff] %v4630
      %4640 = vst [vmem:[%s4636 + $0x18] sm:$0xff] %v4631
      %v4641 = vld [vmem:[%s685] sm:$0xff]
      %v4642 = vld [vmem:[%s685 + $0x8] sm:$0xff]
      %v4643 = vld [vmem:[%s685 + $0x10] sm:$0xff]
      %v4644 = vld [vmem:[%s685 + $0x18] sm:$0xff]
      %v4645 = vunpack.c.l.bf16 %v4641
      %v4646 = vunpack.c.h.bf16 %v4641
      %v4647 = vunpack.c.l.bf16 %v4642
      %v4648 = vunpack.c.h.bf16 %v4642
      %v4649 = vunpack.c.l.bf16 %v4643
      %v4650 = vunpack.c.h.bf16 %v4643
      %v4651 = vunpack.c.l.bf16 %v4644
      %v4652 = vunpack.c.h.bf16 %v4644
      %4653 = vset.pattern.permute.xlu0 6
      %4654 = vperm.xlu0 %4653, %v4230
      %v4655 = vpop.permute.xlu0 %4654
      %4657 = vset.pattern.permute.xlu0 6
      %4658 = vperm.xlu0 %4657, %v4235
      %v4659 = vpop.permute.xlu0 %4658
      %4661 = vset.pattern.permute.xlu0 6
      %4662 = vperm.xlu0 %4661, %v4240
      %v4663 = vpop.permute.xlu0 %4662
      %4665 = vset.pattern.permute.xlu0 6
      %4666 = vperm.xlu0 %4665, %v4245
      %v4667 = vpop.permute.xlu0 %4666
      %v4669 = vadd.f32 %v4645, %v4655
      %v4670 = vadd.f32 %v4646, %v4655
      %v4671 = vadd.f32 %v4647, %v4659
      %v4672 = vadd.f32 %v4648, %v4659
      %v4673 = vadd.f32 %v4649, %v4663
      %v4674 = vadd.f32 %v4650, %v4663
      %v4675 = vadd.f32 %v4651, %v4667
      %v4676 = vadd.f32 %v4652, %v4667
      %v4677 = vpack.c.bf16 %v4671, %v4669
      %v4678 = vpack.c.bf16 %v4672, %v4670
      %v4679 = vpack.c.bf16 %v4675, %v4673
      %v4680 = vpack.c.bf16 %v4676, %v4674
      %v4685 = vunpack.c.l.b16 %v4677
      %v4686 = vunpack.c.l.b16 %v4678
      %v4687 = vunpack.c.h.b16 %v4677
      %v4688 = vunpack.c.h.b16 %v4678
      %v4689 = vunpack.c.l.b16 %v4679
      %v4690 = vunpack.c.l.b16 %v4680
      %v4691 = vunpack.c.h.b16 %v4679
      %v4692 = vunpack.c.h.b16 %v4680
      %v4693 = vpack.c.b16 %v4686, %v4685
      %v4694 = vpack.c.b16 %v4688, %v4687
      %v4695 = vpack.c.b16 %v4690, %v4689
      %v4696 = vpack.c.b16 %v4692, %v4691
      %s4701 = scalar_lea.vmem %s231, 192
      %4702 = vst [vmem:[%s4701] sm:$0xff] %v4693
      %4703 = vst [vmem:[%s4701 + $0x8] sm:$0xff] %v4694
      %4704 = vst [vmem:[%s4701 + $0x10] sm:$0xff] %v4695
      %4705 = vst [vmem:[%s4701 + $0x18] sm:$0xff] %v4696
      %v4706 = vld [vmem:[%s745] sm:$0xff]
      %v4707 = vld [vmem:[%s745 + $0x8] sm:$0xff]
      %v4708 = vld [vmem:[%s745 + $0x10] sm:$0xff]
      %v4709 = vld [vmem:[%s745 + $0x18] sm:$0xff]
      %v4710 = vunpack.c.l.bf16 %v4706
      %v4711 = vunpack.c.h.bf16 %v4706
      %v4712 = vunpack.c.l.bf16 %v4707
      %v4713 = vunpack.c.h.bf16 %v4707
      %v4714 = vunpack.c.l.bf16 %v4708
      %v4715 = vunpack.c.h.bf16 %v4708
      %v4716 = vunpack.c.l.bf16 %v4709
      %v4717 = vunpack.c.h.bf16 %v4709
      %4718 = vset.pattern.permute.xlu0 7
      %4719 = vperm.xlu0 %4718, %v4230
      %v4720 = vpop.permute.xlu0 %4719
      %4722 = vset.pattern.permute.xlu0 7
      %4723 = vperm.xlu0 %4722, %v4235
      %v4724 = vpop.permute.xlu0 %4723
      %4726 = vset.pattern.permute.xlu0 7
      %4727 = vperm.xlu0 %4726, %v4240
      %v4728 = vpop.permute.xlu0 %4727
      %4730 = vset.pattern.permute.xlu0 7
      %4731 = vperm.xlu0 %4730, %v4245
      %v4732 = vpop.permute.xlu0 %4731
      %v4734 = vadd.f32 %v4710, %v4720
      %v4735 = vadd.f32 %v4711, %v4720
      %v4736 = vadd.f32 %v4712, %v4724
      %v4737 = vadd.f32 %v4713, %v4724
      %v4738 = vadd.f32 %v4714, %v4728
      %v4739 = vadd.f32 %v4715, %v4728
      %v4740 = vadd.f32 %v4716, %v4732
      %v4741 = vadd.f32 %v4717, %v4732
      %v4742 = vpack.c.bf16 %v4736, %v4734
      %v4743 = vpack.c.bf16 %v4737, %v4735
      %v4744 = vpack.c.bf16 %v4740, %v4738
      %v4745 = vpack.c.bf16 %v4741, %v4739
      %v4750 = vunpack.c.l.b16 %v4742
      %v4751 = vunpack.c.l.b16 %v4743
      %v4752 = vunpack.c.h.b16 %v4742
      %v4753 = vunpack.c.h.b16 %v4743
      %v4754 = vunpack.c.l.b16 %v4744
      %v4755 = vunpack.c.l.b16 %v4745
      %v4756 = vunpack.c.h.b16 %v4744
      %v4757 = vunpack.c.h.b16 %v4745
      %v4758 = vpack.c.b16 %v4751, %v4750
      %v4759 = vpack.c.b16 %v4753, %v4752
      %v4760 = vpack.c.b16 %v4755, %v4754
      %v4761 = vpack.c.b16 %v4757, %v4756
      %s4766 = scalar_lea.vmem %s231, 224
      %4767 = vst [vmem:[%s4766] sm:$0xff] %v4758
      %4768 = vst [vmem:[%s4766 + $0x8] sm:$0xff] %v4759
      %4769 = vst [vmem:[%s4766 + $0x10] sm:$0xff] %v4760
      %4770 = vst [vmem:[%s4766 + $0x18] sm:$0xff] %v4761
      %v4771 = vld [vmem:[%s805] sm:$0xff]
      %v4772 = vld [vmem:[%s805 + $0x8] sm:$0xff]
      %v4773 = vld [vmem:[%s805 + $0x10] sm:$0xff]
      %v4774 = vld [vmem:[%s805 + $0x18] sm:$0xff]
      %v4775 = vunpack.c.l.bf16 %v4771
      %v4776 = vunpack.c.h.bf16 %v4771
      %v4777 = vunpack.c.l.bf16 %v4772
      %v4778 = vunpack.c.h.bf16 %v4772
      %v4779 = vunpack.c.l.bf16 %v4773
      %v4780 = vunpack.c.h.bf16 %v4773
      %v4781 = vunpack.c.l.bf16 %v4774
      %v4782 = vunpack.c.h.bf16 %v4774
      %4783 = vset.pattern.permute.xlu0 8
      %4784 = vperm.xlu0 %4783, %v4230
      %v4785 = vpop.permute.xlu0 %4784
      %4787 = vset.pattern.permute.xlu0 8
      %4788 = vperm.xlu0 %4787, %v4235
      %v4789 = vpop.permute.xlu0 %4788
      %4791 = vset.pattern.permute.xlu0 8
      %4792 = vperm.xlu0 %4791, %v4240
      %v4793 = vpop.permute.xlu0 %4792
      %4795 = vset.pattern.permute.xlu0 8
      %4796 = vperm.xlu0 %4795, %v4245
      %v4797 = vpop.permute.xlu0 %4796
      %v4799 = vadd.f32 %v4775, %v4785
      %v4800 = vadd.f32 %v4776, %v4785
      %v4801 = vadd.f32 %v4777, %v4789
      %v4802 = vadd.f32 %v4778, %v4789
      %v4803 = vadd.f32 %v4779, %v4793
      %v4804 = vadd.f32 %v4780, %v4793
      %v4805 = vadd.f32 %v4781, %v4797
      %v4806 = vadd.f32 %v4782, %v4797
      %v4807 = vpack.c.bf16 %v4801, %v4799
      %v4808 = vpack.c.bf16 %v4802, %v4800
      %v4809 = vpack.c.bf16 %v4805, %v4803
      %v4810 = vpack.c.bf16 %v4806, %v4804
      %v4815 = vunpack.c.l.b16 %v4807
      %v4816 = vunpack.c.l.b16 %v4808
      %v4817 = vunpack.c.h.b16 %v4807
      %v4818 = vunpack.c.h.b16 %v4808
      %v4819 = vunpack.c.l.b16 %v4809
      %v4820 = vunpack.c.l.b16 %v4810
      %v4821 = vunpack.c.h.b16 %v4809
      %v4822 = vunpack.c.h.b16 %v4810
      %v4823 = vpack.c.b16 %v4816, %v4815
      %v4824 = vpack.c.b16 %v4818, %v4817
      %v4825 = vpack.c.b16 %v4820, %v4819
      %v4826 = vpack.c.b16 %v4822, %v4821
      %s4831 = scalar_lea.vmem %s231, 256
      %4832 = vst [vmem:[%s4831] sm:$0xff] %v4823
      %4833 = vst [vmem:[%s4831 + $0x8] sm:$0xff] %v4824
      %4834 = vst [vmem:[%s4831 + $0x10] sm:$0xff] %v4825
      %4835 = vst [vmem:[%s4831 + $0x18] sm:$0xff] %v4826
      %v4836 = vld [vmem:[%s865] sm:$0xff]
      %v4837 = vld [vmem:[%s865 + $0x8] sm:$0xff]
      %v4838 = vld [vmem:[%s865 + $0x10] sm:$0xff]
      %v4839 = vld [vmem:[%s865 + $0x18] sm:$0xff]
      %v4840 = vunpack.c.l.bf16 %v4836
      %v4841 = vunpack.c.h.bf16 %v4836
      %v4842 = vunpack.c.l.bf16 %v4837
      %v4843 = vunpack.c.h.bf16 %v4837
      %v4844 = vunpack.c.l.bf16 %v4838
      %v4845 = vunpack.c.h.bf16 %v4838
      %v4846 = vunpack.c.l.bf16 %v4839
      %v4847 = vunpack.c.h.bf16 %v4839
      %4848 = vset.pattern.permute.xlu0 9
      %4849 = vperm.xlu0 %4848, %v4230
      %v4850 = vpop.permute.xlu0 %4849
      %4852 = vset.pattern.permute.xlu0 9
      %4853 = vperm.xlu0 %4852, %v4235
      %v4854 = vpop.permute.xlu0 %4853
      %4856 = vset.pattern.permute.xlu0 9
      %4857 = vperm.xlu0 %4856, %v4240
      %v4858 = vpop.permute.xlu0 %4857
      %4860 = vset.pattern.permute.xlu0 9
      %4861 = vperm.xlu0 %4860, %v4245
      %v4862 = vpop.permute.xlu0 %4861
      %v4864 = vadd.f32 %v4840, %v4850
      %v4865 = vadd.f32 %v4841, %v4850
      %v4866 = vadd.f32 %v4842, %v4854
      %v4867 = vadd.f32 %v4843, %v4854
      %v4868 = vadd.f32 %v4844, %v4858
      %v4869 = vadd.f32 %v4845, %v4858
      %v4870 = vadd.f32 %v4846, %v4862
      %v4871 = vadd.f32 %v4847, %v4862
      %v4872 = vpack.c.bf16 %v4866, %v4864
      %v4873 = vpack.c.bf16 %v4867, %v4865
      %v4874 = vpack.c.bf16 %v4870, %v4868
      %v4875 = vpack.c.bf16 %v4871, %v4869
      %v4880 = vunpack.c.l.b16 %v4872
      %v4881 = vunpack.c.l.b16 %v4873
      %v4882 = vunpack.c.h.b16 %v4872
      %v4883 = vunpack.c.h.b16 %v4873
      %v4884 = vunpack.c.l.b16 %v4874
      %v4885 = vunpack.c.l.b16 %v4875
      %v4886 = vunpack.c.h.b16 %v4874
      %v4887 = vunpack.c.h.b16 %v4875
      %v4888 = vpack.c.b16 %v4881, %v4880
      %v4889 = vpack.c.b16 %v4883, %v4882
      %v4890 = vpack.c.b16 %v4885, %v4884
      %v4891 = vpack.c.b16 %v4887, %v4886
      %s4896 = scalar_lea.vmem %s231, 288
      %4897 = vst [vmem:[%s4896] sm:$0xff] %v4888
      %4898 = vst [vmem:[%s4896 + $0x8] sm:$0xff] %v4889
      %4899 = vst [vmem:[%s4896 + $0x10] sm:$0xff] %v4890
      %4900 = vst [vmem:[%s4896 + $0x18] sm:$0xff] %v4891
      %v4901 = vld [vmem:[%s925] sm:$0xff]
      %v4902 = vld [vmem:[%s925 + $0x8] sm:$0xff]
      %v4903 = vld [vmem:[%s925 + $0x10] sm:$0xff]
      %v4904 = vld [vmem:[%s925 + $0x18] sm:$0xff]
      %v4905 = vunpack.c.l.bf16 %v4901
      %v4906 = vunpack.c.h.bf16 %v4901
      %v4907 = vunpack.c.l.bf16 %v4902
      %v4908 = vunpack.c.h.bf16 %v4902
      %v4909 = vunpack.c.l.bf16 %v4903
      %v4910 = vunpack.c.h.bf16 %v4903
      %v4911 = vunpack.c.l.bf16 %v4904
      %v4912 = vunpack.c.h.bf16 %v4904
      %4913 = vset.pattern.permute.xlu0 10
      %4914 = vperm.xlu0 %4913, %v4230
      %v4915 = vpop.permute.xlu0 %4914
      %4917 = vset.pattern.permute.xlu0 10
      %4918 = vperm.xlu0 %4917, %v4235
      %v4919 = vpop.permute.xlu0 %4918
      %4921 = vset.pattern.permute.xlu0 10
      %4922 = vperm.xlu0 %4921, %v4240
      %v4923 = vpop.permute.xlu0 %4922
      %4925 = vset.pattern.permute.xlu0 10
      %4926 = vperm.xlu0 %4925, %v4245
      %v4927 = vpop.permute.xlu0 %4926
      %v4929 = vadd.f32 %v4905, %v4915
      %v4930 = vadd.f32 %v4906, %v4915
      %v4931 = vadd.f32 %v4907, %v4919
      %v4932 = vadd.f32 %v4908, %v4919
      %v4933 = vadd.f32 %v4909, %v4923
      %v4934 = vadd.f32 %v4910, %v4923
      %v4935 = vadd.f32 %v4911, %v4927
      %v4936 = vadd.f32 %v4912, %v4927
      %v4937 = vpack.c.bf16 %v4931, %v4929
      %v4938 = vpack.c.bf16 %v4932, %v4930
      %v4939 = vpack.c.bf16 %v4935, %v4933
      %v4940 = vpack.c.bf16 %v4936, %v4934
      %v4945 = vunpack.c.l.b16 %v4937
      %v4946 = vunpack.c.l.b16 %v4938
      %v4947 = vunpack.c.h.b16 %v4937
      %v4948 = vunpack.c.h.b16 %v4938
      %v4949 = vunpack.c.l.b16 %v4939
      %v4950 = vunpack.c.l.b16 %v4940
      %v4951 = vunpack.c.h.b16 %v4939
      %v4952 = vunpack.c.h.b16 %v4940
      %v4953 = vpack.c.b16 %v4946, %v4945
      %v4954 = vpack.c.b16 %v4948, %v4947
      %v4955 = vpack.c.b16 %v4950, %v4949
      %v4956 = vpack.c.b16 %v4952, %v4951
      %s4961 = scalar_lea.vmem %s231, 320
      %4962 = vst [vmem:[%s4961] sm:$0xff] %v4953
      %4963 = vst [vmem:[%s4961 + $0x8] sm:$0xff] %v4954
      %4964 = vst [vmem:[%s4961 + $0x10] sm:$0xff] %v4955
      %4965 = vst [vmem:[%s4961 + $0x18] sm:$0xff] %v4956
      %v4966 = vld [vmem:[%s985] sm:$0xff]
      %v4967 = vld [vmem:[%s985 + $0x8] sm:$0xff]
      %v4968 = vld [vmem:[%s985 + $0x10] sm:$0xff]
      %v4969 = vld [vmem:[%s985 + $0x18] sm:$0xff]
      %v4970 = vunpack.c.l.bf16 %v4966
      %v4971 = vunpack.c.h.bf16 %v4966
      %v4972 = vunpack.c.l.bf16 %v4967
      %v4973 = vunpack.c.h.bf16 %v4967
      %v4974 = vunpack.c.l.bf16 %v4968
      %v4975 = vunpack.c.h.bf16 %v4968
      %v4976 = vunpack.c.l.bf16 %v4969
      %v4977 = vunpack.c.h.bf16 %v4969
      %4978 = vset.pattern.permute.xlu0 11
      %4979 = vperm.xlu0 %4978, %v4230
      %v4980 = vpop.permute.xlu0 %4979
      %4982 = vset.pattern.permute.xlu0 11
      %4983 = vperm.xlu0 %4982, %v4235
      %v4984 = vpop.permute.xlu0 %4983
      %4986 = vset.pattern.permute.xlu0 11
      %4987 = vperm.xlu0 %4986, %v4240
      %v4988 = vpop.permute.xlu0 %4987
      %4990 = vset.pattern.permute.xlu0 11
      %4991 = vperm.xlu0 %4990, %v4245
      %v4992 = vpop.permute.xlu0 %4991
      %v4994 = vadd.f32 %v4970, %v4980
      %v4995 = vadd.f32 %v4971, %v4980
      %v4996 = vadd.f32 %v4972, %v4984
      %v4997 = vadd.f32 %v4973, %v4984
      %v4998 = vadd.f32 %v4974, %v4988
      %v4999 = vadd.f32 %v4975, %v4988
      %v5000 = vadd.f32 %v4976, %v4992
      %v5001 = vadd.f32 %v4977, %v4992
      %v5002 = vpack.c.bf16 %v4996, %v4994
      %v5003 = vpack.c.bf16 %v4997, %v4995
      %v5004 = vpack.c.bf16 %v5000, %v4998
      %v5005 = vpack.c.bf16 %v5001, %v4999
      %v5010 = vunpack.c.l.b16 %v5002
      %v5011 = vunpack.c.l.b16 %v5003
      %v5012 = vunpack.c.h.b16 %v5002
      %v5013 = vunpack.c.h.b16 %v5003
      %v5014 = vunpack.c.l.b16 %v5004
      %v5015 = vunpack.c.l.b16 %v5005
      %v5016 = vunpack.c.h.b16 %v5004
      %v5017 = vunpack.c.h.b16 %v5005
      %v5018 = vpack.c.b16 %v5011, %v5010
      %v5019 = vpack.c.b16 %v5013, %v5012
      %v5020 = vpack.c.b16 %v5015, %v5014
      %v5021 = vpack.c.b16 %v5017, %v5016
      %s5026 = scalar_lea.vmem %s231, 352
      %5027 = vst [vmem:[%s5026] sm:$0xff] %v5018
      %5028 = vst [vmem:[%s5026 + $0x8] sm:$0xff] %v5019
      %5029 = vst [vmem:[%s5026 + $0x10] sm:$0xff] %v5020
      %5030 = vst [vmem:[%s5026 + $0x18] sm:$0xff] %v5021
      %v5031 = vld [vmem:[%s1045] sm:$0xff]
      %v5032 = vld [vmem:[%s1045 + $0x8] sm:$0xff]
      %v5033 = vld [vmem:[%s1045 + $0x10] sm:$0xff]
      %v5034 = vld [vmem:[%s1045 + $0x18] sm:$0xff]
      %v5035 = vunpack.c.l.bf16 %v5031
      %v5036 = vunpack.c.h.bf16 %v5031
      %v5037 = vunpack.c.l.bf16 %v5032
      %v5038 = vunpack.c.h.bf16 %v5032
      %v5039 = vunpack.c.l.bf16 %v5033
      %v5040 = vunpack.c.h.bf16 %v5033
      %v5041 = vunpack.c.l.bf16 %v5034
      %v5042 = vunpack.c.h.bf16 %v5034
      %5043 = vset.pattern.permute.xlu0 12
      %5044 = vperm.xlu0 %5043, %v4230
      %v5045 = vpop.permute.xlu0 %5044
      %5047 = vset.pattern.permute.xlu0 12
      %5048 = vperm.xlu0 %5047, %v4235
      %v5049 = vpop.permute.xlu0 %5048
      %5051 = vset.pattern.permute.xlu0 12
      %5052 = vperm.xlu0 %5051, %v4240
      %v5053 = vpop.permute.xlu0 %5052
      %5055 = vset.pattern.permute.xlu0 12
      %5056 = vperm.xlu0 %5055, %v4245
      %v5057 = vpop.permute.xlu0 %5056
      %v5059 = vadd.f32 %v5035, %v5045
      %v5060 = vadd.f32 %v5036, %v5045
      %v5061 = vadd.f32 %v5037, %v5049
      %v5062 = vadd.f32 %v5038, %v5049
      %v5063 = vadd.f32 %v5039, %v5053
      %v5064 = vadd.f32 %v5040, %v5053
      %v5065 = vadd.f32 %v5041, %v5057
      %v5066 = vadd.f32 %v5042, %v5057
      %v5067 = vpack.c.bf16 %v5061, %v5059
      %v5068 = vpack.c.bf16 %v5062, %v5060
      %v5069 = vpack.c.bf16 %v5065, %v5063
      %v5070 = vpack.c.bf16 %v5066, %v5064
      %v5075 = vunpack.c.l.b16 %v5067
      %v5076 = vunpack.c.l.b16 %v5068
      %v5077 = vunpack.c.h.b16 %v5067
      %v5078 = vunpack.c.h.b16 %v5068
      %v5079 = vunpack.c.l.b16 %v5069
      %v5080 = vunpack.c.l.b16 %v5070
      %v5081 = vunpack.c.h.b16 %v5069
      %v5082 = vunpack.c.h.b16 %v5070
      %v5083 = vpack.c.b16 %v5076, %v5075
      %v5084 = vpack.c.b16 %v5078, %v5077
      %v5085 = vpack.c.b16 %v5080, %v5079
      %v5086 = vpack.c.b16 %v5082, %v5081
      %s5091 = scalar_lea.vmem %s231, 384
      %5092 = vst [vmem:[%s5091] sm:$0xff] %v5083
      %5093 = vst [vmem:[%s5091 + $0x8] sm:$0xff] %v5084
      %5094 = vst [vmem:[%s5091 + $0x10] sm:$0xff] %v5085
      %5095 = vst [vmem:[%s5091 + $0x18] sm:$0xff] %v5086
      %v5096 = vld [vmem:[%s1105] sm:$0xff]
      %v5097 = vld [vmem:[%s1105 + $0x8] sm:$0xff]
      %v5098 = vld [vmem:[%s1105 + $0x10] sm:$0xff]
      %v5099 = vld [vmem:[%s1105 + $0x18] sm:$0xff]
      %v5100 = vunpack.c.l.bf16 %v5096
      %v5101 = vunpack.c.h.bf16 %v5096
      %v5102 = vunpack.c.l.bf16 %v5097
      %v5103 = vunpack.c.h.bf16 %v5097
      %v5104 = vunpack.c.l.bf16 %v5098
      %v5105 = vunpack.c.h.bf16 %v5098
      %v5106 = vunpack.c.l.bf16 %v5099
      %v5107 = vunpack.c.h.bf16 %v5099
      %5108 = vset.pattern.permute.xlu0 13
      %5109 = vperm.xlu0 %5108, %v4230
      %v5110 = vpop.permute.xlu0 %5109
      %5112 = vset.pattern.permute.xlu0 13
      %5113 = vperm.xlu0 %5112, %v4235
      %v5114 = vpop.permute.xlu0 %5113
      %5116 = vset.pattern.permute.xlu0 13
      %5117 = vperm.xlu0 %5116, %v4240
      %v5118 = vpop.permute.xlu0 %5117
      %5120 = vset.pattern.permute.xlu0 13
      %5121 = vperm.xlu0 %5120, %v4245
      %v5122 = vpop.permute.xlu0 %5121
      %v5124 = vadd.f32 %v5100, %v5110
      %v5125 = vadd.f32 %v5101, %v5110
      %v5126 = vadd.f32 %v5102, %v5114
      %v5127 = vadd.f32 %v5103, %v5114
      %v5128 = vadd.f32 %v5104, %v5118
      %v5129 = vadd.f32 %v5105, %v5118
      %v5130 = vadd.f32 %v5106, %v5122
      %v5131 = vadd.f32 %v5107, %v5122
      %v5132 = vpack.c.bf16 %v5126, %v5124
      %v5133 = vpack.c.bf16 %v5127, %v5125
      %v5134 = vpack.c.bf16 %v5130, %v5128
      %v5135 = vpack.c.bf16 %v5131, %v5129
      %v5140 = vunpack.c.l.b16 %v5132
      %v5141 = vunpack.c.l.b16 %v5133
      %v5142 = vunpack.c.h.b16 %v5132
      %v5143 = vunpack.c.h.b16 %v5133
      %v5144 = vunpack.c.l.b16 %v5134
      %v5145 = vunpack.c.l.b16 %v5135
      %v5146 = vunpack.c.h.b16 %v5134
      %v5147 = vunpack.c.h.b16 %v5135
      %v5148 = vpack.c.b16 %v5141, %v5140
      %v5149 = vpack.c.b16 %v5143, %v5142
      %v5150 = vpack.c.b16 %v5145, %v5144
      %v5151 = vpack.c.b16 %v5147, %v5146
      %s5156 = scalar_lea.vmem %s231, 416
      %5157 = vst [vmem:[%s5156] sm:$0xff] %v5148
      %5158 = vst [vmem:[%s5156 + $0x8] sm:$0xff] %v5149
      %5159 = vst [vmem:[%s5156 + $0x10] sm:$0xff] %v5150
      %5160 = vst [vmem:[%s5156 + $0x18] sm:$0xff] %v5151
      %v5161 = vld [vmem:[%s1165] sm:$0xff]
      %v5162 = vld [vmem:[%s1165 + $0x8] sm:$0xff]
      %v5163 = vld [vmem:[%s1165 + $0x10] sm:$0xff]
      %v5164 = vld [vmem:[%s1165 + $0x18] sm:$0xff]
      %v5165 = vunpack.c.l.bf16 %v5161
      %v5166 = vunpack.c.h.bf16 %v5161
      %v5167 = vunpack.c.l.bf16 %v5162
      %v5168 = vunpack.c.h.bf16 %v5162
      %v5169 = vunpack.c.l.bf16 %v5163
      %v5170 = vunpack.c.h.bf16 %v5163
      %v5171 = vunpack.c.l.bf16 %v5164
      %v5172 = vunpack.c.h.bf16 %v5164
      %5173 = vset.pattern.permute.xlu0 14
      %5174 = vperm.xlu0 %5173, %v4230
      %v5175 = vpop.permute.xlu0 %5174
      %5177 = vset.pattern.permute.xlu0 14
      %5178 = vperm.xlu0 %5177, %v4235
      %v5179 = vpop.permute.xlu0 %5178
      %5181 = vset.pattern.permute.xlu0 14
      %5182 = vperm.xlu0 %5181, %v4240
      %v5183 = vpop.permute.xlu0 %5182
      %5185 = vset.pattern.permute.xlu0 14
      %5186 = vperm.xlu0 %5185, %v4245
      %v5187 = vpop.permute.xlu0 %5186
      %v5189 = vadd.f32 %v5165, %v5175
      %v5190 = vadd.f32 %v5166, %v5175
      %v5191 = vadd.f32 %v5167, %v5179
      %v5192 = vadd.f32 %v5168, %v5179
      %v5193 = vadd.f32 %v5169, %v5183
      %v5194 = vadd.f32 %v5170, %v5183
      %v5195 = vadd.f32 %v5171, %v5187
      %v5196 = vadd.f32 %v5172, %v5187
      %v5197 = vpack.c.bf16 %v5191, %v5189
      %v5198 = vpack.c.bf16 %v5192, %v5190
      %v5199 = vpack.c.bf16 %v5195, %v5193
      %v5200 = vpack.c.bf16 %v5196, %v5194
      %v5205 = vunpack.c.l.b16 %v5197
      %v5206 = vunpack.c.l.b16 %v5198
      %v5207 = vunpack.c.h.b16 %v5197
      %v5208 = vunpack.c.h.b16 %v5198
      %v5209 = vunpack.c.l.b16 %v5199
      %v5210 = vunpack.c.l.b16 %v5200
      %v5211 = vunpack.c.h.b16 %v5199
      %v5212 = vunpack.c.h.b16 %v5200
      %v5213 = vpack.c.b16 %v5206, %v5205
      %v5214 = vpack.c.b16 %v5208, %v5207
      %v5215 = vpack.c.b16 %v5210, %v5209
      %v5216 = vpack.c.b16 %v5212, %v5211
      %s5221 = scalar_lea.vmem %s231, 448
      %5222 = vst [vmem:[%s5221] sm:$0xff] %v5213
      %5223 = vst [vmem:[%s5221 + $0x8] sm:$0xff] %v5214
      %5224 = vst [vmem:[%s5221 + $0x10] sm:$0xff] %v5215
      %5225 = vst [vmem:[%s5221 + $0x18] sm:$0xff] %v5216
      %v5226 = vld [vmem:[%s1225] sm:$0xff]
      %v5227 = vld [vmem:[%s1225 + $0x8] sm:$0xff]
      %v5228 = vld [vmem:[%s1225 + $0x10] sm:$0xff]
      %v5229 = vld [vmem:[%s1225 + $0x18] sm:$0xff]
      %v5230 = vunpack.c.l.bf16 %v5226
      %v5231 = vunpack.c.h.bf16 %v5226
      %v5232 = vunpack.c.l.bf16 %v5227
      %v5233 = vunpack.c.h.bf16 %v5227
      %v5234 = vunpack.c.l.bf16 %v5228
      %v5235 = vunpack.c.h.bf16 %v5228
      %v5236 = vunpack.c.l.bf16 %v5229
      %v5237 = vunpack.c.h.bf16 %v5229
      %5238 = vset.pattern.permute.xlu0 15
      %5239 = vperm.xlu0 %5238, %v4230
      %v5240 = vpop.permute.xlu0 %5239
      %5242 = vset.pattern.permute.xlu0 15
      %5243 = vperm.xlu0 %5242, %v4235
      %v5244 = vpop.permute.xlu0 %5243
      %5246 = vset.pattern.permute.xlu0 15
      %5247 = vperm.xlu0 %5246, %v4240
      %v5248 = vpop.permute.xlu0 %5247
      %5250 = vset.pattern.permute.xlu0 15
      %5251 = vperm.xlu0 %5250, %v4245
      %v5252 = vpop.permute.xlu0 %5251
      %v5254 = vadd.f32 %v5230, %v5240
      %v5255 = vadd.f32 %v5231, %v5240
      %v5256 = vadd.f32 %v5232, %v5244
      %v5257 = vadd.f32 %v5233, %v5244
      %v5258 = vadd.f32 %v5234, %v5248
      %v5259 = vadd.f32 %v5235, %v5248
      %v5260 = vadd.f32 %v5236, %v5252
      %v5261 = vadd.f32 %v5237, %v5252
      %v5262 = vpack.c.bf16 %v5256, %v5254
      %v5263 = vpack.c.bf16 %v5257, %v5255
      %v5264 = vpack.c.bf16 %v5260, %v5258
      %v5265 = vpack.c.bf16 %v5261, %v5259
      %v5270 = vunpack.c.l.b16 %v5262
      %v5271 = vunpack.c.l.b16 %v5263
      %v5272 = vunpack.c.h.b16 %v5262
      %v5273 = vunpack.c.h.b16 %v5263
      %v5274 = vunpack.c.l.b16 %v5264
      %v5275 = vunpack.c.l.b16 %v5265
      %v5276 = vunpack.c.h.b16 %v5264
      %v5277 = vunpack.c.h.b16 %v5265
      %v5278 = vpack.c.b16 %v5271, %v5270
      %v5279 = vpack.c.b16 %v5273, %v5272
      %v5280 = vpack.c.b16 %v5275, %v5274
      %v5281 = vpack.c.b16 %v5277, %v5276
      %s5286 = scalar_lea.vmem %s231, 480
      %5287 = vst [vmem:[%s5286] sm:$0xff] %v5278
      %5288 = vst [vmem:[%s5286 + $0x8] sm:$0xff] %v5279
      %5289 = vst [vmem:[%s5286 + $0x10] sm:$0xff] %v5280
      %5290 = vst [vmem:[%s5286 + $0x18] sm:$0xff] %v5281
      %v5291 = vld [vmem:[%s1285] sm:$0xff]
      %v5292 = vld [vmem:[%s1285 + $0x8] sm:$0xff]
      %v5293 = vld [vmem:[%s1285 + $0x10] sm:$0xff]
      %v5294 = vld [vmem:[%s1285 + $0x18] sm:$0xff]
      %v5295 = vunpack.c.l.bf16 %v5291
      %v5296 = vunpack.c.h.bf16 %v5291
      %v5297 = vunpack.c.l.bf16 %v5292
      %v5298 = vunpack.c.h.bf16 %v5292
      %v5299 = vunpack.c.l.bf16 %v5293
      %v5300 = vunpack.c.h.bf16 %v5293
      %v5301 = vunpack.c.l.bf16 %v5294
      %v5302 = vunpack.c.h.bf16 %v5294
      %5303 = vset.pattern.permute.xlu0 16
      %5304 = vperm.xlu0 %5303, %v4230
      %v5305 = vpop.permute.xlu0 %5304
      %5307 = vset.pattern.permute.xlu0 16
      %5308 = vperm.xlu0 %5307, %v4235
      %v5309 = vpop.permute.xlu0 %5308
      %5311 = vset.pattern.permute.xlu0 16
      %5312 = vperm.xlu0 %5311, %v4240
      %v5313 = vpop.permute.xlu0 %5312
      %5315 = vset.pattern.permute.xlu0 16
      %5316 = vperm.xlu0 %5315, %v4245
      %v5317 = vpop.permute.xlu0 %5316
      %v5319 = vadd.f32 %v5295, %v5305
      %v5320 = vadd.f32 %v5296, %v5305
      %v5321 = vadd.f32 %v5297, %v5309
      %v5322 = vadd.f32 %v5298, %v5309
      %v5323 = vadd.f32 %v5299, %v5313
      %v5324 = vadd.f32 %v5300, %v5313
      %v5325 = vadd.f32 %v5301, %v5317
      %v5326 = vadd.f32 %v5302, %v5317
      %v5327 = vpack.c.bf16 %v5321, %v5319
      %v5328 = vpack.c.bf16 %v5322, %v5320
      %v5329 = vpack.c.bf16 %v5325, %v5323
      %v5330 = vpack.c.bf16 %v5326, %v5324
      %v5335 = vunpack.c.l.b16 %v5327
      %v5336 = vunpack.c.l.b16 %v5328
      %v5337 = vunpack.c.h.b16 %v5327
      %v5338 = vunpack.c.h.b16 %v5328
      %v5339 = vunpack.c.l.b16 %v5329
      %v5340 = vunpack.c.l.b16 %v5330
      %v5341 = vunpack.c.h.b16 %v5329
      %v5342 = vunpack.c.h.b16 %v5330
      %v5343 = vpack.c.b16 %v5336, %v5335
      %v5344 = vpack.c.b16 %v5338, %v5337
      %v5345 = vpack.c.b16 %v5340, %v5339
      %v5346 = vpack.c.b16 %v5342, %v5341
      %s5351 = scalar_lea.vmem %s231, 512
      %5352 = vst [vmem:[%s5351] sm:$0xff] %v5343
      %5353 = vst [vmem:[%s5351 + $0x8] sm:$0xff] %v5344
      %5354 = vst [vmem:[%s5351 + $0x10] sm:$0xff] %v5345
      %5355 = vst [vmem:[%s5351 + $0x18] sm:$0xff] %v5346
      %v5356 = vld [vmem:[%s1345] sm:$0xff]
      %v5357 = vld [vmem:[%s1345 + $0x8] sm:$0xff]
      %v5358 = vld [vmem:[%s1345 + $0x10] sm:$0xff]
      %v5359 = vld [vmem:[%s1345 + $0x18] sm:$0xff]
      %v5360 = vunpack.c.l.bf16 %v5356
      %v5361 = vunpack.c.h.bf16 %v5356
      %v5362 = vunpack.c.l.bf16 %v5357
      %v5363 = vunpack.c.h.bf16 %v5357
      %v5364 = vunpack.c.l.bf16 %v5358
      %v5365 = vunpack.c.h.bf16 %v5358
      %v5366 = vunpack.c.l.bf16 %v5359
      %v5367 = vunpack.c.h.bf16 %v5359
      %5368 = vset.pattern.permute.xlu0 17
      %5369 = vperm.xlu0 %5368, %v4230
      %v5370 = vpop.permute.xlu0 %5369
      %5372 = vset.pattern.permute.xlu0 17
      %5373 = vperm.xlu0 %5372, %v4235
      %v5374 = vpop.permute.xlu0 %5373
      %5376 = vset.pattern.permute.xlu0 17
      %5377 = vperm.xlu0 %5376, %v4240
      %v5378 = vpop.permute.xlu0 %5377
      %5380 = vset.pattern.permute.xlu0 17
      %5381 = vperm.xlu0 %5380, %v4245
      %v5382 = vpop.permute.xlu0 %5381
      %v5384 = vadd.f32 %v5360, %v5370
      %v5385 = vadd.f32 %v5361, %v5370
      %v5386 = vadd.f32 %v5362, %v5374
      %v5387 = vadd.f32 %v5363, %v5374
      %v5388 = vadd.f32 %v5364, %v5378
      %v5389 = vadd.f32 %v5365, %v5378
      %v5390 = vadd.f32 %v5366, %v5382
      %v5391 = vadd.f32 %v5367, %v5382
      %v5392 = vpack.c.bf16 %v5386, %v5384
      %v5393 = vpack.c.bf16 %v5387, %v5385
      %v5394 = vpack.c.bf16 %v5390, %v5388
      %v5395 = vpack.c.bf16 %v5391, %v5389
      %v5400 = vunpack.c.l.b16 %v5392
      %v5401 = vunpack.c.l.b16 %v5393
      %v5402 = vunpack.c.h.b16 %v5392
      %v5403 = vunpack.c.h.b16 %v5393
      %v5404 = vunpack.c.l.b16 %v5394
      %v5405 = vunpack.c.l.b16 %v5395
      %v5406 = vunpack.c.h.b16 %v5394
      %v5407 = vunpack.c.h.b16 %v5395
      %v5408 = vpack.c.b16 %v5401, %v5400
      %v5409 = vpack.c.b16 %v5403, %v5402
      %v5410 = vpack.c.b16 %v5405, %v5404
      %v5411 = vpack.c.b16 %v5407, %v5406
      %s5416 = scalar_lea.vmem %s231, 544
      %5417 = vst [vmem:[%s5416] sm:$0xff] %v5408
      %5418 = vst [vmem:[%s5416 + $0x8] sm:$0xff] %v5409
      %5419 = vst [vmem:[%s5416 + $0x10] sm:$0xff] %v5410
      %5420 = vst [vmem:[%s5416 + $0x18] sm:$0xff] %v5411
      %v5421 = vld [vmem:[%s1405] sm:$0xff]
      %v5422 = vld [vmem:[%s1405 + $0x8] sm:$0xff]
      %v5423 = vld [vmem:[%s1405 + $0x10] sm:$0xff]
      %v5424 = vld [vmem:[%s1405 + $0x18] sm:$0xff]
      %v5425 = vunpack.c.l.bf16 %v5421
      %v5426 = vunpack.c.h.bf16 %v5421
      %v5427 = vunpack.c.l.bf16 %v5422
      %v5428 = vunpack.c.h.bf16 %v5422
      %v5429 = vunpack.c.l.bf16 %v5423
      %v5430 = vunpack.c.h.bf16 %v5423
      %v5431 = vunpack.c.l.bf16 %v5424
      %v5432 = vunpack.c.h.bf16 %v5424
      %5433 = vset.pattern.permute.xlu0 18
      %5434 = vperm.xlu0 %5433, %v4230
      %v5435 = vpop.permute.xlu0 %5434
      %5437 = vset.pattern.permute.xlu0 18
      %5438 = vperm.xlu0 %5437, %v4235
      %v5439 = vpop.permute.xlu0 %5438
      %5441 = vset.pattern.permute.xlu0 18
      %5442 = vperm.xlu0 %5441, %v4240
      %v5443 = vpop.permute.xlu0 %5442
      %5445 = vset.pattern.permute.xlu0 18
      %5446 = vperm.xlu0 %5445, %v4245
      %v5447 = vpop.permute.xlu0 %5446
      %v5449 = vadd.f32 %v5425, %v5435
      %v5450 = vadd.f32 %v5426, %v5435
      %v5451 = vadd.f32 %v5427, %v5439
      %v5452 = vadd.f32 %v5428, %v5439
      %v5453 = vadd.f32 %v5429, %v5443
      %v5454 = vadd.f32 %v5430, %v5443
      %v5455 = vadd.f32 %v5431, %v5447
      %v5456 = vadd.f32 %v5432, %v5447
      %v5457 = vpack.c.bf16 %v5451, %v5449
      %v5458 = vpack.c.bf16 %v5452, %v5450
      %v5459 = vpack.c.bf16 %v5455, %v5453
      %v5460 = vpack.c.bf16 %v5456, %v5454
      %v5465 = vunpack.c.l.b16 %v5457
      %v5466 = vunpack.c.l.b16 %v5458
      %v5467 = vunpack.c.h.b16 %v5457
      %v5468 = vunpack.c.h.b16 %v5458
      %v5469 = vunpack.c.l.b16 %v5459
      %v5470 = vunpack.c.l.b16 %v5460
      %v5471 = vunpack.c.h.b16 %v5459
      %v5472 = vunpack.c.h.b16 %v5460
      %v5473 = vpack.c.b16 %v5466, %v5465
      %v5474 = vpack.c.b16 %v5468, %v5467
      %v5475 = vpack.c.b16 %v5470, %v5469
      %v5476 = vpack.c.b16 %v5472, %v5471
      %s5481 = scalar_lea.vmem %s231, 576
      %5482 = vst [vmem:[%s5481] sm:$0xff] %v5473
      %5483 = vst [vmem:[%s5481 + $0x8] sm:$0xff] %v5474
      %5484 = vst [vmem:[%s5481 + $0x10] sm:$0xff] %v5475
      %5485 = vst [vmem:[%s5481 + $0x18] sm:$0xff] %v5476
      %v5486 = vld [vmem:[%s1465] sm:$0xff]
      %v5487 = vld [vmem:[%s1465 + $0x8] sm:$0xff]
      %v5488 = vld [vmem:[%s1465 + $0x10] sm:$0xff]
      %v5489 = vld [vmem:[%s1465 + $0x18] sm:$0xff]
      %v5490 = vunpack.c.l.bf16 %v5486
      %v5491 = vunpack.c.h.bf16 %v5486
      %v5492 = vunpack.c.l.bf16 %v5487
      %v5493 = vunpack.c.h.bf16 %v5487
      %v5494 = vunpack.c.l.bf16 %v5488
      %v5495 = vunpack.c.h.bf16 %v5488
      %v5496 = vunpack.c.l.bf16 %v5489
      %v5497 = vunpack.c.h.bf16 %v5489
      %5498 = vset.pattern.permute.xlu0 19
      %5499 = vperm.xlu0 %5498, %v4230
      %v5500 = vpop.permute.xlu0 %5499
      %5502 = vset.pattern.permute.xlu0 19
      %5503 = vperm.xlu0 %5502, %v4235
      %v5504 = vpop.permute.xlu0 %5503
      %5506 = vset.pattern.permute.xlu0 19
      %5507 = vperm.xlu0 %5506, %v4240
      %v5508 = vpop.permute.xlu0 %5507
      %5510 = vset.pattern.permute.xlu0 19
      %5511 = vperm.xlu0 %5510, %v4245
      %v5512 = vpop.permute.xlu0 %5511
      %v5514 = vadd.f32 %v5490, %v5500
      %v5515 = vadd.f32 %v5491, %v5500
      %v5516 = vadd.f32 %v5492, %v5504
      %v5517 = vadd.f32 %v5493, %v5504
      %v5518 = vadd.f32 %v5494, %v5508
      %v5519 = vadd.f32 %v5495, %v5508
      %v5520 = vadd.f32 %v5496, %v5512
      %v5521 = vadd.f32 %v5497, %v5512
      %v5522 = vpack.c.bf16 %v5516, %v5514
      %v5523 = vpack.c.bf16 %v5517, %v5515
      %v5524 = vpack.c.bf16 %v5520, %v5518
      %v5525 = vpack.c.bf16 %v5521, %v5519
      %v5530 = vunpack.c.l.b16 %v5522
      %v5531 = vunpack.c.l.b16 %v5523
      %v5532 = vunpack.c.h.b16 %v5522
      %v5533 = vunpack.c.h.b16 %v5523
      %v5534 = vunpack.c.l.b16 %v5524
      %v5535 = vunpack.c.l.b16 %v5525
      %v5536 = vunpack.c.h.b16 %v5524
      %v5537 = vunpack.c.h.b16 %v5525
      %v5538 = vpack.c.b16 %v5531, %v5530
      %v5539 = vpack.c.b16 %v5533, %v5532
      %v5540 = vpack.c.b16 %v5535, %v5534
      %v5541 = vpack.c.b16 %v5537, %v5536
      %s5546 = scalar_lea.vmem %s231, 608
      %5547 = vst [vmem:[%s5546] sm:$0xff] %v5538
      %5548 = vst [vmem:[%s5546 + $0x8] sm:$0xff] %v5539
      %5549 = vst [vmem:[%s5546 + $0x10] sm:$0xff] %v5540
      %5550 = vst [vmem:[%s5546 + $0x18] sm:$0xff] %v5541
      %v5551 = vld [vmem:[%s1525] sm:$0xff]
      %v5552 = vld [vmem:[%s1525 + $0x8] sm:$0xff]
      %v5553 = vld [vmem:[%s1525 + $0x10] sm:$0xff]
      %v5554 = vld [vmem:[%s1525 + $0x18] sm:$0xff]
      %v5555 = vunpack.c.l.bf16 %v5551
      %v5556 = vunpack.c.h.bf16 %v5551
      %v5557 = vunpack.c.l.bf16 %v5552
      %v5558 = vunpack.c.h.bf16 %v5552
      %v5559 = vunpack.c.l.bf16 %v5553
      %v5560 = vunpack.c.h.bf16 %v5553
      %v5561 = vunpack.c.l.bf16 %v5554
      %v5562 = vunpack.c.h.bf16 %v5554
      %5563 = vset.pattern.permute.xlu0 20
      %5564 = vperm.xlu0 %5563, %v4230
      %v5565 = vpop.permute.xlu0 %5564
      %5567 = vset.pattern.permute.xlu0 20
      %5568 = vperm.xlu0 %5567, %v4235
      %v5569 = vpop.permute.xlu0 %5568
      %5571 = vset.pattern.permute.xlu0 20
      %5572 = vperm.xlu0 %5571, %v4240
      %v5573 = vpop.permute.xlu0 %5572
      %5575 = vset.pattern.permute.xlu0 20
      %5576 = vperm.xlu0 %5575, %v4245
      %v5577 = vpop.permute.xlu0 %5576
      %v5579 = vadd.f32 %v5555, %v5565
      %v5580 = vadd.f32 %v5556, %v5565
      %v5581 = vadd.f32 %v5557, %v5569
      %v5582 = vadd.f32 %v5558, %v5569
      %v5583 = vadd.f32 %v5559, %v5573
      %v5584 = vadd.f32 %v5560, %v5573
      %v5585 = vadd.f32 %v5561, %v5577
      %v5586 = vadd.f32 %v5562, %v5577
      %v5587 = vpack.c.bf16 %v5581, %v5579
      %v5588 = vpack.c.bf16 %v5582, %v5580
      %v5589 = vpack.c.bf16 %v5585, %v5583
      %v5590 = vpack.c.bf16 %v5586, %v5584
      %v5595 = vunpack.c.l.b16 %v5587
      %v5596 = vunpack.c.l.b16 %v5588
      %v5597 = vunpack.c.h.b16 %v5587
      %v5598 = vunpack.c.h.b16 %v5588
      %v5599 = vunpack.c.l.b16 %v5589
      %v5600 = vunpack.c.l.b16 %v5590
      %v5601 = vunpack.c.h.b16 %v5589
      %v5602 = vunpack.c.h.b16 %v5590
      %v5603 = vpack.c.b16 %v5596, %v5595
      %v5604 = vpack.c.b16 %v5598, %v5597
      %v5605 = vpack.c.b16 %v5600, %v5599
      %v5606 = vpack.c.b16 %v5602, %v5601
      %s5611 = scalar_lea.vmem %s231, 640
      %5612 = vst [vmem:[%s5611] sm:$0xff] %v5603
      %5613 = vst [vmem:[%s5611 + $0x8] sm:$0xff] %v5604
      %5614 = vst [vmem:[%s5611 + $0x10] sm:$0xff] %v5605
      %5615 = vst [vmem:[%s5611 + $0x18] sm:$0xff] %v5606
      %v5616 = vld [vmem:[%s1585] sm:$0xff]
      %v5617 = vld [vmem:[%s1585 + $0x8] sm:$0xff]
      %v5618 = vld [vmem:[%s1585 + $0x10] sm:$0xff]
      %v5619 = vld [vmem:[%s1585 + $0x18] sm:$0xff]
      %v5620 = vunpack.c.l.bf16 %v5616
      %v5621 = vunpack.c.h.bf16 %v5616
      %v5622 = vunpack.c.l.bf16 %v5617
      %v5623 = vunpack.c.h.bf16 %v5617
      %v5624 = vunpack.c.l.bf16 %v5618
      %v5625 = vunpack.c.h.bf16 %v5618
      %v5626 = vunpack.c.l.bf16 %v5619
      %v5627 = vunpack.c.h.bf16 %v5619
      %5628 = vset.pattern.permute.xlu0 21
      %5629 = vperm.xlu0 %5628, %v4230
      %v5630 = vpop.permute.xlu0 %5629
      %5632 = vset.pattern.permute.xlu0 21
      %5633 = vperm.xlu0 %5632, %v4235
      %v5634 = vpop.permute.xlu0 %5633
      %5636 = vset.pattern.permute.xlu0 21
      %5637 = vperm.xlu0 %5636, %v4240
      %v5638 = vpop.permute.xlu0 %5637
      %5640 = vset.pattern.permute.xlu0 21
      %5641 = vperm.xlu0 %5640, %v4245
      %v5642 = vpop.permute.xlu0 %5641
      %v5644 = vadd.f32 %v5620, %v5630
      %v5645 = vadd.f32 %v5621, %v5630
      %v5646 = vadd.f32 %v5622, %v5634
      %v5647 = vadd.f32 %v5623, %v5634
      %v5648 = vadd.f32 %v5624, %v5638
      %v5649 = vadd.f32 %v5625, %v5638
      %v5650 = vadd.f32 %v5626, %v5642
      %v5651 = vadd.f32 %v5627, %v5642
      %v5652 = vpack.c.bf16 %v5646, %v5644
      %v5653 = vpack.c.bf16 %v5647, %v5645
      %v5654 = vpack.c.bf16 %v5650, %v5648
      %v5655 = vpack.c.bf16 %v5651, %v5649
      %v5660 = vunpack.c.l.b16 %v5652
      %v5661 = vunpack.c.l.b16 %v5653
      %v5662 = vunpack.c.h.b16 %v5652
      %v5663 = vunpack.c.h.b16 %v5653
      %v5664 = vunpack.c.l.b16 %v5654
      %v5665 = vunpack.c.l.b16 %v5655
      %v5666 = vunpack.c.h.b16 %v5654
      %v5667 = vunpack.c.h.b16 %v5655
      %v5668 = vpack.c.b16 %v5661, %v5660
      %v5669 = vpack.c.b16 %v5663, %v5662
      %v5670 = vpack.c.b16 %v5665, %v5664
      %v5671 = vpack.c.b16 %v5667, %v5666
      %s5676 = scalar_lea.vmem %s231, 672
      %5677 = vst [vmem:[%s5676] sm:$0xff] %v5668
      %5678 = vst [vmem:[%s5676 + $0x8] sm:$0xff] %v5669
      %5679 = vst [vmem:[%s5676 + $0x10] sm:$0xff] %v5670
      %5680 = vst [vmem:[%s5676 + $0x18] sm:$0xff] %v5671
      %v5681 = vld [vmem:[%s1645] sm:$0xff]
      %v5682 = vld [vmem:[%s1645 + $0x8] sm:$0xff]
      %v5683 = vld [vmem:[%s1645 + $0x10] sm:$0xff]
      %v5684 = vld [vmem:[%s1645 + $0x18] sm:$0xff]
      %v5685 = vunpack.c.l.bf16 %v5681
      %v5686 = vunpack.c.h.bf16 %v5681
      %v5687 = vunpack.c.l.bf16 %v5682
      %v5688 = vunpack.c.h.bf16 %v5682
      %v5689 = vunpack.c.l.bf16 %v5683
      %v5690 = vunpack.c.h.bf16 %v5683
      %v5691 = vunpack.c.l.bf16 %v5684
      %v5692 = vunpack.c.h.bf16 %v5684
      %5693 = vset.pattern.permute.xlu0 22
      %5694 = vperm.xlu0 %5693, %v4230
      %v5695 = vpop.permute.xlu0 %5694
      %5697 = vset.pattern.permute.xlu0 22
      %5698 = vperm.xlu0 %5697, %v4235
      %v5699 = vpop.permute.xlu0 %5698
      %5701 = vset.pattern.permute.xlu0 22
      %5702 = vperm.xlu0 %5701, %v4240
      %v5703 = vpop.permute.xlu0 %5702
      %5705 = vset.pattern.permute.xlu0 22
      %5706 = vperm.xlu0 %5705, %v4245
      %v5707 = vpop.permute.xlu0 %5706
      %v5709 = vadd.f32 %v5685, %v5695
      %v5710 = vadd.f32 %v5686, %v5695
      %v5711 = vadd.f32 %v5687, %v5699
      %v5712 = vadd.f32 %v5688, %v5699
      %v5713 = vadd.f32 %v5689, %v5703
      %v5714 = vadd.f32 %v5690, %v5703
      %v5715 = vadd.f32 %v5691, %v5707
      %v5716 = vadd.f32 %v5692, %v5707
      %v5717 = vpack.c.bf16 %v5711, %v5709
      %v5718 = vpack.c.bf16 %v5712, %v5710
      %v5719 = vpack.c.bf16 %v5715, %v5713
      %v5720 = vpack.c.bf16 %v5716, %v5714
      %v5725 = vunpack.c.l.b16 %v5717
      %v5726 = vunpack.c.l.b16 %v5718
      %v5727 = vunpack.c.h.b16 %v5717
      %v5728 = vunpack.c.h.b16 %v5718
      %v5729 = vunpack.c.l.b16 %v5719
      %v5730 = vunpack.c.l.b16 %v5720
      %v5731 = vunpack.c.h.b16 %v5719
      %v5732 = vunpack.c.h.b16 %v5720
      %v5733 = vpack.c.b16 %v5726, %v5725
      %v5734 = vpack.c.b16 %v5728, %v5727
      %v5735 = vpack.c.b16 %v5730, %v5729
      %v5736 = vpack.c.b16 %v5732, %v5731
      %s5741 = scalar_lea.vmem %s231, 704
      %5742 = vst [vmem:[%s5741] sm:$0xff] %v5733
      %5743 = vst [vmem:[%s5741 + $0x8] sm:$0xff] %v5734
      %5744 = vst [vmem:[%s5741 + $0x10] sm:$0xff] %v5735
      %5745 = vst [vmem:[%s5741 + $0x18] sm:$0xff] %v5736
      %v5746 = vld [vmem:[%s1705] sm:$0xff]
      %v5747 = vld [vmem:[%s1705 + $0x8] sm:$0xff]
      %v5748 = vld [vmem:[%s1705 + $0x10] sm:$0xff]
      %v5749 = vld [vmem:[%s1705 + $0x18] sm:$0xff]
      %v5750 = vunpack.c.l.bf16 %v5746
      %v5751 = vunpack.c.h.bf16 %v5746
      %v5752 = vunpack.c.l.bf16 %v5747
      %v5753 = vunpack.c.h.bf16 %v5747
      %v5754 = vunpack.c.l.bf16 %v5748
      %v5755 = vunpack.c.h.bf16 %v5748
      %v5756 = vunpack.c.l.bf16 %v5749
      %v5757 = vunpack.c.h.bf16 %v5749
      %5758 = vset.pattern.permute.xlu0 23
      %5759 = vperm.xlu0 %5758, %v4230
      %v5760 = vpop.permute.xlu0 %5759
      %5762 = vset.pattern.permute.xlu0 23
      %5763 = vperm.xlu0 %5762, %v4235
      %v5764 = vpop.permute.xlu0 %5763
      %5766 = vset.pattern.permute.xlu0 23
      %5767 = vperm.xlu0 %5766, %v4240
      %v5768 = vpop.permute.xlu0 %5767
      %5770 = vset.pattern.permute.xlu0 23
      %5771 = vperm.xlu0 %5770, %v4245
      %v5772 = vpop.permute.xlu0 %5771
      %v5774 = vadd.f32 %v5750, %v5760
      %v5775 = vadd.f32 %v5751, %v5760
      %v5776 = vadd.f32 %v5752, %v5764
      %v5777 = vadd.f32 %v5753, %v5764
      %v5778 = vadd.f32 %v5754, %v5768
      %v5779 = vadd.f32 %v5755, %v5768
      %v5780 = vadd.f32 %v5756, %v5772
      %v5781 = vadd.f32 %v5757, %v5772
      %v5782 = vpack.c.bf16 %v5776, %v5774
      %v5783 = vpack.c.bf16 %v5777, %v5775
      %v5784 = vpack.c.bf16 %v5780, %v5778
      %v5785 = vpack.c.bf16 %v5781, %v5779
      %v5790 = vunpack.c.l.b16 %v5782
      %v5791 = vunpack.c.l.b16 %v5783
      %v5792 = vunpack.c.h.b16 %v5782
      %v5793 = vunpack.c.h.b16 %v5783
      %v5794 = vunpack.c.l.b16 %v5784
      %v5795 = vunpack.c.l.b16 %v5785
      %v5796 = vunpack.c.h.b16 %v5784
      %v5797 = vunpack.c.h.b16 %v5785
      %v5798 = vpack.c.b16 %v5791, %v5790
      %v5799 = vpack.c.b16 %v5793, %v5792
      %v5800 = vpack.c.b16 %v5795, %v5794
      %v5801 = vpack.c.b16 %v5797, %v5796
      %s5806 = scalar_lea.vmem %s231, 736
      %5807 = vst [vmem:[%s5806] sm:$0xff] %v5798
      %5808 = vst [vmem:[%s5806 + $0x8] sm:$0xff] %v5799
      %5809 = vst [vmem:[%s5806 + $0x10] sm:$0xff] %v5800
      %5810 = vst [vmem:[%s5806 + $0x18] sm:$0xff] %v5801
      %v5811 = vld [vmem:[%s1765] sm:$0xff]
      %v5812 = vld [vmem:[%s1765 + $0x8] sm:$0xff]
      %v5813 = vld [vmem:[%s1765 + $0x10] sm:$0xff]
      %v5814 = vld [vmem:[%s1765 + $0x18] sm:$0xff]
      %v5815 = vunpack.c.l.bf16 %v5811
      %v5816 = vunpack.c.h.bf16 %v5811
      %v5817 = vunpack.c.l.bf16 %v5812
      %v5818 = vunpack.c.h.bf16 %v5812
      %v5819 = vunpack.c.l.bf16 %v5813
      %v5820 = vunpack.c.h.bf16 %v5813
      %v5821 = vunpack.c.l.bf16 %v5814
      %v5822 = vunpack.c.h.bf16 %v5814
      %5823 = vset.pattern.permute.xlu0 24
      %5824 = vperm.xlu0 %5823, %v4230
      %v5825 = vpop.permute.xlu0 %5824
      %5827 = vset.pattern.permute.xlu0 24
      %5828 = vperm.xlu0 %5827, %v4235
      %v5829 = vpop.permute.xlu0 %5828
      %5831 = vset.pattern.permute.xlu0 24
      %5832 = vperm.xlu0 %5831, %v4240
      %v5833 = vpop.permute.xlu0 %5832
      %5835 = vset.pattern.permute.xlu0 24
      %5836 = vperm.xlu0 %5835, %v4245
      %v5837 = vpop.permute.xlu0 %5836
      %v5839 = vadd.f32 %v5815, %v5825
      %v5840 = vadd.f32 %v5816, %v5825
      %v5841 = vadd.f32 %v5817, %v5829
      %v5842 = vadd.f32 %v5818, %v5829
      %v5843 = vadd.f32 %v5819, %v5833
      %v5844 = vadd.f32 %v5820, %v5833
      %v5845 = vadd.f32 %v5821, %v5837
      %v5846 = vadd.f32 %v5822, %v5837
      %v5847 = vpack.c.bf16 %v5841, %v5839
      %v5848 = vpack.c.bf16 %v5842, %v5840
      %v5849 = vpack.c.bf16 %v5845, %v5843
      %v5850 = vpack.c.bf16 %v5846, %v5844
      %v5855 = vunpack.c.l.b16 %v5847
      %v5856 = vunpack.c.l.b16 %v5848
      %v5857 = vunpack.c.h.b16 %v5847
      %v5858 = vunpack.c.h.b16 %v5848
      %v5859 = vunpack.c.l.b16 %v5849
      %v5860 = vunpack.c.l.b16 %v5850
      %v5861 = vunpack.c.h.b16 %v5849
      %v5862 = vunpack.c.h.b16 %v5850
      %v5863 = vpack.c.b16 %v5856, %v5855
      %v5864 = vpack.c.b16 %v5858, %v5857
      %v5865 = vpack.c.b16 %v5860, %v5859
      %v5866 = vpack.c.b16 %v5862, %v5861
      %s5871 = scalar_lea.vmem %s231, 768
      %5872 = vst [vmem:[%s5871] sm:$0xff] %v5863
      %5873 = vst [vmem:[%s5871 + $0x8] sm:$0xff] %v5864
      %5874 = vst [vmem:[%s5871 + $0x10] sm:$0xff] %v5865
      %5875 = vst [vmem:[%s5871 + $0x18] sm:$0xff] %v5866
      %v5876 = vld [vmem:[%s1825] sm:$0xff]
      %v5877 = vld [vmem:[%s1825 + $0x8] sm:$0xff]
      %v5878 = vld [vmem:[%s1825 + $0x10] sm:$0xff]
      %v5879 = vld [vmem:[%s1825 + $0x18] sm:$0xff]
      %v5880 = vunpack.c.l.bf16 %v5876
      %v5881 = vunpack.c.h.bf16 %v5876
      %v5882 = vunpack.c.l.bf16 %v5877
      %v5883 = vunpack.c.h.bf16 %v5877
      %v5884 = vunpack.c.l.bf16 %v5878
      %v5885 = vunpack.c.h.bf16 %v5878
      %v5886 = vunpack.c.l.bf16 %v5879
      %v5887 = vunpack.c.h.bf16 %v5879
      %5888 = vset.pattern.permute.xlu0 25
      %5889 = vperm.xlu0 %5888, %v4230
      %v5890 = vpop.permute.xlu0 %5889
      %5892 = vset.pattern.permute.xlu0 25
      %5893 = vperm.xlu0 %5892, %v4235
      %v5894 = vpop.permute.xlu0 %5893
      %5896 = vset.pattern.permute.xlu0 25
      %5897 = vperm.xlu0 %5896, %v4240
      %v5898 = vpop.permute.xlu0 %5897
      %5900 = vset.pattern.permute.xlu0 25
      %5901 = vperm.xlu0 %5900, %v4245
      %v5902 = vpop.permute.xlu0 %5901
      %v5904 = vadd.f32 %v5880, %v5890
      %v5905 = vadd.f32 %v5881, %v5890
      %v5906 = vadd.f32 %v5882, %v5894
      %v5907 = vadd.f32 %v5883, %v5894
      %v5908 = vadd.f32 %v5884, %v5898
      %v5909 = vadd.f32 %v5885, %v5898
      %v5910 = vadd.f32 %v5886, %v5902
      %v5911 = vadd.f32 %v5887, %v5902
      %v5912 = vpack.c.bf16 %v5906, %v5904
      %v5913 = vpack.c.bf16 %v5907, %v5905
      %v5914 = vpack.c.bf16 %v5910, %v5908
      %v5915 = vpack.c.bf16 %v5911, %v5909
      %v5920 = vunpack.c.l.b16 %v5912
      %v5921 = vunpack.c.l.b16 %v5913
      %v5922 = vunpack.c.h.b16 %v5912
      %v5923 = vunpack.c.h.b16 %v5913
      %v5924 = vunpack.c.l.b16 %v5914
      %v5925 = vunpack.c.l.b16 %v5915
      %v5926 = vunpack.c.h.b16 %v5914
      %v5927 = vunpack.c.h.b16 %v5915
      %v5928 = vpack.c.b16 %v5921, %v5920
      %v5929 = vpack.c.b16 %v5923, %v5922
      %v5930 = vpack.c.b16 %v5925, %v5924
      %v5931 = vpack.c.b16 %v5927, %v5926
      %s5936 = scalar_lea.vmem %s231, 800
      %5937 = vst [vmem:[%s5936] sm:$0xff] %v5928
      %5938 = vst [vmem:[%s5936 + $0x8] sm:$0xff] %v5929
      %5939 = vst [vmem:[%s5936 + $0x10] sm:$0xff] %v5930
      %5940 = vst [vmem:[%s5936 + $0x18] sm:$0xff] %v5931
      %v5941 = vld [vmem:[%s1885] sm:$0xff]
      %v5942 = vld [vmem:[%s1885 + $0x8] sm:$0xff]
      %v5943 = vld [vmem:[%s1885 + $0x10] sm:$0xff]
      %v5944 = vld [vmem:[%s1885 + $0x18] sm:$0xff]
      %v5945 = vunpack.c.l.bf16 %v5941
      %v5946 = vunpack.c.h.bf16 %v5941
      %v5947 = vunpack.c.l.bf16 %v5942
      %v5948 = vunpack.c.h.bf16 %v5942
      %v5949 = vunpack.c.l.bf16 %v5943
      %v5950 = vunpack.c.h.bf16 %v5943
      %v5951 = vunpack.c.l.bf16 %v5944
      %v5952 = vunpack.c.h.bf16 %v5944
      %5953 = vset.pattern.permute.xlu0 26
      %5954 = vperm.xlu0 %5953, %v4230
      %v5955 = vpop.permute.xlu0 %5954
      %5957 = vset.pattern.permute.xlu0 26
      %5958 = vperm.xlu0 %5957, %v4235
      %v5959 = vpop.permute.xlu0 %5958
      %5961 = vset.pattern.permute.xlu0 26
      %5962 = vperm.xlu0 %5961, %v4240
      %v5963 = vpop.permute.xlu0 %5962
      %5965 = vset.pattern.permute.xlu0 26
      %5966 = vperm.xlu0 %5965, %v4245
      %v5967 = vpop.permute.xlu0 %5966
      %v5969 = vadd.f32 %v5945, %v5955
      %v5970 = vadd.f32 %v5946, %v5955
      %v5971 = vadd.f32 %v5947, %v5959
      %v5972 = vadd.f32 %v5948, %v5959
      %v5973 = vadd.f32 %v5949, %v5963
      %v5974 = vadd.f32 %v5950, %v5963
      %v5975 = vadd.f32 %v5951, %v5967
      %v5976 = vadd.f32 %v5952, %v5967
      %v5977 = vpack.c.bf16 %v5971, %v5969
      %v5978 = vpack.c.bf16 %v5972, %v5970
      %v5979 = vpack.c.bf16 %v5975, %v5973
      %v5980 = vpack.c.bf16 %v5976, %v5974
      %v5985 = vunpack.c.l.b16 %v5977
      %v5986 = vunpack.c.l.b16 %v5978
      %v5987 = vunpack.c.h.b16 %v5977
      %v5988 = vunpack.c.h.b16 %v5978
      %v5989 = vunpack.c.l.b16 %v5979
      %v5990 = vunpack.c.l.b16 %v5980
      %v5991 = vunpack.c.h.b16 %v5979
      %v5992 = vunpack.c.h.b16 %v5980
      %v5993 = vpack.c.b16 %v5986, %v5985
      %v5994 = vpack.c.b16 %v5988, %v5987
      %v5995 = vpack.c.b16 %v5990, %v5989
      %v5996 = vpack.c.b16 %v5992, %v5991
      %s6001 = scalar_lea.vmem %s231, 832
      %6002 = vst [vmem:[%s6001] sm:$0xff] %v5993
      %6003 = vst [vmem:[%s6001 + $0x8] sm:$0xff] %v5994
      %6004 = vst [vmem:[%s6001 + $0x10] sm:$0xff] %v5995
      %6005 = vst [vmem:[%s6001 + $0x18] sm:$0xff] %v5996
      %v6006 = vld [vmem:[%s1945] sm:$0xff]
      %v6007 = vld [vmem:[%s1945 + $0x8] sm:$0xff]
      %v6008 = vld [vmem:[%s1945 + $0x10] sm:$0xff]
      %v6009 = vld [vmem:[%s1945 + $0x18] sm:$0xff]
      %v6010 = vunpack.c.l.bf16 %v6006
      %v6011 = vunpack.c.h.bf16 %v6006
      %v6012 = vunpack.c.l.bf16 %v6007
      %v6013 = vunpack.c.h.bf16 %v6007
      %v6014 = vunpack.c.l.bf16 %v6008
      %v6015 = vunpack.c.h.bf16 %v6008
      %v6016 = vunpack.c.l.bf16 %v6009
      %v6017 = vunpack.c.h.bf16 %v6009
      %6018 = vset.pattern.permute.xlu0 27
      %6019 = vperm.xlu0 %6018, %v4230
      %v6020 = vpop.permute.xlu0 %6019
      %6022 = vset.pattern.permute.xlu0 27
      %6023 = vperm.xlu0 %6022, %v4235
      %v6024 = vpop.permute.xlu0 %6023
      %6026 = vset.pattern.permute.xlu0 27
      %6027 = vperm.xlu0 %6026, %v4240
      %v6028 = vpop.permute.xlu0 %6027
      %6030 = vset.pattern.permute.xlu0 27
      %6031 = vperm.xlu0 %6030, %v4245
      %v6032 = vpop.permute.xlu0 %6031
      %v6034 = vadd.f32 %v6010, %v6020
      %v6035 = vadd.f32 %v6011, %v6020
      %v6036 = vadd.f32 %v6012, %v6024
      %v6037 = vadd.f32 %v6013, %v6024
      %v6038 = vadd.f32 %v6014, %v6028
      %v6039 = vadd.f32 %v6015, %v6028
      %v6040 = vadd.f32 %v6016, %v6032
      %v6041 = vadd.f32 %v6017, %v6032
      %v6042 = vpack.c.bf16 %v6036, %v6034
      %v6043 = vpack.c.bf16 %v6037, %v6035
      %v6044 = vpack.c.bf16 %v6040, %v6038
      %v6045 = vpack.c.bf16 %v6041, %v6039
      %v6050 = vunpack.c.l.b16 %v6042
      %v6051 = vunpack.c.l.b16 %v6043
      %v6052 = vunpack.c.h.b16 %v6042
      %v6053 = vunpack.c.h.b16 %v6043
      %v6054 = vunpack.c.l.b16 %v6044
      %v6055 = vunpack.c.l.b16 %v6045
      %v6056 = vunpack.c.h.b16 %v6044
      %v6057 = vunpack.c.h.b16 %v6045
      %v6058 = vpack.c.b16 %v6051, %v6050
      %v6059 = vpack.c.b16 %v6053, %v6052
      %v6060 = vpack.c.b16 %v6055, %v6054
      %v6061 = vpack.c.b16 %v6057, %v6056
      %s6066 = scalar_lea.vmem %s231, 864
      %6067 = vst [vmem:[%s6066] sm:$0xff] %v6058
      %6068 = vst [vmem:[%s6066 + $0x8] sm:$0xff] %v6059
      %6069 = vst [vmem:[%s6066 + $0x10] sm:$0xff] %v6060
      %6070 = vst [vmem:[%s6066 + $0x18] sm:$0xff] %v6061
      %v6071 = vld [vmem:[%s2005] sm:$0xff]
      %v6072 = vld [vmem:[%s2005 + $0x8] sm:$0xff]
      %v6073 = vld [vmem:[%s2005 + $0x10] sm:$0xff]
      %v6074 = vld [vmem:[%s2005 + $0x18] sm:$0xff]
      %v6075 = vunpack.c.l.bf16 %v6071
      %v6076 = vunpack.c.h.bf16 %v6071
      %v6077 = vunpack.c.l.bf16 %v6072
      %v6078 = vunpack.c.h.bf16 %v6072
      %v6079 = vunpack.c.l.bf16 %v6073
      %v6080 = vunpack.c.h.bf16 %v6073
      %v6081 = vunpack.c.l.bf16 %v6074
      %v6082 = vunpack.c.h.bf16 %v6074
      %6083 = vset.pattern.permute.xlu0 28
      %6084 = vperm.xlu0 %6083, %v4230
      %v6085 = vpop.permute.xlu0 %6084
      %6087 = vset.pattern.permute.xlu0 28
      %6088 = vperm.xlu0 %6087, %v4235
      %v6089 = vpop.permute.xlu0 %6088
      %6091 = vset.pattern.permute.xlu0 28
      %6092 = vperm.xlu0 %6091, %v4240
      %v6093 = vpop.permute.xlu0 %6092
      %6095 = vset.pattern.permute.xlu0 28
      %6096 = vperm.xlu0 %6095, %v4245
      %v6097 = vpop.permute.xlu0 %6096
      %v6099 = vadd.f32 %v6075, %v6085
      %v6100 = vadd.f32 %v6076, %v6085
      %v6101 = vadd.f32 %v6077, %v6089
      %v6102 = vadd.f32 %v6078, %v6089
      %v6103 = vadd.f32 %v6079, %v6093
      %v6104 = vadd.f32 %v6080, %v6093
      %v6105 = vadd.f32 %v6081, %v6097
      %v6106 = vadd.f32 %v6082, %v6097
      %v6107 = vpack.c.bf16 %v6101, %v6099
      %v6108 = vpack.c.bf16 %v6102, %v6100
      %v6109 = vpack.c.bf16 %v6105, %v6103
      %v6110 = vpack.c.bf16 %v6106, %v6104
      %v6115 = vunpack.c.l.b16 %v6107
      %v6116 = vunpack.c.l.b16 %v6108
      %v6117 = vunpack.c.h.b16 %v6107
      %v6118 = vunpack.c.h.b16 %v6108
      %v6119 = vunpack.c.l.b16 %v6109
      %v6120 = vunpack.c.l.b16 %v6110
      %v6121 = vunpack.c.h.b16 %v6109
      %v6122 = vunpack.c.h.b16 %v6110
      %v6123 = vpack.c.b16 %v6116, %v6115
      %v6124 = vpack.c.b16 %v6118, %v6117
      %v6125 = vpack.c.b16 %v6120, %v6119
      %v6126 = vpack.c.b16 %v6122, %v6121
      %s6131 = scalar_lea.vmem %s231, 896
      %6132 = vst [vmem:[%s6131] sm:$0xff] %v6123
      %6133 = vst [vmem:[%s6131 + $0x8] sm:$0xff] %v6124
      %6134 = vst [vmem:[%s6131 + $0x10] sm:$0xff] %v6125
      %6135 = vst [vmem:[%s6131 + $0x18] sm:$0xff] %v6126
      %v6136 = vld [vmem:[%s2065] sm:$0xff]
      %v6137 = vld [vmem:[%s2065 + $0x8] sm:$0xff]
      %v6138 = vld [vmem:[%s2065 + $0x10] sm:$0xff]
      %v6139 = vld [vmem:[%s2065 + $0x18] sm:$0xff]
      %v6140 = vunpack.c.l.bf16 %v6136
      %v6141 = vunpack.c.h.bf16 %v6136
      %v6142 = vunpack.c.l.bf16 %v6137
      %v6143 = vunpack.c.h.bf16 %v6137
      %v6144 = vunpack.c.l.bf16 %v6138
      %v6145 = vunpack.c.h.bf16 %v6138
      %v6146 = vunpack.c.l.bf16 %v6139
      %v6147 = vunpack.c.h.bf16 %v6139
      %6148 = vset.pattern.permute.xlu0 29
      %6149 = vperm.xlu0 %6148, %v4230
      %v6150 = vpop.permute.xlu0 %6149
      %6152 = vset.pattern.permute.xlu0 29
      %6153 = vperm.xlu0 %6152, %v4235
      %v6154 = vpop.permute.xlu0 %6153
      %6156 = vset.pattern.permute.xlu0 29
      %6157 = vperm.xlu0 %6156, %v4240
      %v6158 = vpop.permute.xlu0 %6157
      %6160 = vset.pattern.permute.xlu0 29
      %6161 = vperm.xlu0 %6160, %v4245
      %v6162 = vpop.permute.xlu0 %6161
      %v6164 = vadd.f32 %v6140, %v6150
      %v6165 = vadd.f32 %v6141, %v6150
      %v6166 = vadd.f32 %v6142, %v6154
      %v6167 = vadd.f32 %v6143, %v6154
      %v6168 = vadd.f32 %v6144, %v6158
      %v6169 = vadd.f32 %v6145, %v6158
      %v6170 = vadd.f32 %v6146, %v6162
      %v6171 = vadd.f32 %v6147, %v6162
      %v6172 = vpack.c.bf16 %v6166, %v6164
      %v6173 = vpack.c.bf16 %v6167, %v6165
      %v6174 = vpack.c.bf16 %v6170, %v6168
      %v6175 = vpack.c.bf16 %v6171, %v6169
      %v6180 = vunpack.c.l.b16 %v6172
      %v6181 = vunpack.c.l.b16 %v6173
      %v6182 = vunpack.c.h.b16 %v6172
      %v6183 = vunpack.c.h.b16 %v6173
      %v6184 = vunpack.c.l.b16 %v6174
      %v6185 = vunpack.c.l.b16 %v6175
      %v6186 = vunpack.c.h.b16 %v6174
      %v6187 = vunpack.c.h.b16 %v6175
      %v6188 = vpack.c.b16 %v6181, %v6180
      %v6189 = vpack.c.b16 %v6183, %v6182
      %v6190 = vpack.c.b16 %v6185, %v6184
      %v6191 = vpack.c.b16 %v6187, %v6186
      %s6196 = scalar_lea.vmem %s231, 928
      %6197 = vst [vmem:[%s6196] sm:$0xff] %v6188
      %6198 = vst [vmem:[%s6196 + $0x8] sm:$0xff] %v6189
      %6199 = vst [vmem:[%s6196 + $0x10] sm:$0xff] %v6190
      %6200 = vst [vmem:[%s6196 + $0x18] sm:$0xff] %v6191
      %v6201 = vld [vmem:[%s2125] sm:$0xff]
      %v6202 = vld [vmem:[%s2125 + $0x8] sm:$0xff]
      %v6203 = vld [vmem:[%s2125 + $0x10] sm:$0xff]
      %v6204 = vld [vmem:[%s2125 + $0x18] sm:$0xff]
      %v6205 = vunpack.c.l.bf16 %v6201
      %v6206 = vunpack.c.h.bf16 %v6201
      %v6207 = vunpack.c.l.bf16 %v6202
      %v6208 = vunpack.c.h.bf16 %v6202
      %v6209 = vunpack.c.l.bf16 %v6203
      %v6210 = vunpack.c.h.bf16 %v6203
      %v6211 = vunpack.c.l.bf16 %v6204
      %v6212 = vunpack.c.h.bf16 %v6204
      %6213 = vset.pattern.permute.xlu0 30
      %6214 = vperm.xlu0 %6213, %v4230
      %v6215 = vpop.permute.xlu0 %6214
      %6217 = vset.pattern.permute.xlu0 30
      %6218 = vperm.xlu0 %6217, %v4235
      %v6219 = vpop.permute.xlu0 %6218
      %6221 = vset.pattern.permute.xlu0 30
      %6222 = vperm.xlu0 %6221, %v4240
      %v6223 = vpop.permute.xlu0 %6222
      %6225 = vset.pattern.permute.xlu0 30
      %6226 = vperm.xlu0 %6225, %v4245
      %v6227 = vpop.permute.xlu0 %6226
      %v6229 = vadd.f32 %v6205, %v6215
      %v6230 = vadd.f32 %v6206, %v6215
      %v6231 = vadd.f32 %v6207, %v6219
      %v6232 = vadd.f32 %v6208, %v6219
      %v6233 = vadd.f32 %v6209, %v6223
      %v6234 = vadd.f32 %v6210, %v6223
      %v6235 = vadd.f32 %v6211, %v6227
      %v6236 = vadd.f32 %v6212, %v6227
      %v6237 = vpack.c.bf16 %v6231, %v6229
      %v6238 = vpack.c.bf16 %v6232, %v6230
      %v6239 = vpack.c.bf16 %v6235, %v6233
      %v6240 = vpack.c.bf16 %v6236, %v6234
      %v6245 = vunpack.c.l.b16 %v6237
      %v6246 = vunpack.c.l.b16 %v6238
      %v6247 = vunpack.c.h.b16 %v6237
      %v6248 = vunpack.c.h.b16 %v6238
      %v6249 = vunpack.c.l.b16 %v6239
      %v6250 = vunpack.c.l.b16 %v6240
      %v6251 = vunpack.c.h.b16 %v6239
      %v6252 = vunpack.c.h.b16 %v6240
      %v6253 = vpack.c.b16 %v6246, %v6245
      %v6254 = vpack.c.b16 %v6248, %v6247
      %v6255 = vpack.c.b16 %v6250, %v6249
      %v6256 = vpack.c.b16 %v6252, %v6251
      %s6261 = scalar_lea.vmem %s231, 960
      %6262 = vst [vmem:[%s6261] sm:$0xff] %v6253
      %6263 = vst [vmem:[%s6261 + $0x8] sm:$0xff] %v6254
      %6264 = vst [vmem:[%s6261 + $0x10] sm:$0xff] %v6255
      %6265 = vst [vmem:[%s6261 + $0x18] sm:$0xff] %v6256
      %v6266 = vld [vmem:[%s2185] sm:$0xff]
      %v6267 = vld [vmem:[%s2185 + $0x8] sm:$0xff]
      %v6268 = vld [vmem:[%s2185 + $0x10] sm:$0xff]
      %v6269 = vld [vmem:[%s2185 + $0x18] sm:$0xff]
      %v6270 = vunpack.c.l.bf16 %v6266
      %v6271 = vunpack.c.h.bf16 %v6266
      %v6272 = vunpack.c.l.bf16 %v6267
      %v6273 = vunpack.c.h.bf16 %v6267
      %v6274 = vunpack.c.l.bf16 %v6268
      %v6275 = vunpack.c.h.bf16 %v6268
      %v6276 = vunpack.c.l.bf16 %v6269
      %v6277 = vunpack.c.h.bf16 %v6269
      %6278 = vset.pattern.permute.xlu0 31
      %6279 = vperm.xlu0 %6278, %v4230
      %v6280 = vpop.permute.xlu0 %6279
      %6282 = vset.pattern.permute.xlu0 31
      %6283 = vperm.xlu0 %6282, %v4235
      %v6284 = vpop.permute.xlu0 %6283
      %6286 = vset.pattern.permute.xlu0 31
      %6287 = vperm.xlu0 %6286, %v4240
      %v6288 = vpop.permute.xlu0 %6287
      %6290 = vset.pattern.permute.xlu0 31
      %6291 = vperm.xlu0 %6290, %v4245
      %v6292 = vpop.permute.xlu0 %6291
      %v6294 = vadd.f32 %v6270, %v6280
      %v6295 = vadd.f32 %v6271, %v6280
      %v6296 = vadd.f32 %v6272, %v6284
      %v6297 = vadd.f32 %v6273, %v6284
      %v6298 = vadd.f32 %v6274, %v6288
      %v6299 = vadd.f32 %v6275, %v6288
      %v6300 = vadd.f32 %v6276, %v6292
      %v6301 = vadd.f32 %v6277, %v6292
      %v6302 = vpack.c.bf16 %v6296, %v6294
      %v6303 = vpack.c.bf16 %v6297, %v6295
      %v6304 = vpack.c.bf16 %v6300, %v6298
      %v6305 = vpack.c.bf16 %v6301, %v6299
      %v6310 = vunpack.c.l.b16 %v6302
      %v6311 = vunpack.c.l.b16 %v6303
      %v6312 = vunpack.c.h.b16 %v6302
      %v6313 = vunpack.c.h.b16 %v6303
      %v6314 = vunpack.c.l.b16 %v6304
      %v6315 = vunpack.c.l.b16 %v6305
      %v6316 = vunpack.c.h.b16 %v6304
      %v6317 = vunpack.c.h.b16 %v6305
      %v6318 = vpack.c.b16 %v6311, %v6310
      %v6319 = vpack.c.b16 %v6313, %v6312
      %v6320 = vpack.c.b16 %v6315, %v6314
      %v6321 = vpack.c.b16 %v6317, %v6316
      %s6326 = scalar_lea.vmem %s231, 992
      %6327 = vst [vmem:[%s6326] sm:$0xff] %v6318
      %6328 = vst [vmem:[%s6326 + $0x8] sm:$0xff] %v6319
      %6329 = vst [vmem:[%s6326 + $0x10] sm:$0xff] %v6320
      %6330 = vst [vmem:[%s6326 + $0x18] sm:$0xff] %v6321
      %s6331 = smul.u32 32, %s16
      %p6332 = scmp.lt.s32.totalorder %s6331, 63
      %s6333 = scalar_select %p6332, %s6331, 63
      %s6334 = smul.addr %s6333, 8
      %s6335 = smul.addr %s6334, 4
      %s6336 = scalar_lea.vmem %s5, %s6335
      // Predicated region
      $region41: #{ms_context_block2d.1} parent=39 // pred_check
        %p6337 = pneg %p144
      $region42: #{ms_context_block2d.1} parent=39 // pred_check_branch
        %6339 = sbr.rel (%p6337) target = $region44
      $region43: #{ms_context_block2d.1} parent=39 // pred_region
        %s6340 = smul.u32 32, %s16
      $region44: #{ms_context_block2d.1} parent=39 // pred_fallthru
        _
    $region40: #{ms_context_block2d.1} parent=5 // pred_fallthru
      _
    %p6341 = scmp.le.s32.totalorder 2, %s11
    // Predicated region
    $region45: #{ms_context_block2d.1} parent=5 // pred_check
      %p6342 = pneg %p6341
    $region46: #{ms_context_block2d.1} parent=5 // pred_check_branch
      %6344 = sbr.rel (%p6342) target = $region48
    $region47: #{ms_context_block2d.1} parent=5 // pred_region
      %s6345 = ssub.s32 %s11, 2
      // Predicated region
      $region49: #{ms_context_block2d.1} parent=47 // pred_check
        %p6346 = pneg %p150
      $region50: #{ms_context_block2d.1} parent=47 // pred_check_branch
        %6348 = sbr.rel (%p6346) target = $region52
      $region51: #{ms_context_block2d.1} parent=47 // pred_region
        %s6349 = smul.u32 32, %s17
        %p6350 = scmp.lt.s32.totalorder %s6349, 63
        %s6351 = scalar_select %p6350, %s6349, 63
        %s6352 = smul.addr %s6351, 8
        %s6353 = smul.addr %s6352, 4
        %s6354 = scalar_lea.vmem %s5, %s6353
      $region52: #{ms_context_block2d.1} parent=47 // pred_fallthru
        _
    $region48: #{ms_context_block2d.1} parent=5 // pred_fallthru
      _
  $region6: #{ms_context_block2d.1} parent=0 // loop_footer
    %s15 = sadd.s32 1, %s11
  $region7: #{ms_context_block2d.1} parent=0 // loop_footer_branch
    %10 = sbr.rel target = $region3
  $region8: #{ms_context_block2d.1} parent=0 // loop_exit
    _

</llo_original>
